<compile_context>
chip_gen: v6e
topology: v6e:2x2x1
jax: 0.10.0
libtpu: 0.0.40
codegen_flags: <defaults>
</compile_context>

<pallas_src>
import functools
import numpy as np
import jax
import jax.numpy as jnp
from jax import lax
from jax.experimental import pallas as pl
from jax.experimental.pallas import tpu as pltpu

# ----------------------------------------------------------------------------
# constants
# ----------------------------------------------------------------------------
GROWTH = 32
BN_SIZE = 4
BOTTLENECK = BN_SIZE * GROWTH            # 128
BLOCK_CONFIG = (6, 12, 24, 16)
NUM_INIT_FEATURES = 64
NUM_CLASSES = 101
N_HEAD, D_K, D_V = 8, 64, 64
SEQ = 49                                 # 7*7 "tokens" fed to the attention
SEQ_PAD = 64
ATT_SCALE = 1.0 / float(np.sqrt(D_K))
LN_EPS = 1e-5
BF16_NEG = float(jnp.finfo(jnp.bfloat16).min)
VMEM_LIMIT = 48 * 1024 * 1024            # <= v7x physical (64MiB), fine on v5e/v6e


def _round_up(x, m):
    return ((x + m - 1) // m) * m


def _row_tile(m, cap=3584):
    """Largest divisor row-tile <= cap; prefers >=2 tiles for big M (megacore)."""
    for g in range(1, 257):
        if m % g == 0:
            t = m // g
            if t <= cap and (g >= 2 or m <= 1024):
                return t
    return min(m, cap)


def _pick_tk(cin, c_buf):
    """Smallest K-tile covering the channels written so far (single K step)."""
    for t in (256, 512, 1024):
        if t >= cin and c_buf % t == 0 and t <= c_buf:
            return t
    return c_buf


# ----------------------------------------------------------------------------
# Pallas kernels
# ----------------------------------------------------------------------------
def _dense_layer_kernel(x_ref, s1_ref, b1_ref, w1_ref, s2_ref, b2_ref, w2_ref,
                        o_ref, *, H, W):
    """Fully fused DenseNet layer for ONE image (no HBM round trip of taps):
         a   = relu(x*s1 + b1)                       (folded BN1 + ReLU)
         acc = a @ W1                                (1x1 bottleneck conv)
         h   = relu(acc*s2 + b2)                     (folded BN2 + ReLU)
         new = 3x3 conv(h) = sum over 9 taps of row-shifted (h @ W2_tap)
    Rows are the flattened H*W pixels (plus zero pad rows); column wrap-around
    at image borders is removed with per-row masks, top/bottom by zero shifts.
    """
    rows = o_ref.shape[1]

    a = jnp.maximum(x_ref[0] * s1_ref[...] + b1_ref[...], 0.0)
    acc = jnp.dot(a.astype(jnp.bfloat16), w1_ref[...],
                  preferred_element_type=jnp.float32)
    h = jnp.maximum(acc * s2_ref[...] + b2_ref[...], 0.0).astype(jnp.bfloat16)

    # per-row spatial coordinates (float trick: exact for rows < 2^24, avoids
    # relying on integer div/mod lowering)
    r = lax.broadcasted_iota(jnp.int32, (rows, GROWTH), 0).astype(jnp.float32)
    row_i = jnp.floor((r + 0.5) * (1.0 / W))
    col_j = r - row_i * W
    valid = r < (H * W - 0.5)                        # drop per-image pad rows
    masks = (valid & (col_j < W - 1.5),              # dj==0: drop sources j==W-1
             valid,                                  # dj==1
             valid & (col_j > 0.5))                  # dj==2: drop sources j==0

    out = jnp.zeros((rows, GROWTH), jnp.float32)
    for di in range(3):
        for dj in range(3):
            off = (di - 1) * W + (dj - 1)            # flat row offset of this tap
            y = jnp.dot(h, w2_ref[di * 3 + dj],
                        preferred_element_type=jnp.float32)
            y = jnp.where(masks[dj], y, 0.0)
            # out[r] += y[r + off]  (zero beyond the image)
            if off > 0:
                y = jnp.concatenate(
                    [y[off:, :], jnp.zeros((off, GROWTH), jnp.float32)], axis=0)
            elif off < 0:
                y = jnp.concatenate(
                    [jnp.zeros((-off, GROWTH), jnp.float32), y[:off, :]], axis=0)
            out = out + y
    o_ref[0] = out.astype(o_ref.dtype)


def _bnrelu_gemm_kernel(x_ref, s_ref, b_ref, w_ref, o_ref, acc_ref):
    """o = relu(x*s + b) @ w  (fused BN-ReLU-1x1conv, used for transitions)."""
    k = pl.program_id(2)

    @pl.when(k == 0)
    def _():
        acc_ref[...] = jnp.zeros_like(acc_ref)

    a = jnp.maximum(x_ref[...] * s_ref[...] + b_ref[...], 0.0)
    acc_ref[...] += jnp.dot(a.astype(jnp.bfloat16), w_ref[...],
                            preferred_element_type=jnp.float32)

    @pl.when(k == pl.num_programs(2) - 1)
    def _():
        o_ref[...] = acc_ref[...].astype(o_ref.dtype)


def _conv_bnrelu_kernel(x_ref, w_ref, s_ref, b_ref, o_ref):
    """stem: o = relu((x @ w) * s + b) -- single full-K block."""
    h = jnp.dot(x_ref[...], w_ref[...], preferred_element_type=jnp.float32)
    o_ref[...] = jnp.maximum(h * s_ref[...] + b_ref[...], 0.0).astype(o_ref.dtype)


def _bn_relu_kernel(x_ref, s_ref, b_ref, o_ref):
    o_ref[...] = jnp.maximum(x_ref[...] * s_ref[...] + b_ref[...],
                             0.0).astype(o_ref.dtype)


def _linear_full_kernel(x_ref, w_ref, b_ref, o_ref):
    o_ref[...] = (jnp.dot(x_ref[...], w_ref[...],
                          preferred_element_type=jnp.float32)
                  + b_ref[...]).astype(o_ref.dtype)


def _attn_kernel(q_ref, k_ref, v_ref, o_ref):
    """All heads of one image per grid step (keys beyond SEQ are masked)."""
    col = lax.broadcasted_iota(jnp.int32, (SEQ_PAD, SEQ_PAD), 1)
    key_mask = col < SEQ
    for hd in range(N_HEAD):
        q = q_ref[0, hd]
        k = k_ref[0, hd]
        v = v_ref[0, hd]
        s = lax.dot_general(q, k, (((1,), (1,)), ((), ())),
                            preferred_element_type=jnp.float32) * ATT_SCALE
        s = jnp.where(key_mask, s, -1e30)
        m = jnp.max(s, axis=-1, keepdims=True)
        e = jnp.exp(s - m)
        denom = jnp.sum(e, axis=-1, keepdims=True)
        a = e * pl.reciprocal(denom, approx=True)
        o = jnp.dot(a.astype(v.dtype), v, preferred_element_type=jnp.float32)
        o_ref[0, hd] = o.astype(o_ref.dtype)


def _add_layernorm_kernel(x_ref, r_ref, g_ref, b_ref, o_ref):
    x = x_ref[...].astype(jnp.float32) + r_ref[...].astype(jnp.float32)
    mu = jnp.mean(x, axis=-1, keepdims=True)
    xc = x - mu
    var = jnp.mean(xc * xc, axis=-1, keepdims=True)
    y = xc * lax.rsqrt(var + LN_EPS)
    o_ref[...] = (y * g_ref[...] + b_ref[...]).astype(o_ref.dtype)


def _mean0_kernel(x_ref, o_ref):
    o_ref[...] = jnp.mean(x_ref[...].astype(jnp.float32), axis=0
                          ).astype(o_ref.dtype)


# ----------------------------------------------------------------------------
# pallas_call wrappers
# ----------------------------------------------------------------------------
def dense_layer_new_channels(buf, s1, b1, w1, s2, b2, w2, *, tk, H, W):
    """The fused dense-layer kernel; returns the 32 new channels (N, HWp, 32)."""
    N, HWp, _ = buf.shape
    kern = functools.partial(_dense_layer_kernel, H=H, W=W)
    return pl.pallas_call(
        kern,
        out_shape=jax.ShapeDtypeStruct((N, HWp, GROWTH), jnp.bfloat16),
        grid=(N,),
        in_specs=[
            pl.BlockSpec((1, HWp, tk), lambda i: (i, 0, 0)),            # x
            pl.BlockSpec((1, tk), lambda i: (0, 0)),                    # s1
            pl.BlockSpec((1, tk), lambda i: (0, 0)),                    # b1
            pl.BlockSpec((tk, BOTTLENECK), lambda i: (0, 0)),           # w1
            pl.BlockSpec((1, BOTTLENECK), lambda i: (0, 0)),            # s2
            pl.BlockSpec((1, BOTTLENECK), lambda i: (0, 0)),            # b2
            pl.BlockSpec((9, BOTTLENECK, GROWTH), lambda i: (0, 0, 0)),  # w2 taps
        ],
        out_specs=pl.BlockSpec((1, HWp, GROWTH), lambda i: (i, 0, 0)),
        compiler_params=pltpu.CompilerParams(
            dimension_semantics=("parallel",),
            vmem_limit_bytes=VMEM_LIMIT),
    )(buf, s1, b1, w1, s2, b2, w2)


def bnrelu_linear(x, s, b, w):
    """relu(x*s+b) @ w  for transitions; wide N tiles, deep K tiles."""
    M, K = x.shape
    Nc = w.shape[1]
    tk = 512 if (K >= 512 and K % 512 == 0) else 256
    tn = Nc if Nc <= 256 else 256
    tm = _row_tile(M)
    return pl.pallas_call(
        _bnrelu_gemm_kernel,
        out_shape=jax.ShapeDtypeStruct((M, Nc), jnp.bfloat16),
        grid=(M // tm, Nc // tn, K // tk),
        in_specs=[pl.BlockSpec((tm, tk), lambda i, j, k: (i, k)),
                  pl.BlockSpec((1, tk), lambda i, j, k: (0, k)),
                  pl.BlockSpec((1, tk), lambda i, j, k: (0, k)),
                  pl.BlockSpec((tk, tn), lambda i, j, k: (k, j))],
        out_specs=pl.BlockSpec((tm, tn), lambda i, j, k: (i, j)),
        scratch_shapes=[pltpu.VMEM((tm, tn), jnp.float32)],
        compiler_params=pltpu.CompilerParams(
            dimension_semantics=("parallel", "parallel", "arbitrary"),
            vmem_limit_bytes=VMEM_LIMIT),
    )(x, s, b, w)


def conv_bnrelu(x, w, s, b):
    """stem conv0 (+ norm0 + relu0 fused): single full-K block per row tile."""
    M, K = x.shape
    Nc = w.shape[1]
    tm = _row_tile(M)
    return pl.pallas_call(
        _conv_bnrelu_kernel,
        out_shape=jax.ShapeDtypeStruct((M, Nc), jnp.bfloat16),
        grid=(M // tm,),
        in_specs=[pl.BlockSpec((tm, K), lambda i: (i, 0)),
                  pl.BlockSpec((K, Nc), lambda i: (0, 0)),
                  pl.BlockSpec((1, Nc), lambda i: (0, 0)),
                  pl.BlockSpec((1, Nc), lambda i: (0, 0))],
        out_specs=pl.BlockSpec((tm, Nc), lambda i: (i, 0)),
        compiler_params=pltpu.CompilerParams(
            dimension_semantics=("parallel",),
            vmem_limit_bytes=VMEM_LIMIT),
    )(x, w, s, b)


def linear_full(x, w, b, out_dtype=jnp.bfloat16):
    """Small single-step GEMM (whole operands resident in VMEM)."""
    M, K = x.shape
    Nc = w.shape[1]
    return pl.pallas_call(
        _linear_full_kernel,
        out_shape=jax.ShapeDtypeStruct((M, Nc), out_dtype),
        grid=(1,),
        in_specs=[pl.BlockSpec((M, K), lambda i: (0, 0)),
                  pl.BlockSpec((K, Nc), lambda i: (0, 0)),
                  pl.BlockSpec((1, Nc), lambda i: (0, 0))],
        out_specs=pl.BlockSpec((M, Nc), lambda i: (0, 0)),
    )(x, w, b)


def bn_relu(x, s, b):
    M, C = x.shape
    tm = _row_tile(M)
    return pl.pallas_call(
        _bn_relu_kernel,
        out_shape=jax.ShapeDtypeStruct((M, C), jnp.bfloat16),
        grid=(M // tm,),
        in_specs=[pl.BlockSpec((tm, C), lambda i: (i, 0)),
                  pl.BlockSpec((1, C), lambda i: (0, 0)),
                  pl.BlockSpec((1, C), lambda i: (0, 0))],
        out_specs=pl.BlockSpec((tm, C), lambda i: (i, 0)),
        compiler_params=pltpu.CompilerParams(dimension_semantics=("parallel",)),
    )(x, s, b)


def attention_core(qh, kh, vh):
    N = qh.shape[0]
    spec = pl.BlockSpec((1, N_HEAD, SEQ_PAD, D_K), lambda i: (i, 0, 0, 0))
    return pl.pallas_call(
        _attn_kernel,
        out_shape=jax.ShapeDtypeStruct((N, N_HEAD, SEQ_PAD, D_V), jnp.bfloat16),
        grid=(N,),
        in_specs=[spec, spec, spec],
        out_specs=pl.BlockSpec((1, N_HEAD, SEQ_PAD, D_V), lambda i: (i, 0, 0, 0)),
        compiler_params=pltpu.CompilerParams(dimension_semantics=("parallel",)),
    )(qh, kh, vh)


def add_layernorm(x, res, g, b):
    M, C = x.shape
    return pl.pallas_call(
        _add_layernorm_kernel,
        out_shape=jax.ShapeDtypeStruct((M, C), jnp.bfloat16),
        grid=(1,),
        in_specs=[pl.BlockSpec((M, C), lambda i: (0, 0)),
                  pl.BlockSpec((M, C), lambda i: (0, 0)),
                  pl.BlockSpec((1, C), lambda i: (0, 0)),
                  pl.BlockSpec((1, C), lambda i: (0, 0))],
        out_specs=pl.BlockSpec((M, C), lambda i: (0, 0)),
    )(x, res, g, b)


def pool_mean(xs):
    """xs (K, M, C) -> mean over K -> (M, C)."""
    K, M, C = xs.shape
    return pl.pallas_call(
        _mean0_kernel,
        out_shape=jax.ShapeDtypeStruct((M, C), jnp.bfloat16),
        grid=(1,),
        in_specs=[pl.BlockSpec((K, M, C), lambda i: (0, 0, 0))],
        out_specs=pl.BlockSpec((M, C), lambda i: (0, 0)),
    )(xs)


# ----------------------------------------------------------------------------
# glue: patch extraction & weight re-layout (done once at init)
# ----------------------------------------------------------------------------
def extract_patches(x, kh, kw, stride, pad):
    """(N,H,W,C) -> (N,Ho,Wo,kh*kw*C), column order = (di, dj, cin)."""
    N, H, W, C = x.shape
    xp = jnp.pad(x, ((0, 0), (pad, pad), (pad, pad), (0, 0)))
    Ho = (H + 2 * pad - kh) // stride + 1
    Wo = (W + 2 * pad - kw) // stride + 1
    cols = []
    for di in range(kh):
        for dj in range(kw):
            cols.append(xp[:, di:di + stride * Ho:stride,
                           dj:dj + stride * Wo:stride, :])
    return jnp.concatenate(cols, axis=-1), Ho, Wo


def conv_w_to_mat(w):
    """torch conv weight (Cout,Cin,kh,kw) -> GEMM matrix (kh*kw*Cin, Cout) bf16."""
    cout, cin, kh, kw = w.shape
    return (jnp.transpose(w, (2, 3, 1, 0))
            .reshape(kh * kw * cin, cout).astype(jnp.bfloat16))


def conv3x3_to_taps(w):
    """(32,128,3,3) -> (9, 128, 32): per-tap 1x1 weights [tap, cin, cout]."""
    cout, cin, kh, kw = w.shape
    return (jnp.transpose(w, (2, 3, 1, 0)).reshape(kh * kw, cin, cout)
            .astype(jnp.bfloat16))


# ----------------------------------------------------------------------------
# jitted forward pieces
# ----------------------------------------------------------------------------
@jax.jit
def stem_forward(x, w0, s0, b0):
    """conv0 7x7/2 (+ norm0 + relu0 fused), 3x3/2 max pool, block-1 buffer."""
    N = x.shape[0]
    xh = jnp.transpose(x, (0, 2, 3, 1)).astype(jnp.bfloat16)
    patches, Ho, Wo = extract_patches(xh, 7, 7, 2, 3)
    h = conv_bnrelu(patches.reshape(N * Ho * Wo, 7 * 7 * 3), w0, s0, b0)
    h = h.reshape(N, Ho, Wo, NUM_INIT_FEATURES)
    hp = jnp.pad(h, ((0, 0), (1, 1), (1, 1), (0, 0)), constant_values=BF16_NEG)
    Ho2, Wo2 = Ho // 2, Wo // 2
    out = None
    for di in range(3):
        for dj in range(3):
            v = hp[:, di:di + 2 * Ho2:2, dj:dj + 2 * Wo2:2, :]
            out = v if out is None else jnp.maximum(out, v)
    out = out.reshape(N, Ho2 * Wo2, NUM_INIT_FEATURES)
    c_buf1 = NUM_INIT_FEATURES + BLOCK_CONFIG[0] * GROWTH
    # zero channel padding: the dense-layer kernels rely on unwritten channels
    # being exactly zero (relu(0*0+0)=0 with zero-padded s1/b1/w1).
    return jnp.pad(out, ((0, 0), (0, 0), (0, c_buf1 - NUM_INIT_FEATURES)))


@functools.partial(jax.jit, static_argnames=("tk", "H", "W"),
                   donate_argnames=("buf",))
def dense_layer_step(buf, s1, b1, w1, s2, b2, w2, c_in, *, tk, H, W):
    """One dense layer: fused Pallas kernel + in-place 32-channel writeback."""
    new = dense_layer_new_channels(buf, s1, b1, w1, s2, b2, w2, tk=tk, H=H, W=W)
    return lax.dynamic_update_slice_in_dim(buf, new, c_in, axis=2)


@functools.partial(jax.jit, static_argnames=("H", "W", "hwp_next", "c_next"))
def transition_step(buf, s, b, w, *, H, W, hwp_next, c_next):
    """norm + relu + 1x1 conv (fused Pallas) + 2x2/2 average pool (XLA)."""
    N, HWp, C = buf.shape
    h = bnrelu_linear(buf.reshape(N * HWp, C), s, b, w)
    C2 = h.shape[1]
    h = h.reshape(N, HWp, C2)[:, :H * W, :].reshape(N, H, W, C2)
    pooled = 0.25 * (h[:, 0::2, 0::2].astype(jnp.float32)
                     + h[:, 0::2, 1::2].astype(jnp.float32)
                     + h[:, 1::2, 0::2].astype(jnp.float32)
                     + h[:, 1::2, 1::2].astype(jnp.float32))
    hw2 = (H // 2) * (W // 2)
    pooled = pooled.astype(jnp.bfloat16).reshape(N, hw2, C2)
    return jnp.pad(pooled, ((0, 0), (0, hwp_next - hw2), (0, c_next - C2)))


@functools.partial(jax.jit, static_argnames=("N",))
def head_forward(buf, s5, b5, att, fc_w, fc_b, *, N):
    """norm5 + relu, MultiHeadAttention(8, 1024, 64, 64), avg_pool2d(7), fc."""
    HWp = buf.shape[1]
    h = bn_relu(buf.reshape(N * HWp, 1024), s5, b5)
    h = h.reshape(N, HWp, 1024)[:, :SEQ, :]            # (N, 49, 1024) pixel-major
    # PyTorch: x1(NCHW).view(N, 49, 1024)  (tokens deliberately mix channel+space)
    tokens = jnp.transpose(h, (0, 2, 1)).reshape(N, SEQ, 1024)
    x2 = tokens.reshape(N * SEQ, 1024)

    qkv = linear_full(x2, att["wqkv"], att["bqkv"])    # fused Q|K|V projection
    q = qkv[:, :N_HEAD * D_K]
    k = qkv[:, N_HEAD * D_K:2 * N_HEAD * D_K]
    v = qkv[:, 2 * N_HEAD * D_K:]

    def heads(t):
        return t.reshape(N, SEQ, N_HEAD, D_K).transpose(0, 2, 1, 3)

    pad = ((0, 0), (0, 0), (0, SEQ_PAD - SEQ), (0, 0))
    qh = jnp.pad(heads(q), pad)
    kh = jnp.pad(heads(k), pad)
    vh = jnp.pad(heads(v), pad)
    oh = attention_core(qh, kh, vh)                    # (N, 8, 64, 64)
    oh = (oh[:, :, :SEQ, :].transpose(0, 2, 1, 3).reshape(N * SEQ, N_HEAD * D_V))

    o = linear_full(oh, att["wo"], att["bo"])          # (N*49, 1024)
    xatt = add_layernorm(o, x2, att["ln_g"], att["ln_b"])

    # X.view(N,1024,7,7) -> avg_pool2d(7) -> (N,1024)
    grouped = xatt.reshape(N, 1024, SEQ)
    pooled = pool_mean(jnp.transpose(grouped, (2, 0, 1)))     # (N, 1024)
    logits = linear_full(pooled, fc_w, fc_b, out_dtype=jnp.float32)
    return logits[:, :NUM_CLASSES]


# ----------------------------------------------------------------------------
# deterministic synthetic parameters (densenet121 + attention head shapes)
# ----------------------------------------------------------------------------
def _conv_w(key, cout, cin, kh, kw):
    fan_in = cin * kh * kw
    return (jax.random.normal(key, (cout, cin, kh, kw), jnp.float32)
            * np.sqrt(2.0 / fan_in))


def _bn(key, c):
    k1, k2 = jax.random.split(key)
    scale = 1.0 + 0.02 * jax.random.normal(k1, (c,), jnp.float32)
    shift = 0.01 * jax.random.normal(k2, (c,), jnp.float32)
    return scale, shift


def init_params(key):
    keys = iter(jax.random.split(key, 2048))
    p = {}
    p["conv0_w"] = conv_w_to_mat(_conv_w(next(keys), NUM_INIT_FEATURES, 3, 7, 7))
    s, b = _bn(next(keys), NUM_INIT_FEATURES)
    p["norm0_s"], p["norm0_b"] = s.reshape(1, -1), b.reshape(1, -1)

    nf = NUM_INIT_FEATURES
    for bi, nl in enumerate(BLOCK_CONFIG):
        c_buf = nf + nl * GROWTH
        layers = []
        for li in range(nl):
            cin = nf + li * GROWTH
            s1, b1 = _bn(next(keys), cin)
            w1 = _conv_w(next(keys), BOTTLENECK, cin, 1, 1)
            s2, b2 = _bn(next(keys), BOTTLENECK)
            w2 = _conv_w(next(keys), GROWTH, BOTTLENECK, 3, 3)
            layers.append({
                "s1": jnp.pad(s1, (0, c_buf - cin)).reshape(1, c_buf),
                "b1": jnp.pad(b1, (0, c_buf - cin)).reshape(1, c_buf),
                "w1": jnp.pad(conv_w_to_mat(w1), ((0, c_buf - cin), (0, 0))),
                "s2": s2.reshape(1, -1),
                "b2": b2.reshape(1, -1),
                "w2": conv3x3_to_taps(w2),
            })
        p[f"block{bi + 1}"] = layers
        nf = c_buf
        if bi != len(BLOCK_CONFIG) - 1:
            s, b = _bn(next(keys), nf)
            wt = _conv_w(next(keys), nf // 2, nf, 1, 1)
            p[f"trans{bi + 1}"] = {"s": s.reshape(1, -1), "b": b.reshape(1, -1),
                                   "w": conv_w_to_mat(wt)}
            nf //= 2

    s, b = _bn(next(keys), nf)                                # nf == 1024
    p["norm5_s"], p["norm5_b"] = s.reshape(1, -1), b.reshape(1, -1)

    att = {}
    std_qk = np.sqrt(2.0 / (1024 + D_K))
    wq = jax.random.normal(next(keys), (1024, N_HEAD * D_K), jnp.float32) * std_qk
    wk = jax.random.normal(next(keys), (1024, N_HEAD * D_K), jnp.float32) * std_qk
    wv = jax.random.normal(next(keys), (1024, N_HEAD * D_V), jnp.float32) * std_qk
    att["wqkv"] = jnp.concatenate([wq, wk, wv], axis=1).astype(jnp.bfloat16)
    att["bqkv"] = 0.01 * jax.random.normal(next(keys), (1, 3 * N_HEAD * D_K),
                                           jnp.float32)
    att["wo"] = (jax.random.normal(next(keys), (N_HEAD * D_V, 1024), jnp.float32)
                 * np.sqrt(2.0 / (N_HEAD * D_V + 1024))).astype(jnp.bfloat16)
    att["bo"] = jnp.zeros((1, 1024), jnp.float32)
    att["ln_g"] = jnp.ones((1, 1024), jnp.float32)
    att["ln_b"] = jnp.zeros((1, 1024), jnp.float32)
    p["att"] = att

    fc = (jax.random.normal(next(keys), (NUM_CLASSES, 1024), jnp.float32)
          * np.sqrt(2.0 / 1024)).T
    p["fc_w"] = jnp.pad(fc, ((0, 0), (0, 128 - NUM_CLASSES))).astype(jnp.bfloat16)
    p["fc_b"] = jnp.zeros((1, 128), jnp.float32)
    return p


# ----------------------------------------------------------------------------
# full forward pass
# ----------------------------------------------------------------------------
def att_densenet_forward(x, p):
    N = x.shape[0]
    assert x.shape == (N, 3, 224, 224)
    buf = stem_forward(x, p["conv0_w"], p["norm0_s"], p["norm0_b"])

    nf = NUM_INIT_FEATURES
    H = W = 56
    for bi, nl in enumerate(BLOCK_CONFIG):
        c_buf = nf + nl * GROWTH
        cin = nf
        for lp in p[f"block{bi + 1}"]:
            tk = _pick_tk(cin, c_buf)
            buf = dense_layer_step(buf, lp["s1"], lp["b1"], lp["w1"],
                                   lp["s2"], lp["b2"], lp["w2"],
                                   jnp.int32(cin), tk=tk, H=H, W=W)
            cin += GROWTH
        nf = c_buf
        if bi != len(BLOCK_CONFIG) - 1:
            tp = p[f"trans{bi + 1}"]
            c_next = nf // 2 + BLOCK_CONFIG[bi + 1] * GROWTH
            buf = transition_step(buf, tp["s"], tp["b"], tp["w"], H=H, W=W,
                                  hwp_next=_round_up((H // 2) * (W // 2), 16),
                                  c_next=c_next)
            H //= 2
            W //= 2
            nf //= 2

    logits = head_forward(buf, p["norm5_s"], p["norm5_b"], p["att"],
                          p["fc_w"], p["fc_b"], N=N)
    assert logits.shape == (N, NUM_CLASSES)
    return logits


# ----------------------------------------------------------------------------
if __name__ == "__main__":
    key = jax.random.PRNGKey(0)
    kx, kp = jax.random.split(key)
    x = jax.random.normal(kx, (2, 3, 224, 224), jnp.float32)   # batch N=2
    params = init_params(kp)

    out = att_densenet_forward(x, params)
    out = jax.block_until_ready(out)

    assert out.shape == (2, NUM_CLASSES)
    assert bool(jnp.all(jnp.isfinite(out)))
    print("KERNEL_OK")
</pallas_src>

<mosaic_0001>
module attributes {stable_mosaic.version = 11 : i64} {
  func.func @_conv_bnrelu_kernel(%arg0: i32, %arg1: memref<3584x147xbf16, #tpu.memory_space<vmem>>, %arg2: memref<147x64xbf16, #tpu.memory_space<vmem>>, %arg3: memref<1x64xf32, #tpu.memory_space<vmem>>, %arg4: memref<1x64xf32, #tpu.memory_space<vmem>>, %arg5: memref<3584x64xbf16, #tpu.memory_space<vmem>>) attributes {dimension_semantics = [#tpu.dimension_semantics<parallel>], iteration_bounds = array<i64: 7>, scalar_prefetch = 0 : i64, scratch_operands = 0 : i64, tpu.core_type = #tpu.core_type<tc>, window_params = [{transform_indices = @transform_0, window_bounds = array<i64: 3584, 147>}, {pipeline_mode = #tpu.pipeline_mode<synchronous>, transform_indices = @transform_1, window_bounds = array<i64: 147, 64>}, {pipeline_mode = #tpu.pipeline_mode<synchronous>, transform_indices = @transform_2, window_bounds = array<i64: 1, 64>}, {pipeline_mode = #tpu.pipeline_mode<synchronous>, transform_indices = @transform_3, window_bounds = array<i64: 1, 64>}, {transform_indices = @transform_4, window_bounds = array<i64: 3584, 64>}]} {
    %c0 = arith.constant 0 : index
    %c0_0 = arith.constant 0 : index
    %0 = vector.load %arg1[%c0, %c0_0] : memref<3584x147xbf16, #tpu.memory_space<vmem>>, vector<3584x147xbf16>
    %c0_1 = arith.constant 0 : index
    %c0_2 = arith.constant 0 : index
    %1 = vector.load %arg2[%c0_1, %c0_2] : memref<147x64xbf16, #tpu.memory_space<vmem>>, vector<147x64xbf16>
    %cst = arith.constant dense<0.000000e+00> : vector<3584x64xf32>
    %2 = tpu.matmul %0, %1, %cst {dimension_numbers = #tpu.dot_dimension_numbers<[1], [0], [0], [1], [0, 0, 1, 1], [], []>} : vector<3584x147xbf16>, vector<147x64xbf16>, vector<3584x64xf32> -> vector<3584x64xf32>
    %c0_3 = arith.constant 0 : index
    %c0_4 = arith.constant 0 : index
    %3 = vector.load %arg3[%c0_3, %c0_4] : memref<1x64xf32, #tpu.memory_space<vmem>>, vector<1x64xf32>
    %4 = vector.broadcast %3 : vector<1x64xf32> to vector<3584x64xf32>
    %5 = arith.mulf %2, %4 : vector<3584x64xf32>
    %c0_5 = arith.constant 0 : index
    %c0_6 = arith.constant 0 : index
    %6 = vector.load %arg4[%c0_5, %c0_6] : memref<1x64xf32, #tpu.memory_space<vmem>>, vector<1x64xf32>
    %7 = vector.broadcast %6 : vector<1x64xf32> to vector<3584x64xf32>
    %8 = arith.addf %5, %7 : vector<3584x64xf32>
    %cst_7 = arith.constant 0.000000e+00 : f32
    %9 = vector.broadcast %cst_7 : f32 to vector<3584x64xf32>
    %10 = arith.maximumf %8, %9 : vector<3584x64xf32>
    %11 = arith.truncf %10 : vector<3584x64xf32> to vector<3584x64xbf16>
    %c0_8 = arith.constant 0 : index
    %c0_9 = arith.constant 0 : index
    %12 = vector.load %arg5[%c0_8, %c0_9] : memref<3584x64xbf16, #tpu.memory_space<vmem>>, vector<3584x64xbf16>
    tpu.vector_store %arg5[%c0_8, %c0_9], %11 {strides = array<i32>} : memref<3584x64xbf16, #tpu.memory_space<vmem>>, vector<3584x64xbf16>,
    return
  }
  func.func @transform_0(%arg0: i32) -> (i32, i32) {
    %c0_i32 = arith.constant 0 : i32
    %c0_i32_0 = arith.constant 0 : i32
    return %arg0, %c0_i32 : i32, i32
  }
  func.func @transform_1(%arg0: i32) -> (i32, i32) {
    %c0_i32 = arith.constant 0 : i32
    %c0_i32_0 = arith.constant 0 : i32
    %c0_i32_1 = arith.constant 0 : i32
    return %c0_i32, %c0_i32_0 : i32, i32
  }
  func.func @transform_2(%arg0: i32) -> (i32, i32) {
    %c0_i32 = arith.constant 0 : i32
    %c0_i32_0 = arith.constant 0 : i32
    %c0_i32_1 = arith.constant 0 : i32
    return %c0_i32, %c0_i32_0 : i32, i32
  }
  func.func @transform_3(%arg0: i32) -> (i32, i32) {
    %c0_i32 = arith.constant 0 : i32
    %c0_i32_0 = arith.constant 0 : i32
    %c0_i32_1 = arith.constant 0 : i32
    return %c0_i32, %c0_i32_0 : i32, i32
  }
  func.func @transform_4(%arg0: i32) -> (i32, i32) {
    %c0_i32 = arith.constant 0 : i32
    %c0_i32_0 = arith.constant 0 : i32
    return %arg0, %c0_i32 : i32, i32
  }
}

</mosaic_0001>

<llo_original>
// kernel: stem_forward.1
$region0: #{stem_forward.1}
  #allocation0 [shape = 'u32[]', space=smem, size = 0x4, offset = 0x4, fixed_abs, tag = 'smem constant byte address 0x4 - core index']
  #allocation1 [shape = 'u32[144,128]{1,0:T(1,128)}', space=vmem, size = 0x12000, scoped, tag = 'internal scratch']
  %s0 = inlined_call_operand.vmem [shape: bf16[25088,147], index: 0, kind: input, shape index: {}]
  %s1 = inlined_call_operand.vmem [shape: bf16[147,64], index: 1, kind: input, shape index: {}]
  %s2 = inlined_call_operand.vmem [shape: f32[1,64], index: 2, kind: input, shape index: {}]
  %s3 = inlined_call_operand.vmem [shape: f32[1,64], index: 3, kind: input, shape index: {}]
  %s4 = inlined_call_operand.vmem [shape: bf16[25088,64], index: 4, kind: output, shape index: {}]
  %s5 = sld [smem:[#allocation0]]
  $region49: #{stem_forward.1} parent=0
    _
  %s7 = ssub.s32 1, %s5
  %s8 = scalar_select 0, %s7, %s5
  loop: start=0, step=1, limit=9
  $region2: #{stem_forward.1} parent=0 // loop_pre_header
    _
  $region3: #{stem_forward.1} parent=0 // loop_header
    %s10 = sphi 0, %s14
    %p11 = scmp.ge.s32.totalorder %s10, 9
    %s20 = sphi 0, %s22
    %s23 = sphi 0, %s20
    %s24 = sphi 0, %s23
    %s40 = sphi 0, %s24
    %s44 = sphi 0, %s44
    %s46 = sphi 0, %s44
    %s47 = sphi 0, %s46
    %s61 = sphi 0, %s47
    %s65 = sphi 0, %s65
    %s67 = sphi 0, %s65
    %s68 = sphi 0, %s67
    %s82 = sphi 0, %s68
    %s86 = sphi 0, %s86
    %s88 = sphi 0, %s86
    %s89 = sphi 0, %s88
    %s103 = sphi 0, %s89
    %s109 = sphi 0, %s111
    %s112 = sphi 0, %s109
    %s113 = sphi 0, %s112
    %s129 = sphi 0, %s113
  $region4: #{stem_forward.1} parent=0 // loop_header_branch
    %13 = sbr.rel (%p11) target = $region8
  $region5: #{stem_forward.1} parent=0 // loop_body
    %s15 = ssub.s32 %s10, 1
    %s16 = ssub.s32 %s10, 2
    %s17 = sadd.s32 %s10, 1
    %s18 = ssub.s32 %s10, %s17
    %p19 = scmp.eq.s32.totalorder %s18, 0
    %s21 = sadd.s32 %s20, 1
    %s22 = scalar_select %p19, %s20, %s21
    %p25 = pneg %p19
    %p26 = scmp.eq.s32.totalorder %s10, 6
    %p27 = por %p25, %p26
    %p28 = scmp.ne.s32.totalorder %s20, %s23
    %p29 = scmp.eq.s32.totalorder %s10, 0
    %p30 = por %p28, %p29
    %p31 = scmp.ne.s32.totalorder %s20, %s23
    %p32 = scmp.eq.s32.totalorder %s15, 6
    %p33 = por %p31, %p32
    %p34 = scmp.ne.s32.totalorder %s23, %s24
    %p35 = scmp.eq.s32.totalorder %s15, 0
    %p36 = por %p34, %p35
    %p37 = scmp.ne.s32.totalorder %s23, %s24
    %p38 = scmp.eq.s32.totalorder %s16, 6
    %p39 = por %p37, %p38
    %p41 = scmp.ne.s32.totalorder %s24, %s40
    %p42 = scmp.eq.s32.totalorder %s16, 0
    %p43 = por %p41, %p42
    %s45 = sadd.s32 %s44, 1
    %p48 = scmp.eq.s32.totalorder %s10, 6
    %p49 = scmp.ne.s32.totalorder %s44, %s46
    %p50 = scmp.eq.s32.totalorder %s10, 0
    %p51 = por %p49, %p50
    %p52 = scmp.ne.s32.totalorder %s44, %s46
    %p53 = scmp.eq.s32.totalorder %s15, 6
    %p54 = por %p52, %p53
    %p55 = scmp.ne.s32.totalorder %s46, %s47
    %p56 = scmp.eq.s32.totalorder %s15, 0
    %p57 = por %p55, %p56
    %p58 = scmp.ne.s32.totalorder %s46, %s47
    %p59 = scmp.eq.s32.totalorder %s16, 6
    %p60 = por %p58, %p59
    %p62 = scmp.ne.s32.totalorder %s47, %s61
    %p63 = scmp.eq.s32.totalorder %s16, 0
    %p64 = por %p62, %p63
    %s66 = sadd.s32 %s65, 1
    %p69 = scmp.eq.s32.totalorder %s10, 6
    %p70 = scmp.ne.s32.totalorder %s65, %s67
    %p71 = scmp.eq.s32.totalorder %s10, 0
    %p72 = por %p70, %p71
    %p73 = scmp.ne.s32.totalorder %s65, %s67
    %p74 = scmp.eq.s32.totalorder %s15, 6
    %p75 = por %p73, %p74
    %p76 = scmp.ne.s32.totalorder %s67, %s68
    %p77 = scmp.eq.s32.totalorder %s15, 0
    %p78 = por %p76, %p77
    %p79 = scmp.ne.s32.totalorder %s67, %s68
    %p80 = scmp.eq.s32.totalorder %s16, 6
    %p81 = por %p79, %p80
    %p83 = scmp.ne.s32.totalorder %s68, %s82
    %p84 = scmp.eq.s32.totalorder %s16, 0
    %p85 = por %p83, %p84
    %s87 = sadd.s32 %s86, 1
    %p90 = scmp.eq.s32.totalorder %s10, 6
    %p91 = scmp.ne.s32.totalorder %s86, %s88
    %p92 = scmp.eq.s32.totalorder %s10, 0
    %p93 = por %p91, %p92
    %p94 = scmp.ne.s32.totalorder %s86, %s88
    %p95 = scmp.eq.s32.totalorder %s15, 6
    %p96 = por %p94, %p95
    %p97 = scmp.ne.s32.totalorder %s88, %s89
    %p98 = scmp.eq.s32.totalorder %s15, 0
    %p99 = por %p97, %p98
    %p100 = scmp.ne.s32.totalorder %s88, %s89
    %p101 = scmp.eq.s32.totalorder %s16, 6
    %p102 = por %p100, %p101
    %p104 = scmp.ne.s32.totalorder %s89, %s103
    %p105 = scmp.eq.s32.totalorder %s16, 0
    %p106 = por %p104, %p105
    %s107 = ssub.s32 %s10, %s17
    %p108 = scmp.eq.s32.totalorder %s107, 0
    %s110 = sadd.s32 %s109, 1
    %s111 = scalar_select %p108, %s109, %s110
    %p114 = pneg %p108
    %p115 = scmp.eq.s32.totalorder %s10, 6
    %p116 = por %p114, %p115
    %p117 = scmp.ne.s32.totalorder %s109, %s112
    %p118 = scmp.eq.s32.totalorder %s10, 0
    %p119 = por %p117, %p118
    %p120 = scmp.ne.s32.totalorder %s109, %s112
    %p121 = scmp.eq.s32.totalorder %s15, 6
    %p122 = por %p120, %p121
    %p123 = scmp.ne.s32.totalorder %s112, %s113
    %p124 = scmp.eq.s32.totalorder %s15, 0
    %p125 = por %p123, %p124
    %p126 = scmp.ne.s32.totalorder %s112, %s113
    %p127 = scmp.eq.s32.totalorder %s16, 6
    %p128 = por %p126, %p127
    %p130 = scmp.ne.s32.totalorder %s113, %s129
    %p131 = scmp.eq.s32.totalorder %s16, 0
    %p132 = por %p130, %p131
    %p133 = scmp.le.s32.totalorder 1, %s10
    %p134 = scmp.lt.s32.totalorder %s10, 8
    %p135 = pnand %p133, %p134
    %p136 = pneg %p135
    // Predicated region
    $region9: #{stem_forward.1} parent=5 // pred_check
      _
    $region10: #{stem_forward.1} parent=5 // pred_check_branch
      %138 = sbr.rel (%p135) target = $region12
    $region11: #{stem_forward.1} parent=5 // pred_region
      %s139 = ssub.s32 %s10, 1
      // Predicated region
      $region13: #{stem_forward.1} parent=11 // pred_check
        %p140 = pneg %p57
      $region14: #{stem_forward.1} parent=11 // pred_check_branch
        %142 = sbr.rel (%p140) target = $region16
      $region15: #{stem_forward.1} parent=11 // pred_region
        _
      $region16: #{stem_forward.1} parent=11 // pred_fallthru
        _
      // Predicated region
      $region17: #{stem_forward.1} parent=11 // pred_check
        %p143 = pneg %p78
      $region18: #{stem_forward.1} parent=11 // pred_check_branch
        %145 = sbr.rel (%p143) target = $region20
      $region19: #{stem_forward.1} parent=11 // pred_region
        _
      $region20: #{stem_forward.1} parent=11 // pred_fallthru
        _
      // Predicated region
      $region21: #{stem_forward.1} parent=11 // pred_check
        %p146 = pneg %p99
      $region22: #{stem_forward.1} parent=11 // pred_check_branch
        %148 = sbr.rel (%p146) target = $region24
      $region23: #{stem_forward.1} parent=11 // pred_region
        _
      $region24: #{stem_forward.1} parent=11 // pred_fallthru
        _
    $region12: #{stem_forward.1} parent=5 // pred_fallthru
      _
    %p149 = scmp.lt.s32.totalorder %s10, 7
    // Predicated region
    $region25: #{stem_forward.1} parent=5 // pred_check
      %p150 = pneg %p149
    $region26: #{stem_forward.1} parent=5 // pred_check_branch
      %152 = sbr.rel (%p150) target = $region28
    $region27: #{stem_forward.1} parent=5 // pred_region
      // Predicated region
      $region29: #{stem_forward.1} parent=27 // pred_check
        %p153 = pneg %p30
      $region30: #{stem_forward.1} parent=27 // pred_check_branch
        %155 = sbr.rel (%p153) target = $region32
      $region31: #{stem_forward.1} parent=27 // pred_region
        %s156 = smul.u32 448, %s10
        %p157 = scmp.lt.s32.totalorder %s156, 3135
        %s158 = scalar_select %p157, %s156, 3135
        %s159 = smul.addr %s158, 2
        %s160 = smul.addr %s159, 4
        %s161 = scalar_lea.vmem %s0, %s160
        %s162 = smul.u32 448, %s10
      $region32: #{stem_forward.1} parent=27 // pred_fallthru
        _
    $region28: #{stem_forward.1} parent=5 // pred_fallthru
      _
    %p163 = scmp.le.s32.totalorder 1, %s10
    %p164 = scmp.lt.s32.totalorder %s10, 8
    %p165 = pnand %p163, %p164
    %p166 = pneg %p165
    // Predicated region
    $region33: #{stem_forward.1} parent=5 // pred_check
      _
    $region34: #{stem_forward.1} parent=5 // pred_check_branch
      %168 = sbr.rel (%p165) target = $region36
    $region35: #{stem_forward.1} parent=5 // pred_region
      %s169 = ssub.s32 %s10, 1
      %s170 = smul.u32 448, %s15
      %p171 = scmp.lt.s32.totalorder %s170, 3135
      %s172 = scalar_select %p171, %s170, 3135
      %s173 = smul.addr %s172, 2
      %s174 = smul.addr %s173, 4
      %s175 = scalar_lea.vmem %s0, %s174
      %p176 = pneg %p36
      %p177 = pneg %p33
      %p178 = pneg %p57
      %p179 = pneg %p54
      %p180 = pneg %p78
      %p181 = pneg %p75
      %p182 = pneg %p99
      %p183 = pneg %p96
      %p184 = pneg %p125
      %p185 = pneg %p122
      %s186 = smul.u32 448, %s15
      %p187 = scmp.lt.s32.totalorder %s186, 3135
      %s188 = scalar_select %p187, %s186, 3135
      %s189 = smul.addr %s188, 4
      %s190 = scalar_lea.vmem %s4, %s189
      %s191 = smul.u32 448, %s15
      %p192 = scmp.lt.s32.totalorder %s191, 3135
      %s193 = scalar_select %p192, %s191, 3135
      %s194 = smul.addr %s193, 2
      %s195 = smul.addr %s194, 4
      %s196 = scalar_lea.vmem %s0, %s195
      %s197 = smul.u32 448, %s15
      %s198 = smul.u32 448, %s15
      %p199 = scmp.lt.s32.totalorder %s198, 3135
      %s200 = scalar_select %p199, %s198, 3135
      %s201 = smul.addr %s200, 4
      %s202 = scalar_lea.vmem %s4, %s201
      %s203 = smul.u32 448, %s15
      %v205 = vld [vmem:[%s196] sm:$0xff]
      %v206 = vld [vmem:[%s196 + $0x8] sm:$0xff]
      %v207 = vld [vmem:[%s196 + $0x10] sm:$0xff]
      %v208 = vld [vmem:[%s196 + $0x18] sm:$0xff]
      %v209 = vld [vmem:[%s196 + $0x20] sm:$0xff]
      %v210 = vld [vmem:[%s196 + $0x28] sm:$0xff]
      %v211 = vld [vmem:[%s196 + $0x30] sm:$0xff]
      %v212 = vld [vmem:[%s196 + $0x38] sm:$0xff]
      %v213 = vld [vmem:[%s196 + $0x40] sm:$0xff]
      %v214 = vld [vmem:[%s196 + $0x48] sm:$0xff]
      %v215 = vld [vmem:[%s196 + $0x50] sm:$0xff]
      %v216 = vld [vmem:[%s196 + $0x58] sm:$0xff]
      %v217 = vld [vmem:[%s196 + $0x60] sm:$0xff]
      %v218 = vld [vmem:[%s196 + $0x68] sm:$0xff]
      %v219 = vld [vmem:[%s196 + $0x70] sm:$0xff]
      %v220 = vld [vmem:[%s196 + $0x78] sm:$0xff]
      %v221 = vld [vmem:[%s196 + $0x80] sm:$0xff]
      %v222 = vld [vmem:[%s196 + $0x88] sm:$0xff]
      %v223 = vld [vmem:[%s196 + $0x90] sm:$0xff]
      %v224 = vld [vmem:[%s196 + $0x98] sm:$0xff]
      %v225 = vld [vmem:[%s196 + $0xa0] sm:$0xff]
      %v226 = vld [vmem:[%s196 + $0xa8] sm:$0xff]
      %v227 = vld [vmem:[%s196 + $0xb0] sm:$0xff]
      %v228 = vld [vmem:[%s196 + $0xb8] sm:$0xff]
      %v229 = vld [vmem:[%s196 + $0xc0] sm:$0xff]
      %v230 = vld [vmem:[%s196 + $0xc8] sm:$0xff]
      %v231 = vld [vmem:[%s196 + $0xd0] sm:$0xff]
      %v232 = vld [vmem:[%s196 + $0xd8] sm:$0xff]
      %v233 = vld [vmem:[%s196 + $0xe0] sm:$0xff]
      %v234 = vld [vmem:[%s196 + $0xe8] sm:$0xff]
      %v235 = vld [vmem:[%s196 + $0xf0] sm:$0xff]
      %v236 = vld [vmem:[%s196 + $0xf8] sm:$0xff]
      %v237 = vld [vmem:[%s196 + $0x100] sm:$0xff]
      %v238 = vld [vmem:[%s196 + $0x108] sm:$0xff]
      %v239 = vld [vmem:[%s196 + $0x110] sm:$0xff]
      %v240 = vld [vmem:[%s196 + $0x118] sm:$0xff]
      %v241 = vld [vmem:[%s196 + $0x120] sm:$0xff]
      %v242 = vld [vmem:[%s196 + $0x128] sm:$0xff]
      %v243 = vld [vmem:[%s196 + $0x130] sm:$0xff]
      %v244 = vld [vmem:[%s196 + $0x138] sm:$0xff]
      %v245 = vld [vmem:[%s196 + $0x140] sm:$0xff]
      %v246 = vld [vmem:[%s196 + $0x148] sm:$0xff]
      %v247 = vld [vmem:[%s196 + $0x150] sm:$0xff]
      %v248 = vld [vmem:[%s196 + $0x158] sm:$0xff]
      %v249 = vld [vmem:[%s196 + $0x160] sm:$0xff]
      %v250 = vld [vmem:[%s196 + $0x168] sm:$0xff]
      %v251 = vld [vmem:[%s196 + $0x170] sm:$0xff]
      %v252 = vld [vmem:[%s196 + $0x178] sm:$0xff]
      %v253 = vld [vmem:[%s196 + $0x180] sm:$0xff]
      %v254 = vld [vmem:[%s196 + $0x188] sm:$0xff]
      %v255 = vld [vmem:[%s196 + $0x190] sm:$0xff]
      %v256 = vld [vmem:[%s196 + $0x198] sm:$0xff]
      %v257 = vld [vmem:[%s196 + $0x1a0] sm:$0xff]
      %v258 = vld [vmem:[%s196 + $0x1a8] sm:$0xff]
      %v259 = vld [vmem:[%s196 + $0x1b0] sm:$0xff]
      %v260 = vld [vmem:[%s196 + $0x1b8] sm:$0xff]
      %v261 = vld [vmem:[%s196 + $0x1c0] sm:$0xff]
      %v262 = vld [vmem:[%s196 + $0x1c8] sm:$0xff]
      %v263 = vld [vmem:[%s196 + $0x1d0] sm:$0xff]
      %v264 = vld [vmem:[%s196 + $0x1d8] sm:$0xff]
      %v265 = vld [vmem:[%s196 + $0x1e0] sm:$0xff]
      %v266 = vld [vmem:[%s196 + $0x1e8] sm:$0xff]
      %v267 = vld [vmem:[%s196 + $0x1f0] sm:$0xff]
      %v268 = vld [vmem:[%s196 + $0x1f8] sm:$0xff]
      %v269 = vld [vmem:[%s196 + $0x200] sm:$0xff]
      %v270 = vld [vmem:[%s196 + $0x208] sm:$0xff]
      %v271 = vld [vmem:[%s196 + $0x210] sm:$0xff]
      %v272 = vld [vmem:[%s196 + $0x218] sm:$0xff]
      %v273 = vld [vmem:[%s196 + $0x220] sm:$0xff]
      %v274 = vld [vmem:[%s196 + $0x228] sm:$0xff]
      %v275 = vld [vmem:[%s196 + $0x230] sm:$0xff]
      %v276 = vld [vmem:[%s196 + $0x238] sm:$0xff]
      %v277 = vld [vmem:[%s196 + $0x240] sm:$0xff]
      %v278 = vld [vmem:[%s196 + $0x248] sm:$0xff]
      %v279 = vld [vmem:[%s196 + $0x250] sm:$0xff]
      %v280 = vld [vmem:[%s196 + $0x258] sm:$0xff]
      %v281 = vld [vmem:[%s196 + $0x260] sm:$0xff]
      %v282 = vld [vmem:[%s196 + $0x268] sm:$0xff]
      %v283 = vld [vmem:[%s196 + $0x270] sm:$0xff]
      %v284 = vld [vmem:[%s196 + $0x278] sm:$0xff]
      %v285 = vld [vmem:[%s196 + $0x280] sm:$0xff]
      %v286 = vld [vmem:[%s196 + $0x288] sm:$0xff]
      %v287 = vld [vmem:[%s196 + $0x290] sm:$0xff]
      %v288 = vld [vmem:[%s196 + $0x298] sm:$0xff]
      %v289 = vld [vmem:[%s196 + $0x2a0] sm:$0xff]
      %v290 = vld [vmem:[%s196 + $0x2a8] sm:$0xff]
      %v291 = vld [vmem:[%s196 + $0x2b0] sm:$0xff]
      %v292 = vld [vmem:[%s196 + $0x2b8] sm:$0xff]
      %v293 = vld [vmem:[%s196 + $0x2c0] sm:$0xff]
      %v294 = vld [vmem:[%s196 + $0x2c8] sm:$0xff]
      %v295 = vld [vmem:[%s196 + $0x2d0] sm:$0xff]
      %v296 = vld [vmem:[%s196 + $0x2d8] sm:$0xff]
      %v297 = vld [vmem:[%s196 + $0x2e0] sm:$0xff]
      %v298 = vld [vmem:[%s196 + $0x2e8] sm:$0xff]
      %v299 = vld [vmem:[%s196 + $0x2f0] sm:$0xff]
      %v300 = vld [vmem:[%s196 + $0x2f8] sm:$0xff]
      %v301 = vld [vmem:[%s196 + $0x300] sm:$0xff]
      %v302 = vld [vmem:[%s196 + $0x308] sm:$0xff]
      %v303 = vld [vmem:[%s196 + $0x310] sm:$0xff]
      %v304 = vld [vmem:[%s196 + $0x318] sm:$0xff]
      %v305 = vld [vmem:[%s196 + $0x320] sm:$0xff]
      %v306 = vld [vmem:[%s196 + $0x328] sm:$0xff]
      %v307 = vld [vmem:[%s196 + $0x330] sm:$0xff]
      %v308 = vld [vmem:[%s196 + $0x338] sm:$0xff]
      %v309 = vld [vmem:[%s196 + $0x340] sm:$0xff]
      %v310 = vld [vmem:[%s196 + $0x348] sm:$0xff]
      %v311 = vld [vmem:[%s196 + $0x350] sm:$0xff]
      %v312 = vld [vmem:[%s196 + $0x358] sm:$0xff]
      %v313 = vld [vmem:[%s196 + $0x360] sm:$0xff]
      %v314 = vld [vmem:[%s196 + $0x368] sm:$0xff]
      %v315 = vld [vmem:[%s196 + $0x370] sm:$0xff]
      %v316 = vld [vmem:[%s196 + $0x378] sm:$0xff]
      %v317 = vld [vmem:[%s196 + $0x380] sm:$0xff]
      %v318 = vld [vmem:[%s196 + $0x388] sm:$0xff]
      %v319 = vld [vmem:[%s196 + $0x390] sm:$0xff]
      %v320 = vld [vmem:[%s196 + $0x398] sm:$0xff]
      %v321 = vld [vmem:[%s196 + $0x3a0] sm:$0xff]
      %v322 = vld [vmem:[%s196 + $0x3a8] sm:$0xff]
      %v323 = vld [vmem:[%s196 + $0x3b0] sm:$0xff]
      %v324 = vld [vmem:[%s196 + $0x3b8] sm:$0xff]
      %v325 = vld [vmem:[%s196 + $0x3c0] sm:$0xff]
      %v326 = vld [vmem:[%s196 + $0x3c8] sm:$0xff]
      %v327 = vld [vmem:[%s196 + $0x3d0] sm:$0xff]
      %v328 = vld [vmem:[%s196 + $0x3d8] sm:$0xff]
      %v329 = vld [vmem:[%s196 + $0x3e0] sm:$0xff]
      %v330 = vld [vmem:[%s196 + $0x3e8] sm:$0xff]
      %v331 = vld [vmem:[%s196 + $0x3f0] sm:$0xff]
      %v332 = vld [vmem:[%s196 + $0x3f8] sm:$0xff]
      %v333 = vld [vmem:[%s196 + $0x400] sm:$0xff]
      %v334 = vld [vmem:[%s196 + $0x408] sm:$0xff]
      %v335 = vld [vmem:[%s196 + $0x410] sm:$0xff]
      %v336 = vld [vmem:[%s196 + $0x418] sm:$0xff]
      %v337 = vld [vmem:[%s196 + $0x420] sm:$0xff]
      %v338 = vld [vmem:[%s196 + $0x428] sm:$0xff]
      %v339 = vld [vmem:[%s196 + $0x430] sm:$0xff]
      %v340 = vld [vmem:[%s196 + $0x438] sm:$0xff]
      %v341 = vld [vmem:[%s196 + $0x440] sm:$0xff]
      %v342 = vld [vmem:[%s196 + $0x448] sm:$0xff]
      %v343 = vld [vmem:[%s196 + $0x450] sm:$0xff]
      %v344 = vld [vmem:[%s196 + $0x458] sm:$0xff]
      %v345 = vld [vmem:[%s196 + $0x460] sm:$0xff]
      %v346 = vld [vmem:[%s196 + $0x468] sm:$0xff]
      %v347 = vld [vmem:[%s196 + $0x470] sm:$0xff]
      %v348 = vld [vmem:[%s196 + $0x478] sm:$0xff]
      %v349 = vld [vmem:[%s196 + $0x480] sm:$0xff]
      %v350 = vld [vmem:[%s196 + $0x488] sm:$0xff]
      %v351 = vld [vmem:[%s196 + $0x490] sm:$0xff]
      %v352 = vld [vmem:[%s196 + $0x498] sm:$0xff]
      %v353 = vld [vmem:[%s196 + $0x4a0] sm:$0xff]
      %v354 = vld [vmem:[%s196 + $0x4a8] sm:$0xff]
      %v355 = vld [vmem:[%s196 + $0x4b0] sm:$0xff]
      %v356 = vld [vmem:[%s196 + $0x4b8] sm:$0xff]
      %v357 = vld [vmem:[%s196 + $0x4c0] sm:$0xff]
      %v358 = vld [vmem:[%s196 + $0x4c8] sm:$0xff]
      %v359 = vld [vmem:[%s196 + $0x4d0] sm:$0xff]
      %v360 = vld [vmem:[%s196 + $0x4d8] sm:$0xff]
      %v361 = vld [vmem:[%s196 + $0x4e0] sm:$0xff]
      %v362 = vld [vmem:[%s196 + $0x4e8] sm:$0xff]
      %v363 = vld [vmem:[%s196 + $0x4f0] sm:$0xff]
      %v364 = vld [vmem:[%s196 + $0x4f8] sm:$0xff]
      %v365 = vld [vmem:[%s196 + $0x500] sm:$0xff]
      %v366 = vld [vmem:[%s196 + $0x508] sm:$0xff]
      %v367 = vld [vmem:[%s196 + $0x510] sm:$0xff]
      %v368 = vld [vmem:[%s196 + $0x518] sm:$0xff]
      %v369 = vld [vmem:[%s196 + $0x520] sm:$0xff]
      %v370 = vld [vmem:[%s196 + $0x528] sm:$0xff]
      %v371 = vld [vmem:[%s196 + $0x530] sm:$0xff]
      %v372 = vld [vmem:[%s196 + $0x538] sm:$0xff]
      %v373 = vld [vmem:[%s196 + $0x540] sm:$0xff]
      %v374 = vld [vmem:[%s196 + $0x548] sm:$0xff]
      %v375 = vld [vmem:[%s196 + $0x550] sm:$0xff]
      %v376 = vld [vmem:[%s196 + $0x558] sm:$0xff]
      %v377 = vld [vmem:[%s196 + $0x560] sm:$0xff]
      %v378 = vld [vmem:[%s196 + $0x568] sm:$0xff]
      %v379 = vld [vmem:[%s196 + $0x570] sm:$0xff]
      %v380 = vld [vmem:[%s196 + $0x578] sm:$0xff]
      %v381 = vld [vmem:[%s196 + $0x580] sm:$0xff]
      %v382 = vld [vmem:[%s196 + $0x588] sm:$0xff]
      %v383 = vld [vmem:[%s196 + $0x590] sm:$0xff]
      %v384 = vld [vmem:[%s196 + $0x598] sm:$0xff]
      %v385 = vld [vmem:[%s196 + $0x5a0] sm:$0xff]
      %v386 = vld [vmem:[%s196 + $0x5a8] sm:$0xff]
      %v387 = vld [vmem:[%s196 + $0x5b0] sm:$0xff]
      %v388 = vld [vmem:[%s196 + $0x5b8] sm:$0xff]
      %v389 = vld [vmem:[%s196 + $0x5c0] sm:$0xff]
      %v390 = vld [vmem:[%s196 + $0x5c8] sm:$0xff]
      %v391 = vld [vmem:[%s196 + $0x5d0] sm:$0xff]
      %v392 = vld [vmem:[%s196 + $0x5d8] sm:$0xff]
      %v393 = vld [vmem:[%s196 + $0x5e0] sm:$0xff]
      %v394 = vld [vmem:[%s196 + $0x5e8] sm:$0xff]
      %v395 = vld [vmem:[%s196 + $0x5f0] sm:$0xff]
      %v396 = vld [vmem:[%s196 + $0x5f8] sm:$0xff]
      %v397 = vld [vmem:[%s196 + $0x600] sm:$0xff]
      %v398 = vld [vmem:[%s196 + $0x608] sm:$0xff]
      %v399 = vld [vmem:[%s196 + $0x610] sm:$0xff]
      %v400 = vld [vmem:[%s196 + $0x618] sm:$0xff]
      %v401 = vld [vmem:[%s196 + $0x620] sm:$0xff]
      %v402 = vld [vmem:[%s196 + $0x628] sm:$0xff]
      %v403 = vld [vmem:[%s196 + $0x630] sm:$0xff]
      %v404 = vld [vmem:[%s196 + $0x638] sm:$0xff]
      %v405 = vld [vmem:[%s196 + $0x640] sm:$0xff]
      %v406 = vld [vmem:[%s196 + $0x648] sm:$0xff]
      %v407 = vld [vmem:[%s196 + $0x650] sm:$0xff]
      %v408 = vld [vmem:[%s196 + $0x658] sm:$0xff]
      %v409 = vld [vmem:[%s196 + $0x660] sm:$0xff]
      %v410 = vld [vmem:[%s196 + $0x668] sm:$0xff]
      %v411 = vld [vmem:[%s196 + $0x670] sm:$0xff]
      %v412 = vld [vmem:[%s196 + $0x678] sm:$0xff]
      %v413 = vld [vmem:[%s196 + $0x680] sm:$0xff]
      %v414 = vld [vmem:[%s196 + $0x688] sm:$0xff]
      %v415 = vld [vmem:[%s196 + $0x690] sm:$0xff]
      %v416 = vld [vmem:[%s196 + $0x698] sm:$0xff]
      %v417 = vld [vmem:[%s196 + $0x6a0] sm:$0xff]
      %v418 = vld [vmem:[%s196 + $0x6a8] sm:$0xff]
      %v419 = vld [vmem:[%s196 + $0x6b0] sm:$0xff]
      %v420 = vld [vmem:[%s196 + $0x6b8] sm:$0xff]
      %v421 = vld [vmem:[%s196 + $0x6c0] sm:$0xff]
      %v422 = vld [vmem:[%s196 + $0x6c8] sm:$0xff]
      %v423 = vld [vmem:[%s196 + $0x6d0] sm:$0xff]
      %v424 = vld [vmem:[%s196 + $0x6d8] sm:$0xff]
      %v425 = vld [vmem:[%s196 + $0x6e0] sm:$0xff]
      %v426 = vld [vmem:[%s196 + $0x6e8] sm:$0xff]
      %v427 = vld [vmem:[%s196 + $0x6f0] sm:$0xff]
      %v428 = vld [vmem:[%s196 + $0x6f8] sm:$0xff]
      %v429 = vld [vmem:[%s196 + $0x700] sm:$0xff]
      %v430 = vld [vmem:[%s196 + $0x708] sm:$0xff]
      %v431 = vld [vmem:[%s196 + $0x710] sm:$0xff]
      %v432 = vld [vmem:[%s196 + $0x718] sm:$0xff]
      %v433 = vld [vmem:[%s196 + $0x720] sm:$0xff]
      %v434 = vld [vmem:[%s196 + $0x728] sm:$0xff]
      %v435 = vld [vmem:[%s196 + $0x730] sm:$0xff]
      %v436 = vld [vmem:[%s196 + $0x738] sm:$0xff]
      %v437 = vld [vmem:[%s196 + $0x740] sm:$0xff]
      %v438 = vld [vmem:[%s196 + $0x748] sm:$0xff]
      %v439 = vld [vmem:[%s196 + $0x750] sm:$0xff]
      %v440 = vld [vmem:[%s196 + $0x758] sm:$0xff]
      %v441 = vld [vmem:[%s196 + $0x760] sm:$0xff]
      %v442 = vld [vmem:[%s196 + $0x768] sm:$0xff]
      %v443 = vld [vmem:[%s196 + $0x770] sm:$0xff]
      %v444 = vld [vmem:[%s196 + $0x778] sm:$0xff]
      %v445 = vld [vmem:[%s196 + $0x780] sm:$0xff]
      %v446 = vld [vmem:[%s196 + $0x788] sm:$0xff]
      %v447 = vld [vmem:[%s196 + $0x790] sm:$0xff]
      %v448 = vld [vmem:[%s196 + $0x798] sm:$0xff]
      %v449 = vld [vmem:[%s196 + $0x7a0] sm:$0xff]
      %v450 = vld [vmem:[%s196 + $0x7a8] sm:$0xff]
      %v451 = vld [vmem:[%s196 + $0x7b0] sm:$0xff]
      %v452 = vld [vmem:[%s196 + $0x7b8] sm:$0xff]
      %v453 = vld [vmem:[%s196 + $0x7c0] sm:$0xff]
      %v454 = vld [vmem:[%s196 + $0x7c8] sm:$0xff]
      %v455 = vld [vmem:[%s196 + $0x7d0] sm:$0xff]
      %v456 = vld [vmem:[%s196 + $0x7d8] sm:$0xff]
      %v457 = vld [vmem:[%s196 + $0x7e0] sm:$0xff]
      %v458 = vld [vmem:[%s196 + $0x7e8] sm:$0xff]
      %v459 = vld [vmem:[%s196 + $0x7f0] sm:$0xff]
      %v460 = vld [vmem:[%s196 + $0x7f8] sm:$0xff]
      %v461 = vld [vmem:[%s196 + $0x800] sm:$0xff]
      %v462 = vld [vmem:[%s196 + $0x808] sm:$0xff]
      %v463 = vld [vmem:[%s196 + $0x810] sm:$0xff]
      %v464 = vld [vmem:[%s196 + $0x818] sm:$0xff]
      %v465 = vld [vmem:[%s196 + $0x820] sm:$0xff]
      %v466 = vld [vmem:[%s196 + $0x828] sm:$0xff]
      %v467 = vld [vmem:[%s196 + $0x830] sm:$0xff]
      %v468 = vld [vmem:[%s196 + $0x838] sm:$0xff]
      %v469 = vld [vmem:[%s196 + $0x840] sm:$0xff]
      %v470 = vld [vmem:[%s196 + $0x848] sm:$0xff]
      %v471 = vld [vmem:[%s196 + $0x850] sm:$0xff]
      %v472 = vld [vmem:[%s196 + $0x858] sm:$0xff]
      %v473 = vld [vmem:[%s196 + $0x860] sm:$0xff]
      %v474 = vld [vmem:[%s196 + $0x868] sm:$0xff]
      %v475 = vld [vmem:[%s196 + $0x870] sm:$0xff]
      %v476 = vld [vmem:[%s196 + $0x878] sm:$0xff]
      %v477 = vld [vmem:[%s196 + $0x880] sm:$0xff]
      %v478 = vld [vmem:[%s196 + $0x888] sm:$0xff]
      %v479 = vld [vmem:[%s196 + $0x890] sm:$0xff]
      %v480 = vld [vmem:[%s196 + $0x898] sm:$0xff]
      %v481 = vld [vmem:[%s196 + $0x8a0] sm:$0xff]
      %v482 = vld [vmem:[%s196 + $0x8a8] sm:$0xff]
      %v483 = vld [vmem:[%s196 + $0x8b0] sm:$0xff]
      %v484 = vld [vmem:[%s196 + $0x8b8] sm:$0xff]
      %v485 = vld [vmem:[%s196 + $0x8c0] sm:$0xff]
      %v486 = vld [vmem:[%s196 + $0x8c8] sm:$0xff]
      %v487 = vld [vmem:[%s196 + $0x8d0] sm:$0xff]
      %v488 = vld [vmem:[%s196 + $0x8d8] sm:$0xff]
      %v489 = vld [vmem:[%s196 + $0x8e0] sm:$0xff]
      %v490 = vld [vmem:[%s196 + $0x8e8] sm:$0xff]
      %v491 = vld [vmem:[%s196 + $0x8f0] sm:$0xff]
      %v492 = vld [vmem:[%s196 + $0x8f8] sm:$0xff]
      %v493 = vld [vmem:[%s196 + $0x900] sm:$0xff]
      %v494 = vld [vmem:[%s196 + $0x908] sm:$0xff]
      %v495 = vld [vmem:[%s196 + $0x910] sm:$0xff]
      %v496 = vld [vmem:[%s196 + $0x918] sm:$0xff]
      %v497 = vld [vmem:[%s196 + $0x920] sm:$0xff]
      %v498 = vld [vmem:[%s196 + $0x928] sm:$0xff]
      %v499 = vld [vmem:[%s196 + $0x930] sm:$0xff]
      %v500 = vld [vmem:[%s196 + $0x938] sm:$0xff]
      %v501 = vld [vmem:[%s196 + $0x940] sm:$0xff]
      %v502 = vld [vmem:[%s196 + $0x948] sm:$0xff]
      %v503 = vld [vmem:[%s196 + $0x950] sm:$0xff]
      %v504 = vld [vmem:[%s196 + $0x958] sm:$0xff]
      %v505 = vld [vmem:[%s196 + $0x960] sm:$0xff]
      %v506 = vld [vmem:[%s196 + $0x968] sm:$0xff]
      %v507 = vld [vmem:[%s196 + $0x970] sm:$0xff]
      %v508 = vld [vmem:[%s196 + $0x978] sm:$0xff]
      %v509 = vld [vmem:[%s196 + $0x980] sm:$0xff]
      %v510 = vld [vmem:[%s196 + $0x988] sm:$0xff]
      %v511 = vld [vmem:[%s196 + $0x990] sm:$0xff]
      %v512 = vld [vmem:[%s196 + $0x998] sm:$0xff]
      %v513 = vld [vmem:[%s196 + $0x9a0] sm:$0xff]
      %v514 = vld [vmem:[%s196 + $0x9a8] sm:$0xff]
      %v515 = vld [vmem:[%s196 + $0x9b0] sm:$0xff]
      %v516 = vld [vmem:[%s196 + $0x9b8] sm:$0xff]
      %v517 = vld [vmem:[%s196 + $0x9c0] sm:$0xff]
      %v518 = vld [vmem:[%s196 + $0x9c8] sm:$0xff]
      %v519 = vld [vmem:[%s196 + $0x9d0] sm:$0xff]
      %v520 = vld [vmem:[%s196 + $0x9d8] sm:$0xff]
      %v521 = vld [vmem:[%s196 + $0x9e0] sm:$0xff]
      %v522 = vld [vmem:[%s196 + $0x9e8] sm:$0xff]
      %v523 = vld [vmem:[%s196 + $0x9f0] sm:$0xff]
      %v524 = vld [vmem:[%s196 + $0x9f8] sm:$0xff]
      %v525 = vld [vmem:[%s196 + $0xa00] sm:$0xff]
      %v526 = vld [vmem:[%s196 + $0xa08] sm:$0xff]
      %v527 = vld [vmem:[%s196 + $0xa10] sm:$0xff]
      %v528 = vld [vmem:[%s196 + $0xa18] sm:$0xff]
      %v529 = vld [vmem:[%s196 + $0xa20] sm:$0xff]
      %v530 = vld [vmem:[%s196 + $0xa28] sm:$0xff]
      %v531 = vld [vmem:[%s196 + $0xa30] sm:$0xff]
      %v532 = vld [vmem:[%s196 + $0xa38] sm:$0xff]
      %v533 = vld [vmem:[%s196 + $0xa40] sm:$0xff]
      %v534 = vld [vmem:[%s196 + $0xa48] sm:$0xff]
      %v535 = vld [vmem:[%s196 + $0xa50] sm:$0xff]
      %v536 = vld [vmem:[%s196 + $0xa58] sm:$0xff]
      %v537 = vld [vmem:[%s196 + $0xa60] sm:$0xff]
      %v538 = vld [vmem:[%s196 + $0xa68] sm:$0xff]
      %v539 = vld [vmem:[%s196 + $0xa70] sm:$0xff]
      %v540 = vld [vmem:[%s196 + $0xa78] sm:$0xff]
      %v541 = vld [vmem:[%s196 + $0xa80] sm:$0xff]
      %v542 = vld [vmem:[%s196 + $0xa88] sm:$0xff]
      %v543 = vld [vmem:[%s196 + $0xa90] sm:$0xff]
      %v544 = vld [vmem:[%s196 + $0xa98] sm:$0xff]
      %v545 = vld [vmem:[%s196 + $0xaa0] sm:$0xff]
      %v546 = vld [vmem:[%s196 + $0xaa8] sm:$0xff]
      %v547 = vld [vmem:[%s196 + $0xab0] sm:$0xff]
      %v548 = vld [vmem:[%s196 + $0xab8] sm:$0xff]
      %v549 = vld [vmem:[%s196 + $0xac0] sm:$0xff]
      %v550 = vld [vmem:[%s196 + $0xac8] sm:$0xff]
      %v551 = vld [vmem:[%s196 + $0xad0] sm:$0xff]
      %v552 = vld [vmem:[%s196 + $0xad8] sm:$0xff]
      %v553 = vld [vmem:[%s196 + $0xae0] sm:$0xff]
      %v554 = vld [vmem:[%s196 + $0xae8] sm:$0xff]
      %v555 = vld [vmem:[%s196 + $0xaf0] sm:$0xff]
      %v556 = vld [vmem:[%s196 + $0xaf8] sm:$0xff]
      %v557 = vld [vmem:[%s196 + $0xb00] sm:$0xff]
      %v558 = vld [vmem:[%s196 + $0xb08] sm:$0xff]
      %v559 = vld [vmem:[%s196 + $0xb10] sm:$0xff]
      %v560 = vld [vmem:[%s196 + $0xb18] sm:$0xff]
      %v561 = vld [vmem:[%s196 + $0xb20] sm:$0xff]
      %v562 = vld [vmem:[%s196 + $0xb28] sm:$0xff]
      %v563 = vld [vmem:[%s196 + $0xb30] sm:$0xff]
      %v564 = vld [vmem:[%s196 + $0xb38] sm:$0xff]
      %v565 = vld [vmem:[%s196 + $0xb40] sm:$0xff]
      %v566 = vld [vmem:[%s196 + $0xb48] sm:$0xff]
      %v567 = vld [vmem:[%s196 + $0xb50] sm:$0xff]
      %v568 = vld [vmem:[%s196 + $0xb58] sm:$0xff]
      %v569 = vld [vmem:[%s196 + $0xb60] sm:$0xff]
      %v570 = vld [vmem:[%s196 + $0xb68] sm:$0xff]
      %v571 = vld [vmem:[%s196 + $0xb70] sm:$0xff]
      %v572 = vld [vmem:[%s196 + $0xb78] sm:$0xff]
      %v573 = vld [vmem:[%s196 + $0xb80] sm:$0xff]
      %v574 = vld [vmem:[%s196 + $0xb88] sm:$0xff]
      %v575 = vld [vmem:[%s196 + $0xb90] sm:$0xff]
      %v576 = vld [vmem:[%s196 + $0xb98] sm:$0xff]
      %v577 = vld [vmem:[%s196 + $0xba0] sm:$0xff]
      %v578 = vld [vmem:[%s196 + $0xba8] sm:$0xff]
      %v579 = vld [vmem:[%s196 + $0xbb0] sm:$0xff]
      %v580 = vld [vmem:[%s196 + $0xbb8] sm:$0xff]
      %v581 = vld [vmem:[%s196 + $0xbc0] sm:$0xff]
      %v582 = vld [vmem:[%s196 + $0xbc8] sm:$0xff]
      %v583 = vld [vmem:[%s196 + $0xbd0] sm:$0xff]
      %v584 = vld [vmem:[%s196 + $0xbd8] sm:$0xff]
      %v585 = vld [vmem:[%s196 + $0xbe0] sm:$0xff]
      %v586 = vld [vmem:[%s196 + $0xbe8] sm:$0xff]
      %v587 = vld [vmem:[%s196 + $0xbf0] sm:$0xff]
      %v588 = vld [vmem:[%s196 + $0xbf8] sm:$0xff]
      %v589 = vld [vmem:[%s196 + $0xc00] sm:$0xff]
      %v590 = vld [vmem:[%s196 + $0xc08] sm:$0xff]
      %v591 = vld [vmem:[%s196 + $0xc10] sm:$0xff]
      %v592 = vld [vmem:[%s196 + $0xc18] sm:$0xff]
      %v593 = vld [vmem:[%s196 + $0xc20] sm:$0xff]
      %v594 = vld [vmem:[%s196 + $0xc28] sm:$0xff]
      %v595 = vld [vmem:[%s196 + $0xc30] sm:$0xff]
      %v596 = vld [vmem:[%s196 + $0xc38] sm:$0xff]
      %v597 = vld [vmem:[%s196 + $0xc40] sm:$0xff]
      %v598 = vld [vmem:[%s196 + $0xc48] sm:$0xff]
      %v599 = vld [vmem:[%s196 + $0xc50] sm:$0xff]
      %v600 = vld [vmem:[%s196 + $0xc58] sm:$0xff]
      %v601 = vld [vmem:[%s196 + $0xc60] sm:$0xff]
      %v602 = vld [vmem:[%s196 + $0xc68] sm:$0xff]
      %v603 = vld [vmem:[%s196 + $0xc70] sm:$0xff]
      %v604 = vld [vmem:[%s196 + $0xc78] sm:$0xff]
      %v605 = vld [vmem:[%s196 + $0xc80] sm:$0xff]
      %v606 = vld [vmem:[%s196 + $0xc88] sm:$0xff]
      %v607 = vld [vmem:[%s196 + $0xc90] sm:$0xff]
      %v608 = vld [vmem:[%s196 + $0xc98] sm:$0xff]
      %v609 = vld [vmem:[%s196 + $0xca0] sm:$0xff]
      %v610 = vld [vmem:[%s196 + $0xca8] sm:$0xff]
      %v611 = vld [vmem:[%s196 + $0xcb0] sm:$0xff]
      %v612 = vld [vmem:[%s196 + $0xcb8] sm:$0xff]
      %v613 = vld [vmem:[%s196 + $0xcc0] sm:$0xff]
      %v614 = vld [vmem:[%s196 + $0xcc8] sm:$0xff]
      %v615 = vld [vmem:[%s196 + $0xcd0] sm:$0xff]
      %v616 = vld [vmem:[%s196 + $0xcd8] sm:$0xff]
      %v617 = vld [vmem:[%s196 + $0xce0] sm:$0xff]
      %v618 = vld [vmem:[%s196 + $0xce8] sm:$0xff]
      %v619 = vld [vmem:[%s196 + $0xcf0] sm:$0xff]
      %v620 = vld [vmem:[%s196 + $0xcf8] sm:$0xff]
      %v621 = vld [vmem:[%s196 + $0xd00] sm:$0xff]
      %v622 = vld [vmem:[%s196 + $0xd08] sm:$0xff]
      %v623 = vld [vmem:[%s196 + $0xd10] sm:$0xff]
      %v624 = vld [vmem:[%s196 + $0xd18] sm:$0xff]
      %v625 = vld [vmem:[%s196 + $0xd20] sm:$0xff]
      %v626 = vld [vmem:[%s196 + $0xd28] sm:$0xff]
      %v627 = vld [vmem:[%s196 + $0xd30] sm:$0xff]
      %v628 = vld [vmem:[%s196 + $0xd38] sm:$0xff]
      %v629 = vld [vmem:[%s196 + $0xd40] sm:$0xff]
      %v630 = vld [vmem:[%s196 + $0xd48] sm:$0xff]
      %v631 = vld [vmem:[%s196 + $0xd50] sm:$0xff]
      %v632 = vld [vmem:[%s196 + $0xd58] sm:$0xff]
      %v633 = vld [vmem:[%s196 + $0xd60] sm:$0xff]
      %v634 = vld [vmem:[%s196 + $0xd68] sm:$0xff]
      %v635 = vld [vmem:[%s196 + $0xd70] sm:$0xff]
      %v636 = vld [vmem:[%s196 + $0xd78] sm:$0xff]
      %v637 = vld [vmem:[%s196 + $0xd80] sm:$0xff]
      %v638 = vld [vmem:[%s196 + $0xd88] sm:$0xff]
      %v639 = vld [vmem:[%s196 + $0xd90] sm:$0xff]
      %v640 = vld [vmem:[%s196 + $0xd98] sm:$0xff]
      %v641 = vld [vmem:[%s196 + $0xda0] sm:$0xff]
      %v642 = vld [vmem:[%s196 + $0xda8] sm:$0xff]
      %v643 = vld [vmem:[%s196 + $0xdb0] sm:$0xff]
      %v644 = vld [vmem:[%s196 + $0xdb8] sm:$0xff]
      %v645 = vld [vmem:[%s196 + $0xdc0] sm:$0xff]
      %v646 = vld [vmem:[%s196 + $0xdc8] sm:$0xff]
      %v647 = vld [vmem:[%s196 + $0xdd0] sm:$0xff]
      %v648 = vld [vmem:[%s196 + $0xdd8] sm:$0xff]
      %v649 = vld [vmem:[%s196 + $0xde0] sm:$0xff]
      %v650 = vld [vmem:[%s196 + $0xde8] sm:$0xff]
      %v651 = vld [vmem:[%s196 + $0xdf0] sm:$0xff]
      %v652 = vld [vmem:[%s196 + $0xdf8] sm:$0xff]
      %v653 = vld [vmem:[%s1] sm:$0xf]
      %v654 = vld [vmem:[%s1 + $0x4] sm:$0xf]
      %v655 = vld [vmem:[%s1 + $0x8] sm:$0xf]
      %v656 = vld [vmem:[%s1 + $0xc] sm:$0xf]
      %v657 = vld [vmem:[%s1 + $0x10] sm:$0xf]
      %v658 = vld [vmem:[%s1 + $0x14] sm:$0xf]
      %v659 = vld [vmem:[%s1 + $0x18] sm:$0xf]
      %v660 = vld [vmem:[%s1 + $0x1c] sm:$0xf]
      %v661 = vld [vmem:[%s1 + $0x20] sm:$0xf]
      %v662 = vld [vmem:[%s1 + $0x24] sm:$0xf]
      %v663 = vld [vmem:[%s1 + $0x28] sm:$0xf]
      %v664 = vld [vmem:[%s1 + $0x2c] sm:$0xf]
      %v665 = vld [vmem:[%s1 + $0x30] sm:$0xf]
      %v666 = vld [vmem:[%s1 + $0x34] sm:$0xf]
      %v667 = vld [vmem:[%s1 + $0x38] sm:$0xf]
      %v668 = vld [vmem:[%s1 + $0x3c] sm:$0xf]
      %v669 = vld [vmem:[%s1 + $0x40] sm:$0xf]
      %v670 = vld [vmem:[%s1 + $0x44] sm:$0xf]
      %v671 = vld [vmem:[%s1 + $0x48] sm:$0x3]
      %v1120 = vunpack.c.l.b16 %v205
      %v1121 = vunpack.c.h.b16 %v205
      %v1122 = vunpack.c.l.b16 %v206
      %v1123 = vunpack.c.h.b16 %v206
      %v1124 = vunpack.c.l.b16 %v207
      %v1125 = vunpack.c.h.b16 %v207
      %v1126 = vunpack.c.l.b16 %v208
      %v1127 = vunpack.c.h.b16 %v208
      %v1128 = vunpack.c.l.b16 %v209
      %v1129 = vunpack.c.h.b16 %v209
      %v1130 = vunpack.c.l.b16 %v210
      %v1131 = vunpack.c.h.b16 %v210
      %v1132 = vunpack.c.l.b16 %v211
      %v1133 = vunpack.c.h.b16 %v211
      %v1134 = vunpack.c.l.b16 %v212
      %v1135 = vunpack.c.h.b16 %v212
      %v1136 = vunpack.c.l.b16 %v213
      %v1137 = vunpack.c.h.b16 %v213
      %v1138 = vunpack.c.l.b16 %v214
      %v1139 = vunpack.c.h.b16 %v214
      %v1140 = vunpack.c.l.b16 %v215
      %v1141 = vunpack.c.h.b16 %v215
      %v1142 = vunpack.c.l.b16 %v216
      %v1143 = vunpack.c.h.b16 %v216
      %v1144 = vunpack.c.l.b16 %v217
      %v1145 = vunpack.c.h.b16 %v217
      %v1146 = vunpack.c.l.b16 %v218
      %v1147 = vunpack.c.h.b16 %v218
      %v1148 = vunpack.c.l.b16 %v219
      %v1149 = vunpack.c.h.b16 %v219
      %v1150 = vunpack.c.l.b16 %v220
      %v1151 = vunpack.c.h.b16 %v220
      %v1152 = vunpack.c.l.b16 %v221
      %v1153 = vunpack.c.h.b16 %v221
      %v1154 = vunpack.c.l.b16 %v222
      %v1155 = vunpack.c.h.b16 %v222
      %v1156 = vunpack.c.l.b16 %v223
      %v1157 = vunpack.c.h.b16 %v223
      %v1158 = vunpack.c.l.b16 %v224
      %v1159 = vunpack.c.h.b16 %v224
      %v1160 = vunpack.c.l.b16 %v225
      %v1161 = vunpack.c.h.b16 %v225
      %v1162 = vunpack.c.l.b16 %v226
      %v1163 = vunpack.c.h.b16 %v226
      %v1164 = vunpack.c.l.b16 %v227
      %v1165 = vunpack.c.h.b16 %v227
      %v1166 = vunpack.c.l.b16 %v228
      %v1167 = vunpack.c.h.b16 %v228
      %v1168 = vunpack.c.l.b16 %v229
      %v1169 = vunpack.c.h.b16 %v229
      %v1170 = vunpack.c.l.b16 %v230
      %v1171 = vunpack.c.h.b16 %v230
      %v1172 = vunpack.c.l.b16 %v231
      %v1173 = vunpack.c.h.b16 %v231
      %v1174 = vunpack.c.l.b16 %v232
      %v1175 = vunpack.c.h.b16 %v232
      %v1176 = vunpack.c.l.b16 %v233
      %v1177 = vunpack.c.h.b16 %v233
      %v1178 = vunpack.c.l.b16 %v234
      %v1179 = vunpack.c.h.b16 %v234
      %v1180 = vunpack.c.l.b16 %v235
      %v1181 = vunpack.c.h.b16 %v235
      %v1182 = vunpack.c.l.b16 %v236
      %v1183 = vunpack.c.h.b16 %v236
      %v1184 = vunpack.c.l.b16 %v237
      %v1185 = vunpack.c.h.b16 %v237
      %v1186 = vunpack.c.l.b16 %v238
      %v1187 = vunpack.c.h.b16 %v238
      %v1188 = vunpack.c.l.b16 %v239
      %v1189 = vunpack.c.h.b16 %v239
      %v1190 = vunpack.c.l.b16 %v240
      %v1191 = vunpack.c.h.b16 %v240
      %v1192 = vunpack.c.l.b16 %v241
      %v1193 = vunpack.c.h.b16 %v241
      %v1194 = vunpack.c.l.b16 %v242
      %v1195 = vunpack.c.h.b16 %v242
      %v1196 = vunpack.c.l.b16 %v243
      %v1197 = vunpack.c.h.b16 %v243
      %v1198 = vunpack.c.l.b16 %v244
      %v1199 = vunpack.c.h.b16 %v244
      %v1200 = vunpack.c.l.b16 %v245
      %v1201 = vunpack.c.h.b16 %v245
      %v1202 = vunpack.c.l.b16 %v246
      %v1203 = vunpack.c.h.b16 %v246
      %v1204 = vunpack.c.l.b16 %v247
      %v1205 = vunpack.c.h.b16 %v247
      %v1206 = vunpack.c.l.b16 %v248
      %v1207 = vunpack.c.h.b16 %v248
      %v1208 = vunpack.c.l.b16 %v249
      %v1209 = vunpack.c.h.b16 %v249
      %v1210 = vunpack.c.l.b16 %v250
      %v1211 = vunpack.c.h.b16 %v250
      %v1212 = vunpack.c.l.b16 %v251
      %v1213 = vunpack.c.h.b16 %v251
      %v1214 = vunpack.c.l.b16 %v252
      %v1215 = vunpack.c.h.b16 %v252
      %v1216 = vunpack.c.l.b16 %v253
      %v1217 = vunpack.c.h.b16 %v253
      %v1218 = vunpack.c.l.b16 %v254
      %v1219 = vunpack.c.h.b16 %v254
      %v1220 = vunpack.c.l.b16 %v255
      %v1221 = vunpack.c.h.b16 %v255
      %v1222 = vunpack.c.l.b16 %v256
      %v1223 = vunpack.c.h.b16 %v256
      %v1224 = vunpack.c.l.b16 %v257
      %v1225 = vunpack.c.h.b16 %v257
      %v1226 = vunpack.c.l.b16 %v258
      %v1227 = vunpack.c.h.b16 %v258
      %v1228 = vunpack.c.l.b16 %v259
      %v1229 = vunpack.c.h.b16 %v259
      %v1230 = vunpack.c.l.b16 %v260
      %v1231 = vunpack.c.h.b16 %v260
      %v1232 = vunpack.c.l.b16 %v261
      %v1233 = vunpack.c.h.b16 %v261
      %v1234 = vunpack.c.l.b16 %v262
      %v1235 = vunpack.c.h.b16 %v262
      %v1236 = vunpack.c.l.b16 %v263
      %v1237 = vunpack.c.h.b16 %v263
      %v1238 = vunpack.c.l.b16 %v264
      %v1239 = vunpack.c.h.b16 %v264
      %v1240 = vunpack.c.l.b16 %v265
      %v1241 = vunpack.c.h.b16 %v265
      %v1242 = vunpack.c.l.b16 %v266
      %v1243 = vunpack.c.h.b16 %v266
      %v1244 = vunpack.c.l.b16 %v267
      %v1245 = vunpack.c.h.b16 %v267
      %v1246 = vunpack.c.l.b16 %v268
      %v1247 = vunpack.c.h.b16 %v268
      %v1248 = vunpack.c.l.b16 %v269
      %v1249 = vunpack.c.h.b16 %v269
      %v1250 = vunpack.c.l.b16 %v270
      %v1251 = vunpack.c.h.b16 %v270
      %v1252 = vunpack.c.l.b16 %v271
      %v1253 = vunpack.c.h.b16 %v271
      %v1254 = vunpack.c.l.b16 %v272
      %v1255 = vunpack.c.h.b16 %v272
      %v1256 = vunpack.c.l.b16 %v273
      %v1257 = vunpack.c.h.b16 %v273
      %v1258 = vunpack.c.l.b16 %v274
      %v1259 = vunpack.c.h.b16 %v274
      %v1260 = vunpack.c.l.b16 %v275
      %v1261 = vunpack.c.h.b16 %v275
      %v1262 = vunpack.c.l.b16 %v276
      %v1263 = vunpack.c.h.b16 %v276
      %v1264 = vunpack.c.l.b16 %v277
      %v1265 = vunpack.c.h.b16 %v277
      %v1266 = vunpack.c.l.b16 %v278
      %v1267 = vunpack.c.h.b16 %v278
      %v1268 = vunpack.c.l.b16 %v279
      %v1269 = vunpack.c.h.b16 %v279
      %v1270 = vunpack.c.l.b16 %v280
      %v1271 = vunpack.c.h.b16 %v280
      %v1272 = vunpack.c.l.b16 %v281
      %v1273 = vunpack.c.h.b16 %v281
      %v1274 = vunpack.c.l.b16 %v282
      %v1275 = vunpack.c.h.b16 %v282
      %v1276 = vunpack.c.l.b16 %v283
      %v1277 = vunpack.c.h.b16 %v283
      %v1278 = vunpack.c.l.b16 %v284
      %v1279 = vunpack.c.h.b16 %v284
      %v1280 = vunpack.c.l.b16 %v285
      %v1281 = vunpack.c.h.b16 %v285
      %v1282 = vunpack.c.l.b16 %v286
      %v1283 = vunpack.c.h.b16 %v286
      %v1284 = vunpack.c.l.b16 %v287
      %v1285 = vunpack.c.h.b16 %v287
      %v1286 = vunpack.c.l.b16 %v288
      %v1287 = vunpack.c.h.b16 %v288
      %v1288 = vunpack.c.l.b16 %v289
      %v1289 = vunpack.c.h.b16 %v289
      %v1290 = vunpack.c.l.b16 %v290
      %v1291 = vunpack.c.h.b16 %v290
      %v1292 = vunpack.c.l.b16 %v291
      %v1293 = vunpack.c.h.b16 %v291
      %v1294 = vunpack.c.l.b16 %v292
      %v1295 = vunpack.c.h.b16 %v292
      %v1296 = vunpack.c.l.b16 %v293
      %v1297 = vunpack.c.h.b16 %v293
      %v1298 = vunpack.c.l.b16 %v294
      %v1299 = vunpack.c.h.b16 %v294
      %v1300 = vunpack.c.l.b16 %v295
      %v1301 = vunpack.c.h.b16 %v295
      %v1302 = vunpack.c.l.b16 %v296
      %v1303 = vunpack.c.h.b16 %v296
      %v1304 = vunpack.c.l.b16 %v297
      %v1305 = vunpack.c.h.b16 %v297
      %v1306 = vunpack.c.l.b16 %v298
      %v1307 = vunpack.c.h.b16 %v298
      %v1308 = vunpack.c.l.b16 %v299
      %v1309 = vunpack.c.h.b16 %v299
      %v1310 = vunpack.c.l.b16 %v300
      %v1311 = vunpack.c.h.b16 %v300
      %v1312 = vunpack.c.l.b16 %v301
      %v1313 = vunpack.c.h.b16 %v301
      %v1314 = vunpack.c.l.b16 %v302
      %v1315 = vunpack.c.h.b16 %v302
      %v1316 = vunpack.c.l.b16 %v303
      %v1317 = vunpack.c.h.b16 %v303
      %v1318 = vunpack.c.l.b16 %v304
      %v1319 = vunpack.c.h.b16 %v304
      %v1320 = vunpack.c.l.b16 %v305
      %v1321 = vunpack.c.h.b16 %v305
      %v1322 = vunpack.c.l.b16 %v306
      %v1323 = vunpack.c.h.b16 %v306
      %v1324 = vunpack.c.l.b16 %v307
      %v1325 = vunpack.c.h.b16 %v307
      %v1326 = vunpack.c.l.b16 %v308
      %v1327 = vunpack.c.h.b16 %v308
      %v1328 = vunpack.c.l.b16 %v309
      %v1329 = vunpack.c.h.b16 %v309
      %v1330 = vunpack.c.l.b16 %v310
      %v1331 = vunpack.c.h.b16 %v310
      %v1332 = vunpack.c.l.b16 %v311
      %v1333 = vunpack.c.h.b16 %v311
      %v1334 = vunpack.c.l.b16 %v312
      %v1335 = vunpack.c.h.b16 %v312
      %v1336 = vunpack.c.l.b16 %v313
      %v1337 = vunpack.c.h.b16 %v313
      %v1338 = vunpack.c.l.b16 %v314
      %v1339 = vunpack.c.h.b16 %v314
      %v1340 = vunpack.c.l.b16 %v315
      %v1341 = vunpack.c.h.b16 %v315
      %v1342 = vunpack.c.l.b16 %v316
      %v1343 = vunpack.c.h.b16 %v316
      %v1344 = vunpack.c.l.b16 %v317
      %v1345 = vunpack.c.h.b16 %v317
      %v1346 = vunpack.c.l.b16 %v318
      %v1347 = vunpack.c.h.b16 %v318
      %v1348 = vunpack.c.l.b16 %v319
      %v1349 = vunpack.c.h.b16 %v319
      %v1350 = vunpack.c.l.b16 %v320
      %v1351 = vunpack.c.h.b16 %v320
      %v1352 = vunpack.c.l.b16 %v321
      %v1353 = vunpack.c.h.b16 %v321
      %v1354 = vunpack.c.l.b16 %v322
      %v1355 = vunpack.c.h.b16 %v322
      %v1356 = vunpack.c.l.b16 %v323
      %v1357 = vunpack.c.h.b16 %v323
      %v1358 = vunpack.c.l.b16 %v324
      %v1359 = vunpack.c.h.b16 %v324
      %v1360 = vunpack.c.l.b16 %v325
      %v1361 = vunpack.c.h.b16 %v325
      %v1362 = vunpack.c.l.b16 %v326
      %v1363 = vunpack.c.h.b16 %v326
      %v1364 = vunpack.c.l.b16 %v327
      %v1365 = vunpack.c.h.b16 %v327
      %v1366 = vunpack.c.l.b16 %v328
      %v1367 = vunpack.c.h.b16 %v328
      %v1368 = vunpack.c.l.b16 %v329
      %v1369 = vunpack.c.h.b16 %v329
      %v1370 = vunpack.c.l.b16 %v330
      %v1371 = vunpack.c.h.b16 %v330
      %v1372 = vunpack.c.l.b16 %v331
      %v1373 = vunpack.c.h.b16 %v331
      %v1374 = vunpack.c.l.b16 %v332
      %v1375 = vunpack.c.h.b16 %v332
      %v1376 = vunpack.c.l.b16 %v333
      %v1377 = vunpack.c.h.b16 %v333
      %v1378 = vunpack.c.l.b16 %v334
      %v1379 = vunpack.c.h.b16 %v334
      %v1380 = vunpack.c.l.b16 %v335
      %v1381 = vunpack.c.h.b16 %v335
      %v1382 = vunpack.c.l.b16 %v336
      %v1383 = vunpack.c.h.b16 %v336
      %v1384 = vunpack.c.l.b16 %v337
      %v1385 = vunpack.c.h.b16 %v337
      %v1386 = vunpack.c.l.b16 %v338
      %v1387 = vunpack.c.h.b16 %v338
      %v1388 = vunpack.c.l.b16 %v339
      %v1389 = vunpack.c.h.b16 %v339
      %v1390 = vunpack.c.l.b16 %v340
      %v1391 = vunpack.c.h.b16 %v340
      %v1392 = vunpack.c.l.b16 %v341
      %v1393 = vunpack.c.h.b16 %v341
      %v1394 = vunpack.c.l.b16 %v342
      %v1395 = vunpack.c.h.b16 %v342
      %v1396 = vunpack.c.l.b16 %v343
      %v1397 = vunpack.c.h.b16 %v343
      %v1398 = vunpack.c.l.b16 %v344
      %v1399 = vunpack.c.h.b16 %v344
      %v1400 = vunpack.c.l.b16 %v345
      %v1401 = vunpack.c.h.b16 %v345
      %v1402 = vunpack.c.l.b16 %v346
      %v1403 = vunpack.c.h.b16 %v346
      %v1404 = vunpack.c.l.b16 %v347
      %v1405 = vunpack.c.h.b16 %v347
      %v1406 = vunpack.c.l.b16 %v348
      %v1407 = vunpack.c.h.b16 %v348
      %v1408 = vunpack.c.l.b16 %v349
      %v1409 = vunpack.c.h.b16 %v349
      %v1410 = vunpack.c.l.b16 %v350
      %v1411 = vunpack.c.h.b16 %v350
      %v1412 = vunpack.c.l.b16 %v351
      %v1413 = vunpack.c.h.b16 %v351
      %v1414 = vunpack.c.l.b16 %v352
      %v1415 = vunpack.c.h.b16 %v352
      %v1416 = vunpack.c.l.b16 %v353
      %v1417 = vunpack.c.h.b16 %v353
      %v1418 = vunpack.c.l.b16 %v354
      %v1419 = vunpack.c.h.b16 %v354
      %v1420 = vunpack.c.l.b16 %v355
      %v1421 = vunpack.c.h.b16 %v355
      %v1422 = vunpack.c.l.b16 %v356
      %v1423 = vunpack.c.h.b16 %v356
      %v1424 = vunpack.c.l.b16 %v357
      %v1425 = vunpack.c.h.b16 %v357
      %v1426 = vunpack.c.l.b16 %v358
      %v1427 = vunpack.c.h.b16 %v358
      %v1428 = vunpack.c.l.b16 %v359
      %v1429 = vunpack.c.h.b16 %v359
      %v1430 = vunpack.c.l.b16 %v360
      %v1431 = vunpack.c.h.b16 %v360
      %v1432 = vunpack.c.l.b16 %v361
      %v1433 = vunpack.c.h.b16 %v361
      %v1434 = vunpack.c.l.b16 %v362
      %v1435 = vunpack.c.h.b16 %v362
      %v1436 = vunpack.c.l.b16 %v363
      %v1437 = vunpack.c.h.b16 %v363
      %v1438 = vunpack.c.l.b16 %v364
      %v1439 = vunpack.c.h.b16 %v364
      %v1440 = vunpack.c.l.b16 %v365
      %v1441 = vunpack.c.h.b16 %v365
      %v1442 = vunpack.c.l.b16 %v366
      %v1443 = vunpack.c.h.b16 %v366
      %v1444 = vunpack.c.l.b16 %v367
      %v1445 = vunpack.c.h.b16 %v367
      %v1446 = vunpack.c.l.b16 %v368
      %v1447 = vunpack.c.h.b16 %v368
      %v1448 = vunpack.c.l.b16 %v369
      %v1449 = vunpack.c.h.b16 %v369
      %v1450 = vunpack.c.l.b16 %v370
      %v1451 = vunpack.c.h.b16 %v370
      %v1452 = vunpack.c.l.b16 %v371
      %v1453 = vunpack.c.h.b16 %v371
      %v1454 = vunpack.c.l.b16 %v372
      %v1455 = vunpack.c.h.b16 %v372
      %v1456 = vunpack.c.l.b16 %v373
      %v1457 = vunpack.c.h.b16 %v373
      %v1458 = vunpack.c.l.b16 %v374
      %v1459 = vunpack.c.h.b16 %v374
      %v1460 = vunpack.c.l.b16 %v375
      %v1461 = vunpack.c.h.b16 %v375
      %v1462 = vunpack.c.l.b16 %v376
      %v1463 = vunpack.c.h.b16 %v376
      %v1464 = vunpack.c.l.b16 %v377
      %v1465 = vunpack.c.h.b16 %v377
      %v1466 = vunpack.c.l.b16 %v378
      %v1467 = vunpack.c.h.b16 %v378
      %v1468 = vunpack.c.l.b16 %v379
      %v1469 = vunpack.c.h.b16 %v379
      %v1470 = vunpack.c.l.b16 %v380
      %v1471 = vunpack.c.h.b16 %v380
      %v1472 = vunpack.c.l.b16 %v381
      %v1473 = vunpack.c.h.b16 %v381
      %v1474 = vunpack.c.l.b16 %v382
      %v1475 = vunpack.c.h.b16 %v382
      %v1476 = vunpack.c.l.b16 %v383
      %v1477 = vunpack.c.h.b16 %v383
      %v1478 = vunpack.c.l.b16 %v384
      %v1479 = vunpack.c.h.b16 %v384
      %v1480 = vunpack.c.l.b16 %v385
      %v1481 = vunpack.c.h.b16 %v385
      %v1482 = vunpack.c.l.b16 %v386
      %v1483 = vunpack.c.h.b16 %v386
      %v1484 = vunpack.c.l.b16 %v387
      %v1485 = vunpack.c.h.b16 %v387
      %v1486 = vunpack.c.l.b16 %v388
      %v1487 = vunpack.c.h.b16 %v388
      %v1488 = vunpack.c.l.b16 %v389
      %v1489 = vunpack.c.h.b16 %v389
      %v1490 = vunpack.c.l.b16 %v390
      %v1491 = vunpack.c.h.b16 %v390
      %v1492 = vunpack.c.l.b16 %v391
      %v1493 = vunpack.c.h.b16 %v391
      %v1494 = vunpack.c.l.b16 %v392
      %v1495 = vunpack.c.h.b16 %v392
      %v1496 = vunpack.c.l.b16 %v393
      %v1497 = vunpack.c.h.b16 %v393
      %v1498 = vunpack.c.l.b16 %v394
      %v1499 = vunpack.c.h.b16 %v394
      %v1500 = vunpack.c.l.b16 %v395
      %v1501 = vunpack.c.h.b16 %v395
      %v1502 = vunpack.c.l.b16 %v396
      %v1503 = vunpack.c.h.b16 %v396
      %v1504 = vunpack.c.l.b16 %v397
      %v1505 = vunpack.c.h.b16 %v397
      %v1506 = vunpack.c.l.b16 %v398
      %v1507 = vunpack.c.h.b16 %v398
      %v1508 = vunpack.c.l.b16 %v399
      %v1509 = vunpack.c.h.b16 %v399
      %v1510 = vunpack.c.l.b16 %v400
      %v1511 = vunpack.c.h.b16 %v400
      %v1512 = vunpack.c.l.b16 %v401
      %v1513 = vunpack.c.h.b16 %v401
      %v1514 = vunpack.c.l.b16 %v402
      %v1515 = vunpack.c.h.b16 %v402
      %v1516 = vunpack.c.l.b16 %v403
      %v1517 = vunpack.c.h.b16 %v403
      %v1518 = vunpack.c.l.b16 %v404
      %v1519 = vunpack.c.h.b16 %v404
      %v1520 = vunpack.c.l.b16 %v405
      %v1521 = vunpack.c.h.b16 %v405
      %v1522 = vunpack.c.l.b16 %v406
      %v1523 = vunpack.c.h.b16 %v406
      %v1524 = vunpack.c.l.b16 %v407
      %v1525 = vunpack.c.h.b16 %v407
      %v1526 = vunpack.c.l.b16 %v408
      %v1527 = vunpack.c.h.b16 %v408
      %v1528 = vunpack.c.l.b16 %v409
      %v1529 = vunpack.c.h.b16 %v409
      %v1530 = vunpack.c.l.b16 %v410
      %v1531 = vunpack.c.h.b16 %v410
      %v1532 = vunpack.c.l.b16 %v411
      %v1533 = vunpack.c.h.b16 %v411
      %v1534 = vunpack.c.l.b16 %v412
      %v1535 = vunpack.c.h.b16 %v412
      %v1536 = vunpack.c.l.b16 %v413
      %v1537 = vunpack.c.h.b16 %v413
      %v1538 = vunpack.c.l.b16 %v414
      %v1539 = vunpack.c.h.b16 %v414
      %v1540 = vunpack.c.l.b16 %v415
      %v1541 = vunpack.c.h.b16 %v415
      %v1542 = vunpack.c.l.b16 %v416
      %v1543 = vunpack.c.h.b16 %v416
      %v1544 = vunpack.c.l.b16 %v417
      %v1545 = vunpack.c.h.b16 %v417
      %v1546 = vunpack.c.l.b16 %v418
      %v1547 = vunpack.c.h.b16 %v418
      %v1548 = vunpack.c.l.b16 %v419
      %v1549 = vunpack.c.h.b16 %v419
      %v1550 = vunpack.c.l.b16 %v420
      %v1551 = vunpack.c.h.b16 %v420
      %v1552 = vunpack.c.l.b16 %v421
      %v1553 = vunpack.c.h.b16 %v421
      %v1554 = vunpack.c.l.b16 %v422
      %v1555 = vunpack.c.h.b16 %v422
      %v1556 = vunpack.c.l.b16 %v423
      %v1557 = vunpack.c.h.b16 %v423
      %v1558 = vunpack.c.l.b16 %v424
      %v1559 = vunpack.c.h.b16 %v424
      %v1560 = vunpack.c.l.b16 %v425
      %v1561 = vunpack.c.h.b16 %v425
      %v1562 = vunpack.c.l.b16 %v426
      %v1563 = vunpack.c.h.b16 %v426
      %v1564 = vunpack.c.l.b16 %v427
      %v1565 = vunpack.c.h.b16 %v427
      %v1566 = vunpack.c.l.b16 %v428
      %v1567 = vunpack.c.h.b16 %v428
      %v1568 = vunpack.c.l.b16 %v429
      %v1569 = vunpack.c.h.b16 %v429
      %v1570 = vunpack.c.l.b16 %v430
      %v1571 = vunpack.c.h.b16 %v430
      %v1572 = vunpack.c.l.b16 %v431
      %v1573 = vunpack.c.h.b16 %v431
      %v1574 = vunpack.c.l.b16 %v432
      %v1575 = vunpack.c.h.b16 %v432
      %v1576 = vunpack.c.l.b16 %v433
      %v1577 = vunpack.c.h.b16 %v433
      %v1578 = vunpack.c.l.b16 %v434
      %v1579 = vunpack.c.h.b16 %v434
      %v1580 = vunpack.c.l.b16 %v435
      %v1581 = vunpack.c.h.b16 %v435
      %v1582 = vunpack.c.l.b16 %v436
      %v1583 = vunpack.c.h.b16 %v436
      %v1584 = vunpack.c.l.b16 %v437
      %v1585 = vunpack.c.h.b16 %v437
      %v1586 = vunpack.c.l.b16 %v438
      %v1587 = vunpack.c.h.b16 %v438
      %v1588 = vunpack.c.l.b16 %v439
      %v1589 = vunpack.c.h.b16 %v439
      %v1590 = vunpack.c.l.b16 %v440
      %v1591 = vunpack.c.h.b16 %v440
      %v1592 = vunpack.c.l.b16 %v441
      %v1593 = vunpack.c.h.b16 %v441
      %v1594 = vunpack.c.l.b16 %v442
      %v1595 = vunpack.c.h.b16 %v442
      %v1596 = vunpack.c.l.b16 %v443
      %v1597 = vunpack.c.h.b16 %v443
      %v1598 = vunpack.c.l.b16 %v444
      %v1599 = vunpack.c.h.b16 %v444
      %v1600 = vunpack.c.l.b16 %v445
      %v1601 = vunpack.c.h.b16 %v445
      %v1602 = vunpack.c.l.b16 %v446
      %v1603 = vunpack.c.h.b16 %v446
      %v1604 = vunpack.c.l.b16 %v447
      %v1605 = vunpack.c.h.b16 %v447
      %v1606 = vunpack.c.l.b16 %v448
      %v1607 = vunpack.c.h.b16 %v448
      %v1608 = vunpack.c.l.b16 %v449
      %v1609 = vunpack.c.h.b16 %v449
      %v1610 = vunpack.c.l.b16 %v450
      %v1611 = vunpack.c.h.b16 %v450
      %v1612 = vunpack.c.l.b16 %v451
      %v1613 = vunpack.c.h.b16 %v451
      %v1614 = vunpack.c.l.b16 %v452
      %v1615 = vunpack.c.h.b16 %v452
      %v1616 = vunpack.c.l.b16 %v453
      %v1617 = vunpack.c.h.b16 %v453
      %v1618 = vunpack.c.l.b16 %v454
      %v1619 = vunpack.c.h.b16 %v454
      %v1620 = vunpack.c.l.b16 %v455
      %v1621 = vunpack.c.h.b16 %v455
      %v1622 = vunpack.c.l.b16 %v456
      %v1623 = vunpack.c.h.b16 %v456
      %v1624 = vunpack.c.l.b16 %v457
      %v1625 = vunpack.c.h.b16 %v457
      %v1626 = vunpack.c.l.b16 %v458
      %v1627 = vunpack.c.h.b16 %v458
      %v1628 = vunpack.c.l.b16 %v459
      %v1629 = vunpack.c.h.b16 %v459
      %v1630 = vunpack.c.l.b16 %v460
      %v1631 = vunpack.c.h.b16 %v460
      %v1632 = vunpack.c.l.b16 %v461
      %v1633 = vunpack.c.h.b16 %v461
      %v1634 = vunpack.c.l.b16 %v462
      %v1635 = vunpack.c.h.b16 %v462
      %v1636 = vunpack.c.l.b16 %v463
      %v1637 = vunpack.c.h.b16 %v463
      %v1638 = vunpack.c.l.b16 %v464
      %v1639 = vunpack.c.h.b16 %v464
      %v1640 = vunpack.c.l.b16 %v465
      %v1641 = vunpack.c.h.b16 %v465
      %v1642 = vunpack.c.l.b16 %v466
      %v1643 = vunpack.c.h.b16 %v466
      %v1644 = vunpack.c.l.b16 %v467
      %v1645 = vunpack.c.h.b16 %v467
      %v1646 = vunpack.c.l.b16 %v468
      %v1647 = vunpack.c.h.b16 %v468
      %v1648 = vunpack.c.l.b16 %v469
      %v1649 = vunpack.c.h.b16 %v469
      %v1650 = vunpack.c.l.b16 %v470
      %v1651 = vunpack.c.h.b16 %v470
      %v1652 = vunpack.c.l.b16 %v471
      %v1653 = vunpack.c.h.b16 %v471
      %v1654 = vunpack.c.l.b16 %v472
      %v1655 = vunpack.c.h.b16 %v472
      %v1656 = vunpack.c.l.b16 %v473
      %v1657 = vunpack.c.h.b16 %v473
      %v1658 = vunpack.c.l.b16 %v474
      %v1659 = vunpack.c.h.b16 %v474
      %v1660 = vunpack.c.l.b16 %v475
      %v1661 = vunpack.c.h.b16 %v475
      %v1662 = vunpack.c.l.b16 %v476
      %v1663 = vunpack.c.h.b16 %v476
      %v1664 = vunpack.c.l.b16 %v477
      %v1665 = vunpack.c.h.b16 %v477
      %v1666 = vunpack.c.l.b16 %v478
      %v1667 = vunpack.c.h.b16 %v478
      %v1668 = vunpack.c.l.b16 %v479
      %v1669 = vunpack.c.h.b16 %v479
      %v1670 = vunpack.c.l.b16 %v480
      %v1671 = vunpack.c.h.b16 %v480
      %v1672 = vunpack.c.l.b16 %v481
      %v1673 = vunpack.c.h.b16 %v481
      %v1674 = vunpack.c.l.b16 %v482
      %v1675 = vunpack.c.h.b16 %v482
      %v1676 = vunpack.c.l.b16 %v483
      %v1677 = vunpack.c.h.b16 %v483
      %v1678 = vunpack.c.l.b16 %v484
      %v1679 = vunpack.c.h.b16 %v484
      %v1680 = vunpack.c.l.b16 %v485
      %v1681 = vunpack.c.h.b16 %v485
      %v1682 = vunpack.c.l.b16 %v486
      %v1683 = vunpack.c.h.b16 %v486
      %v1684 = vunpack.c.l.b16 %v487
      %v1685 = vunpack.c.h.b16 %v487
      %v1686 = vunpack.c.l.b16 %v488
      %v1687 = vunpack.c.h.b16 %v488
      %v1688 = vunpack.c.l.b16 %v489
      %v1689 = vunpack.c.h.b16 %v489
      %v1690 = vunpack.c.l.b16 %v490
      %v1691 = vunpack.c.h.b16 %v490
      %v1692 = vunpack.c.l.b16 %v491
      %v1693 = vunpack.c.h.b16 %v491
      %v1694 = vunpack.c.l.b16 %v492
      %v1695 = vunpack.c.h.b16 %v492
      %v1696 = vunpack.c.l.b16 %v493
      %v1697 = vunpack.c.h.b16 %v493
      %v1698 = vunpack.c.l.b16 %v494
      %v1699 = vunpack.c.h.b16 %v494
      %v1700 = vunpack.c.l.b16 %v495
      %v1701 = vunpack.c.h.b16 %v495
      %v1702 = vunpack.c.l.b16 %v496
      %v1703 = vunpack.c.h.b16 %v496
      %v1704 = vunpack.c.l.b16 %v497
      %v1705 = vunpack.c.h.b16 %v497
      %v1706 = vunpack.c.l.b16 %v498
      %v1707 = vunpack.c.h.b16 %v498
      %v1708 = vunpack.c.l.b16 %v499
      %v1709 = vunpack.c.h.b16 %v499
      %v1710 = vunpack.c.l.b16 %v500
      %v1711 = vunpack.c.h.b16 %v500
      %v1712 = vunpack.c.l.b16 %v501
      %v1713 = vunpack.c.h.b16 %v501
      %v1714 = vunpack.c.l.b16 %v502
      %v1715 = vunpack.c.h.b16 %v502
      %v1716 = vunpack.c.l.b16 %v503
      %v1717 = vunpack.c.h.b16 %v503
      %v1718 = vunpack.c.l.b16 %v504
      %v1719 = vunpack.c.h.b16 %v504
      %v1720 = vunpack.c.l.b16 %v505
      %v1721 = vunpack.c.h.b16 %v505
      %v1722 = vunpack.c.l.b16 %v506
      %v1723 = vunpack.c.h.b16 %v506
      %v1724 = vunpack.c.l.b16 %v507
      %v1725 = vunpack.c.h.b16 %v507
      %v1726 = vunpack.c.l.b16 %v508
      %v1727 = vunpack.c.h.b16 %v508
      %v1728 = vunpack.c.l.b16 %v509
      %v1729 = vunpack.c.h.b16 %v509
      %v1730 = vunpack.c.l.b16 %v510
      %v1731 = vunpack.c.h.b16 %v510
      %v1732 = vunpack.c.l.b16 %v511
      %v1733 = vunpack.c.h.b16 %v511
      %v1734 = vunpack.c.l.b16 %v512
      %v1735 = vunpack.c.h.b16 %v512
      %v1736 = vunpack.c.l.b16 %v513
      %v1737 = vunpack.c.h.b16 %v513
      %v1738 = vunpack.c.l.b16 %v514
      %v1739 = vunpack.c.h.b16 %v514
      %v1740 = vunpack.c.l.b16 %v515
      %v1741 = vunpack.c.h.b16 %v515
      %v1742 = vunpack.c.l.b16 %v516
      %v1743 = vunpack.c.h.b16 %v516
      %v1744 = vunpack.c.l.b16 %v517
      %v1745 = vunpack.c.h.b16 %v517
      %v1746 = vunpack.c.l.b16 %v518
      %v1747 = vunpack.c.h.b16 %v518
      %v1748 = vunpack.c.l.b16 %v519
      %v1749 = vunpack.c.h.b16 %v519
      %v1750 = vunpack.c.l.b16 %v520
      %v1751 = vunpack.c.h.b16 %v520
      %v1752 = vunpack.c.l.b16 %v521
      %v1753 = vunpack.c.h.b16 %v521
      %v1754 = vunpack.c.l.b16 %v522
      %v1755 = vunpack.c.h.b16 %v522
      %v1756 = vunpack.c.l.b16 %v523
      %v1757 = vunpack.c.h.b16 %v523
      %v1758 = vunpack.c.l.b16 %v524
      %v1759 = vunpack.c.h.b16 %v524
      %v1760 = vunpack.c.l.b16 %v525
      %v1761 = vunpack.c.h.b16 %v525
      %v1762 = vunpack.c.l.b16 %v526
      %v1763 = vunpack.c.h.b16 %v526
      %v1764 = vunpack.c.l.b16 %v527
      %v1765 = vunpack.c.h.b16 %v527
      %v1766 = vunpack.c.l.b16 %v528
      %v1767 = vunpack.c.h.b16 %v528
      %v1768 = vunpack.c.l.b16 %v529
      %v1769 = vunpack.c.h.b16 %v529
      %v1770 = vunpack.c.l.b16 %v530
      %v1771 = vunpack.c.h.b16 %v530
      %v1772 = vunpack.c.l.b16 %v531
      %v1773 = vunpack.c.h.b16 %v531
      %v1774 = vunpack.c.l.b16 %v532
      %v1775 = vunpack.c.h.b16 %v532
      %v1776 = vunpack.c.l.b16 %v533
      %v1777 = vunpack.c.h.b16 %v533
      %v1778 = vunpack.c.l.b16 %v534
      %v1779 = vunpack.c.h.b16 %v534
      %v1780 = vunpack.c.l.b16 %v535
      %v1781 = vunpack.c.h.b16 %v535
      %v1782 = vunpack.c.l.b16 %v536
      %v1783 = vunpack.c.h.b16 %v536
      %v1784 = vunpack.c.l.b16 %v537
      %v1785 = vunpack.c.h.b16 %v537
      %v1786 = vunpack.c.l.b16 %v538
      %v1787 = vunpack.c.h.b16 %v538
      %v1788 = vunpack.c.l.b16 %v539
      %v1789 = vunpack.c.h.b16 %v539
      %v1790 = vunpack.c.l.b16 %v540
      %v1791 = vunpack.c.h.b16 %v540
      %v1792 = vunpack.c.l.b16 %v541
      %v1793 = vunpack.c.h.b16 %v541
      %v1794 = vunpack.c.l.b16 %v542
      %v1795 = vunpack.c.h.b16 %v542
      %v1796 = vunpack.c.l.b16 %v543
      %v1797 = vunpack.c.h.b16 %v543
      %v1798 = vunpack.c.l.b16 %v544
      %v1799 = vunpack.c.h.b16 %v544
      %v1800 = vunpack.c.l.b16 %v545
      %v1801 = vunpack.c.h.b16 %v545
      %v1802 = vunpack.c.l.b16 %v546
      %v1803 = vunpack.c.h.b16 %v546
      %v1804 = vunpack.c.l.b16 %v547
      %v1805 = vunpack.c.h.b16 %v547
      %v1806 = vunpack.c.l.b16 %v548
      %v1807 = vunpack.c.h.b16 %v548
      %v1808 = vunpack.c.l.b16 %v549
      %v1809 = vunpack.c.h.b16 %v549
      %v1810 = vunpack.c.l.b16 %v550
      %v1811 = vunpack.c.h.b16 %v550
      %v1812 = vunpack.c.l.b16 %v551
      %v1813 = vunpack.c.h.b16 %v551
      %v1814 = vunpack.c.l.b16 %v552
      %v1815 = vunpack.c.h.b16 %v552
      %v1816 = vunpack.c.l.b16 %v553
      %v1817 = vunpack.c.h.b16 %v553
      %v1818 = vunpack.c.l.b16 %v554
      %v1819 = vunpack.c.h.b16 %v554
      %v1820 = vunpack.c.l.b16 %v555
      %v1821 = vunpack.c.h.b16 %v555
      %v1822 = vunpack.c.l.b16 %v556
      %v1823 = vunpack.c.h.b16 %v556
      %v1824 = vunpack.c.l.b16 %v557
      %v1825 = vunpack.c.h.b16 %v557
      %v1826 = vunpack.c.l.b16 %v558
      %v1827 = vunpack.c.h.b16 %v558
      %v1828 = vunpack.c.l.b16 %v559
      %v1829 = vunpack.c.h.b16 %v559
      %v1830 = vunpack.c.l.b16 %v560
      %v1831 = vunpack.c.h.b16 %v560
      %v1832 = vunpack.c.l.b16 %v561
      %v1833 = vunpack.c.h.b16 %v561
      %v1834 = vunpack.c.l.b16 %v562
      %v1835 = vunpack.c.h.b16 %v562
      %v1836 = vunpack.c.l.b16 %v563
      %v1837 = vunpack.c.h.b16 %v563
      %v1838 = vunpack.c.l.b16 %v564
      %v1839 = vunpack.c.h.b16 %v564
      %v1840 = vunpack.c.l.b16 %v565
      %v1841 = vunpack.c.h.b16 %v565
      %v1842 = vunpack.c.l.b16 %v566
      %v1843 = vunpack.c.h.b16 %v566
      %v1844 = vunpack.c.l.b16 %v567
      %v1845 = vunpack.c.h.b16 %v567
      %v1846 = vunpack.c.l.b16 %v568
      %v1847 = vunpack.c.h.b16 %v568
      %v1848 = vunpack.c.l.b16 %v569
      %v1849 = vunpack.c.h.b16 %v569
      %v1850 = vunpack.c.l.b16 %v570
      %v1851 = vunpack.c.h.b16 %v570
      %v1852 = vunpack.c.l.b16 %v571
      %v1853 = vunpack.c.h.b16 %v571
      %v1854 = vunpack.c.l.b16 %v572
      %v1855 = vunpack.c.h.b16 %v572
      %v1856 = vunpack.c.l.b16 %v573
      %v1857 = vunpack.c.h.b16 %v573
      %v1858 = vunpack.c.l.b16 %v574
      %v1859 = vunpack.c.h.b16 %v574
      %v1860 = vunpack.c.l.b16 %v575
      %v1861 = vunpack.c.h.b16 %v575
      %v1862 = vunpack.c.l.b16 %v576
      %v1863 = vunpack.c.h.b16 %v576
      %v1864 = vunpack.c.l.b16 %v577
      %v1865 = vunpack.c.h.b16 %v577
      %v1866 = vunpack.c.l.b16 %v578
      %v1867 = vunpack.c.h.b16 %v578
      %v1868 = vunpack.c.l.b16 %v579
      %v1869 = vunpack.c.h.b16 %v579
      %v1870 = vunpack.c.l.b16 %v580
      %v1871 = vunpack.c.h.b16 %v580
      %v1872 = vunpack.c.l.b16 %v581
      %v1873 = vunpack.c.h.b16 %v581
      %v1874 = vunpack.c.l.b16 %v582
      %v1875 = vunpack.c.h.b16 %v582
      %v1876 = vunpack.c.l.b16 %v583
      %v1877 = vunpack.c.h.b16 %v583
      %v1878 = vunpack.c.l.b16 %v584
      %v1879 = vunpack.c.h.b16 %v584
      %v1880 = vunpack.c.l.b16 %v585
      %v1881 = vunpack.c.h.b16 %v585
      %v1882 = vunpack.c.l.b16 %v586
      %v1883 = vunpack.c.h.b16 %v586
      %v1884 = vunpack.c.l.b16 %v587
      %v1885 = vunpack.c.h.b16 %v587
      %v1886 = vunpack.c.l.b16 %v588
      %v1887 = vunpack.c.h.b16 %v588
      %v1888 = vunpack.c.l.b16 %v589
      %v1889 = vunpack.c.h.b16 %v589
      %v1890 = vunpack.c.l.b16 %v590
      %v1891 = vunpack.c.h.b16 %v590
      %v1892 = vunpack.c.l.b16 %v591
      %v1893 = vunpack.c.h.b16 %v591
      %v1894 = vunpack.c.l.b16 %v592
      %v1895 = vunpack.c.h.b16 %v592
      %v1896 = vunpack.c.l.b16 %v593
      %v1897 = vunpack.c.h.b16 %v593
      %v1898 = vunpack.c.l.b16 %v594
      %v1899 = vunpack.c.h.b16 %v594
      %v1900 = vunpack.c.l.b16 %v595
      %v1901 = vunpack.c.h.b16 %v595
      %v1902 = vunpack.c.l.b16 %v596
      %v1903 = vunpack.c.h.b16 %v596
      %v1904 = vunpack.c.l.b16 %v597
      %v1905 = vunpack.c.h.b16 %v597
      %v1906 = vunpack.c.l.b16 %v598
      %v1907 = vunpack.c.h.b16 %v598
      %v1908 = vunpack.c.l.b16 %v599
      %v1909 = vunpack.c.h.b16 %v599
      %v1910 = vunpack.c.l.b16 %v600
      %v1911 = vunpack.c.h.b16 %v600
      %v1912 = vunpack.c.l.b16 %v601
      %v1913 = vunpack.c.h.b16 %v601
      %v1914 = vunpack.c.l.b16 %v602
      %v1915 = vunpack.c.h.b16 %v602
      %v1916 = vunpack.c.l.b16 %v603
      %v1917 = vunpack.c.h.b16 %v603
      %v1918 = vunpack.c.l.b16 %v604
      %v1919 = vunpack.c.h.b16 %v604
      %v1920 = vunpack.c.l.b16 %v605
      %v1921 = vunpack.c.h.b16 %v605
      %v1922 = vunpack.c.l.b16 %v606
      %v1923 = vunpack.c.h.b16 %v606
      %v1924 = vunpack.c.l.b16 %v607
      %v1925 = vunpack.c.h.b16 %v607
      %v1926 = vunpack.c.l.b16 %v608
      %v1927 = vunpack.c.h.b16 %v608
      %v1928 = vunpack.c.l.b16 %v609
      %v1929 = vunpack.c.h.b16 %v609
      %v1930 = vunpack.c.l.b16 %v610
      %v1931 = vunpack.c.h.b16 %v610
      %v1932 = vunpack.c.l.b16 %v611
      %v1933 = vunpack.c.h.b16 %v611
      %v1934 = vunpack.c.l.b16 %v612
      %v1935 = vunpack.c.h.b16 %v612
      %v1936 = vunpack.c.l.b16 %v613
      %v1937 = vunpack.c.h.b16 %v613
      %v1938 = vunpack.c.l.b16 %v614
      %v1939 = vunpack.c.h.b16 %v614
      %v1940 = vunpack.c.l.b16 %v615
      %v1941 = vunpack.c.h.b16 %v615
      %v1942 = vunpack.c.l.b16 %v616
      %v1943 = vunpack.c.h.b16 %v616
      %v1944 = vunpack.c.l.b16 %v617
      %v1945 = vunpack.c.h.b16 %v617
      %v1946 = vunpack.c.l.b16 %v618
      %v1947 = vunpack.c.h.b16 %v618
      %v1948 = vunpack.c.l.b16 %v619
      %v1949 = vunpack.c.h.b16 %v619
      %v1950 = vunpack.c.l.b16 %v620
      %v1951 = vunpack.c.h.b16 %v620
      %v1952 = vunpack.c.l.b16 %v621
      %v1953 = vunpack.c.h.b16 %v621
      %v1954 = vunpack.c.l.b16 %v622
      %v1955 = vunpack.c.h.b16 %v622
      %v1956 = vunpack.c.l.b16 %v623
      %v1957 = vunpack.c.h.b16 %v623
      %v1958 = vunpack.c.l.b16 %v624
      %v1959 = vunpack.c.h.b16 %v624
      %v1960 = vunpack.c.l.b16 %v625
      %v1961 = vunpack.c.h.b16 %v625
      %v1962 = vunpack.c.l.b16 %v626
      %v1963 = vunpack.c.h.b16 %v626
      %v1964 = vunpack.c.l.b16 %v627
      %v1965 = vunpack.c.h.b16 %v627
      %v1966 = vunpack.c.l.b16 %v628
      %v1967 = vunpack.c.h.b16 %v628
      %v1968 = vunpack.c.l.b16 %v629
      %v1969 = vunpack.c.h.b16 %v629
      %v1970 = vunpack.c.l.b16 %v630
      %v1971 = vunpack.c.h.b16 %v630
      %v1972 = vunpack.c.l.b16 %v631
      %v1973 = vunpack.c.h.b16 %v631
      %v1974 = vunpack.c.l.b16 %v632
      %v1975 = vunpack.c.h.b16 %v632
      %v1976 = vunpack.c.l.b16 %v633
      %v1977 = vunpack.c.h.b16 %v633
      %v1978 = vunpack.c.l.b16 %v634
      %v1979 = vunpack.c.h.b16 %v634
      %v1980 = vunpack.c.l.b16 %v635
      %v1981 = vunpack.c.h.b16 %v635
      %v1982 = vunpack.c.l.b16 %v636
      %v1983 = vunpack.c.h.b16 %v636
      %v1984 = vunpack.c.l.b16 %v637
      %v1985 = vunpack.c.h.b16 %v637
      %v1986 = vunpack.c.l.b16 %v638
      %v1987 = vunpack.c.h.b16 %v638
      %v1988 = vunpack.c.l.b16 %v639
      %v1989 = vunpack.c.h.b16 %v639
      %v1990 = vunpack.c.l.b16 %v640
      %v1991 = vunpack.c.h.b16 %v640
      %v1992 = vunpack.c.l.b16 %v641
      %v1993 = vunpack.c.h.b16 %v641
      %v1994 = vunpack.c.l.b16 %v642
      %v1995 = vunpack.c.h.b16 %v642
      %v1996 = vunpack.c.l.b16 %v643
      %v1997 = vunpack.c.h.b16 %v643
      %v1998 = vunpack.c.l.b16 %v644
      %v1999 = vunpack.c.h.b16 %v644
      %v2000 = vunpack.c.l.b16 %v645
      %v2001 = vunpack.c.h.b16 %v645
      %v2002 = vunpack.c.l.b16 %v646
      %v2003 = vunpack.c.h.b16 %v646
      %v2004 = vunpack.c.l.b16 %v647
      %v2005 = vunpack.c.h.b16 %v647
      %v2006 = vunpack.c.l.b16 %v648
      %v2007 = vunpack.c.h.b16 %v648
      %v2008 = vunpack.c.l.b16 %v649
      %v2009 = vunpack.c.h.b16 %v649
      %v2010 = vunpack.c.l.b16 %v650
      %v2011 = vunpack.c.h.b16 %v650
      %v2012 = vunpack.c.l.b16 %v651
      %v2013 = vunpack.c.h.b16 %v651
      %v2014 = vunpack.c.l.b16 %v652
      %v2015 = vunpack.c.h.b16 %v652
      %v2016 = vpack.c.b16 %v1122, %v1120
      %v2017 = vpack.c.b16 %v1123, %v1121
      %v2018 = vpack.c.b16 %v1126, %v1124
      %v2019 = vpack.c.b16 %v1127, %v1125
      %v2020 = vpack.c.b16 %v1130, %v1128
      %v2021 = vpack.c.b16 %v1131, %v1129
      %v2022 = vpack.c.b16 %v1134, %v1132
      %v2023 = vpack.c.b16 %v1135, %v1133
      %v2024 = vpack.c.b16 %v1138, %v1136
      %v2025 = vpack.c.b16 %v1139, %v1137
      %v2026 = vpack.c.b16 %v1142, %v1140
      %v2027 = vpack.c.b16 %v1143, %v1141
      %v2028 = vpack.c.b16 %v1146, %v1144
      %v2029 = vpack.c.b16 %v1147, %v1145
      %v2030 = vpack.c.b16 %v1150, %v1148
      %v2031 = vpack.c.b16 %v1151, %v1149
      %v2032 = vpack.c.b16 %v1154, %v1152
      %v2033 = vpack.c.b16 %v1155, %v1153
      %v2034 = vpack.c.b16 %v1158, %v1156
      %v2035 = vpack.c.b16 %v1159, %v1157
      %v2036 = vpack.c.b16 %v1162, %v1160
      %v2037 = vpack.c.b16 %v1163, %v1161
      %v2038 = vpack.c.b16 %v1166, %v1164
      %v2039 = vpack.c.b16 %v1167, %v1165
      %v2040 = vpack.c.b16 %v1170, %v1168
      %v2041 = vpack.c.b16 %v1171, %v1169
      %v2042 = vpack.c.b16 %v1174, %v1172
      %v2043 = vpack.c.b16 %v1175, %v1173
      %v2044 = vpack.c.b16 %v1178, %v1176
      %v2045 = vpack.c.b16 %v1179, %v1177
      %v2046 = vpack.c.b16 %v1182, %v1180
      %v2047 = vpack.c.b16 %v1183, %v1181
      %v2048 = vpack.c.b16 %v1186, %v1184
      %v2049 = vpack.c.b16 %v1187, %v1185
      %v2050 = vpack.c.b16 %v1190, %v1188
      %v2051 = vpack.c.b16 %v1191, %v1189
      %v2052 = vpack.c.b16 %v1194, %v1192
      %v2053 = vpack.c.b16 %v1195, %v1193
      %v2054 = vpack.c.b16 %v1198, %v1196
      %v2055 = vpack.c.b16 %v1199, %v1197
      %v2056 = vpack.c.b16 %v1202, %v1200
      %v2057 = vpack.c.b16 %v1203, %v1201
      %v2058 = vpack.c.b16 %v1206, %v1204
      %v2059 = vpack.c.b16 %v1207, %v1205
      %v2060 = vpack.c.b16 %v1210, %v1208
      %v2061 = vpack.c.b16 %v1211, %v1209
      %v2062 = vpack.c.b16 %v1214, %v1212
      %v2063 = vpack.c.b16 %v1215, %v1213
      %v2064 = vpack.c.b16 %v1218, %v1216
      %v2065 = vpack.c.b16 %v1219, %v1217
      %v2066 = vpack.c.b16 %v1222, %v1220
      %v2067 = vpack.c.b16 %v1223, %v1221
      %v2068 = vpack.c.b16 %v1226, %v1224
      %v2069 = vpack.c.b16 %v1227, %v1225
      %v2070 = vpack.c.b16 %v1230, %v1228
      %v2071 = vpack.c.b16 %v1231, %v1229
      %v2072 = vpack.c.b16 %v1234, %v1232
      %v2073 = vpack.c.b16 %v1235, %v1233
      %v2074 = vpack.c.b16 %v1238, %v1236
      %v2075 = vpack.c.b16 %v1239, %v1237
      %v2076 = vpack.c.b16 %v1242, %v1240
      %v2077 = vpack.c.b16 %v1243, %v1241
      %v2078 = vpack.c.b16 %v1246, %v1244
      %v2079 = vpack.c.b16 %v1247, %v1245
      %v2080 = vpack.c.b16 %v1250, %v1248
      %v2081 = vpack.c.b16 %v1251, %v1249
      %v2082 = vpack.c.b16 %v1254, %v1252
      %v2083 = vpack.c.b16 %v1255, %v1253
      %v2084 = vpack.c.b16 %v1258, %v1256
      %v2085 = vpack.c.b16 %v1259, %v1257
      %v2086 = vpack.c.b16 %v1262, %v1260
      %v2087 = vpack.c.b16 %v1263, %v1261
      %v2088 = vpack.c.b16 %v1266, %v1264
      %v2089 = vpack.c.b16 %v1267, %v1265
      %v2090 = vpack.c.b16 %v1270, %v1268
      %v2091 = vpack.c.b16 %v1271, %v1269
      %v2092 = vpack.c.b16 %v1274, %v1272
      %v2093 = vpack.c.b16 %v1275, %v1273
      %v2094 = vpack.c.b16 %v1278, %v1276
      %v2095 = vpack.c.b16 %v1279, %v1277
      %v2096 = vpack.c.b16 %v1282, %v1280
      %v2097 = vpack.c.b16 %v1283, %v1281
      %v2098 = vpack.c.b16 %v1286, %v1284
      %v2099 = vpack.c.b16 %v1287, %v1285
      %v2100 = vpack.c.b16 %v1290, %v1288
      %v2101 = vpack.c.b16 %v1291, %v1289
      %v2102 = vpack.c.b16 %v1294, %v1292
      %v2103 = vpack.c.b16 %v1295, %v1293
      %v2104 = vpack.c.b16 %v1298, %v1296
      %v2105 = vpack.c.b16 %v1299, %v1297
      %v2106 = vpack.c.b16 %v1302, %v1300
      %v2107 = vpack.c.b16 %v1303, %v1301
      %v2108 = vpack.c.b16 %v1306, %v1304
      %v2109 = vpack.c.b16 %v1307, %v1305
      %v2110 = vpack.c.b16 %v1310, %v1308
      %v2111 = vpack.c.b16 %v1311, %v1309
      %v2112 = vpack.c.b16 %v1314, %v1312
      %v2113 = vpack.c.b16 %v1315, %v1313
      %v2114 = vpack.c.b16 %v1318, %v1316
      %v2115 = vpack.c.b16 %v1319, %v1317
      %v2116 = vpack.c.b16 %v1322, %v1320
      %v2117 = vpack.c.b16 %v1323, %v1321
      %v2118 = vpack.c.b16 %v1326, %v1324
      %v2119 = vpack.c.b16 %v1327, %v1325
      %v2120 = vpack.c.b16 %v1330, %v1328
      %v2121 = vpack.c.b16 %v1331, %v1329
      %v2122 = vpack.c.b16 %v1334, %v1332
      %v2123 = vpack.c.b16 %v1335, %v1333
      %v2124 = vpack.c.b16 %v1338, %v1336
      %v2125 = vpack.c.b16 %v1339, %v1337
      %v2126 = vpack.c.b16 %v1342, %v1340
      %v2127 = vpack.c.b16 %v1343, %v1341
      %v2128 = vpack.c.b16 %v1346, %v1344
      %v2129 = vpack.c.b16 %v1347, %v1345
      %v2130 = vpack.c.b16 %v1350, %v1348
      %v2131 = vpack.c.b16 %v1351, %v1349
      %v2132 = vpack.c.b16 %v1354, %v1352
      %v2133 = vpack.c.b16 %v1355, %v1353
      %v2134 = vpack.c.b16 %v1358, %v1356
      %v2135 = vpack.c.b16 %v1359, %v1357
      %v2136 = vpack.c.b16 %v1362, %v1360
      %v2137 = vpack.c.b16 %v1363, %v1361
      %v2138 = vpack.c.b16 %v1366, %v1364
      %v2139 = vpack.c.b16 %v1367, %v1365
      %v2140 = vpack.c.b16 %v1370, %v1368
      %v2141 = vpack.c.b16 %v1371, %v1369
      %v2142 = vpack.c.b16 %v1374, %v1372
      %v2143 = vpack.c.b16 %v1375, %v1373
      %v2144 = vpack.c.b16 %v1378, %v1376
      %v2145 = vpack.c.b16 %v1379, %v1377
      %v2146 = vpack.c.b16 %v1382, %v1380
      %v2147 = vpack.c.b16 %v1383, %v1381
      %v2148 = vpack.c.b16 %v1386, %v1384
      %v2149 = vpack.c.b16 %v1387, %v1385
      %v2150 = vpack.c.b16 %v1390, %v1388
      %v2151 = vpack.c.b16 %v1391, %v1389
      %v2152 = vpack.c.b16 %v1394, %v1392
      %v2153 = vpack.c.b16 %v1395, %v1393
      %v2154 = vpack.c.b16 %v1398, %v1396
      %v2155 = vpack.c.b16 %v1399, %v1397
      %v2156 = vpack.c.b16 %v1402, %v1400
      %v2157 = vpack.c.b16 %v1403, %v1401
      %v2158 = vpack.c.b16 %v1406, %v1404
      %v2159 = vpack.c.b16 %v1407, %v1405
      %v2160 = vpack.c.b16 %v1410, %v1408
      %v2161 = vpack.c.b16 %v1411, %v1409
      %v2162 = vpack.c.b16 %v1414, %v1412
      %v2163 = vpack.c.b16 %v1415, %v1413
      %v2164 = vpack.c.b16 %v1418, %v1416
      %v2165 = vpack.c.b16 %v1419, %v1417
      %v2166 = vpack.c.b16 %v1422, %v1420
      %v2167 = vpack.c.b16 %v1423, %v1421
      %v2168 = vpack.c.b16 %v1426, %v1424
      %v2169 = vpack.c.b16 %v1427, %v1425
      %v2170 = vpack.c.b16 %v1430, %v1428
      %v2171 = vpack.c.b16 %v1431, %v1429
      %v2172 = vpack.c.b16 %v1434, %v1432
      %v2173 = vpack.c.b16 %v1435, %v1433
      %v2174 = vpack.c.b16 %v1438, %v1436
      %v2175 = vpack.c.b16 %v1439, %v1437
      %v2176 = vpack.c.b16 %v1442, %v1440
      %v2177 = vpack.c.b16 %v1443, %v1441
      %v2178 = vpack.c.b16 %v1446, %v1444
      %v2179 = vpack.c.b16 %v1447, %v1445
      %v2180 = vpack.c.b16 %v1450, %v1448
      %v2181 = vpack.c.b16 %v1451, %v1449
      %v2182 = vpack.c.b16 %v1454, %v1452
      %v2183 = vpack.c.b16 %v1455, %v1453
      %v2184 = vpack.c.b16 %v1458, %v1456
      %v2185 = vpack.c.b16 %v1459, %v1457
      %v2186 = vpack.c.b16 %v1462, %v1460
      %v2187 = vpack.c.b16 %v1463, %v1461
      %v2188 = vpack.c.b16 %v1466, %v1464
      %v2189 = vpack.c.b16 %v1467, %v1465
      %v2190 = vpack.c.b16 %v1470, %v1468
      %v2191 = vpack.c.b16 %v1471, %v1469
      %v2192 = vpack.c.b16 %v1474, %v1472
      %v2193 = vpack.c.b16 %v1475, %v1473
      %v2194 = vpack.c.b16 %v1478, %v1476
      %v2195 = vpack.c.b16 %v1479, %v1477
      %v2196 = vpack.c.b16 %v1482, %v1480
      %v2197 = vpack.c.b16 %v1483, %v1481
      %v2198 = vpack.c.b16 %v1486, %v1484
      %v2199 = vpack.c.b16 %v1487, %v1485
      %v2200 = vpack.c.b16 %v1490, %v1488
      %v2201 = vpack.c.b16 %v1491, %v1489
      %v2202 = vpack.c.b16 %v1494, %v1492
      %v2203 = vpack.c.b16 %v1495, %v1493
      %v2204 = vpack.c.b16 %v1498, %v1496
      %v2205 = vpack.c.b16 %v1499, %v1497
      %v2206 = vpack.c.b16 %v1502, %v1500
      %v2207 = vpack.c.b16 %v1503, %v1501
      %v2208 = vpack.c.b16 %v1506, %v1504
      %v2209 = vpack.c.b16 %v1507, %v1505
      %v2210 = vpack.c.b16 %v1510, %v1508
      %v2211 = vpack.c.b16 %v1511, %v1509
      %v2212 = vpack.c.b16 %v1514, %v1512
      %v2213 = vpack.c.b16 %v1515, %v1513
      %v2214 = vpack.c.b16 %v1518, %v1516
      %v2215 = vpack.c.b16 %v1519, %v1517
      %v2216 = vpack.c.b16 %v1522, %v1520
      %v2217 = vpack.c.b16 %v1523, %v1521
      %v2218 = vpack.c.b16 %v1526, %v1524
      %v2219 = vpack.c.b16 %v1527, %v1525
      %v2220 = vpack.c.b16 %v1530, %v1528
      %v2221 = vpack.c.b16 %v1531, %v1529
      %v2222 = vpack.c.b16 %v1534, %v1532
      %v2223 = vpack.c.b16 %v1535, %v1533
      %v2224 = vpack.c.b16 %v1538, %v1536
      %v2225 = vpack.c.b16 %v1539, %v1537
      %v2226 = vpack.c.b16 %v1542, %v1540
      %v2227 = vpack.c.b16 %v1543, %v1541
      %v2228 = vpack.c.b16 %v1546, %v1544
      %v2229 = vpack.c.b16 %v1547, %v1545
      %v2230 = vpack.c.b16 %v1550, %v1548
      %v2231 = vpack.c.b16 %v1551, %v1549
      %v2232 = vpack.c.b16 %v1554, %v1552
      %v2233 = vpack.c.b16 %v1555, %v1553
      %v2234 = vpack.c.b16 %v1558, %v1556
      %v2235 = vpack.c.b16 %v1559, %v1557
      %v2236 = vpack.c.b16 %v1562, %v1560
      %v2237 = vpack.c.b16 %v1563, %v1561
      %v2238 = vpack.c.b16 %v1566, %v1564
      %v2239 = vpack.c.b16 %v1567, %v1565
      %v2240 = vpack.c.b16 %v1570, %v1568
      %v2241 = vpack.c.b16 %v1571, %v1569
      %v2242 = vpack.c.b16 %v1574, %v1572
      %v2243 = vpack.c.b16 %v1575, %v1573
      %v2244 = vpack.c.b16 %v1578, %v1576
      %v2245 = vpack.c.b16 %v1579, %v1577
      %v2246 = vpack.c.b16 %v1582, %v1580
      %v2247 = vpack.c.b16 %v1583, %v1581
      %v2248 = vpack.c.b16 %v1586, %v1584
      %v2249 = vpack.c.b16 %v1587, %v1585
      %v2250 = vpack.c.b16 %v1590, %v1588
      %v2251 = vpack.c.b16 %v1591, %v1589
      %v2252 = vpack.c.b16 %v1594, %v1592
      %v2253 = vpack.c.b16 %v1595, %v1593
      %v2254 = vpack.c.b16 %v1598, %v1596
      %v2255 = vpack.c.b16 %v1599, %v1597
      %v2256 = vpack.c.b16 %v1602, %v1600
      %v2257 = vpack.c.b16 %v1603, %v1601
      %v2258 = vpack.c.b16 %v1606, %v1604
      %v2259 = vpack.c.b16 %v1607, %v1605
      %v2260 = vpack.c.b16 %v1610, %v1608
      %v2261 = vpack.c.b16 %v1611, %v1609
      %v2262 = vpack.c.b16 %v1614, %v1612
      %v2263 = vpack.c.b16 %v1615, %v1613
      %v2264 = vpack.c.b16 %v1618, %v1616
      %v2265 = vpack.c.b16 %v1619, %v1617
      %v2266 = vpack.c.b16 %v1622, %v1620
      %v2267 = vpack.c.b16 %v1623, %v1621
      %v2268 = vpack.c.b16 %v1626, %v1624
      %v2269 = vpack.c.b16 %v1627, %v1625
      %v2270 = vpack.c.b16 %v1630, %v1628
      %v2271 = vpack.c.b16 %v1631, %v1629
      %v2272 = vpack.c.b16 %v1634, %v1632
      %v2273 = vpack.c.b16 %v1635, %v1633
      %v2274 = vpack.c.b16 %v1638, %v1636
      %v2275 = vpack.c.b16 %v1639, %v1637
      %v2276 = vpack.c.b16 %v1642, %v1640
      %v2277 = vpack.c.b16 %v1643, %v1641
      %v2278 = vpack.c.b16 %v1646, %v1644
      %v2279 = vpack.c.b16 %v1647, %v1645
      %v2280 = vpack.c.b16 %v1650, %v1648
      %v2281 = vpack.c.b16 %v1651, %v1649
      %v2282 = vpack.c.b16 %v1654, %v1652
      %v2283 = vpack.c.b16 %v1655, %v1653
      %v2284 = vpack.c.b16 %v1658, %v1656
      %v2285 = vpack.c.b16 %v1659, %v1657
      %v2286 = vpack.c.b16 %v1662, %v1660
      %v2287 = vpack.c.b16 %v1663, %v1661
      %v2288 = vpack.c.b16 %v1666, %v1664
      %v2289 = vpack.c.b16 %v1667, %v1665
      %v2290 = vpack.c.b16 %v1670, %v1668
      %v2291 = vpack.c.b16 %v1671, %v1669
      %v2292 = vpack.c.b16 %v1674, %v1672
      %v2293 = vpack.c.b16 %v1675, %v1673
      %v2294 = vpack.c.b16 %v1678, %v1676
      %v2295 = vpack.c.b16 %v1679, %v1677
      %v2296 = vpack.c.b16 %v1682, %v1680
      %v2297 = vpack.c.b16 %v1683, %v1681
      %v2298 = vpack.c.b16 %v1686, %v1684
      %v2299 = vpack.c.b16 %v1687, %v1685
      %v2300 = vpack.c.b16 %v1690, %v1688
      %v2301 = vpack.c.b16 %v1691, %v1689
      %v2302 = vpack.c.b16 %v1694, %v1692
      %v2303 = vpack.c.b16 %v1695, %v1693
      %v2304 = vpack.c.b16 %v1698, %v1696
      %v2305 = vpack.c.b16 %v1699, %v1697
      %v2306 = vpack.c.b16 %v1702, %v1700
      %v2307 = vpack.c.b16 %v1703, %v1701
      %v2308 = vpack.c.b16 %v1706, %v1704
      %v2309 = vpack.c.b16 %v1707, %v1705
      %v2310 = vpack.c.b16 %v1710, %v1708
      %v2311 = vpack.c.b16 %v1711, %v1709
      %v2312 = vpack.c.b16 %v1714, %v1712
      %v2313 = vpack.c.b16 %v1715, %v1713
      %v2314 = vpack.c.b16 %v1718, %v1716
      %v2315 = vpack.c.b16 %v1719, %v1717
      %v2316 = vpack.c.b16 %v1722, %v1720
      %v2317 = vpack.c.b16 %v1723, %v1721
      %v2318 = vpack.c.b16 %v1726, %v1724
      %v2319 = vpack.c.b16 %v1727, %v1725
      %v2320 = vpack.c.b16 %v1730, %v1728
      %v2321 = vpack.c.b16 %v1731, %v1729
      %v2322 = vpack.c.b16 %v1734, %v1732
      %v2323 = vpack.c.b16 %v1735, %v1733
      %v2324 = vpack.c.b16 %v1738, %v1736
      %v2325 = vpack.c.b16 %v1739, %v1737
      %v2326 = vpack.c.b16 %v1742, %v1740
      %v2327 = vpack.c.b16 %v1743, %v1741
      %v2328 = vpack.c.b16 %v1746, %v1744
      %v2329 = vpack.c.b16 %v1747, %v1745
      %v2330 = vpack.c.b16 %v1750, %v1748
      %v2331 = vpack.c.b16 %v1751, %v1749
      %v2332 = vpack.c.b16 %v1754, %v1752
      %v2333 = vpack.c.b16 %v1755, %v1753
      %v2334 = vpack.c.b16 %v1758, %v1756
      %v2335 = vpack.c.b16 %v1759, %v1757
      %v2336 = vpack.c.b16 %v1762, %v1760
      %v2337 = vpack.c.b16 %v1763, %v1761
      %v2338 = vpack.c.b16 %v1766, %v1764
      %v2339 = vpack.c.b16 %v1767, %v1765
      %v2340 = vpack.c.b16 %v1770, %v1768
      %v2341 = vpack.c.b16 %v1771, %v1769
      %v2342 = vpack.c.b16 %v1774, %v1772
      %v2343 = vpack.c.b16 %v1775, %v1773
      %v2344 = vpack.c.b16 %v1778, %v1776
      %v2345 = vpack.c.b16 %v1779, %v1777
      %v2346 = vpack.c.b16 %v1782, %v1780
      %v2347 = vpack.c.b16 %v1783, %v1781
      %v2348 = vpack.c.b16 %v1786, %v1784
      %v2349 = vpack.c.b16 %v1787, %v1785
      %v2350 = vpack.c.b16 %v1790, %v1788
      %v2351 = vpack.c.b16 %v1791, %v1789
      %v2352 = vpack.c.b16 %v1794, %v1792
      %v2353 = vpack.c.b16 %v1795, %v1793
      %v2354 = vpack.c.b16 %v1798, %v1796
      %v2355 = vpack.c.b16 %v1799, %v1797
      %v2356 = vpack.c.b16 %v1802, %v1800
      %v2357 = vpack.c.b16 %v1803, %v1801
      %v2358 = vpack.c.b16 %v1806, %v1804
      %v2359 = vpack.c.b16 %v1807, %v1805
      %v2360 = vpack.c.b16 %v1810, %v1808
      %v2361 = vpack.c.b16 %v1811, %v1809
      %v2362 = vpack.c.b16 %v1814, %v1812
      %v2363 = vpack.c.b16 %v1815, %v1813
      %v2364 = vpack.c.b16 %v1818, %v1816
      %v2365 = vpack.c.b16 %v1819, %v1817
      %v2366 = vpack.c.b16 %v1822, %v1820
      %v2367 = vpack.c.b16 %v1823, %v1821
      %v2368 = vpack.c.b16 %v1826, %v1824
      %v2369 = vpack.c.b16 %v1827, %v1825
      %v2370 = vpack.c.b16 %v1830, %v1828
      %v2371 = vpack.c.b16 %v1831, %v1829
      %v2372 = vpack.c.b16 %v1834, %v1832
      %v2373 = vpack.c.b16 %v1835, %v1833
      %v2374 = vpack.c.b16 %v1838, %v1836
      %v2375 = vpack.c.b16 %v1839, %v1837
      %v2376 = vpack.c.b16 %v1842, %v1840
      %v2377 = vpack.c.b16 %v1843, %v1841
      %v2378 = vpack.c.b16 %v1846, %v1844
      %v2379 = vpack.c.b16 %v1847, %v1845
      %v2380 = vpack.c.b16 %v1850, %v1848
      %v2381 = vpack.c.b16 %v1851, %v1849
      %v2382 = vpack.c.b16 %v1854, %v1852
      %v2383 = vpack.c.b16 %v1855, %v1853
      %v2384 = vpack.c.b16 %v1858, %v1856
      %v2385 = vpack.c.b16 %v1859, %v1857
      %v2386 = vpack.c.b16 %v1862, %v1860
      %v2387 = vpack.c.b16 %v1863, %v1861
      %v2388 = vpack.c.b16 %v1866, %v1864
      %v2389 = vpack.c.b16 %v1867, %v1865
      %v2390 = vpack.c.b16 %v1870, %v1868
      %v2391 = vpack.c.b16 %v1871, %v1869
      %v2392 = vpack.c.b16 %v1874, %v1872
      %v2393 = vpack.c.b16 %v1875, %v1873
      %v2394 = vpack.c.b16 %v1878, %v1876
      %v2395 = vpack.c.b16 %v1879, %v1877
      %v2396 = vpack.c.b16 %v1882, %v1880
      %v2397 = vpack.c.b16 %v1883, %v1881
      %v2398 = vpack.c.b16 %v1886, %v1884
      %v2399 = vpack.c.b16 %v1887, %v1885
      %v2400 = vpack.c.b16 %v1890, %v1888
      %v2401 = vpack.c.b16 %v1891, %v1889
      %v2402 = vpack.c.b16 %v1894, %v1892
      %v2403 = vpack.c.b16 %v1895, %v1893
      %v2404 = vpack.c.b16 %v1898, %v1896
      %v2405 = vpack.c.b16 %v1899, %v1897
      %v2406 = vpack.c.b16 %v1902, %v1900
      %v2407 = vpack.c.b16 %v1903, %v1901
      %v2408 = vpack.c.b16 %v1906, %v1904
      %v2409 = vpack.c.b16 %v1907, %v1905
      %v2410 = vpack.c.b16 %v1910, %v1908
      %v2411 = vpack.c.b16 %v1911, %v1909
      %v2412 = vpack.c.b16 %v1914, %v1912
      %v2413 = vpack.c.b16 %v1915, %v1913
      %v2414 = vpack.c.b16 %v1918, %v1916
      %v2415 = vpack.c.b16 %v1919, %v1917
      %v2416 = vpack.c.b16 %v1922, %v1920
      %v2417 = vpack.c.b16 %v1923, %v1921
      %v2418 = vpack.c.b16 %v1926, %v1924
      %v2419 = vpack.c.b16 %v1927, %v1925
      %v2420 = vpack.c.b16 %v1930, %v1928
      %v2421 = vpack.c.b16 %v1931, %v1929
      %v2422 = vpack.c.b16 %v1934, %v1932
      %v2423 = vpack.c.b16 %v1935, %v1933
      %v2424 = vpack.c.b16 %v1938, %v1936
      %v2425 = vpack.c.b16 %v1939, %v1937
      %v2426 = vpack.c.b16 %v1942, %v1940
      %v2427 = vpack.c.b16 %v1943, %v1941
      %v2428 = vpack.c.b16 %v1946, %v1944
      %v2429 = vpack.c.b16 %v1947, %v1945
      %v2430 = vpack.c.b16 %v1950, %v1948
      %v2431 = vpack.c.b16 %v1951, %v1949
      %v2432 = vpack.c.b16 %v1954, %v1952
      %v2433 = vpack.c.b16 %v1955, %v1953
      %v2434 = vpack.c.b16 %v1958, %v1956
      %v2435 = vpack.c.b16 %v1959, %v1957
      %v2436 = vpack.c.b16 %v1962, %v1960
      %v2437 = vpack.c.b16 %v1963, %v1961
      %v2438 = vpack.c.b16 %v1966, %v1964
      %v2439 = vpack.c.b16 %v1967, %v1965
      %v2440 = vpack.c.b16 %v1970, %v1968
      %v2441 = vpack.c.b16 %v1971, %v1969
      %v2442 = vpack.c.b16 %v1974, %v1972
      %v2443 = vpack.c.b16 %v1975, %v1973
      %v2444 = vpack.c.b16 %v1978, %v1976
      %v2445 = vpack.c.b16 %v1979, %v1977
      %v2446 = vpack.c.b16 %v1982, %v1980
      %v2447 = vpack.c.b16 %v1983, %v1981
      %v2448 = vpack.c.b16 %v1986, %v1984
      %v2449 = vpack.c.b16 %v1987, %v1985
      %v2450 = vpack.c.b16 %v1990, %v1988
      %v2451 = vpack.c.b16 %v1991, %v1989
      %v2452 = vpack.c.b16 %v1994, %v1992
      %v2453 = vpack.c.b16 %v1995, %v1993
      %v2454 = vpack.c.b16 %v1998, %v1996
      %v2455 = vpack.c.b16 %v1999, %v1997
      %v2456 = vpack.c.b16 %v2002, %v2000
      %v2457 = vpack.c.b16 %v2003, %v2001
      %v2458 = vpack.c.b16 %v2006, %v2004
      %v2459 = vpack.c.b16 %v2007, %v2005
      %v2460 = vpack.c.b16 %v2010, %v2008
      %v2461 = vpack.c.b16 %v2011, %v2009
      %v2462 = vpack.c.b16 %v2014, %v2012
      %v2463 = vpack.c.b16 %v2015, %v2013
      %v2707 = vunpack.c.l.b16 %v653
      %v2708 = vunpack.c.l.b16 %v654
      %v2709 = vunpack.c.l.b16 %v655
      %v2710 = vunpack.c.l.b16 %v656
      %v2711 = vunpack.c.l.b16 %v657
      %v2712 = vunpack.c.l.b16 %v658
      %v2713 = vunpack.c.l.b16 %v659
      %v2714 = vunpack.c.l.b16 %v660
      %v2715 = vunpack.c.l.b16 %v661
      %v2716 = vunpack.c.l.b16 %v662
      %v2717 = vunpack.c.l.b16 %v663
      %v2718 = vunpack.c.l.b16 %v664
      %v2719 = vunpack.c.l.b16 %v665
      %v2720 = vunpack.c.l.b16 %v666
      %v2721 = vunpack.c.l.b16 %v667
      %v2722 = vunpack.c.l.b16 %v668
      %v2723 = vunpack.c.l.b16 %v669
      %v2724 = vunpack.c.l.b16 %v670
      %v2725 = vunpack.c.l.b16 %v671
      %v2726 = vpack.c.b16 %v2708, %v2707
      %v2727 = vpack.c.b16 %v2710, %v2709
      %v2728 = vpack.c.b16 %v2712, %v2711
      %v2729 = vpack.c.b16 %v2714, %v2713
      %v2730 = vpack.c.b16 %v2716, %v2715
      %v2731 = vpack.c.b16 %v2718, %v2717
      %v2732 = vpack.c.b16 %v2720, %v2719
      %v2733 = vpack.c.b16 %v2722, %v2721
      %v2734 = vpack.c.b16 %v2724, %v2723
      %v2735 = vpack.c.b16 %v2725, %v2725
      %vm2745 = vcmask 154624
      %v2747 = vsel %vm2745, %v2017, 0
      %v2750 = vsel %vm2745, %v2019, 0
      %v2753 = vsel %vm2745, %v2021, 0
      %v2756 = vsel %vm2745, %v2023, 0
      %v2759 = vsel %vm2745, %v2025, 0
      %v2762 = vsel %vm2745, %v2027, 0
      %v2765 = vsel %vm2745, %v2029, 0
      %v2768 = vsel %vm2745, %v2031, 0
      %v2771 = vsel %vm2745, %v2033, 0
      %v2774 = vsel %vm2745, %v2035, 0
      %v2777 = vsel %vm2745, %v2037, 0
      %v2780 = vsel %vm2745, %v2039, 0
      %v2783 = vsel %vm2745, %v2041, 0
      %v2786 = vsel %vm2745, %v2043, 0
      %v2789 = vsel %vm2745, %v2045, 0
      %v2792 = vsel %vm2745, %v2047, 0
      %v2795 = vsel %vm2745, %v2049, 0
      %v2798 = vsel %vm2745, %v2051, 0
      %v2801 = vsel %vm2745, %v2053, 0
      %v2804 = vsel %vm2745, %v2055, 0
      %v2807 = vsel %vm2745, %v2057, 0
      %v2810 = vsel %vm2745, %v2059, 0
      %v2813 = vsel %vm2745, %v2061, 0
      %v2816 = vsel %vm2745, %v2063, 0
      %v2819 = vsel %vm2745, %v2065, 0
      %v2822 = vsel %vm2745, %v2067, 0
      %v2825 = vsel %vm2745, %v2069, 0
      %v2828 = vsel %vm2745, %v2071, 0
      %v2831 = vsel %vm2745, %v2073, 0
      %v2834 = vsel %vm2745, %v2075, 0
      %v2837 = vsel %vm2745, %v2077, 0
      %v2840 = vsel %vm2745, %v2079, 0
      %v2843 = vsel %vm2745, %v2081, 0
      %v2846 = vsel %vm2745, %v2083, 0
      %v2849 = vsel %vm2745, %v2085, 0
      %v2852 = vsel %vm2745, %v2087, 0
      %v2855 = vsel %vm2745, %v2089, 0
      %v2858 = vsel %vm2745, %v2091, 0
      %v2861 = vsel %vm2745, %v2093, 0
      %v2864 = vsel %vm2745, %v2095, 0
      %v2867 = vsel %vm2745, %v2097, 0
      %v2870 = vsel %vm2745, %v2099, 0
      %v2873 = vsel %vm2745, %v2101, 0
      %v2876 = vsel %vm2745, %v2103, 0
      %v2879 = vsel %vm2745, %v2105, 0
      %v2882 = vsel %vm2745, %v2107, 0
      %v2885 = vsel %vm2745, %v2109, 0
      %v2888 = vsel %vm2745, %v2111, 0
      %v2891 = vsel %vm2745, %v2113, 0
      %v2894 = vsel %vm2745, %v2115, 0
      %v2897 = vsel %vm2745, %v2117, 0
      %v2900 = vsel %vm2745, %v2119, 0
      %v2903 = vsel %vm2745, %v2121, 0
      %v2906 = vsel %vm2745, %v2123, 0
      %v2909 = vsel %vm2745, %v2125, 0
      %v2912 = vsel %vm2745, %v2127, 0
      %v2915 = vsel %vm2745, %v2129, 0
      %v2918 = vsel %vm2745, %v2131, 0
      %v2921 = vsel %vm2745, %v2133, 0
      %v2924 = vsel %vm2745, %v2135, 0
      %v2927 = vsel %vm2745, %v2137, 0
      %v2930 = vsel %vm2745, %v2139, 0
      %v2933 = vsel %vm2745, %v2141, 0
      %v2936 = vsel %vm2745, %v2143, 0
      %v2939 = vsel %vm2745, %v2145, 0
      %v2942 = vsel %vm2745, %v2147, 0
      %v2945 = vsel %vm2745, %v2149, 0
      %v2948 = vsel %vm2745, %v2151, 0
      %v2951 = vsel %vm2745, %v2153, 0
      %v2954 = vsel %vm2745, %v2155, 0
      %v2957 = vsel %vm2745, %v2157, 0
      %v2960 = vsel %vm2745, %v2159, 0
      %v2963 = vsel %vm2745, %v2161, 0
      %v2966 = vsel %vm2745, %v2163, 0
      %v2969 = vsel %vm2745, %v2165, 0
      %v2972 = vsel %vm2745, %v2167, 0
      %v2975 = vsel %vm2745, %v2169, 0
      %v2978 = vsel %vm2745, %v2171, 0
      %v2981 = vsel %vm2745, %v2173, 0
      %v2984 = vsel %vm2745, %v2175, 0
      %v2987 = vsel %vm2745, %v2177, 0
      %v2990 = vsel %vm2745, %v2179, 0
      %v2993 = vsel %vm2745, %v2181, 0
      %v2996 = vsel %vm2745, %v2183, 0
      %v2999 = vsel %vm2745, %v2185, 0
      %v3002 = vsel %vm2745, %v2187, 0
      %v3005 = vsel %vm2745, %v2189, 0
      %v3008 = vsel %vm2745, %v2191, 0
      %v3011 = vsel %vm2745, %v2193, 0
      %v3014 = vsel %vm2745, %v2195, 0
      %v3017 = vsel %vm2745, %v2197, 0
      %v3020 = vsel %vm2745, %v2199, 0
      %v3023 = vsel %vm2745, %v2201, 0
      %v3026 = vsel %vm2745, %v2203, 0
      %v3029 = vsel %vm2745, %v2205, 0
      %v3032 = vsel %vm2745, %v2207, 0
      %v3035 = vsel %vm2745, %v2209, 0
      %v3038 = vsel %vm2745, %v2211, 0
      %v3041 = vsel %vm2745, %v2213, 0
      %v3044 = vsel %vm2745, %v2215, 0
      %v3047 = vsel %vm2745, %v2217, 0
      %v3050 = vsel %vm2745, %v2219, 0
      %v3053 = vsel %vm2745, %v2221, 0
      %v3056 = vsel %vm2745, %v2223, 0
      %v3059 = vsel %vm2745, %v2225, 0
      %v3062 = vsel %vm2745, %v2227, 0
      %v3065 = vsel %vm2745, %v2229, 0
      %v3068 = vsel %vm2745, %v2231, 0
      %v3071 = vsel %vm2745, %v2233, 0
      %v3074 = vsel %vm2745, %v2235, 0
      %v3077 = vsel %vm2745, %v2237, 0
      %v3080 = vsel %vm2745, %v2239, 0
      %v3083 = vsel %vm2745, %v2241, 0
      %v3086 = vsel %vm2745, %v2243, 0
      %v3089 = vsel %vm2745, %v2245, 0
      %v3092 = vsel %vm2745, %v2247, 0
      %v3095 = vsel %vm2745, %v2249, 0
      %v3098 = vsel %vm2745, %v2251, 0
      %v3101 = vsel %vm2745, %v2253, 0
      %v3104 = vsel %vm2745, %v2255, 0
      %v3107 = vsel %vm2745, %v2257, 0
      %v3110 = vsel %vm2745, %v2259, 0
      %v3113 = vsel %vm2745, %v2261, 0
      %v3116 = vsel %vm2745, %v2263, 0
      %v3119 = vsel %vm2745, %v2265, 0
      %v3122 = vsel %vm2745, %v2267, 0
      %v3125 = vsel %vm2745, %v2269, 0
      %v3128 = vsel %vm2745, %v2271, 0
      %v3131 = vsel %vm2745, %v2273, 0
      %v3134 = vsel %vm2745, %v2275, 0
      %v3137 = vsel %vm2745, %v2277, 0
      %v3140 = vsel %vm2745, %v2279, 0
      %v3143 = vsel %vm2745, %v2281, 0
      %v3146 = vsel %vm2745, %v2283, 0
      %v3149 = vsel %vm2745, %v2285, 0
      %v3152 = vsel %vm2745, %v2287, 0
      %v3155 = vsel %vm2745, %v2289, 0
      %v3158 = vsel %vm2745, %v2291, 0
      %v3161 = vsel %vm2745, %v2293, 0
      %v3164 = vsel %vm2745, %v2295, 0
      %v3167 = vsel %vm2745, %v2297, 0
      %v3170 = vsel %vm2745, %v2299, 0
      %v3173 = vsel %vm2745, %v2301, 0
      %v3176 = vsel %vm2745, %v2303, 0
      %v3179 = vsel %vm2745, %v2305, 0
      %v3182 = vsel %vm2745, %v2307, 0
      %v3185 = vsel %vm2745, %v2309, 0
      %v3188 = vsel %vm2745, %v2311, 0
      %v3191 = vsel %vm2745, %v2313, 0
      %v3194 = vsel %vm2745, %v2315, 0
      %v3197 = vsel %vm2745, %v2317, 0
      %v3200 = vsel %vm2745, %v2319, 0
      %v3203 = vsel %vm2745, %v2321, 0
      %v3206 = vsel %vm2745, %v2323, 0
      %v3209 = vsel %vm2745, %v2325, 0
      %v3212 = vsel %vm2745, %v2327, 0
      %v3215 = vsel %vm2745, %v2329, 0
      %v3218 = vsel %vm2745, %v2331, 0
      %v3221 = vsel %vm2745, %v2333, 0
      %v3224 = vsel %vm2745, %v2335, 0
      %v3227 = vsel %vm2745, %v2337, 0
      %v3230 = vsel %vm2745, %v2339, 0
      %v3233 = vsel %vm2745, %v2341, 0
      %v3236 = vsel %vm2745, %v2343, 0
      %v3239 = vsel %vm2745, %v2345, 0
      %v3242 = vsel %vm2745, %v2347, 0
      %v3245 = vsel %vm2745, %v2349, 0
      %v3248 = vsel %vm2745, %v2351, 0
      %v3251 = vsel %vm2745, %v2353, 0
      %v3254 = vsel %vm2745, %v2355, 0
      %v3257 = vsel %vm2745, %v2357, 0
      %v3260 = vsel %vm2745, %v2359, 0
      %v3263 = vsel %vm2745, %v2361, 0
      %v3266 = vsel %vm2745, %v2363, 0
      %v3269 = vsel %vm2745, %v2365, 0
      %v3272 = vsel %vm2745, %v2367, 0
      %v3275 = vsel %vm2745, %v2369, 0
      %v3278 = vsel %vm2745, %v2371, 0
      %v3281 = vsel %vm2745, %v2373, 0
      %v3284 = vsel %vm2745, %v2375, 0
      %v3287 = vsel %vm2745, %v2377, 0
      %v3290 = vsel %vm2745, %v2379, 0
      %v3293 = vsel %vm2745, %v2381, 0
      %v3296 = vsel %vm2745, %v2383, 0
      %v3299 = vsel %vm2745, %v2385, 0
      %v3302 = vsel %vm2745, %v2387, 0
      %v3305 = vsel %vm2745, %v2389, 0
      %v3308 = vsel %vm2745, %v2391, 0
      %v3311 = vsel %vm2745, %v2393, 0
      %v3314 = vsel %vm2745, %v2395, 0
      %v3317 = vsel %vm2745, %v2397, 0
      %v3320 = vsel %vm2745, %v2399, 0
      %v3323 = vsel %vm2745, %v2401, 0
      %v3326 = vsel %vm2745, %v2403, 0
      %v3329 = vsel %vm2745, %v2405, 0
      %v3332 = vsel %vm2745, %v2407, 0
      %v3335 = vsel %vm2745, %v2409, 0
      %v3338 = vsel %vm2745, %v2411, 0
      %v3341 = vsel %vm2745, %v2413, 0
      %v3344 = vsel %vm2745, %v2415, 0
      %v3347 = vsel %vm2745, %v2417, 0
      %v3350 = vsel %vm2745, %v2419, 0
      %v3353 = vsel %vm2745, %v2421, 0
      %v3356 = vsel %vm2745, %v2423, 0
      %v3359 = vsel %vm2745, %v2425, 0
      %v3362 = vsel %vm2745, %v2427, 0
      %v3365 = vsel %vm2745, %v2429, 0
      %v3368 = vsel %vm2745, %v2431, 0
      %v3371 = vsel %vm2745, %v2433, 0
      %v3374 = vsel %vm2745, %v2435, 0
      %v3377 = vsel %vm2745, %v2437, 0
      %v3380 = vsel %vm2745, %v2439, 0
      %v3383 = vsel %vm2745, %v2441, 0
      %v3386 = vsel %vm2745, %v2443, 0
      %v3389 = vsel %vm2745, %v2445, 0
      %v3392 = vsel %vm2745, %v2447, 0
      %v3395 = vsel %vm2745, %v2449, 0
      %v3398 = vsel %vm2745, %v2451, 0
      %v3401 = vsel %vm2745, %v2453, 0
      %v3404 = vsel %vm2745, %v2455, 0
      %v3407 = vsel %vm2745, %v2457, 0
      %v3410 = vsel %vm2745, %v2459, 0
      %v3413 = vsel %vm2745, %v2461, 0
      %v3416 = vsel %vm2745, %v2463, 0
      %vm3418 = vcmask 1040384
      %vm3419 = vcmask 1041408
      %v3420 = vsel %vm3418, 4294967295, 65535
      %v3421 = vsel %vm3419, %v3420, 0
      %v3423 = vand.u32 %v2735, %v3421
      %3425 = vmatprep.subr.bf16.mxu0 0
      %3426 = vmatpush1.bf16.msra.mxu0 %v2733
      %3427 = vmatprep.subr.bf16.mxu0 0
      %3428 = vmatpush1.bf16.msra.mxu0 %v2732
      %3429 = vmatprep.subr.bf16.mxu0 0
      %3430 = vmatpush1.bf16.msra.mxu0 %v2731
      %3431 = vmatprep.subr.bf16.mxu0 0
      %3432 = vmatpush1.bf16.msra.mxu0 %v2730
      %3433 = vmatprep.subr.bf16.mxu0 0
      %3434 = vmatpush1.bf16.msra.mxu0 %v2729
      %3435 = vmatprep.subr.bf16.mxu0 0
      %3436 = vmatpush1.bf16.msra.mxu0 %v2728
      %3437 = vmatprep.subr.bf16.mxu0 0
      %3438 = vmatpush1.bf16.msra.mxu0 %v2727
      %3439 = vmatprep.subr.bf16.mxu0 0
      %3440 = vmatpush1.bf16.msra.mxu0 %v2726
      %3441 = vmatprep.subr.bf16.mxu0 0
      %3442 = vmatpush2.bf16.msra.mxu0 0
      %3443 = vmatprep.subr.bf16.mxu0 0
      %3444 = vmatpush2.bf16.msra.mxu0 0
      %3445 = vmatprep.subr.bf16.mxu0 0
      %3446 = vmatpush2.bf16.msra.mxu0 0
      %3447 = vmatprep.subr.bf16.mxu0 0
      %3448 = vmatpush2.bf16.msra.mxu0 0
      %3449 = vmatprep.subr.bf16.mxu0 0
      %3450 = vmatpush2.bf16.msra.mxu0 0
      %3451 = vmatprep.subr.bf16.mxu0 0
      %3452 = vmatpush2.bf16.msra.mxu0 0
      %3453 = vmatprep.subr.bf16.mxu0 0
      %3454 = vmatpush2.bf16.msra.mxu0 %v3423
      %3455 = vmatprep.subr.bf16.mxu0 0
      %3456 = vmatpush2.bf16.msra.mxu0 %v2734
      %3457 = vmatprep.mubr.bf16.mxu0 %v2747
      %3458 = vmatmul.mubr.bf16.gmra.mxu0 %v2016
      %v3459 = vpop.f32.mrf.mxu0
      %v3460 = vadd.f32 0.0, %v3459
      %v3461 = vpop.f32.mrf.mxu0
      %v3462 = vpop.f32.mrf.mxu0
      %v3463 = vadd.f32 0.0, %v3462
      %v3464 = vpop.f32.mrf.mxu0
      %3465 = vmatprep.mubr.bf16.mxu0 %v2750
      %3466 = vmatmul.mubr.bf16.gmra.mxu0 %v2018
      %v3467 = vpop.f32.mrf.mxu0
      %v3468 = vadd.f32 0.0, %v3467
      %v3469 = vpop.f32.mrf.mxu0
      %v3470 = vpop.f32.mrf.mxu0
      %v3471 = vadd.f32 0.0, %v3470
      %v3472 = vpop.f32.mrf.mxu0
      %3473 = vmatprep.mubr.bf16.mxu0 %v2753
      %3474 = vmatmul.mubr.bf16.gmra.mxu0 %v2020
      %v3475 = vpop.f32.mrf.mxu0
      %v3476 = vadd.f32 0.0, %v3475
      %v3477 = vpop.f32.mrf.mxu0
      %v3478 = vpop.f32.mrf.mxu0
      %v3479 = vadd.f32 0.0, %v3478
      %v3480 = vpop.f32.mrf.mxu0
      %3481 = vmatprep.mubr.bf16.mxu0 %v2756
      %3482 = vmatmul.mubr.bf16.gmra.mxu0 %v2022
      %v3483 = vpop.f32.mrf.mxu0
      %v3484 = vadd.f32 0.0, %v3483
      %v3485 = vpop.f32.mrf.mxu0
      %v3486 = vpop.f32.mrf.mxu0
      %v3487 = vadd.f32 0.0, %v3486
      %v3488 = vpop.f32.mrf.mxu0
      %3489 = vmatprep.mubr.bf16.mxu0 %v2759
      %3490 = vmatmul.mubr.bf16.gmra.mxu0 %v2024
      %v3491 = vpop.f32.mrf.mxu0
      %v3492 = vadd.f32 0.0, %v3491
      %v3493 = vpop.f32.mrf.mxu0
      %v3494 = vpop.f32.mrf.mxu0
      %v3495 = vadd.f32 0.0, %v3494
      %v3496 = vpop.f32.mrf.mxu0
      %3497 = vmatprep.mubr.bf16.mxu0 %v2762
      %3498 = vmatmul.mubr.bf16.gmra.mxu0 %v2026
      %v3499 = vpop.f32.mrf.mxu0
      %v3500 = vadd.f32 0.0, %v3499
      %v3501 = vpop.f32.mrf.mxu0
      %v3502 = vpop.f32.mrf.mxu0
      %v3503 = vadd.f32 0.0, %v3502
      %v3504 = vpop.f32.mrf.mxu0
      %3505 = vmatprep.mubr.bf16.mxu0 %v2765
      %3506 = vmatmul.mubr.bf16.gmra.mxu0 %v2028
      %v3507 = vpop.f32.mrf.mxu0
      %v3508 = vadd.f32 0.0, %v3507
      %v3509 = vpop.f32.mrf.mxu0
      %v3510 = vpop.f32.mrf.mxu0
      %v3511 = vadd.f32 0.0, %v3510
      %v3512 = vpop.f32.mrf.mxu0
      %3513 = vmatprep.mubr.bf16.mxu0 %v2768
      %3514 = vmatmul.mubr.bf16.gmra.mxu0 %v2030
      %v3515 = vpop.f32.mrf.mxu0
      %v3516 = vadd.f32 0.0, %v3515
      %v3517 = vpop.f32.mrf.mxu0
      %v3518 = vpop.f32.mrf.mxu0
      %v3519 = vadd.f32 0.0, %v3518
      %v3520 = vpop.f32.mrf.mxu0
      %3521 = vmatprep.mubr.bf16.mxu0 %v2771
      %3522 = vmatmul.mubr.bf16.gmra.mxu0 %v2032
      %v3523 = vpop.f32.mrf.mxu0
      %v3524 = vadd.f32 0.0, %v3523
      %v3525 = vpop.f32.mrf.mxu0
      %v3526 = vpop.f32.mrf.mxu0
      %v3527 = vadd.f32 0.0, %v3526
      %v3528 = vpop.f32.mrf.mxu0
      %3529 = vmatprep.mubr.bf16.mxu0 %v2774
      %3530 = vmatmul.mubr.bf16.gmra.mxu0 %v2034
      %v3531 = vpop.f32.mrf.mxu0
      %v3532 = vadd.f32 0.0, %v3531
      %v3533 = vpop.f32.mrf.mxu0
      %v3534 = vpop.f32.mrf.mxu0
      %v3535 = vadd.f32 0.0, %v3534
      %v3536 = vpop.f32.mrf.mxu0
      %3537 = vmatprep.mubr.bf16.mxu0 %v2777
      %3538 = vmatmul.mubr.bf16.gmra.mxu0 %v2036
      %v3539 = vpop.f32.mrf.mxu0
      %v3540 = vadd.f32 0.0, %v3539
      %v3541 = vpop.f32.mrf.mxu0
      %v3542 = vpop.f32.mrf.mxu0
      %v3543 = vadd.f32 0.0, %v3542
      %v3544 = vpop.f32.mrf.mxu0
      %3545 = vmatprep.mubr.bf16.mxu0 %v2780
      %3546 = vmatmul.mubr.bf16.gmra.mxu0 %v2038
      %v3547 = vpop.f32.mrf.mxu0
      %v3548 = vadd.f32 0.0, %v3547
      %v3549 = vpop.f32.mrf.mxu0
      %v3550 = vpop.f32.mrf.mxu0
      %v3551 = vadd.f32 0.0, %v3550
      %v3552 = vpop.f32.mrf.mxu0
      %3553 = vmatprep.mubr.bf16.mxu0 %v2783
      %3554 = vmatmul.mubr.bf16.gmra.mxu0 %v2040
      %v3555 = vpop.f32.mrf.mxu0
      %v3556 = vadd.f32 0.0, %v3555
      %v3557 = vpop.f32.mrf.mxu0
      %v3558 = vpop.f32.mrf.mxu0
      %v3559 = vadd.f32 0.0, %v3558
      %v3560 = vpop.f32.mrf.mxu0
      %3561 = vmatprep.mubr.bf16.mxu0 %v2786
      %3562 = vmatmul.mubr.bf16.gmra.mxu0 %v2042
      %v3563 = vpop.f32.mrf.mxu0
      %v3564 = vadd.f32 0.0, %v3563
      %v3565 = vpop.f32.mrf.mxu0
      %v3566 = vpop.f32.mrf.mxu0
      %v3567 = vadd.f32 0.0, %v3566
      %v3568 = vpop.f32.mrf.mxu0
      %3569 = vmatprep.mubr.bf16.mxu0 %v2789
      %3570 = vmatmul.mubr.bf16.gmra.mxu0 %v2044
      %v3571 = vpop.f32.mrf.mxu0
      %v3572 = vadd.f32 0.0, %v3571
      %v3573 = vpop.f32.mrf.mxu0
      %v3574 = vpop.f32.mrf.mxu0
      %v3575 = vadd.f32 0.0, %v3574
      %v3576 = vpop.f32.mrf.mxu0
      %3577 = vmatprep.mubr.bf16.mxu0 %v2792
      %3578 = vmatmul.mubr.bf16.gmra.mxu0 %v2046
      %v3579 = vpop.f32.mrf.mxu0
      %v3580 = vadd.f32 0.0, %v3579
      %v3581 = vpop.f32.mrf.mxu0
      %v3582 = vpop.f32.mrf.mxu0
      %v3583 = vadd.f32 0.0, %v3582
      %v3584 = vpop.f32.mrf.mxu0
      %3585 = vmatprep.mubr.bf16.mxu0 %v2795
      %3586 = vmatmul.mubr.bf16.gmra.mxu0 %v2048
      %v3587 = vpop.f32.mrf.mxu0
      %v3588 = vadd.f32 0.0, %v3587
      %v3589 = vpop.f32.mrf.mxu0
      %v3590 = vpop.f32.mrf.mxu0
      %v3591 = vadd.f32 0.0, %v3590
      %v3592 = vpop.f32.mrf.mxu0
      %3593 = vmatprep.mubr.bf16.mxu0 %v2798
      %3594 = vmatmul.mubr.bf16.gmra.mxu0 %v2050
      %v3595 = vpop.f32.mrf.mxu0
      %v3596 = vadd.f32 0.0, %v3595
      %v3597 = vpop.f32.mrf.mxu0
      %v3598 = vpop.f32.mrf.mxu0
      %v3599 = vadd.f32 0.0, %v3598
      %v3600 = vpop.f32.mrf.mxu0
      %3601 = vmatprep.mubr.bf16.mxu0 %v2801
      %3602 = vmatmul.mubr.bf16.gmra.mxu0 %v2052
      %v3603 = vpop.f32.mrf.mxu0
      %v3604 = vadd.f32 0.0, %v3603
      %v3605 = vpop.f32.mrf.mxu0
      %v3606 = vpop.f32.mrf.mxu0
      %v3607 = vadd.f32 0.0, %v3606
      %v3608 = vpop.f32.mrf.mxu0
      %3609 = vmatprep.mubr.bf16.mxu0 %v2804
      %3610 = vmatmul.mubr.bf16.gmra.mxu0 %v2054
      %v3611 = vpop.f32.mrf.mxu0
      %v3612 = vadd.f32 0.0, %v3611
      %v3613 = vpop.f32.mrf.mxu0
      %v3614 = vpop.f32.mrf.mxu0
      %v3615 = vadd.f32 0.0, %v3614
      %v3616 = vpop.f32.mrf.mxu0
      %3617 = vmatprep.mubr.bf16.mxu0 %v2807
      %3618 = vmatmul.mubr.bf16.gmra.mxu0 %v2056
      %v3619 = vpop.f32.mrf.mxu0
      %v3620 = vadd.f32 0.0, %v3619
      %v3621 = vpop.f32.mrf.mxu0
      %v3622 = vpop.f32.mrf.mxu0
      %v3623 = vadd.f32 0.0, %v3622
      %v3624 = vpop.f32.mrf.mxu0
      %3625 = vmatprep.mubr.bf16.mxu0 %v2810
      %3626 = vmatmul.mubr.bf16.gmra.mxu0 %v2058
      %v3627 = vpop.f32.mrf.mxu0
      %v3628 = vadd.f32 0.0, %v3627
      %v3629 = vpop.f32.mrf.mxu0
      %v3630 = vpop.f32.mrf.mxu0
      %v3631 = vadd.f32 0.0, %v3630
      %v3632 = vpop.f32.mrf.mxu0
      %3633 = vmatprep.mubr.bf16.mxu0 %v2813
      %3634 = vmatmul.mubr.bf16.gmra.mxu0 %v2060
      %v3635 = vpop.f32.mrf.mxu0
      %v3636 = vadd.f32 0.0, %v3635
      %v3637 = vpop.f32.mrf.mxu0
      %v3638 = vpop.f32.mrf.mxu0
      %v3639 = vadd.f32 0.0, %v3638
      %v3640 = vpop.f32.mrf.mxu0
      %3641 = vmatprep.mubr.bf16.mxu0 %v2816
      %3642 = vmatmul.mubr.bf16.gmra.mxu0 %v2062
      %v3643 = vpop.f32.mrf.mxu0
      %v3644 = vadd.f32 0.0, %v3643
      %v3645 = vpop.f32.mrf.mxu0
      %v3646 = vpop.f32.mrf.mxu0
      %v3647 = vadd.f32 0.0, %v3646
      %v3648 = vpop.f32.mrf.mxu0
      %3649 = vmatprep.mubr.bf16.mxu0 %v2819
      %3650 = vmatmul.mubr.bf16.gmra.mxu0 %v2064
      %v3651 = vpop.f32.mrf.mxu0
      %v3652 = vadd.f32 0.0, %v3651
      %v3653 = vpop.f32.mrf.mxu0
      %v3654 = vpop.f32.mrf.mxu0
      %v3655 = vadd.f32 0.0, %v3654
      %v3656 = vpop.f32.mrf.mxu0
      %3657 = vmatprep.mubr.bf16.mxu0 %v2822
      %3658 = vmatmul.mubr.bf16.gmra.mxu0 %v2066
      %v3659 = vpop.f32.mrf.mxu0
      %v3660 = vadd.f32 0.0, %v3659
      %v3661 = vpop.f32.mrf.mxu0
      %v3662 = vpop.f32.mrf.mxu0
      %v3663 = vadd.f32 0.0, %v3662
      %v3664 = vpop.f32.mrf.mxu0
      %3665 = vmatprep.mubr.bf16.mxu0 %v2825
      %3666 = vmatmul.mubr.bf16.gmra.mxu0 %v2068
      %v3667 = vpop.f32.mrf.mxu0
      %v3668 = vadd.f32 0.0, %v3667
      %v3669 = vpop.f32.mrf.mxu0
      %v3670 = vpop.f32.mrf.mxu0
      %v3671 = vadd.f32 0.0, %v3670
      %v3672 = vpop.f32.mrf.mxu0
      %3673 = vmatprep.mubr.bf16.mxu0 %v2828
      %3674 = vmatmul.mubr.bf16.gmra.mxu0 %v2070
      %v3675 = vpop.f32.mrf.mxu0
      %v3676 = vadd.f32 0.0, %v3675
      %v3677 = vpop.f32.mrf.mxu0
      %v3678 = vpop.f32.mrf.mxu0
      %v3679 = vadd.f32 0.0, %v3678
      %v3680 = vpop.f32.mrf.mxu0
      %3681 = vmatprep.mubr.bf16.mxu0 %v2831
      %3682 = vmatmul.mubr.bf16.gmra.mxu0 %v2072
      %v3683 = vpop.f32.mrf.mxu0
      %v3684 = vadd.f32 0.0, %v3683
      %v3685 = vpop.f32.mrf.mxu0
      %v3686 = vpop.f32.mrf.mxu0
      %v3687 = vadd.f32 0.0, %v3686
      %v3688 = vpop.f32.mrf.mxu0
      %3689 = vmatprep.mubr.bf16.mxu0 %v2834
      %3690 = vmatmul.mubr.bf16.gmra.mxu0 %v2074
      %v3691 = vpop.f32.mrf.mxu0
      %v3692 = vadd.f32 0.0, %v3691
      %v3693 = vpop.f32.mrf.mxu0
      %v3694 = vpop.f32.mrf.mxu0
      %v3695 = vadd.f32 0.0, %v3694
      %v3696 = vpop.f32.mrf.mxu0
      %3697 = vmatprep.mubr.bf16.mxu0 %v2837
      %3698 = vmatmul.mubr.bf16.gmra.mxu0 %v2076
      %v3699 = vpop.f32.mrf.mxu0
      %v3700 = vadd.f32 0.0, %v3699
      %v3701 = vpop.f32.mrf.mxu0
      %v3702 = vpop.f32.mrf.mxu0
      %v3703 = vadd.f32 0.0, %v3702
      %v3704 = vpop.f32.mrf.mxu0
      %3705 = vmatprep.mubr.bf16.mxu0 %v2840
      %3706 = vmatmul.mubr.bf16.gmra.mxu0 %v2078
      %v3707 = vpop.f32.mrf.mxu0
      %v3708 = vadd.f32 0.0, %v3707
      %v3709 = vpop.f32.mrf.mxu0
      %v3710 = vpop.f32.mrf.mxu0
      %v3711 = vadd.f32 0.0, %v3710
      %v3712 = vpop.f32.mrf.mxu0
      %3713 = vmatprep.mubr.bf16.mxu0 %v2843
      %3714 = vmatmul.mubr.bf16.gmra.mxu0 %v2080
      %v3715 = vpop.f32.mrf.mxu0
      %v3716 = vadd.f32 0.0, %v3715
      %v3717 = vpop.f32.mrf.mxu0
      %v3718 = vpop.f32.mrf.mxu0
      %v3719 = vadd.f32 0.0, %v3718
      %v3720 = vpop.f32.mrf.mxu0
      %3721 = vmatprep.mubr.bf16.mxu0 %v2846
      %3722 = vmatmul.mubr.bf16.gmra.mxu0 %v2082
      %v3723 = vpop.f32.mrf.mxu0
      %v3724 = vadd.f32 0.0, %v3723
      %v3725 = vpop.f32.mrf.mxu0
      %v3726 = vpop.f32.mrf.mxu0
      %v3727 = vadd.f32 0.0, %v3726
      %v3728 = vpop.f32.mrf.mxu0
      %3729 = vmatprep.mubr.bf16.mxu0 %v2849
      %3730 = vmatmul.mubr.bf16.gmra.mxu0 %v2084
      %v3731 = vpop.f32.mrf.mxu0
      %v3732 = vadd.f32 0.0, %v3731
      %v3733 = vpop.f32.mrf.mxu0
      %v3734 = vpop.f32.mrf.mxu0
      %v3735 = vadd.f32 0.0, %v3734
      %v3736 = vpop.f32.mrf.mxu0
      %3737 = vmatprep.mubr.bf16.mxu0 %v2852
      %3738 = vmatmul.mubr.bf16.gmra.mxu0 %v2086
      %v3739 = vpop.f32.mrf.mxu0
      %v3740 = vadd.f32 0.0, %v3739
      %v3741 = vpop.f32.mrf.mxu0
      %v3742 = vpop.f32.mrf.mxu0
      %v3743 = vadd.f32 0.0, %v3742
      %v3744 = vpop.f32.mrf.mxu0
      %3745 = vmatprep.mubr.bf16.mxu0 %v2855
      %3746 = vmatmul.mubr.bf16.gmra.mxu0 %v2088
      %v3747 = vpop.f32.mrf.mxu0
      %v3748 = vadd.f32 0.0, %v3747
      %v3749 = vpop.f32.mrf.mxu0
      %v3750 = vpop.f32.mrf.mxu0
      %v3751 = vadd.f32 0.0, %v3750
      %v3752 = vpop.f32.mrf.mxu0
      %3753 = vmatprep.mubr.bf16.mxu0 %v2858
      %3754 = vmatmul.mubr.bf16.gmra.mxu0 %v2090
      %v3755 = vpop.f32.mrf.mxu0
      %v3756 = vadd.f32 0.0, %v3755
      %v3757 = vpop.f32.mrf.mxu0
      %v3758 = vpop.f32.mrf.mxu0
      %v3759 = vadd.f32 0.0, %v3758
      %v3760 = vpop.f32.mrf.mxu0
      %3761 = vmatprep.mubr.bf16.mxu0 %v2861
      %3762 = vmatmul.mubr.bf16.gmra.mxu0 %v2092
      %v3763 = vpop.f32.mrf.mxu0
      %v3764 = vadd.f32 0.0, %v3763
      %v3765 = vpop.f32.mrf.mxu0
      %v3766 = vpop.f32.mrf.mxu0
      %v3767 = vadd.f32 0.0, %v3766
      %v3768 = vpop.f32.mrf.mxu0
      %3769 = vmatprep.mubr.bf16.mxu0 %v2864
      %3770 = vmatmul.mubr.bf16.gmra.mxu0 %v2094
      %v3771 = vpop.f32.mrf.mxu0
      %v3772 = vadd.f32 0.0, %v3771
      %v3773 = vpop.f32.mrf.mxu0
      %v3774 = vpop.f32.mrf.mxu0
      %v3775 = vadd.f32 0.0, %v3774
      %v3776 = vpop.f32.mrf.mxu0
      %3777 = vmatprep.mubr.bf16.mxu0 %v2867
      %3778 = vmatmul.mubr.bf16.gmra.mxu0 %v2096
      %v3779 = vpop.f32.mrf.mxu0
      %v3780 = vadd.f32 0.0, %v3779
      %v3781 = vpop.f32.mrf.mxu0
      %v3782 = vpop.f32.mrf.mxu0
      %v3783 = vadd.f32 0.0, %v3782
      %v3784 = vpop.f32.mrf.mxu0
      %3785 = vmatprep.mubr.bf16.mxu0 %v2870
      %3786 = vmatmul.mubr.bf16.gmra.mxu0 %v2098
      %v3787 = vpop.f32.mrf.mxu0
      %v3788 = vadd.f32 0.0, %v3787
      %v3789 = vpop.f32.mrf.mxu0
      %v3790 = vpop.f32.mrf.mxu0
      %v3791 = vadd.f32 0.0, %v3790
      %v3792 = vpop.f32.mrf.mxu0
      %3793 = vmatprep.mubr.bf16.mxu0 %v2873
      %3794 = vmatmul.mubr.bf16.gmra.mxu0 %v2100
      %v3795 = vpop.f32.mrf.mxu0
      %v3796 = vadd.f32 0.0, %v3795
      %v3797 = vpop.f32.mrf.mxu0
      %v3798 = vpop.f32.mrf.mxu0
      %v3799 = vadd.f32 0.0, %v3798
      %v3800 = vpop.f32.mrf.mxu0
      %3801 = vmatprep.mubr.bf16.mxu0 %v2876
      %3802 = vmatmul.mubr.bf16.gmra.mxu0 %v2102
      %v3803 = vpop.f32.mrf.mxu0
      %v3804 = vadd.f32 0.0, %v3803
      %v3805 = vpop.f32.mrf.mxu0
      %v3806 = vpop.f32.mrf.mxu0
      %v3807 = vadd.f32 0.0, %v3806
      %v3808 = vpop.f32.mrf.mxu0
      %3809 = vmatprep.mubr.bf16.mxu0 %v2879
      %3810 = vmatmul.mubr.bf16.gmra.mxu0 %v2104
      %v3811 = vpop.f32.mrf.mxu0
      %v3812 = vadd.f32 0.0, %v3811
      %v3813 = vpop.f32.mrf.mxu0
      %v3814 = vpop.f32.mrf.mxu0
      %v3815 = vadd.f32 0.0, %v3814
      %v3816 = vpop.f32.mrf.mxu0
      %3817 = vmatprep.mubr.bf16.mxu0 %v2882
      %3818 = vmatmul.mubr.bf16.gmra.mxu0 %v2106
      %v3819 = vpop.f32.mrf.mxu0
      %v3820 = vadd.f32 0.0, %v3819
      %v3821 = vpop.f32.mrf.mxu0
      %v3822 = vpop.f32.mrf.mxu0
      %v3823 = vadd.f32 0.0, %v3822
      %v3824 = vpop.f32.mrf.mxu0
      %3825 = vmatprep.mubr.bf16.mxu0 %v2885
      %3826 = vmatmul.mubr.bf16.gmra.mxu0 %v2108
      %v3827 = vpop.f32.mrf.mxu0
      %v3828 = vadd.f32 0.0, %v3827
      %v3829 = vpop.f32.mrf.mxu0
      %v3830 = vpop.f32.mrf.mxu0
      %v3831 = vadd.f32 0.0, %v3830
      %v3832 = vpop.f32.mrf.mxu0
      %3833 = vmatprep.mubr.bf16.mxu0 %v2888
      %3834 = vmatmul.mubr.bf16.gmra.mxu0 %v2110
      %v3835 = vpop.f32.mrf.mxu0
      %v3836 = vadd.f32 0.0, %v3835
      %v3837 = vpop.f32.mrf.mxu0
      %v3838 = vpop.f32.mrf.mxu0
      %v3839 = vadd.f32 0.0, %v3838
      %v3840 = vpop.f32.mrf.mxu0
      %3841 = vmatprep.mubr.bf16.mxu0 %v2891
      %3842 = vmatmul.mubr.bf16.gmra.mxu0 %v2112
      %v3843 = vpop.f32.mrf.mxu0
      %v3844 = vadd.f32 0.0, %v3843
      %v3845 = vpop.f32.mrf.mxu0
      %v3846 = vpop.f32.mrf.mxu0
      %v3847 = vadd.f32 0.0, %v3846
      %v3848 = vpop.f32.mrf.mxu0
      %3849 = vmatprep.mubr.bf16.mxu0 %v2894
      %3850 = vmatmul.mubr.bf16.gmra.mxu0 %v2114
      %v3851 = vpop.f32.mrf.mxu0
      %v3852 = vadd.f32 0.0, %v3851
      %v3853 = vpop.f32.mrf.mxu0
      %v3854 = vpop.f32.mrf.mxu0
      %v3855 = vadd.f32 0.0, %v3854
      %v3856 = vpop.f32.mrf.mxu0
      %3857 = vmatprep.mubr.bf16.mxu0 %v2897
      %3858 = vmatmul.mubr.bf16.gmra.mxu0 %v2116
      %v3859 = vpop.f32.mrf.mxu0
      %v3860 = vadd.f32 0.0, %v3859
      %v3861 = vpop.f32.mrf.mxu0
      %v3862 = vpop.f32.mrf.mxu0
      %v3863 = vadd.f32 0.0, %v3862
      %v3864 = vpop.f32.mrf.mxu0
      %3865 = vmatprep.mubr.bf16.mxu0 %v2900
      %3866 = vmatmul.mubr.bf16.gmra.mxu0 %v2118
      %v3867 = vpop.f32.mrf.mxu0
      %v3868 = vadd.f32 0.0, %v3867
      %v3869 = vpop.f32.mrf.mxu0
      %v3870 = vpop.f32.mrf.mxu0
      %v3871 = vadd.f32 0.0, %v3870
      %v3872 = vpop.f32.mrf.mxu0
      %3873 = vmatprep.mubr.bf16.mxu0 %v2903
      %3874 = vmatmul.mubr.bf16.gmra.mxu0 %v2120
      %v3875 = vpop.f32.mrf.mxu0
      %v3876 = vadd.f32 0.0, %v3875
      %v3877 = vpop.f32.mrf.mxu0
      %v3878 = vpop.f32.mrf.mxu0
      %v3879 = vadd.f32 0.0, %v3878
      %v3880 = vpop.f32.mrf.mxu0
      %3881 = vmatprep.mubr.bf16.mxu0 %v2906
      %3882 = vmatmul.mubr.bf16.gmra.mxu0 %v2122
      %v3883 = vpop.f32.mrf.mxu0
      %v3884 = vadd.f32 0.0, %v3883
      %v3885 = vpop.f32.mrf.mxu0
      %v3886 = vpop.f32.mrf.mxu0
      %v3887 = vadd.f32 0.0, %v3886
      %v3888 = vpop.f32.mrf.mxu0
      %3889 = vmatprep.mubr.bf16.mxu0 %v2909
      %3890 = vmatmul.mubr.bf16.gmra.mxu0 %v2124
      %v3891 = vpop.f32.mrf.mxu0
      %v3892 = vadd.f32 0.0, %v3891
      %v3893 = vpop.f32.mrf.mxu0
      %v3894 = vpop.f32.mrf.mxu0
      %v3895 = vadd.f32 0.0, %v3894
      %v3896 = vpop.f32.mrf.mxu0
      %3897 = vmatprep.mubr.bf16.mxu0 %v2912
      %3898 = vmatmul.mubr.bf16.gmra.mxu0 %v2126
      %v3899 = vpop.f32.mrf.mxu0
      %v3900 = vadd.f32 0.0, %v3899
      %v3901 = vpop.f32.mrf.mxu0
      %v3902 = vpop.f32.mrf.mxu0
      %v3903 = vadd.f32 0.0, %v3902
      %v3904 = vpop.f32.mrf.mxu0
      %3905 = vmatprep.mubr.bf16.mxu0 %v2915
      %3906 = vmatmul.mubr.bf16.gmra.mxu0 %v2128
      %v3907 = vpop.f32.mrf.mxu0
      %v3908 = vadd.f32 0.0, %v3907
      %v3909 = vpop.f32.mrf.mxu0
      %v3910 = vpop.f32.mrf.mxu0
      %v3911 = vadd.f32 0.0, %v3910
      %v3912 = vpop.f32.mrf.mxu0
      %3913 = vmatprep.mubr.bf16.mxu0 %v2918
      %3914 = vmatmul.mubr.bf16.gmra.mxu0 %v2130
      %v3915 = vpop.f32.mrf.mxu0
      %v3916 = vadd.f32 0.0, %v3915
      %v3917 = vpop.f32.mrf.mxu0
      %v3918 = vpop.f32.mrf.mxu0
      %v3919 = vadd.f32 0.0, %v3918
      %v3920 = vpop.f32.mrf.mxu0
      %3921 = vmatprep.mubr.bf16.mxu0 %v2921
      %3922 = vmatmul.mubr.bf16.gmra.mxu0 %v2132
      %v3923 = vpop.f32.mrf.mxu0
      %v3924 = vadd.f32 0.0, %v3923
      %v3925 = vpop.f32.mrf.mxu0
      %v3926 = vpop.f32.mrf.mxu0
      %v3927 = vadd.f32 0.0, %v3926
      %v3928 = vpop.f32.mrf.mxu0
      %3929 = vmatprep.mubr.bf16.mxu0 %v2924
      %3930 = vmatmul.mubr.bf16.gmra.mxu0 %v2134
      %v3931 = vpop.f32.mrf.mxu0
      %v3932 = vadd.f32 0.0, %v3931
      %v3933 = vpop.f32.mrf.mxu0
      %v3934 = vpop.f32.mrf.mxu0
      %v3935 = vadd.f32 0.0, %v3934
      %v3936 = vpop.f32.mrf.mxu0
      %3937 = vmatprep.mubr.bf16.mxu0 %v2927
      %3938 = vmatmul.mubr.bf16.gmra.mxu0 %v2136
      %v3939 = vpop.f32.mrf.mxu0
      %v3940 = vadd.f32 0.0, %v3939
      %v3941 = vpop.f32.mrf.mxu0
      %v3942 = vpop.f32.mrf.mxu0
      %v3943 = vadd.f32 0.0, %v3942
      %v3944 = vpop.f32.mrf.mxu0
      %3945 = vmatprep.mubr.bf16.mxu0 %v2930
      %3946 = vmatmul.mubr.bf16.gmra.mxu0 %v2138
      %v3947 = vpop.f32.mrf.mxu0
      %v3948 = vadd.f32 0.0, %v3947
      %v3949 = vpop.f32.mrf.mxu0
      %v3950 = vpop.f32.mrf.mxu0
      %v3951 = vadd.f32 0.0, %v3950
      %v3952 = vpop.f32.mrf.mxu0
      %3953 = vmatprep.mubr.bf16.mxu0 %v2933
      %3954 = vmatmul.mubr.bf16.gmra.mxu0 %v2140
      %v3955 = vpop.f32.mrf.mxu0
      %v3956 = vadd.f32 0.0, %v3955
      %v3957 = vpop.f32.mrf.mxu0
      %v3958 = vpop.f32.mrf.mxu0
      %v3959 = vadd.f32 0.0, %v3958
      %v3960 = vpop.f32.mrf.mxu0
      %3961 = vmatprep.mubr.bf16.mxu0 %v2936
      %3962 = vmatmul.mubr.bf16.gmra.mxu0 %v2142
      %v3963 = vpop.f32.mrf.mxu0
      %v3964 = vadd.f32 0.0, %v3963
      %v3965 = vpop.f32.mrf.mxu0
      %v3966 = vpop.f32.mrf.mxu0
      %v3967 = vadd.f32 0.0, %v3966
      %v3968 = vpop.f32.mrf.mxu0
      %3969 = vmatprep.mubr.bf16.mxu0 %v2939
      %3970 = vmatmul.mubr.bf16.gmra.mxu0 %v2144
      %v3971 = vpop.f32.mrf.mxu0
      %v3972 = vadd.f32 0.0, %v3971
      %v3973 = vpop.f32.mrf.mxu0
      %v3974 = vpop.f32.mrf.mxu0
      %v3975 = vadd.f32 0.0, %v3974
      %v3976 = vpop.f32.mrf.mxu0
      %3977 = vmatprep.mubr.bf16.mxu0 %v2942
      %3978 = vmatmul.mubr.bf16.gmra.mxu0 %v2146
      %v3979 = vpop.f32.mrf.mxu0
      %v3980 = vadd.f32 0.0, %v3979
      %v3981 = vpop.f32.mrf.mxu0
      %v3982 = vpop.f32.mrf.mxu0
      %v3983 = vadd.f32 0.0, %v3982
      %v3984 = vpop.f32.mrf.mxu0
      %3985 = vmatprep.mubr.bf16.mxu0 %v2945
      %3986 = vmatmul.mubr.bf16.gmra.mxu0 %v2148
      %v3987 = vpop.f32.mrf.mxu0
      %v3988 = vadd.f32 0.0, %v3987
      %v3989 = vpop.f32.mrf.mxu0
      %v3990 = vpop.f32.mrf.mxu0
      %v3991 = vadd.f32 0.0, %v3990
      %v3992 = vpop.f32.mrf.mxu0
      %3993 = vmatprep.mubr.bf16.mxu0 %v2948
      %3994 = vmatmul.mubr.bf16.gmra.mxu0 %v2150
      %v3995 = vpop.f32.mrf.mxu0
      %v3996 = vadd.f32 0.0, %v3995
      %v3997 = vpop.f32.mrf.mxu0
      %v3998 = vpop.f32.mrf.mxu0
      %v3999 = vadd.f32 0.0, %v3998
      %v4000 = vpop.f32.mrf.mxu0
      %4001 = vmatprep.mubr.bf16.mxu0 %v2951
      %4002 = vmatmul.mubr.bf16.gmra.mxu0 %v2152
      %v4003 = vpop.f32.mrf.mxu0
      %v4004 = vadd.f32 0.0, %v4003
      %v4005 = vpop.f32.mrf.mxu0
      %v4006 = vpop.f32.mrf.mxu0
      %v4007 = vadd.f32 0.0, %v4006
      %v4008 = vpop.f32.mrf.mxu0
      %4009 = vmatprep.mubr.bf16.mxu0 %v2954
      %4010 = vmatmul.mubr.bf16.gmra.mxu0 %v2154
      %v4011 = vpop.f32.mrf.mxu0
      %v4012 = vadd.f32 0.0, %v4011
      %v4013 = vpop.f32.mrf.mxu0
      %v4014 = vpop.f32.mrf.mxu0
      %v4015 = vadd.f32 0.0, %v4014
      %v4016 = vpop.f32.mrf.mxu0
      %4017 = vmatprep.mubr.bf16.mxu0 %v2957
      %4018 = vmatmul.mubr.bf16.gmra.mxu0 %v2156
      %v4019 = vpop.f32.mrf.mxu0
      %v4020 = vadd.f32 0.0, %v4019
      %v4021 = vpop.f32.mrf.mxu0
      %v4022 = vpop.f32.mrf.mxu0
      %v4023 = vadd.f32 0.0, %v4022
      %v4024 = vpop.f32.mrf.mxu0
      %4025 = vmatprep.mubr.bf16.mxu0 %v2960
      %4026 = vmatmul.mubr.bf16.gmra.mxu0 %v2158
      %v4027 = vpop.f32.mrf.mxu0
      %v4028 = vadd.f32 0.0, %v4027
      %v4029 = vpop.f32.mrf.mxu0
      %v4030 = vpop.f32.mrf.mxu0
      %v4031 = vadd.f32 0.0, %v4030
      %v4032 = vpop.f32.mrf.mxu0
      %4033 = vmatprep.mubr.bf16.mxu0 %v2963
      %4034 = vmatmul.mubr.bf16.gmra.mxu0 %v2160
      %v4035 = vpop.f32.mrf.mxu0
      %v4036 = vadd.f32 0.0, %v4035
      %v4037 = vpop.f32.mrf.mxu0
      %v4038 = vpop.f32.mrf.mxu0
      %v4039 = vadd.f32 0.0, %v4038
      %v4040 = vpop.f32.mrf.mxu0
      %4041 = vmatprep.mubr.bf16.mxu0 %v2966
      %4042 = vmatmul.mubr.bf16.gmra.mxu0 %v2162
      %v4043 = vpop.f32.mrf.mxu0
      %v4044 = vadd.f32 0.0, %v4043
      %v4045 = vpop.f32.mrf.mxu0
      %v4046 = vpop.f32.mrf.mxu0
      %v4047 = vadd.f32 0.0, %v4046
      %v4048 = vpop.f32.mrf.mxu0
      %4049 = vmatprep.mubr.bf16.mxu0 %v2969
      %4050 = vmatmul.mubr.bf16.gmra.mxu0 %v2164
      %v4051 = vpop.f32.mrf.mxu0
      %v4052 = vadd.f32 0.0, %v4051
      %v4053 = vpop.f32.mrf.mxu0
      %v4054 = vpop.f32.mrf.mxu0
      %v4055 = vadd.f32 0.0, %v4054
      %v4056 = vpop.f32.mrf.mxu0
      %4057 = vmatprep.mubr.bf16.mxu0 %v2972
      %4058 = vmatmul.mubr.bf16.gmra.mxu0 %v2166
      %v4059 = vpop.f32.mrf.mxu0
      %v4060 = vadd.f32 0.0, %v4059
      %v4061 = vpop.f32.mrf.mxu0
      %v4062 = vpop.f32.mrf.mxu0
      %v4063 = vadd.f32 0.0, %v4062
      %v4064 = vpop.f32.mrf.mxu0
      %4065 = vmatprep.mubr.bf16.mxu0 %v2975
      %4066 = vmatmul.mubr.bf16.gmra.mxu0 %v2168
      %v4067 = vpop.f32.mrf.mxu0
      %v4068 = vadd.f32 0.0, %v4067
      %v4069 = vpop.f32.mrf.mxu0
      %v4070 = vpop.f32.mrf.mxu0
      %v4071 = vadd.f32 0.0, %v4070
      %v4072 = vpop.f32.mrf.mxu0
      %4073 = vmatprep.mubr.bf16.mxu0 %v2978
      %4074 = vmatmul.mubr.bf16.gmra.mxu0 %v2170
      %v4075 = vpop.f32.mrf.mxu0
      %v4076 = vadd.f32 0.0, %v4075
      %v4077 = vpop.f32.mrf.mxu0
      %v4078 = vpop.f32.mrf.mxu0
      %v4079 = vadd.f32 0.0, %v4078
      %v4080 = vpop.f32.mrf.mxu0
      %4081 = vmatprep.mubr.bf16.mxu0 %v2981
      %4082 = vmatmul.mubr.bf16.gmra.mxu0 %v2172
      %v4083 = vpop.f32.mrf.mxu0
      %v4084 = vadd.f32 0.0, %v4083
      %v4085 = vpop.f32.mrf.mxu0
      %v4086 = vpop.f32.mrf.mxu0
      %v4087 = vadd.f32 0.0, %v4086
      %v4088 = vpop.f32.mrf.mxu0
      %4089 = vmatprep.mubr.bf16.mxu0 %v2984
      %4090 = vmatmul.mubr.bf16.gmra.mxu0 %v2174
      %v4091 = vpop.f32.mrf.mxu0
      %v4092 = vadd.f32 0.0, %v4091
      %v4093 = vpop.f32.mrf.mxu0
      %v4094 = vpop.f32.mrf.mxu0
      %v4095 = vadd.f32 0.0, %v4094
      %v4096 = vpop.f32.mrf.mxu0
      %4097 = vmatprep.mubr.bf16.mxu0 %v2987
      %4098 = vmatmul.mubr.bf16.gmra.mxu0 %v2176
      %v4099 = vpop.f32.mrf.mxu0
      %v4100 = vadd.f32 0.0, %v4099
      %v4101 = vpop.f32.mrf.mxu0
      %v4102 = vpop.f32.mrf.mxu0
      %v4103 = vadd.f32 0.0, %v4102
      %v4104 = vpop.f32.mrf.mxu0
      %4105 = vmatprep.mubr.bf16.mxu0 %v2990
      %4106 = vmatmul.mubr.bf16.gmra.mxu0 %v2178
      %v4107 = vpop.f32.mrf.mxu0
      %v4108 = vadd.f32 0.0, %v4107
      %v4109 = vpop.f32.mrf.mxu0
      %v4110 = vpop.f32.mrf.mxu0
      %v4111 = vadd.f32 0.0, %v4110
      %v4112 = vpop.f32.mrf.mxu0
      %4113 = vmatprep.mubr.bf16.mxu0 %v2993
      %4114 = vmatmul.mubr.bf16.gmra.mxu0 %v2180
      %v4115 = vpop.f32.mrf.mxu0
      %v4116 = vadd.f32 0.0, %v4115
      %v4117 = vpop.f32.mrf.mxu0
      %v4118 = vpop.f32.mrf.mxu0
      %v4119 = vadd.f32 0.0, %v4118
      %v4120 = vpop.f32.mrf.mxu0
      %4121 = vmatprep.mubr.bf16.mxu0 %v2996
      %4122 = vmatmul.mubr.bf16.gmra.mxu0 %v2182
      %v4123 = vpop.f32.mrf.mxu0
      %v4124 = vadd.f32 0.0, %v4123
      %v4125 = vpop.f32.mrf.mxu0
      %v4126 = vpop.f32.mrf.mxu0
      %v4127 = vadd.f32 0.0, %v4126
      %v4128 = vpop.f32.mrf.mxu0
      %4129 = vmatprep.mubr.bf16.mxu0 %v2999
      %4130 = vmatmul.mubr.bf16.gmra.mxu0 %v2184
      %v4131 = vpop.f32.mrf.mxu0
      %v4132 = vadd.f32 0.0, %v4131
      %v4133 = vpop.f32.mrf.mxu0
      %v4134 = vpop.f32.mrf.mxu0
      %v4135 = vadd.f32 0.0, %v4134
      %v4136 = vpop.f32.mrf.mxu0
      %4137 = vmatprep.mubr.bf16.mxu0 %v3002
      %4138 = vmatmul.mubr.bf16.gmra.mxu0 %v2186
      %v4139 = vpop.f32.mrf.mxu0
      %v4140 = vadd.f32 0.0, %v4139
      %v4141 = vpop.f32.mrf.mxu0
      %v4142 = vpop.f32.mrf.mxu0
      %v4143 = vadd.f32 0.0, %v4142
      %v4144 = vpop.f32.mrf.mxu0
      %4145 = vmatprep.mubr.bf16.mxu0 %v3005
      %4146 = vmatmul.mubr.bf16.gmra.mxu0 %v2188
      %v4147 = vpop.f32.mrf.mxu0
      %v4148 = vadd.f32 0.0, %v4147
      %v4149 = vpop.f32.mrf.mxu0
      %v4150 = vpop.f32.mrf.mxu0
      %v4151 = vadd.f32 0.0, %v4150
      %v4152 = vpop.f32.mrf.mxu0
      %4153 = vmatprep.mubr.bf16.mxu0 %v3008
      %4154 = vmatmul.mubr.bf16.gmra.mxu0 %v2190
      %v4155 = vpop.f32.mrf.mxu0
      %v4156 = vadd.f32 0.0, %v4155
      %v4157 = vpop.f32.mrf.mxu0
      %v4158 = vpop.f32.mrf.mxu0
      %v4159 = vadd.f32 0.0, %v4158
      %v4160 = vpop.f32.mrf.mxu0
      %4161 = vmatprep.mubr.bf16.mxu0 %v3011
      %4162 = vmatmul.mubr.bf16.gmra.mxu0 %v2192
      %v4163 = vpop.f32.mrf.mxu0
      %v4164 = vadd.f32 0.0, %v4163
      %v4165 = vpop.f32.mrf.mxu0
      %v4166 = vpop.f32.mrf.mxu0
      %v4167 = vadd.f32 0.0, %v4166
      %v4168 = vpop.f32.mrf.mxu0
      %4169 = vmatprep.mubr.bf16.mxu0 %v3014
      %4170 = vmatmul.mubr.bf16.gmra.mxu0 %v2194
      %v4171 = vpop.f32.mrf.mxu0
      %v4172 = vadd.f32 0.0, %v4171
      %v4173 = vpop.f32.mrf.mxu0
      %v4174 = vpop.f32.mrf.mxu0
      %v4175 = vadd.f32 0.0, %v4174
      %v4176 = vpop.f32.mrf.mxu0
      %4177 = vmatprep.mubr.bf16.mxu0 %v3017
      %4178 = vmatmul.mubr.bf16.gmra.mxu0 %v2196
      %v4179 = vpop.f32.mrf.mxu0
      %v4180 = vadd.f32 0.0, %v4179
      %v4181 = vpop.f32.mrf.mxu0
      %v4182 = vpop.f32.mrf.mxu0
      %v4183 = vadd.f32 0.0, %v4182
      %v4184 = vpop.f32.mrf.mxu0
      %4185 = vmatprep.mubr.bf16.mxu0 %v3020
      %4186 = vmatmul.mubr.bf16.gmra.mxu0 %v2198
      %v4187 = vpop.f32.mrf.mxu0
      %v4188 = vadd.f32 0.0, %v4187
      %v4189 = vpop.f32.mrf.mxu0
      %v4190 = vpop.f32.mrf.mxu0
      %v4191 = vadd.f32 0.0, %v4190
      %v4192 = vpop.f32.mrf.mxu0
      %4193 = vmatprep.mubr.bf16.mxu0 %v3023
      %4194 = vmatmul.mubr.bf16.gmra.mxu0 %v2200
      %v4195 = vpop.f32.mrf.mxu0
      %v4196 = vadd.f32 0.0, %v4195
      %v4197 = vpop.f32.mrf.mxu0
      %v4198 = vpop.f32.mrf.mxu0
      %v4199 = vadd.f32 0.0, %v4198
      %v4200 = vpop.f32.mrf.mxu0
      %4201 = vmatprep.mubr.bf16.mxu0 %v3026
      %4202 = vmatmul.mubr.bf16.gmra.mxu0 %v2202
      %v4203 = vpop.f32.mrf.mxu0
      %v4204 = vadd.f32 0.0, %v4203
      %v4205 = vpop.f32.mrf.mxu0
      %v4206 = vpop.f32.mrf.mxu0
      %v4207 = vadd.f32 0.0, %v4206
      %v4208 = vpop.f32.mrf.mxu0
      %4209 = vmatprep.mubr.bf16.mxu0 %v3029
      %4210 = vmatmul.mubr.bf16.gmra.mxu0 %v2204
      %v4211 = vpop.f32.mrf.mxu0
      %v4212 = vadd.f32 0.0, %v4211
      %v4213 = vpop.f32.mrf.mxu0
      %v4214 = vpop.f32.mrf.mxu0
      %v4215 = vadd.f32 0.0, %v4214
      %v4216 = vpop.f32.mrf.mxu0
      %4217 = vmatprep.mubr.bf16.mxu0 %v3032
      %4218 = vmatmul.mubr.bf16.gmra.mxu0 %v2206
      %v4219 = vpop.f32.mrf.mxu0
      %v4220 = vadd.f32 0.0, %v4219
      %v4221 = vpop.f32.mrf.mxu0
      %v4222 = vpop.f32.mrf.mxu0
      %v4223 = vadd.f32 0.0, %v4222
      %v4224 = vpop.f32.mrf.mxu0
      %4225 = vmatprep.mubr.bf16.mxu0 %v3035
      %4226 = vmatmul.mubr.bf16.gmra.mxu0 %v2208
      %v4227 = vpop.f32.mrf.mxu0
      %v4228 = vadd.f32 0.0, %v4227
      %v4229 = vpop.f32.mrf.mxu0
      %v4230 = vpop.f32.mrf.mxu0
      %v4231 = vadd.f32 0.0, %v4230
      %v4232 = vpop.f32.mrf.mxu0
      %4233 = vmatprep.mubr.bf16.mxu0 %v3038
      %4234 = vmatmul.mubr.bf16.gmra.mxu0 %v2210
      %v4235 = vpop.f32.mrf.mxu0
      %v4236 = vadd.f32 0.0, %v4235
      %v4237 = vpop.f32.mrf.mxu0
      %v4238 = vpop.f32.mrf.mxu0
      %v4239 = vadd.f32 0.0, %v4238
      %v4240 = vpop.f32.mrf.mxu0
      %4241 = vmatprep.mubr.bf16.mxu0 %v3041
      %4242 = vmatmul.mubr.bf16.gmra.mxu0 %v2212
      %v4243 = vpop.f32.mrf.mxu0
      %v4244 = vadd.f32 0.0, %v4243
      %v4245 = vpop.f32.mrf.mxu0
      %v4246 = vpop.f32.mrf.mxu0
      %v4247 = vadd.f32 0.0, %v4246
      %v4248 = vpop.f32.mrf.mxu0
      %4249 = vmatprep.mubr.bf16.mxu0 %v3044
      %4250 = vmatmul.mubr.bf16.gmra.mxu0 %v2214
      %v4251 = vpop.f32.mrf.mxu0
      %v4252 = vadd.f32 0.0, %v4251
      %v4253 = vpop.f32.mrf.mxu0
      %v4254 = vpop.f32.mrf.mxu0
      %v4255 = vadd.f32 0.0, %v4254
      %v4256 = vpop.f32.mrf.mxu0
      %4257 = vmatprep.mubr.bf16.mxu0 %v3047
      %4258 = vmatmul.mubr.bf16.gmra.mxu0 %v2216
      %v4259 = vpop.f32.mrf.mxu0
      %v4260 = vadd.f32 0.0, %v4259
      %v4261 = vpop.f32.mrf.mxu0
      %v4262 = vpop.f32.mrf.mxu0
      %v4263 = vadd.f32 0.0, %v4262
      %v4264 = vpop.f32.mrf.mxu0
      %4265 = vmatprep.mubr.bf16.mxu0 %v3050
      %4266 = vmatmul.mubr.bf16.gmra.mxu0 %v2218
      %v4267 = vpop.f32.mrf.mxu0
      %v4268 = vadd.f32 0.0, %v4267
      %v4269 = vpop.f32.mrf.mxu0
      %v4270 = vpop.f32.mrf.mxu0
      %v4271 = vadd.f32 0.0, %v4270
      %v4272 = vpop.f32.mrf.mxu0
      %4273 = vmatprep.mubr.bf16.mxu0 %v3053
      %4274 = vmatmul.mubr.bf16.gmra.mxu0 %v2220
      %v4275 = vpop.f32.mrf.mxu0
      %v4276 = vadd.f32 0.0, %v4275
      %v4277 = vpop.f32.mrf.mxu0
      %v4278 = vpop.f32.mrf.mxu0
      %v4279 = vadd.f32 0.0, %v4278
      %v4280 = vpop.f32.mrf.mxu0
      %4281 = vmatprep.mubr.bf16.mxu0 %v3056
      %4282 = vmatmul.mubr.bf16.gmra.mxu0 %v2222
      %v4283 = vpop.f32.mrf.mxu0
      %v4284 = vadd.f32 0.0, %v4283
      %v4285 = vpop.f32.mrf.mxu0
      %v4286 = vpop.f32.mrf.mxu0
      %v4287 = vadd.f32 0.0, %v4286
      %v4288 = vpop.f32.mrf.mxu0
      %4289 = vmatprep.mubr.bf16.mxu0 %v3059
      %4290 = vmatmul.mubr.bf16.gmra.mxu0 %v2224
      %v4291 = vpop.f32.mrf.mxu0
      %v4292 = vadd.f32 0.0, %v4291
      %v4293 = vpop.f32.mrf.mxu0
      %v4294 = vpop.f32.mrf.mxu0
      %v4295 = vadd.f32 0.0, %v4294
      %v4296 = vpop.f32.mrf.mxu0
      %4297 = vmatprep.mubr.bf16.mxu0 %v3062
      %4298 = vmatmul.mubr.bf16.gmra.mxu0 %v2226
      %v4299 = vpop.f32.mrf.mxu0
      %v4300 = vadd.f32 0.0, %v4299
      %v4301 = vpop.f32.mrf.mxu0
      %v4302 = vpop.f32.mrf.mxu0
      %v4303 = vadd.f32 0.0, %v4302
      %v4304 = vpop.f32.mrf.mxu0
      %4305 = vmatprep.mubr.bf16.mxu0 %v3065
      %4306 = vmatmul.mubr.bf16.gmra.mxu0 %v2228
      %v4307 = vpop.f32.mrf.mxu0
      %v4308 = vadd.f32 0.0, %v4307
      %v4309 = vpop.f32.mrf.mxu0
      %v4310 = vpop.f32.mrf.mxu0
      %v4311 = vadd.f32 0.0, %v4310
      %v4312 = vpop.f32.mrf.mxu0
      %4313 = vmatprep.mubr.bf16.mxu0 %v3068
      %4314 = vmatmul.mubr.bf16.gmra.mxu0 %v2230
      %v4315 = vpop.f32.mrf.mxu0
      %v4316 = vadd.f32 0.0, %v4315
      %v4317 = vpop.f32.mrf.mxu0
      %v4318 = vpop.f32.mrf.mxu0
      %v4319 = vadd.f32 0.0, %v4318
      %v4320 = vpop.f32.mrf.mxu0
      %4321 = vmatprep.mubr.bf16.mxu0 %v3071
      %4322 = vmatmul.mubr.bf16.gmra.mxu0 %v2232
      %v4323 = vpop.f32.mrf.mxu0
      %v4324 = vadd.f32 0.0, %v4323
      %v4325 = vpop.f32.mrf.mxu0
      %v4326 = vpop.f32.mrf.mxu0
      %v4327 = vadd.f32 0.0, %v4326
      %v4328 = vpop.f32.mrf.mxu0
      %4329 = vmatprep.mubr.bf16.mxu0 %v3074
      %4330 = vmatmul.mubr.bf16.gmra.mxu0 %v2234
      %v4331 = vpop.f32.mrf.mxu0
      %v4332 = vadd.f32 0.0, %v4331
      %v4333 = vpop.f32.mrf.mxu0
      %v4334 = vpop.f32.mrf.mxu0
      %v4335 = vadd.f32 0.0, %v4334
      %v4336 = vpop.f32.mrf.mxu0
      %4337 = vmatprep.mubr.bf16.mxu0 %v3077
      %4338 = vmatmul.mubr.bf16.gmra.mxu0 %v2236
      %v4339 = vpop.f32.mrf.mxu0
      %v4340 = vadd.f32 0.0, %v4339
      %v4341 = vpop.f32.mrf.mxu0
      %v4342 = vpop.f32.mrf.mxu0
      %v4343 = vadd.f32 0.0, %v4342
      %v4344 = vpop.f32.mrf.mxu0
      %4345 = vmatprep.mubr.bf16.mxu0 %v3080
      %4346 = vmatmul.mubr.bf16.gmra.mxu0 %v2238
      %v4347 = vpop.f32.mrf.mxu0
      %v4348 = vadd.f32 0.0, %v4347
      %v4349 = vpop.f32.mrf.mxu0
      %v4350 = vpop.f32.mrf.mxu0
      %v4351 = vadd.f32 0.0, %v4350
      %v4352 = vpop.f32.mrf.mxu0
      %4353 = vmatprep.mubr.bf16.mxu0 %v3083
      %4354 = vmatmul.mubr.bf16.gmra.mxu0 %v2240
      %v4355 = vpop.f32.mrf.mxu0
      %v4356 = vadd.f32 0.0, %v4355
      %v4357 = vpop.f32.mrf.mxu0
      %v4358 = vpop.f32.mrf.mxu0
      %v4359 = vadd.f32 0.0, %v4358
      %v4360 = vpop.f32.mrf.mxu0
      %4361 = vmatprep.mubr.bf16.mxu0 %v3086
      %4362 = vmatmul.mubr.bf16.gmra.mxu0 %v2242
      %v4363 = vpop.f32.mrf.mxu0
      %v4364 = vadd.f32 0.0, %v4363
      %v4365 = vpop.f32.mrf.mxu0
      %v4366 = vpop.f32.mrf.mxu0
      %v4367 = vadd.f32 0.0, %v4366
      %v4368 = vpop.f32.mrf.mxu0
      %4369 = vmatprep.mubr.bf16.mxu0 %v3089
      %4370 = vmatmul.mubr.bf16.gmra.mxu0 %v2244
      %v4371 = vpop.f32.mrf.mxu0
      %v4372 = vadd.f32 0.0, %v4371
      %v4373 = vpop.f32.mrf.mxu0
      %v4374 = vpop.f32.mrf.mxu0
      %v4375 = vadd.f32 0.0, %v4374
      %v4376 = vpop.f32.mrf.mxu0
      %4377 = vmatprep.mubr.bf16.mxu0 %v3092
      %4378 = vmatmul.mubr.bf16.gmra.mxu0 %v2246
      %v4379 = vpop.f32.mrf.mxu0
      %v4380 = vadd.f32 0.0, %v4379
      %v4381 = vpop.f32.mrf.mxu0
      %v4382 = vpop.f32.mrf.mxu0
      %v4383 = vadd.f32 0.0, %v4382
      %v4384 = vpop.f32.mrf.mxu0
      %4385 = vmatprep.mubr.bf16.mxu0 %v3095
      %4386 = vmatmul.mubr.bf16.gmra.mxu0 %v2248
      %v4387 = vpop.f32.mrf.mxu0
      %v4388 = vadd.f32 0.0, %v4387
      %v4389 = vpop.f32.mrf.mxu0
      %v4390 = vpop.f32.mrf.mxu0
      %v4391 = vadd.f32 0.0, %v4390
      %v4392 = vpop.f32.mrf.mxu0
      %4393 = vmatprep.mubr.bf16.mxu0 %v3098
      %4394 = vmatmul.mubr.bf16.gmra.mxu0 %v2250
      %v4395 = vpop.f32.mrf.mxu0
      %v4396 = vadd.f32 0.0, %v4395
      %v4397 = vpop.f32.mrf.mxu0
      %v4398 = vpop.f32.mrf.mxu0
      %v4399 = vadd.f32 0.0, %v4398
      %v4400 = vpop.f32.mrf.mxu0
      %4401 = vmatprep.mubr.bf16.mxu0 %v3101
      %4402 = vmatmul.mubr.bf16.gmra.mxu0 %v2252
      %v4403 = vpop.f32.mrf.mxu0
      %v4404 = vadd.f32 0.0, %v4403
      %v4405 = vpop.f32.mrf.mxu0
      %v4406 = vpop.f32.mrf.mxu0
      %v4407 = vadd.f32 0.0, %v4406
      %v4408 = vpop.f32.mrf.mxu0
      %4409 = vmatprep.mubr.bf16.mxu0 %v3104
      %4410 = vmatmul.mubr.bf16.gmra.mxu0 %v2254
      %v4411 = vpop.f32.mrf.mxu0
      %v4412 = vadd.f32 0.0, %v4411
      %v4413 = vpop.f32.mrf.mxu0
      %v4414 = vpop.f32.mrf.mxu0
      %v4415 = vadd.f32 0.0, %v4414
      %v4416 = vpop.f32.mrf.mxu0
      %4417 = vmatprep.mubr.bf16.mxu0 %v3107
      %4418 = vmatmul.mubr.bf16.gmra.mxu0 %v2256
      %v4419 = vpop.f32.mrf.mxu0
      %v4420 = vadd.f32 0.0, %v4419
      %v4421 = vpop.f32.mrf.mxu0
      %v4422 = vpop.f32.mrf.mxu0
      %v4423 = vadd.f32 0.0, %v4422
      %v4424 = vpop.f32.mrf.mxu0
      %4425 = vmatprep.mubr.bf16.mxu0 %v3110
      %4426 = vmatmul.mubr.bf16.gmra.mxu0 %v2258
      %v4427 = vpop.f32.mrf.mxu0
      %v4428 = vadd.f32 0.0, %v4427
      %v4429 = vpop.f32.mrf.mxu0
      %v4430 = vpop.f32.mrf.mxu0
      %v4431 = vadd.f32 0.0, %v4430
      %v4432 = vpop.f32.mrf.mxu0
      %4433 = vmatprep.mubr.bf16.mxu0 %v3113
      %4434 = vmatmul.mubr.bf16.gmra.mxu0 %v2260
      %v4435 = vpop.f32.mrf.mxu0
      %v4436 = vadd.f32 0.0, %v4435
      %v4437 = vpop.f32.mrf.mxu0
      %v4438 = vpop.f32.mrf.mxu0
      %v4439 = vadd.f32 0.0, %v4438
      %v4440 = vpop.f32.mrf.mxu0
      %4441 = vmatprep.mubr.bf16.mxu0 %v3116
      %4442 = vmatmul.mubr.bf16.gmra.mxu0 %v2262
      %v4443 = vpop.f32.mrf.mxu0
      %v4444 = vadd.f32 0.0, %v4443
      %v4445 = vpop.f32.mrf.mxu0
      %v4446 = vpop.f32.mrf.mxu0
      %v4447 = vadd.f32 0.0, %v4446
      %v4448 = vpop.f32.mrf.mxu0
      %4449 = vmatprep.mubr.bf16.mxu0 %v3119
      %4450 = vmatmul.mubr.bf16.gmra.mxu0 %v2264
      %v4451 = vpop.f32.mrf.mxu0
      %v4452 = vadd.f32 0.0, %v4451
      %v4453 = vpop.f32.mrf.mxu0
      %v4454 = vpop.f32.mrf.mxu0
      %v4455 = vadd.f32 0.0, %v4454
      %v4456 = vpop.f32.mrf.mxu0
      %4457 = vmatprep.mubr.bf16.mxu0 %v3122
      %4458 = vmatmul.mubr.bf16.gmra.mxu0 %v2266
      %v4459 = vpop.f32.mrf.mxu0
      %v4460 = vadd.f32 0.0, %v4459
      %v4461 = vpop.f32.mrf.mxu0
      %v4462 = vpop.f32.mrf.mxu0
      %v4463 = vadd.f32 0.0, %v4462
      %v4464 = vpop.f32.mrf.mxu0
      %4465 = vmatprep.mubr.bf16.mxu0 %v3125
      %4466 = vmatmul.mubr.bf16.gmra.mxu0 %v2268
      %v4467 = vpop.f32.mrf.mxu0
      %v4468 = vadd.f32 0.0, %v4467
      %v4469 = vpop.f32.mrf.mxu0
      %v4470 = vpop.f32.mrf.mxu0
      %v4471 = vadd.f32 0.0, %v4470
      %v4472 = vpop.f32.mrf.mxu0
      %4473 = vmatprep.mubr.bf16.mxu0 %v3128
      %4474 = vmatmul.mubr.bf16.gmra.mxu0 %v2270
      %v4475 = vpop.f32.mrf.mxu0
      %v4476 = vadd.f32 0.0, %v4475
      %v4477 = vpop.f32.mrf.mxu0
      %v4478 = vpop.f32.mrf.mxu0
      %v4479 = vadd.f32 0.0, %v4478
      %v4480 = vpop.f32.mrf.mxu0
      %4481 = vmatprep.mubr.bf16.mxu0 %v3131
      %4482 = vmatmul.mubr.bf16.gmra.mxu0 %v2272
      %v4483 = vpop.f32.mrf.mxu0
      %v4484 = vadd.f32 0.0, %v4483
      %v4485 = vpop.f32.mrf.mxu0
      %v4486 = vpop.f32.mrf.mxu0
      %v4487 = vadd.f32 0.0, %v4486
      %v4488 = vpop.f32.mrf.mxu0
      %4489 = vmatprep.mubr.bf16.mxu0 %v3134
      %4490 = vmatmul.mubr.bf16.gmra.mxu0 %v2274
      %v4491 = vpop.f32.mrf.mxu0
      %v4492 = vadd.f32 0.0, %v4491
      %v4493 = vpop.f32.mrf.mxu0
      %v4494 = vpop.f32.mrf.mxu0
      %v4495 = vadd.f32 0.0, %v4494
      %v4496 = vpop.f32.mrf.mxu0
      %4497 = vmatprep.mubr.bf16.mxu0 %v3137
      %4498 = vmatmul.mubr.bf16.gmra.mxu0 %v2276
      %v4499 = vpop.f32.mrf.mxu0
      %v4500 = vadd.f32 0.0, %v4499
      %v4501 = vpop.f32.mrf.mxu0
      %v4502 = vpop.f32.mrf.mxu0
      %v4503 = vadd.f32 0.0, %v4502
      %v4504 = vpop.f32.mrf.mxu0
      %4505 = vmatprep.mubr.bf16.mxu0 %v3140
      %4506 = vmatmul.mubr.bf16.gmra.mxu0 %v2278
      %v4507 = vpop.f32.mrf.mxu0
      %v4508 = vadd.f32 0.0, %v4507
      %v4509 = vpop.f32.mrf.mxu0
      %v4510 = vpop.f32.mrf.mxu0
      %v4511 = vadd.f32 0.0, %v4510
      %v4512 = vpop.f32.mrf.mxu0
      %4513 = vmatprep.mubr.bf16.mxu0 %v3143
      %4514 = vmatmul.mubr.bf16.gmra.mxu0 %v2280
      %v4515 = vpop.f32.mrf.mxu0
      %v4516 = vadd.f32 0.0, %v4515
      %v4517 = vpop.f32.mrf.mxu0
      %v4518 = vpop.f32.mrf.mxu0
      %v4519 = vadd.f32 0.0, %v4518
      %v4520 = vpop.f32.mrf.mxu0
      %4521 = vmatprep.mubr.bf16.mxu0 %v3146
      %4522 = vmatmul.mubr.bf16.gmra.mxu0 %v2282
      %v4523 = vpop.f32.mrf.mxu0
      %v4524 = vadd.f32 0.0, %v4523
      %v4525 = vpop.f32.mrf.mxu0
      %v4526 = vpop.f32.mrf.mxu0
      %v4527 = vadd.f32 0.0, %v4526
      %v4528 = vpop.f32.mrf.mxu0
      %4529 = vmatprep.mubr.bf16.mxu0 %v3149
      %4530 = vmatmul.mubr.bf16.gmra.mxu0 %v2284
      %v4531 = vpop.f32.mrf.mxu0
      %v4532 = vadd.f32 0.0, %v4531
      %v4533 = vpop.f32.mrf.mxu0
      %v4534 = vpop.f32.mrf.mxu0
      %v4535 = vadd.f32 0.0, %v4534
      %v4536 = vpop.f32.mrf.mxu0
      %4537 = vmatprep.mubr.bf16.mxu0 %v3152
      %4538 = vmatmul.mubr.bf16.gmra.mxu0 %v2286
      %v4539 = vpop.f32.mrf.mxu0
      %v4540 = vadd.f32 0.0, %v4539
      %v4541 = vpop.f32.mrf.mxu0
      %v4542 = vpop.f32.mrf.mxu0
      %v4543 = vadd.f32 0.0, %v4542
      %v4544 = vpop.f32.mrf.mxu0
      %4545 = vmatprep.mubr.bf16.mxu0 %v3155
      %4546 = vmatmul.mubr.bf16.gmra.mxu0 %v2288
      %v4547 = vpop.f32.mrf.mxu0
      %v4548 = vadd.f32 0.0, %v4547
      %v4549 = vpop.f32.mrf.mxu0
      %v4550 = vpop.f32.mrf.mxu0
      %v4551 = vadd.f32 0.0, %v4550
      %v4552 = vpop.f32.mrf.mxu0
      %4553 = vmatprep.mubr.bf16.mxu0 %v3158
      %4554 = vmatmul.mubr.bf16.gmra.mxu0 %v2290
      %v4555 = vpop.f32.mrf.mxu0
      %v4556 = vadd.f32 0.0, %v4555
      %v4557 = vpop.f32.mrf.mxu0
      %v4558 = vpop.f32.mrf.mxu0
      %v4559 = vadd.f32 0.0, %v4558
      %v4560 = vpop.f32.mrf.mxu0
      %4561 = vmatprep.mubr.bf16.mxu0 %v3161
      %4562 = vmatmul.mubr.bf16.gmra.mxu0 %v2292
      %v4563 = vpop.f32.mrf.mxu0
      %v4564 = vadd.f32 0.0, %v4563
      %v4565 = vpop.f32.mrf.mxu0
      %v4566 = vpop.f32.mrf.mxu0
      %v4567 = vadd.f32 0.0, %v4566
      %v4568 = vpop.f32.mrf.mxu0
      %4569 = vmatprep.mubr.bf16.mxu0 %v3164
      %4570 = vmatmul.mubr.bf16.gmra.mxu0 %v2294
      %v4571 = vpop.f32.mrf.mxu0
      %v4572 = vadd.f32 0.0, %v4571
      %v4573 = vpop.f32.mrf.mxu0
      %v4574 = vpop.f32.mrf.mxu0
      %v4575 = vadd.f32 0.0, %v4574
      %v4576 = vpop.f32.mrf.mxu0
      %4577 = vmatprep.mubr.bf16.mxu0 %v3167
      %4578 = vmatmul.mubr.bf16.gmra.mxu0 %v2296
      %v4579 = vpop.f32.mrf.mxu0
      %v4580 = vadd.f32 0.0, %v4579
      %v4581 = vpop.f32.mrf.mxu0
      %v4582 = vpop.f32.mrf.mxu0
      %v4583 = vadd.f32 0.0, %v4582
      %v4584 = vpop.f32.mrf.mxu0
      %4585 = vmatprep.mubr.bf16.mxu0 %v3170
      %4586 = vmatmul.mubr.bf16.gmra.mxu0 %v2298
      %v4587 = vpop.f32.mrf.mxu0
      %v4588 = vadd.f32 0.0, %v4587
      %v4589 = vpop.f32.mrf.mxu0
      %v4590 = vpop.f32.mrf.mxu0
      %v4591 = vadd.f32 0.0, %v4590
      %v4592 = vpop.f32.mrf.mxu0
      %4593 = vmatprep.mubr.bf16.mxu0 %v3173
      %4594 = vmatmul.mubr.bf16.gmra.mxu0 %v2300
      %v4595 = vpop.f32.mrf.mxu0
      %v4596 = vadd.f32 0.0, %v4595
      %v4597 = vpop.f32.mrf.mxu0
      %v4598 = vpop.f32.mrf.mxu0
      %v4599 = vadd.f32 0.0, %v4598
      %v4600 = vpop.f32.mrf.mxu0
      %4601 = vmatprep.mubr.bf16.mxu0 %v3176
      %4602 = vmatmul.mubr.bf16.gmra.mxu0 %v2302
      %v4603 = vpop.f32.mrf.mxu0
      %v4604 = vadd.f32 0.0, %v4603
      %v4605 = vpop.f32.mrf.mxu0
      %v4606 = vpop.f32.mrf.mxu0
      %v4607 = vadd.f32 0.0, %v4606
      %v4608 = vpop.f32.mrf.mxu0
      %4609 = vmatprep.mubr.bf16.mxu0 %v3179
      %4610 = vmatmul.mubr.bf16.gmra.mxu0 %v2304
      %v4611 = vpop.f32.mrf.mxu0
      %v4612 = vadd.f32 0.0, %v4611
      %v4613 = vpop.f32.mrf.mxu0
      %v4614 = vpop.f32.mrf.mxu0
      %v4615 = vadd.f32 0.0, %v4614
      %v4616 = vpop.f32.mrf.mxu0
      %4617 = vmatprep.mubr.bf16.mxu0 %v3182
      %4618 = vmatmul.mubr.bf16.gmra.mxu0 %v2306
      %v4619 = vpop.f32.mrf.mxu0
      %v4620 = vadd.f32 0.0, %v4619
      %v4621 = vpop.f32.mrf.mxu0
      %v4622 = vpop.f32.mrf.mxu0
      %v4623 = vadd.f32 0.0, %v4622
      %v4624 = vpop.f32.mrf.mxu0
      %4625 = vmatprep.mubr.bf16.mxu0 %v3185
      %4626 = vmatmul.mubr.bf16.gmra.mxu0 %v2308
      %v4627 = vpop.f32.mrf.mxu0
      %v4628 = vadd.f32 0.0, %v4627
      %v4629 = vpop.f32.mrf.mxu0
      %v4630 = vpop.f32.mrf.mxu0
      %v4631 = vadd.f32 0.0, %v4630
      %v4632 = vpop.f32.mrf.mxu0
      %4633 = vmatprep.mubr.bf16.mxu0 %v3188
      %4634 = vmatmul.mubr.bf16.gmra.mxu0 %v2310
      %v4635 = vpop.f32.mrf.mxu0
      %v4636 = vadd.f32 0.0, %v4635
      %v4637 = vpop.f32.mrf.mxu0
      %v4638 = vpop.f32.mrf.mxu0
      %v4639 = vadd.f32 0.0, %v4638
      %v4640 = vpop.f32.mrf.mxu0
      %4641 = vmatprep.mubr.bf16.mxu0 %v3191
      %4642 = vmatmul.mubr.bf16.gmra.mxu0 %v2312
      %v4643 = vpop.f32.mrf.mxu0
      %v4644 = vadd.f32 0.0, %v4643
      %v4645 = vpop.f32.mrf.mxu0
      %v4646 = vpop.f32.mrf.mxu0
      %v4647 = vadd.f32 0.0, %v4646
      %v4648 = vpop.f32.mrf.mxu0
      %4649 = vmatprep.mubr.bf16.mxu0 %v3194
      %4650 = vmatmul.mubr.bf16.gmra.mxu0 %v2314
      %v4651 = vpop.f32.mrf.mxu0
      %v4652 = vadd.f32 0.0, %v4651
      %v4653 = vpop.f32.mrf.mxu0
      %v4654 = vpop.f32.mrf.mxu0
      %v4655 = vadd.f32 0.0, %v4654
      %v4656 = vpop.f32.mrf.mxu0
      %4657 = vmatprep.mubr.bf16.mxu0 %v3197
      %4658 = vmatmul.mubr.bf16.gmra.mxu0 %v2316
      %v4659 = vpop.f32.mrf.mxu0
      %v4660 = vadd.f32 0.0, %v4659
      %v4661 = vpop.f32.mrf.mxu0
      %v4662 = vpop.f32.mrf.mxu0
      %v4663 = vadd.f32 0.0, %v4662
      %v4664 = vpop.f32.mrf.mxu0
      %4665 = vmatprep.mubr.bf16.mxu0 %v3200
      %4666 = vmatmul.mubr.bf16.gmra.mxu0 %v2318
      %v4667 = vpop.f32.mrf.mxu0
      %v4668 = vadd.f32 0.0, %v4667
      %v4669 = vpop.f32.mrf.mxu0
      %v4670 = vpop.f32.mrf.mxu0
      %v4671 = vadd.f32 0.0, %v4670
      %v4672 = vpop.f32.mrf.mxu0
      %4673 = vmatprep.mubr.bf16.mxu0 %v3203
      %4674 = vmatmul.mubr.bf16.gmra.mxu0 %v2320
      %v4675 = vpop.f32.mrf.mxu0
      %v4676 = vadd.f32 0.0, %v4675
      %v4677 = vpop.f32.mrf.mxu0
      %v4678 = vpop.f32.mrf.mxu0
      %v4679 = vadd.f32 0.0, %v4678
      %v4680 = vpop.f32.mrf.mxu0
      %4681 = vmatprep.mubr.bf16.mxu0 %v3206
      %4682 = vmatmul.mubr.bf16.gmra.mxu0 %v2322
      %v4683 = vpop.f32.mrf.mxu0
      %v4684 = vadd.f32 0.0, %v4683
      %v4685 = vpop.f32.mrf.mxu0
      %v4686 = vpop.f32.mrf.mxu0
      %v4687 = vadd.f32 0.0, %v4686
      %v4688 = vpop.f32.mrf.mxu0
      %4689 = vmatprep.mubr.bf16.mxu0 %v3209
      %4690 = vmatmul.mubr.bf16.gmra.mxu0 %v2324
      %v4691 = vpop.f32.mrf.mxu0
      %v4692 = vadd.f32 0.0, %v4691
      %v4693 = vpop.f32.mrf.mxu0
      %v4694 = vpop.f32.mrf.mxu0
      %v4695 = vadd.f32 0.0, %v4694
      %v4696 = vpop.f32.mrf.mxu0
      %4697 = vmatprep.mubr.bf16.mxu0 %v3212
      %4698 = vmatmul.mubr.bf16.gmra.mxu0 %v2326
      %v4699 = vpop.f32.mrf.mxu0
      %v4700 = vadd.f32 0.0, %v4699
      %v4701 = vpop.f32.mrf.mxu0
      %v4702 = vpop.f32.mrf.mxu0
      %v4703 = vadd.f32 0.0, %v4702
      %v4704 = vpop.f32.mrf.mxu0
      %4705 = vmatprep.mubr.bf16.mxu0 %v3215
      %4706 = vmatmul.mubr.bf16.gmra.mxu0 %v2328
      %v4707 = vpop.f32.mrf.mxu0
      %v4708 = vadd.f32 0.0, %v4707
      %v4709 = vpop.f32.mrf.mxu0
      %v4710 = vpop.f32.mrf.mxu0
      %v4711 = vadd.f32 0.0, %v4710
      %v4712 = vpop.f32.mrf.mxu0
      %4713 = vmatprep.mubr.bf16.mxu0 %v3218
      %4714 = vmatmul.mubr.bf16.gmra.mxu0 %v2330
      %v4715 = vpop.f32.mrf.mxu0
      %v4716 = vadd.f32 0.0, %v4715
      %v4717 = vpop.f32.mrf.mxu0
      %v4718 = vpop.f32.mrf.mxu0
      %v4719 = vadd.f32 0.0, %v4718
      %v4720 = vpop.f32.mrf.mxu0
      %4721 = vmatprep.mubr.bf16.mxu0 %v3221
      %4722 = vmatmul.mubr.bf16.gmra.mxu0 %v2332
      %v4723 = vpop.f32.mrf.mxu0
      %v4724 = vadd.f32 0.0, %v4723
      %v4725 = vpop.f32.mrf.mxu0
      %v4726 = vpop.f32.mrf.mxu0
      %v4727 = vadd.f32 0.0, %v4726
      %v4728 = vpop.f32.mrf.mxu0
      %4729 = vmatprep.mubr.bf16.mxu0 %v3224
      %4730 = vmatmul.mubr.bf16.gmra.mxu0 %v2334
      %v4731 = vpop.f32.mrf.mxu0
      %v4732 = vadd.f32 0.0, %v4731
      %v4733 = vpop.f32.mrf.mxu0
      %v4734 = vpop.f32.mrf.mxu0
      %v4735 = vadd.f32 0.0, %v4734
      %v4736 = vpop.f32.mrf.mxu0
      %4737 = vmatprep.mubr.bf16.mxu0 %v3227
      %4738 = vmatmul.mubr.bf16.gmra.mxu0 %v2336
      %v4739 = vpop.f32.mrf.mxu0
      %v4740 = vadd.f32 0.0, %v4739
      %v4741 = vpop.f32.mrf.mxu0
      %v4742 = vpop.f32.mrf.mxu0
      %v4743 = vadd.f32 0.0, %v4742
      %v4744 = vpop.f32.mrf.mxu0
      %4745 = vmatprep.mubr.bf16.mxu0 %v3230
      %4746 = vmatmul.mubr.bf16.gmra.mxu0 %v2338
      %v4747 = vpop.f32.mrf.mxu0
      %v4748 = vadd.f32 0.0, %v4747
      %v4749 = vpop.f32.mrf.mxu0
      %v4750 = vpop.f32.mrf.mxu0
      %v4751 = vadd.f32 0.0, %v4750
      %v4752 = vpop.f32.mrf.mxu0
      %4753 = vmatprep.mubr.bf16.mxu0 %v3233
      %4754 = vmatmul.mubr.bf16.gmra.mxu0 %v2340
      %v4755 = vpop.f32.mrf.mxu0
      %v4756 = vadd.f32 0.0, %v4755
      %v4757 = vpop.f32.mrf.mxu0
      %v4758 = vpop.f32.mrf.mxu0
      %v4759 = vadd.f32 0.0, %v4758
      %v4760 = vpop.f32.mrf.mxu0
      %4761 = vmatprep.mubr.bf16.mxu0 %v3236
      %4762 = vmatmul.mubr.bf16.gmra.mxu0 %v2342
      %v4763 = vpop.f32.mrf.mxu0
      %v4764 = vadd.f32 0.0, %v4763
      %v4765 = vpop.f32.mrf.mxu0
      %v4766 = vpop.f32.mrf.mxu0
      %v4767 = vadd.f32 0.0, %v4766
      %v4768 = vpop.f32.mrf.mxu0
      %4769 = vmatprep.mubr.bf16.mxu0 %v3239
      %4770 = vmatmul.mubr.bf16.gmra.mxu0 %v2344
      %v4771 = vpop.f32.mrf.mxu0
      %v4772 = vadd.f32 0.0, %v4771
      %v4773 = vpop.f32.mrf.mxu0
      %v4774 = vpop.f32.mrf.mxu0
      %v4775 = vadd.f32 0.0, %v4774
      %v4776 = vpop.f32.mrf.mxu0
      %4777 = vmatprep.mubr.bf16.mxu0 %v3242
      %4778 = vmatmul.mubr.bf16.gmra.mxu0 %v2346
      %v4779 = vpop.f32.mrf.mxu0
      %v4780 = vadd.f32 0.0, %v4779
      %v4781 = vpop.f32.mrf.mxu0
      %v4782 = vpop.f32.mrf.mxu0
      %v4783 = vadd.f32 0.0, %v4782
      %v4784 = vpop.f32.mrf.mxu0
      %4785 = vmatprep.mubr.bf16.mxu0 %v3245
      %4786 = vmatmul.mubr.bf16.gmra.mxu0 %v2348
      %v4787 = vpop.f32.mrf.mxu0
      %v4788 = vadd.f32 0.0, %v4787
      %v4789 = vpop.f32.mrf.mxu0
      %v4790 = vpop.f32.mrf.mxu0
      %v4791 = vadd.f32 0.0, %v4790
      %v4792 = vpop.f32.mrf.mxu0
      %4793 = vmatprep.mubr.bf16.mxu0 %v3248
      %4794 = vmatmul.mubr.bf16.gmra.mxu0 %v2350
      %v4795 = vpop.f32.mrf.mxu0
      %v4796 = vadd.f32 0.0, %v4795
      %v4797 = vpop.f32.mrf.mxu0
      %v4798 = vpop.f32.mrf.mxu0
      %v4799 = vadd.f32 0.0, %v4798
      %v4800 = vpop.f32.mrf.mxu0
      %4801 = vmatprep.mubr.bf16.mxu0 %v3251
      %4802 = vmatmul.mubr.bf16.gmra.mxu0 %v2352
      %v4803 = vpop.f32.mrf.mxu0
      %v4804 = vadd.f32 0.0, %v4803
      %v4805 = vpop.f32.mrf.mxu0
      %v4806 = vpop.f32.mrf.mxu0
      %v4807 = vadd.f32 0.0, %v4806
      %v4808 = vpop.f32.mrf.mxu0
      %4809 = vmatprep.mubr.bf16.mxu0 %v3254
      %4810 = vmatmul.mubr.bf16.gmra.mxu0 %v2354
      %v4811 = vpop.f32.mrf.mxu0
      %v4812 = vadd.f32 0.0, %v4811
      %v4813 = vpop.f32.mrf.mxu0
      %v4814 = vpop.f32.mrf.mxu0
      %v4815 = vadd.f32 0.0, %v4814
      %v4816 = vpop.f32.mrf.mxu0
      %4817 = vmatprep.mubr.bf16.mxu0 %v3257
      %4818 = vmatmul.mubr.bf16.gmra.mxu0 %v2356
      %v4819 = vpop.f32.mrf.mxu0
      %v4820 = vadd.f32 0.0, %v4819
      %v4821 = vpop.f32.mrf.mxu0
      %v4822 = vpop.f32.mrf.mxu0
      %v4823 = vadd.f32 0.0, %v4822
      %v4824 = vpop.f32.mrf.mxu0
      %4825 = vmatprep.mubr.bf16.mxu0 %v3260
      %4826 = vmatmul.mubr.bf16.gmra.mxu0 %v2358
      %v4827 = vpop.f32.mrf.mxu0
      %v4828 = vadd.f32 0.0, %v4827
      %v4829 = vpop.f32.mrf.mxu0
      %v4830 = vpop.f32.mrf.mxu0
      %v4831 = vadd.f32 0.0, %v4830
      %v4832 = vpop.f32.mrf.mxu0
      %4833 = vmatprep.mubr.bf16.mxu0 %v3263
      %4834 = vmatmul.mubr.bf16.gmra.mxu0 %v2360
      %v4835 = vpop.f32.mrf.mxu0
      %v4836 = vadd.f32 0.0, %v4835
      %v4837 = vpop.f32.mrf.mxu0
      %v4838 = vpop.f32.mrf.mxu0
      %v4839 = vadd.f32 0.0, %v4838
      %v4840 = vpop.f32.mrf.mxu0
      %4841 = vmatprep.mubr.bf16.mxu0 %v3266
      %4842 = vmatmul.mubr.bf16.gmra.mxu0 %v2362
      %v4843 = vpop.f32.mrf.mxu0
      %v4844 = vadd.f32 0.0, %v4843
      %v4845 = vpop.f32.mrf.mxu0
      %v4846 = vpop.f32.mrf.mxu0
      %v4847 = vadd.f32 0.0, %v4846
      %v4848 = vpop.f32.mrf.mxu0
      %4849 = vmatprep.mubr.bf16.mxu0 %v3269
      %4850 = vmatmul.mubr.bf16.gmra.mxu0 %v2364
      %v4851 = vpop.f32.mrf.mxu0
      %v4852 = vadd.f32 0.0, %v4851
      %v4853 = vpop.f32.mrf.mxu0
      %v4854 = vpop.f32.mrf.mxu0
      %v4855 = vadd.f32 0.0, %v4854
      %v4856 = vpop.f32.mrf.mxu0
      %4857 = vmatprep.mubr.bf16.mxu0 %v3272
      %4858 = vmatmul.mubr.bf16.gmra.mxu0 %v2366
      %v4859 = vpop.f32.mrf.mxu0
      %v4860 = vadd.f32 0.0, %v4859
      %v4861 = vpop.f32.mrf.mxu0
      %v4862 = vpop.f32.mrf.mxu0
      %v4863 = vadd.f32 0.0, %v4862
      %v4864 = vpop.f32.mrf.mxu0
      %4865 = vmatprep.mubr.bf16.mxu0 %v3275
      %4866 = vmatmul.mubr.bf16.gmra.mxu0 %v2368
      %v4867 = vpop.f32.mrf.mxu0
      %v4868 = vadd.f32 0.0, %v4867
      %v4869 = vpop.f32.mrf.mxu0
      %v4870 = vpop.f32.mrf.mxu0
      %v4871 = vadd.f32 0.0, %v4870
      %v4872 = vpop.f32.mrf.mxu0
      %4873 = vmatprep.mubr.bf16.mxu0 %v3278
      %4874 = vmatmul.mubr.bf16.gmra.mxu0 %v2370
      %v4875 = vpop.f32.mrf.mxu0
      %v4876 = vadd.f32 0.0, %v4875
      %v4877 = vpop.f32.mrf.mxu0
      %v4878 = vpop.f32.mrf.mxu0
      %v4879 = vadd.f32 0.0, %v4878
      %v4880 = vpop.f32.mrf.mxu0
      %4881 = vmatprep.mubr.bf16.mxu0 %v3281
      %4882 = vmatmul.mubr.bf16.gmra.mxu0 %v2372
      %v4883 = vpop.f32.mrf.mxu0
      %v4884 = vadd.f32 0.0, %v4883
      %v4885 = vpop.f32.mrf.mxu0
      %v4886 = vpop.f32.mrf.mxu0
      %v4887 = vadd.f32 0.0, %v4886
      %v4888 = vpop.f32.mrf.mxu0
      %4889 = vmatprep.mubr.bf16.mxu0 %v3284
      %4890 = vmatmul.mubr.bf16.gmra.mxu0 %v2374
      %v4891 = vpop.f32.mrf.mxu0
      %v4892 = vadd.f32 0.0, %v4891
      %v4893 = vpop.f32.mrf.mxu0
      %v4894 = vpop.f32.mrf.mxu0
      %v4895 = vadd.f32 0.0, %v4894
      %v4896 = vpop.f32.mrf.mxu0
      %4897 = vmatprep.mubr.bf16.mxu0 %v3287
      %4898 = vmatmul.mubr.bf16.gmra.mxu0 %v2376
      %v4899 = vpop.f32.mrf.mxu0
      %v4900 = vadd.f32 0.0, %v4899
      %v4901 = vpop.f32.mrf.mxu0
      %v4902 = vpop.f32.mrf.mxu0
      %v4903 = vadd.f32 0.0, %v4902
      %v4904 = vpop.f32.mrf.mxu0
      %4905 = vmatprep.mubr.bf16.mxu0 %v3290
      %4906 = vmatmul.mubr.bf16.gmra.mxu0 %v2378
      %v4907 = vpop.f32.mrf.mxu0
      %v4908 = vadd.f32 0.0, %v4907
      %v4909 = vpop.f32.mrf.mxu0
      %v4910 = vpop.f32.mrf.mxu0
      %v4911 = vadd.f32 0.0, %v4910
      %v4912 = vpop.f32.mrf.mxu0
      %4913 = vmatprep.mubr.bf16.mxu0 %v3293
      %4914 = vmatmul.mubr.bf16.gmra.mxu0 %v2380
      %v4915 = vpop.f32.mrf.mxu0
      %v4916 = vadd.f32 0.0, %v4915
      %v4917 = vpop.f32.mrf.mxu0
      %v4918 = vpop.f32.mrf.mxu0
      %v4919 = vadd.f32 0.0, %v4918
      %v4920 = vpop.f32.mrf.mxu0
      %4921 = vmatprep.mubr.bf16.mxu0 %v3296
      %4922 = vmatmul.mubr.bf16.gmra.mxu0 %v2382
      %v4923 = vpop.f32.mrf.mxu0
      %v4924 = vadd.f32 0.0, %v4923
      %v4925 = vpop.f32.mrf.mxu0
      %v4926 = vpop.f32.mrf.mxu0
      %v4927 = vadd.f32 0.0, %v4926
      %v4928 = vpop.f32.mrf.mxu0
      %4929 = vmatprep.mubr.bf16.mxu0 %v3299
      %4930 = vmatmul.mubr.bf16.gmra.mxu0 %v2384
      %v4931 = vpop.f32.mrf.mxu0
      %v4932 = vadd.f32 0.0, %v4931
      %v4933 = vpop.f32.mrf.mxu0
      %v4934 = vpop.f32.mrf.mxu0
      %v4935 = vadd.f32 0.0, %v4934
      %v4936 = vpop.f32.mrf.mxu0
      %4937 = vmatprep.mubr.bf16.mxu0 %v3302
      %4938 = vmatmul.mubr.bf16.gmra.mxu0 %v2386
      %v4939 = vpop.f32.mrf.mxu0
      %v4940 = vadd.f32 0.0, %v4939
      %v4941 = vpop.f32.mrf.mxu0
      %v4942 = vpop.f32.mrf.mxu0
      %v4943 = vadd.f32 0.0, %v4942
      %v4944 = vpop.f32.mrf.mxu0
      %4945 = vmatprep.mubr.bf16.mxu0 %v3305
      %4946 = vmatmul.mubr.bf16.gmra.mxu0 %v2388
      %v4947 = vpop.f32.mrf.mxu0
      %v4948 = vadd.f32 0.0, %v4947
      %v4949 = vpop.f32.mrf.mxu0
      %v4950 = vpop.f32.mrf.mxu0
      %v4951 = vadd.f32 0.0, %v4950
      %v4952 = vpop.f32.mrf.mxu0
      %4953 = vmatprep.mubr.bf16.mxu0 %v3308
      %4954 = vmatmul.mubr.bf16.gmra.mxu0 %v2390
      %v4955 = vpop.f32.mrf.mxu0
      %v4956 = vadd.f32 0.0, %v4955
      %v4957 = vpop.f32.mrf.mxu0
      %v4958 = vpop.f32.mrf.mxu0
      %v4959 = vadd.f32 0.0, %v4958
      %v4960 = vpop.f32.mrf.mxu0
      %4961 = vmatprep.mubr.bf16.mxu0 %v3311
      %4962 = vmatmul.mubr.bf16.gmra.mxu0 %v2392
      %v4963 = vpop.f32.mrf.mxu0
      %v4964 = vadd.f32 0.0, %v4963
      %v4965 = vpop.f32.mrf.mxu0
      %v4966 = vpop.f32.mrf.mxu0
      %v4967 = vadd.f32 0.0, %v4966
      %v4968 = vpop.f32.mrf.mxu0
      %4969 = vmatprep.mubr.bf16.mxu0 %v3314
      %4970 = vmatmul.mubr.bf16.gmra.mxu0 %v2394
      %v4971 = vpop.f32.mrf.mxu0
      %v4972 = vadd.f32 0.0, %v4971
      %v4973 = vpop.f32.mrf.mxu0
      %v4974 = vpop.f32.mrf.mxu0
      %v4975 = vadd.f32 0.0, %v4974
      %v4976 = vpop.f32.mrf.mxu0
      %4977 = vmatprep.mubr.bf16.mxu0 %v3317
      %4978 = vmatmul.mubr.bf16.gmra.mxu0 %v2396
      %v4979 = vpop.f32.mrf.mxu0
      %v4980 = vadd.f32 0.0, %v4979
      %v4981 = vpop.f32.mrf.mxu0
      %v4982 = vpop.f32.mrf.mxu0
      %v4983 = vadd.f32 0.0, %v4982
      %v4984 = vpop.f32.mrf.mxu0
      %4985 = vmatprep.mubr.bf16.mxu0 %v3320
      %4986 = vmatmul.mubr.bf16.gmra.mxu0 %v2398
      %v4987 = vpop.f32.mrf.mxu0
      %v4988 = vadd.f32 0.0, %v4987
      %v4989 = vpop.f32.mrf.mxu0
      %v4990 = vpop.f32.mrf.mxu0
      %v4991 = vadd.f32 0.0, %v4990
      %v4992 = vpop.f32.mrf.mxu0
      %4993 = vmatprep.mubr.bf16.mxu0 %v3323
      %4994 = vmatmul.mubr.bf16.gmra.mxu0 %v2400
      %v4995 = vpop.f32.mrf.mxu0
      %v4996 = vadd.f32 0.0, %v4995
      %v4997 = vpop.f32.mrf.mxu0
      %v4998 = vpop.f32.mrf.mxu0
      %v4999 = vadd.f32 0.0, %v4998
      %v5000 = vpop.f32.mrf.mxu0
      %5001 = vmatprep.mubr.bf16.mxu0 %v3326
      %5002 = vmatmul.mubr.bf16.gmra.mxu0 %v2402
      %v5003 = vpop.f32.mrf.mxu0
      %v5004 = vadd.f32 0.0, %v5003
      %v5005 = vpop.f32.mrf.mxu0
      %v5006 = vpop.f32.mrf.mxu0
      %v5007 = vadd.f32 0.0, %v5006
      %v5008 = vpop.f32.mrf.mxu0
      %5009 = vmatprep.mubr.bf16.mxu0 %v3329
      %5010 = vmatmul.mubr.bf16.gmra.mxu0 %v2404
      %v5011 = vpop.f32.mrf.mxu0
      %v5012 = vadd.f32 0.0, %v5011
      %v5013 = vpop.f32.mrf.mxu0
      %v5014 = vpop.f32.mrf.mxu0
      %v5015 = vadd.f32 0.0, %v5014
      %v5016 = vpop.f32.mrf.mxu0
      %5017 = vmatprep.mubr.bf16.mxu0 %v3332
      %5018 = vmatmul.mubr.bf16.gmra.mxu0 %v2406
      %v5019 = vpop.f32.mrf.mxu0
      %v5020 = vadd.f32 0.0, %v5019
      %v5021 = vpop.f32.mrf.mxu0
      %v5022 = vpop.f32.mrf.mxu0
      %v5023 = vadd.f32 0.0, %v5022
      %v5024 = vpop.f32.mrf.mxu0
      %5025 = vmatprep.mubr.bf16.mxu0 %v3335
      %5026 = vmatmul.mubr.bf16.gmra.mxu0 %v2408
      %v5027 = vpop.f32.mrf.mxu0
      %v5028 = vadd.f32 0.0, %v5027
      %v5029 = vpop.f32.mrf.mxu0
      %v5030 = vpop.f32.mrf.mxu0
      %v5031 = vadd.f32 0.0, %v5030
      %v5032 = vpop.f32.mrf.mxu0
      %5033 = vmatprep.mubr.bf16.mxu0 %v3338
      %5034 = vmatmul.mubr.bf16.gmra.mxu0 %v2410
      %v5035 = vpop.f32.mrf.mxu0
      %v5036 = vadd.f32 0.0, %v5035
      %v5037 = vpop.f32.mrf.mxu0
      %v5038 = vpop.f32.mrf.mxu0
      %v5039 = vadd.f32 0.0, %v5038
      %v5040 = vpop.f32.mrf.mxu0
      %5041 = vmatprep.mubr.bf16.mxu0 %v3341
      %5042 = vmatmul.mubr.bf16.gmra.mxu0 %v2412
      %v5043 = vpop.f32.mrf.mxu0
      %v5044 = vadd.f32 0.0, %v5043
      %v5045 = vpop.f32.mrf.mxu0
      %v5046 = vpop.f32.mrf.mxu0
      %v5047 = vadd.f32 0.0, %v5046
      %v5048 = vpop.f32.mrf.mxu0
      %5049 = vmatprep.mubr.bf16.mxu0 %v3344
      %5050 = vmatmul.mubr.bf16.gmra.mxu0 %v2414
      %v5051 = vpop.f32.mrf.mxu0
      %v5052 = vadd.f32 0.0, %v5051
      %v5053 = vpop.f32.mrf.mxu0
      %v5054 = vpop.f32.mrf.mxu0
      %v5055 = vadd.f32 0.0, %v5054
      %v5056 = vpop.f32.mrf.mxu0
      %5057 = vmatprep.mubr.bf16.mxu0 %v3347
      %5058 = vmatmul.mubr.bf16.gmra.mxu0 %v2416
      %v5059 = vpop.f32.mrf.mxu0
      %v5060 = vadd.f32 0.0, %v5059
      %v5061 = vpop.f32.mrf.mxu0
      %v5062 = vpop.f32.mrf.mxu0
      %v5063 = vadd.f32 0.0, %v5062
      %v5064 = vpop.f32.mrf.mxu0
      %5065 = vmatprep.mubr.bf16.mxu0 %v3350
      %5066 = vmatmul.mubr.bf16.gmra.mxu0 %v2418
      %v5067 = vpop.f32.mrf.mxu0
      %v5068 = vadd.f32 0.0, %v5067
      %v5069 = vpop.f32.mrf.mxu0
      %v5070 = vpop.f32.mrf.mxu0
      %v5071 = vadd.f32 0.0, %v5070
      %v5072 = vpop.f32.mrf.mxu0
      %5073 = vmatprep.mubr.bf16.mxu0 %v3353
      %5074 = vmatmul.mubr.bf16.gmra.mxu0 %v2420
      %v5075 = vpop.f32.mrf.mxu0
      %v5076 = vadd.f32 0.0, %v5075
      %v5077 = vpop.f32.mrf.mxu0
      %v5078 = vpop.f32.mrf.mxu0
      %v5079 = vadd.f32 0.0, %v5078
      %v5080 = vpop.f32.mrf.mxu0
      %5081 = vmatprep.mubr.bf16.mxu0 %v3356
      %5082 = vmatmul.mubr.bf16.gmra.mxu0 %v2422
      %v5083 = vpop.f32.mrf.mxu0
      %v5084 = vadd.f32 0.0, %v5083
      %v5085 = vpop.f32.mrf.mxu0
      %v5086 = vpop.f32.mrf.mxu0
      %v5087 = vadd.f32 0.0, %v5086
      %v5088 = vpop.f32.mrf.mxu0
      %5089 = vmatprep.mubr.bf16.mxu0 %v3359
      %5090 = vmatmul.mubr.bf16.gmra.mxu0 %v2424
      %v5091 = vpop.f32.mrf.mxu0
      %v5092 = vadd.f32 0.0, %v5091
      %v5093 = vpop.f32.mrf.mxu0
      %v5094 = vpop.f32.mrf.mxu0
      %v5095 = vadd.f32 0.0, %v5094
      %v5096 = vpop.f32.mrf.mxu0
      %5097 = vmatprep.mubr.bf16.mxu0 %v3362
      %5098 = vmatmul.mubr.bf16.gmra.mxu0 %v2426
      %v5099 = vpop.f32.mrf.mxu0
      %v5100 = vadd.f32 0.0, %v5099
      %v5101 = vpop.f32.mrf.mxu0
      %v5102 = vpop.f32.mrf.mxu0
      %v5103 = vadd.f32 0.0, %v5102
      %v5104 = vpop.f32.mrf.mxu0
      %5105 = vmatprep.mubr.bf16.mxu0 %v3365
      %5106 = vmatmul.mubr.bf16.gmra.mxu0 %v2428
      %v5107 = vpop.f32.mrf.mxu0
      %v5108 = vadd.f32 0.0, %v5107
      %v5109 = vpop.f32.mrf.mxu0
      %v5110 = vpop.f32.mrf.mxu0
      %v5111 = vadd.f32 0.0, %v5110
      %v5112 = vpop.f32.mrf.mxu0
      %5113 = vmatprep.mubr.bf16.mxu0 %v3368
      %5114 = vmatmul.mubr.bf16.gmra.mxu0 %v2430
      %v5115 = vpop.f32.mrf.mxu0
      %v5116 = vadd.f32 0.0, %v5115
      %v5117 = vpop.f32.mrf.mxu0
      %v5118 = vpop.f32.mrf.mxu0
      %v5119 = vadd.f32 0.0, %v5118
      %v5120 = vpop.f32.mrf.mxu0
      %5121 = vmatprep.mubr.bf16.mxu0 %v3371
      %5122 = vmatmul.mubr.bf16.gmra.mxu0 %v2432
      %v5123 = vpop.f32.mrf.mxu0
      %v5124 = vadd.f32 0.0, %v5123
      %v5125 = vpop.f32.mrf.mxu0
      %v5126 = vpop.f32.mrf.mxu0
      %v5127 = vadd.f32 0.0, %v5126
      %v5128 = vpop.f32.mrf.mxu0
      %5129 = vmatprep.mubr.bf16.mxu0 %v3374
      %5130 = vmatmul.mubr.bf16.gmra.mxu0 %v2434
      %v5131 = vpop.f32.mrf.mxu0
      %v5132 = vadd.f32 0.0, %v5131
      %v5133 = vpop.f32.mrf.mxu0
      %v5134 = vpop.f32.mrf.mxu0
      %v5135 = vadd.f32 0.0, %v5134
      %v5136 = vpop.f32.mrf.mxu0
      %5137 = vmatprep.mubr.bf16.mxu0 %v3377
      %5138 = vmatmul.mubr.bf16.gmra.mxu0 %v2436
      %v5139 = vpop.f32.mrf.mxu0
      %v5140 = vadd.f32 0.0, %v5139
      %v5141 = vpop.f32.mrf.mxu0
      %v5142 = vpop.f32.mrf.mxu0
      %v5143 = vadd.f32 0.0, %v5142
      %v5144 = vpop.f32.mrf.mxu0
      %5145 = vmatprep.mubr.bf16.mxu0 %v3380
      %5146 = vmatmul.mubr.bf16.gmra.mxu0 %v2438
      %v5147 = vpop.f32.mrf.mxu0
      %v5148 = vadd.f32 0.0, %v5147
      %v5149 = vpop.f32.mrf.mxu0
      %v5150 = vpop.f32.mrf.mxu0
      %v5151 = vadd.f32 0.0, %v5150
      %v5152 = vpop.f32.mrf.mxu0
      %5153 = vmatprep.mubr.bf16.mxu0 %v3383
      %5154 = vmatmul.mubr.bf16.gmra.mxu0 %v2440
      %v5155 = vpop.f32.mrf.mxu0
      %v5156 = vadd.f32 0.0, %v5155
      %v5157 = vpop.f32.mrf.mxu0
      %v5158 = vpop.f32.mrf.mxu0
      %v5159 = vadd.f32 0.0, %v5158
      %v5160 = vpop.f32.mrf.mxu0
      %5161 = vmatprep.mubr.bf16.mxu0 %v3386
      %5162 = vmatmul.mubr.bf16.gmra.mxu0 %v2442
      %v5163 = vpop.f32.mrf.mxu0
      %v5164 = vadd.f32 0.0, %v5163
      %v5165 = vpop.f32.mrf.mxu0
      %v5166 = vpop.f32.mrf.mxu0
      %v5167 = vadd.f32 0.0, %v5166
      %v5168 = vpop.f32.mrf.mxu0
      %5169 = vmatprep.mubr.bf16.mxu0 %v3389
      %5170 = vmatmul.mubr.bf16.gmra.mxu0 %v2444
      %v5171 = vpop.f32.mrf.mxu0
      %v5172 = vadd.f32 0.0, %v5171
      %v5173 = vpop.f32.mrf.mxu0
      %v5174 = vpop.f32.mrf.mxu0
      %v5175 = vadd.f32 0.0, %v5174
      %v5176 = vpop.f32.mrf.mxu0
      %5177 = vmatprep.mubr.bf16.mxu0 %v3392
      %5178 = vmatmul.mubr.bf16.gmra.mxu0 %v2446
      %v5179 = vpop.f32.mrf.mxu0
      %v5180 = vadd.f32 0.0, %v5179
      %v5181 = vpop.f32.mrf.mxu0
      %v5182 = vpop.f32.mrf.mxu0
      %v5183 = vadd.f32 0.0, %v5182
      %v5184 = vpop.f32.mrf.mxu0
      %5185 = vmatprep.mubr.bf16.mxu0 %v3395
      %5186 = vmatmul.mubr.bf16.gmra.mxu0 %v2448
      %v5187 = vpop.f32.mrf.mxu0
      %v5188 = vadd.f32 0.0, %v5187
      %v5189 = vpop.f32.mrf.mxu0
      %v5190 = vpop.f32.mrf.mxu0
      %v5191 = vadd.f32 0.0, %v5190
      %v5192 = vpop.f32.mrf.mxu0
      %5193 = vmatprep.mubr.bf16.mxu0 %v3398
      %5194 = vmatmul.mubr.bf16.gmra.mxu0 %v2450
      %v5195 = vpop.f32.mrf.mxu0
      %v5196 = vadd.f32 0.0, %v5195
      %v5197 = vpop.f32.mrf.mxu0
      %v5198 = vpop.f32.mrf.mxu0
      %v5199 = vadd.f32 0.0, %v5198
      %v5200 = vpop.f32.mrf.mxu0
      %5201 = vmatprep.mubr.bf16.mxu0 %v3401
      %5202 = vmatmul.mubr.bf16.gmra.mxu0 %v2452
      %v5203 = vpop.f32.mrf.mxu0
      %v5204 = vadd.f32 0.0, %v5203
      %v5205 = vpop.f32.mrf.mxu0
      %v5206 = vpop.f32.mrf.mxu0
      %v5207 = vadd.f32 0.0, %v5206
      %v5208 = vpop.f32.mrf.mxu0
      %5209 = vmatprep.mubr.bf16.mxu0 %v3404
      %5210 = vmatmul.mubr.bf16.gmra.mxu0 %v2454
      %v5211 = vpop.f32.mrf.mxu0
      %v5212 = vadd.f32 0.0, %v5211
      %v5213 = vpop.f32.mrf.mxu0
      %v5214 = vpop.f32.mrf.mxu0
      %v5215 = vadd.f32 0.0, %v5214
      %v5216 = vpop.f32.mrf.mxu0
      %5217 = vmatprep.mubr.bf16.mxu0 %v3407
      %5218 = vmatmul.mubr.bf16.gmra.mxu0 %v2456
      %v5219 = vpop.f32.mrf.mxu0
      %v5220 = vadd.f32 0.0, %v5219
      %v5221 = vpop.f32.mrf.mxu0
      %v5222 = vpop.f32.mrf.mxu0
      %v5223 = vadd.f32 0.0, %v5222
      %v5224 = vpop.f32.mrf.mxu0
      %5225 = vmatprep.mubr.bf16.mxu0 %v3410
      %5226 = vmatmul.mubr.bf16.gmra.mxu0 %v2458
      %v5227 = vpop.f32.mrf.mxu0
      %v5228 = vadd.f32 0.0, %v5227
      %v5229 = vpop.f32.mrf.mxu0
      %v5230 = vpop.f32.mrf.mxu0
      %v5231 = vadd.f32 0.0, %v5230
      %v5232 = vpop.f32.mrf.mxu0
      %5233 = vmatprep.mubr.bf16.mxu0 %v3413
      %5234 = vmatmul.mubr.bf16.gmra.mxu0 %v2460
      %v5235 = vpop.f32.mrf.mxu0
      %v5236 = vadd.f32 0.0, %v5235
      %v5237 = vpop.f32.mrf.mxu0
      %v5238 = vpop.f32.mrf.mxu0
      %v5239 = vadd.f32 0.0, %v5238
      %v5240 = vpop.f32.mrf.mxu0
      %5241 = vmatprep.mubr.bf16.mxu0 %v3416
      %5242 = vmatmul.mubr.bf16.gmra.mxu0 %v2462
      %v5243 = vpop.f32.mrf.mxu0
      %v5244 = vadd.f32 0.0, %v5243
      %v5245 = vpop.f32.mrf.mxu0
      %v5246 = vpop.f32.mrf.mxu0
      %v5247 = vadd.f32 0.0, %v5246
      %v5248 = vpop.f32.mrf.mxu0
      %5249 = vdwg.mxu0
      %v5250 = vld [vmem:[%s2] sm:$0x1]
      %v5252 = vlaneseq
      %v5253 = vshrl.u32 %v5252, 7
      %v5254 = vsub.s32 0, %v5253
      %v5255 = vrot.slane %v5250, %v5254
      %v5257 = vmul.f32 %v3460, %v5255
      %v5258 = vmul.f32 %v3463, %v5255
      %v5259 = vmul.f32 %v3468, %v5255
      %v5260 = vmul.f32 %v3471, %v5255
      %v5261 = vmul.f32 %v3476, %v5255
      %v5262 = vmul.f32 %v3479, %v5255
      %v5263 = vmul.f32 %v3484, %v5255
      %v5264 = vmul.f32 %v3487, %v5255
      %v5265 = vmul.f32 %v3492, %v5255
      %v5266 = vmul.f32 %v3495, %v5255
      %v5267 = vmul.f32 %v3500, %v5255
      %v5268 = vmul.f32 %v3503, %v5255
      %v5269 = vmul.f32 %v3508, %v5255
      %v5270 = vmul.f32 %v3511, %v5255
      %v5271 = vmul.f32 %v3516, %v5255
      %v5272 = vmul.f32 %v3519, %v5255
      %v5273 = vmul.f32 %v3524, %v5255
      %v5274 = vmul.f32 %v3527, %v5255
      %v5275 = vmul.f32 %v3532, %v5255
      %v5276 = vmul.f32 %v3535, %v5255
      %v5277 = vmul.f32 %v3540, %v5255
      %v5278 = vmul.f32 %v3543, %v5255
      %v5279 = vmul.f32 %v3548, %v5255
      %v5280 = vmul.f32 %v3551, %v5255
      %v5281 = vmul.f32 %v3556, %v5255
      %v5282 = vmul.f32 %v3559, %v5255
      %v5283 = vmul.f32 %v3564, %v5255
      %v5284 = vmul.f32 %v3567, %v5255
      %v5285 = vmul.f32 %v3572, %v5255
      %v5286 = vmul.f32 %v3575, %v5255
      %v5287 = vmul.f32 %v3580, %v5255
      %v5288 = vmul.f32 %v3583, %v5255
      %v5289 = vmul.f32 %v3588, %v5255
      %v5290 = vmul.f32 %v3591, %v5255
      %v5291 = vmul.f32 %v3596, %v5255
      %v5292 = vmul.f32 %v3599, %v5255
      %v5293 = vmul.f32 %v3604, %v5255
      %v5294 = vmul.f32 %v3607, %v5255
      %v5295 = vmul.f32 %v3612, %v5255
      %v5296 = vmul.f32 %v3615, %v5255
      %v5297 = vmul.f32 %v3620, %v5255
      %v5298 = vmul.f32 %v3623, %v5255
      %v5299 = vmul.f32 %v3628, %v5255
      %v5300 = vmul.f32 %v3631, %v5255
      %v5301 = vmul.f32 %v3636, %v5255
      %v5302 = vmul.f32 %v3639, %v5255
      %v5303 = vmul.f32 %v3644, %v5255
      %v5304 = vmul.f32 %v3647, %v5255
      %v5305 = vmul.f32 %v3652, %v5255
      %v5306 = vmul.f32 %v3655, %v5255
      %v5307 = vmul.f32 %v3660, %v5255
      %v5308 = vmul.f32 %v3663, %v5255
      %v5309 = vmul.f32 %v3668, %v5255
      %v5310 = vmul.f32 %v3671, %v5255
      %v5311 = vmul.f32 %v3676, %v5255
      %v5312 = vmul.f32 %v3679, %v5255
      %v5313 = vmul.f32 %v3684, %v5255
      %v5314 = vmul.f32 %v3687, %v5255
      %v5315 = vmul.f32 %v3692, %v5255
      %v5316 = vmul.f32 %v3695, %v5255
      %v5317 = vmul.f32 %v3700, %v5255
      %v5318 = vmul.f32 %v3703, %v5255
      %v5319 = vmul.f32 %v3708, %v5255
      %v5320 = vmul.f32 %v3711, %v5255
      %v5321 = vmul.f32 %v3716, %v5255
      %v5322 = vmul.f32 %v3719, %v5255
      %v5323 = vmul.f32 %v3724, %v5255
      %v5324 = vmul.f32 %v3727, %v5255
      %v5325 = vmul.f32 %v3732, %v5255
      %v5326 = vmul.f32 %v3735, %v5255
      %v5327 = vmul.f32 %v3740, %v5255
      %v5328 = vmul.f32 %v3743, %v5255
      %v5329 = vmul.f32 %v3748, %v5255
      %v5330 = vmul.f32 %v3751, %v5255
      %v5331 = vmul.f32 %v3756, %v5255
      %v5332 = vmul.f32 %v3759, %v5255
      %v5333 = vmul.f32 %v3764, %v5255
      %v5334 = vmul.f32 %v3767, %v5255
      %v5335 = vmul.f32 %v3772, %v5255
      %v5336 = vmul.f32 %v3775, %v5255
      %v5337 = vmul.f32 %v3780, %v5255
      %v5338 = vmul.f32 %v3783, %v5255
      %v5339 = vmul.f32 %v3788, %v5255
      %v5340 = vmul.f32 %v3791, %v5255
      %v5341 = vmul.f32 %v3796, %v5255
      %v5342 = vmul.f32 %v3799, %v5255
      %v5343 = vmul.f32 %v3804, %v5255
      %v5344 = vmul.f32 %v3807, %v5255
      %v5345 = vmul.f32 %v3812, %v5255
      %v5346 = vmul.f32 %v3815, %v5255
      %v5347 = vmul.f32 %v3820, %v5255
      %v5348 = vmul.f32 %v3823, %v5255
      %v5349 = vmul.f32 %v3828, %v5255
      %v5350 = vmul.f32 %v3831, %v5255
      %v5351 = vmul.f32 %v3836, %v5255
      %v5352 = vmul.f32 %v3839, %v5255
      %v5353 = vmul.f32 %v3844, %v5255
      %v5354 = vmul.f32 %v3847, %v5255
      %v5355 = vmul.f32 %v3852, %v5255
      %v5356 = vmul.f32 %v3855, %v5255
      %v5357 = vmul.f32 %v3860, %v5255
      %v5358 = vmul.f32 %v3863, %v5255
      %v5359 = vmul.f32 %v3868, %v5255
      %v5360 = vmul.f32 %v3871, %v5255
      %v5361 = vmul.f32 %v3876, %v5255
      %v5362 = vmul.f32 %v3879, %v5255
      %v5363 = vmul.f32 %v3884, %v5255
      %v5364 = vmul.f32 %v3887, %v5255
      %v5365 = vmul.f32 %v3892, %v5255
      %v5366 = vmul.f32 %v3895, %v5255
      %v5367 = vmul.f32 %v3900, %v5255
      %v5368 = vmul.f32 %v3903, %v5255
      %v5369 = vmul.f32 %v3908, %v5255
      %v5370 = vmul.f32 %v3911, %v5255
      %v5371 = vmul.f32 %v3916, %v5255
      %v5372 = vmul.f32 %v3919, %v5255
      %v5373 = vmul.f32 %v3924, %v5255
      %v5374 = vmul.f32 %v3927, %v5255
      %v5375 = vmul.f32 %v3932, %v5255
      %v5376 = vmul.f32 %v3935, %v5255
      %v5377 = vmul.f32 %v3940, %v5255
      %v5378 = vmul.f32 %v3943, %v5255
      %v5379 = vmul.f32 %v3948, %v5255
      %v5380 = vmul.f32 %v3951, %v5255
      %v5381 = vmul.f32 %v3956, %v5255
      %v5382 = vmul.f32 %v3959, %v5255
      %v5383 = vmul.f32 %v3964, %v5255
      %v5384 = vmul.f32 %v3967, %v5255
      %v5385 = vmul.f32 %v3972, %v5255
      %v5386 = vmul.f32 %v3975, %v5255
      %v5387 = vmul.f32 %v3980, %v5255
      %v5388 = vmul.f32 %v3983, %v5255
      %v5389 = vmul.f32 %v3988, %v5255
      %v5390 = vmul.f32 %v3991, %v5255
      %v5391 = vmul.f32 %v3996, %v5255
      %v5392 = vmul.f32 %v3999, %v5255
      %v5393 = vmul.f32 %v4004, %v5255
      %v5394 = vmul.f32 %v4007, %v5255
      %v5395 = vmul.f32 %v4012, %v5255
      %v5396 = vmul.f32 %v4015, %v5255
      %v5397 = vmul.f32 %v4020, %v5255
      %v5398 = vmul.f32 %v4023, %v5255
      %v5399 = vmul.f32 %v4028, %v5255
      %v5400 = vmul.f32 %v4031, %v5255
      %v5401 = vmul.f32 %v4036, %v5255
      %v5402 = vmul.f32 %v4039, %v5255
      %v5403 = vmul.f32 %v4044, %v5255
      %v5404 = vmul.f32 %v4047, %v5255
      %v5405 = vmul.f32 %v4052, %v5255
      %v5406 = vmul.f32 %v4055, %v5255
      %v5407 = vmul.f32 %v4060, %v5255
      %v5408 = vmul.f32 %v4063, %v5255
      %v5409 = vmul.f32 %v4068, %v5255
      %v5410 = vmul.f32 %v4071, %v5255
      %v5411 = vmul.f32 %v4076, %v5255
      %v5412 = vmul.f32 %v4079, %v5255
      %v5413 = vmul.f32 %v4084, %v5255
      %v5414 = vmul.f32 %v4087, %v5255
      %v5415 = vmul.f32 %v4092, %v5255
      %v5416 = vmul.f32 %v4095, %v5255
      %v5417 = vmul.f32 %v4100, %v5255
      %v5418 = vmul.f32 %v4103, %v5255
      %v5419 = vmul.f32 %v4108, %v5255
      %v5420 = vmul.f32 %v4111, %v5255
      %v5421 = vmul.f32 %v4116, %v5255
      %v5422 = vmul.f32 %v4119, %v5255
      %v5423 = vmul.f32 %v4124, %v5255
      %v5424 = vmul.f32 %v4127, %v5255
      %v5425 = vmul.f32 %v4132, %v5255
      %v5426 = vmul.f32 %v4135, %v5255
      %v5427 = vmul.f32 %v4140, %v5255
      %v5428 = vmul.f32 %v4143, %v5255
      %v5429 = vmul.f32 %v4148, %v5255
      %v5430 = vmul.f32 %v4151, %v5255
      %v5431 = vmul.f32 %v4156, %v5255
      %v5432 = vmul.f32 %v4159, %v5255
      %v5433 = vmul.f32 %v4164, %v5255
      %v5434 = vmul.f32 %v4167, %v5255
      %v5435 = vmul.f32 %v4172, %v5255
      %v5436 = vmul.f32 %v4175, %v5255
      %v5437 = vmul.f32 %v4180, %v5255
      %v5438 = vmul.f32 %v4183, %v5255
      %v5439 = vmul.f32 %v4188, %v5255
      %v5440 = vmul.f32 %v4191, %v5255
      %v5441 = vmul.f32 %v4196, %v5255
      %v5442 = vmul.f32 %v4199, %v5255
      %v5443 = vmul.f32 %v4204, %v5255
      %v5444 = vmul.f32 %v4207, %v5255
      %v5445 = vmul.f32 %v4212, %v5255
      %v5446 = vmul.f32 %v4215, %v5255
      %v5447 = vmul.f32 %v4220, %v5255
      %v5448 = vmul.f32 %v4223, %v5255
      %v5449 = vmul.f32 %v4228, %v5255
      %v5450 = vmul.f32 %v4231, %v5255
      %v5451 = vmul.f32 %v4236, %v5255
      %v5452 = vmul.f32 %v4239, %v5255
      %v5453 = vmul.f32 %v4244, %v5255
      %v5454 = vmul.f32 %v4247, %v5255
      %v5455 = vmul.f32 %v4252, %v5255
      %v5456 = vmul.f32 %v4255, %v5255
      %v5457 = vmul.f32 %v4260, %v5255
      %v5458 = vmul.f32 %v4263, %v5255
      %v5459 = vmul.f32 %v4268, %v5255
      %v5460 = vmul.f32 %v4271, %v5255
      %v5461 = vmul.f32 %v4276, %v5255
      %v5462 = vmul.f32 %v4279, %v5255
      %v5463 = vmul.f32 %v4284, %v5255
      %v5464 = vmul.f32 %v4287, %v5255
      %v5465 = vmul.f32 %v4292, %v5255
      %v5466 = vmul.f32 %v4295, %v5255
      %v5467 = vmul.f32 %v4300, %v5255
      %v5468 = vmul.f32 %v4303, %v5255
      %v5469 = vmul.f32 %v4308, %v5255
      %v5470 = vmul.f32 %v4311, %v5255
      %v5471 = vmul.f32 %v4316, %v5255
      %v5472 = vmul.f32 %v4319, %v5255
      %v5473 = vmul.f32 %v4324, %v5255
      %v5474 = vmul.f32 %v4327, %v5255
      %v5475 = vmul.f32 %v4332, %v5255
      %v5476 = vmul.f32 %v4335, %v5255
      %v5477 = vmul.f32 %v4340, %v5255
      %v5478 = vmul.f32 %v4343, %v5255
      %v5479 = vmul.f32 %v4348, %v5255
      %v5480 = vmul.f32 %v4351, %v5255
      %v5481 = vmul.f32 %v4356, %v5255
      %v5482 = vmul.f32 %v4359, %v5255
      %v5483 = vmul.f32 %v4364, %v5255
      %v5484 = vmul.f32 %v4367, %v5255
      %v5485 = vmul.f32 %v4372, %v5255
      %v5486 = vmul.f32 %v4375, %v5255
      %v5487 = vmul.f32 %v4380, %v5255
      %v5488 = vmul.f32 %v4383, %v5255
      %v5489 = vmul.f32 %v4388, %v5255
      %v5490 = vmul.f32 %v4391, %v5255
      %v5491 = vmul.f32 %v4396, %v5255
      %v5492 = vmul.f32 %v4399, %v5255
      %v5493 = vmul.f32 %v4404, %v5255
      %v5494 = vmul.f32 %v4407, %v5255
      %v5495 = vmul.f32 %v4412, %v5255
      %v5496 = vmul.f32 %v4415, %v5255
      %v5497 = vmul.f32 %v4420, %v5255
      %v5498 = vmul.f32 %v4423, %v5255
      %v5499 = vmul.f32 %v4428, %v5255
      %v5500 = vmul.f32 %v4431, %v5255
      %v5501 = vmul.f32 %v4436, %v5255
      %v5502 = vmul.f32 %v4439, %v5255
      %v5503 = vmul.f32 %v4444, %v5255
      %v5504 = vmul.f32 %v4447, %v5255
      %v5505 = vmul.f32 %v4452, %v5255
      %v5506 = vmul.f32 %v4455, %v5255
      %v5507 = vmul.f32 %v4460, %v5255
      %v5508 = vmul.f32 %v4463, %v5255
      %v5509 = vmul.f32 %v4468, %v5255
      %v5510 = vmul.f32 %v4471, %v5255
      %v5511 = vmul.f32 %v4476, %v5255
      %v5512 = vmul.f32 %v4479, %v5255
      %v5513 = vmul.f32 %v4484, %v5255
      %v5514 = vmul.f32 %v4487, %v5255
      %v5515 = vmul.f32 %v4492, %v5255
      %v5516 = vmul.f32 %v4495, %v5255
      %v5517 = vmul.f32 %v4500, %v5255
      %v5518 = vmul.f32 %v4503, %v5255
      %v5519 = vmul.f32 %v4508, %v5255
      %v5520 = vmul.f32 %v4511, %v5255
      %v5521 = vmul.f32 %v4516, %v5255
      %v5522 = vmul.f32 %v4519, %v5255
      %v5523 = vmul.f32 %v4524, %v5255
      %v5524 = vmul.f32 %v4527, %v5255
      %v5525 = vmul.f32 %v4532, %v5255
      %v5526 = vmul.f32 %v4535, %v5255
      %v5527 = vmul.f32 %v4540, %v5255
      %v5528 = vmul.f32 %v4543, %v5255
      %v5529 = vmul.f32 %v4548, %v5255
      %v5530 = vmul.f32 %v4551, %v5255
      %v5531 = vmul.f32 %v4556, %v5255
      %v5532 = vmul.f32 %v4559, %v5255
      %v5533 = vmul.f32 %v4564, %v5255
      %v5534 = vmul.f32 %v4567, %v5255
      %v5535 = vmul.f32 %v4572, %v5255
      %v5536 = vmul.f32 %v4575, %v5255
      %v5537 = vmul.f32 %v4580, %v5255
      %v5538 = vmul.f32 %v4583, %v5255
      %v5539 = vmul.f32 %v4588, %v5255
      %v5540 = vmul.f32 %v4591, %v5255
      %v5541 = vmul.f32 %v4596, %v5255
      %v5542 = vmul.f32 %v4599, %v5255
      %v5543 = vmul.f32 %v4604, %v5255
      %v5544 = vmul.f32 %v4607, %v5255
      %v5545 = vmul.f32 %v4612, %v5255
      %v5546 = vmul.f32 %v4615, %v5255
      %v5547 = vmul.f32 %v4620, %v5255
      %v5548 = vmul.f32 %v4623, %v5255
      %v5549 = vmul.f32 %v4628, %v5255
      %v5550 = vmul.f32 %v4631, %v5255
      %v5551 = vmul.f32 %v4636, %v5255
      %v5552 = vmul.f32 %v4639, %v5255
      %v5553 = vmul.f32 %v4644, %v5255
      %v5554 = vmul.f32 %v4647, %v5255
      %v5555 = vmul.f32 %v4652, %v5255
      %v5556 = vmul.f32 %v4655, %v5255
      %v5557 = vmul.f32 %v4660, %v5255
      %v5558 = vmul.f32 %v4663, %v5255
      %v5559 = vmul.f32 %v4668, %v5255
      %v5560 = vmul.f32 %v4671, %v5255
      %v5561 = vmul.f32 %v4676, %v5255
      %v5562 = vmul.f32 %v4679, %v5255
      %v5563 = vmul.f32 %v4684, %v5255
      %v5564 = vmul.f32 %v4687, %v5255
      %v5565 = vmul.f32 %v4692, %v5255
      %v5566 = vmul.f32 %v4695, %v5255
      %v5567 = vmul.f32 %v4700, %v5255
      %v5568 = vmul.f32 %v4703, %v5255
      %v5569 = vmul.f32 %v4708, %v5255
      %v5570 = vmul.f32 %v4711, %v5255
      %v5571 = vmul.f32 %v4716, %v5255
      %v5572 = vmul.f32 %v4719, %v5255
      %v5573 = vmul.f32 %v4724, %v5255
      %v5574 = vmul.f32 %v4727, %v5255
      %v5575 = vmul.f32 %v4732, %v5255
      %v5576 = vmul.f32 %v4735, %v5255
      %v5577 = vmul.f32 %v4740, %v5255
      %v5578 = vmul.f32 %v4743, %v5255
      %v5579 = vmul.f32 %v4748, %v5255
      %v5580 = vmul.f32 %v4751, %v5255
      %v5581 = vmul.f32 %v4756, %v5255
      %v5582 = vmul.f32 %v4759, %v5255
      %v5583 = vmul.f32 %v4764, %v5255
      %v5584 = vmul.f32 %v4767, %v5255
      %v5585 = vmul.f32 %v4772, %v5255
      %v5586 = vmul.f32 %v4775, %v5255
      %v5587 = vmul.f32 %v4780, %v5255
      %v5588 = vmul.f32 %v4783, %v5255
      %v5589 = vmul.f32 %v4788, %v5255
      %v5590 = vmul.f32 %v4791, %v5255
      %v5591 = vmul.f32 %v4796, %v5255
      %v5592 = vmul.f32 %v4799, %v5255
      %v5593 = vmul.f32 %v4804, %v5255
      %v5594 = vmul.f32 %v4807, %v5255
      %v5595 = vmul.f32 %v4812, %v5255
      %v5596 = vmul.f32 %v4815, %v5255
      %v5597 = vmul.f32 %v4820, %v5255
      %v5598 = vmul.f32 %v4823, %v5255
      %v5599 = vmul.f32 %v4828, %v5255
      %v5600 = vmul.f32 %v4831, %v5255
      %v5601 = vmul.f32 %v4836, %v5255
      %v5602 = vmul.f32 %v4839, %v5255
      %v5603 = vmul.f32 %v4844, %v5255
      %v5604 = vmul.f32 %v4847, %v5255
      %v5605 = vmul.f32 %v4852, %v5255
      %v5606 = vmul.f32 %v4855, %v5255
      %v5607 = vmul.f32 %v4860, %v5255
      %v5608 = vmul.f32 %v4863, %v5255
      %v5609 = vmul.f32 %v4868, %v5255
      %v5610 = vmul.f32 %v4871, %v5255
      %v5611 = vmul.f32 %v4876, %v5255
      %v5612 = vmul.f32 %v4879, %v5255
      %v5613 = vmul.f32 %v4884, %v5255
      %v5614 = vmul.f32 %v4887, %v5255
      %v5615 = vmul.f32 %v4892, %v5255
      %v5616 = vmul.f32 %v4895, %v5255
      %v5617 = vmul.f32 %v4900, %v5255
      %v5618 = vmul.f32 %v4903, %v5255
      %v5619 = vmul.f32 %v4908, %v5255
      %v5620 = vmul.f32 %v4911, %v5255
      %v5621 = vmul.f32 %v4916, %v5255
      %v5622 = vmul.f32 %v4919, %v5255
      %v5623 = vmul.f32 %v4924, %v5255
      %v5624 = vmul.f32 %v4927, %v5255
      %v5625 = vmul.f32 %v4932, %v5255
      %v5626 = vmul.f32 %v4935, %v5255
      %v5627 = vmul.f32 %v4940, %v5255
      %v5628 = vmul.f32 %v4943, %v5255
      %v5629 = vmul.f32 %v4948, %v5255
      %v5630 = vmul.f32 %v4951, %v5255
      %v5631 = vmul.f32 %v4956, %v5255
      %v5632 = vmul.f32 %v4959, %v5255
      %v5633 = vmul.f32 %v4964, %v5255
      %v5634 = vmul.f32 %v4967, %v5255
      %v5635 = vmul.f32 %v4972, %v5255
      %v5636 = vmul.f32 %v4975, %v5255
      %v5637 = vmul.f32 %v4980, %v5255
      %v5638 = vmul.f32 %v4983, %v5255
      %v5639 = vmul.f32 %v4988, %v5255
      %v5640 = vmul.f32 %v4991, %v5255
      %v5641 = vmul.f32 %v4996, %v5255
      %v5642 = vmul.f32 %v4999, %v5255
      %v5643 = vmul.f32 %v5004, %v5255
      %v5644 = vmul.f32 %v5007, %v5255
      %v5645 = vmul.f32 %v5012, %v5255
      %v5646 = vmul.f32 %v5015, %v5255
      %v5647 = vmul.f32 %v5020, %v5255
      %v5648 = vmul.f32 %v5023, %v5255
      %v5649 = vmul.f32 %v5028, %v5255
      %v5650 = vmul.f32 %v5031, %v5255
      %v5651 = vmul.f32 %v5036, %v5255
      %v5652 = vmul.f32 %v5039, %v5255
      %v5653 = vmul.f32 %v5044, %v5255
      %v5654 = vmul.f32 %v5047, %v5255
      %v5655 = vmul.f32 %v5052, %v5255
      %v5656 = vmul.f32 %v5055, %v5255
      %v5657 = vmul.f32 %v5060, %v5255
      %v5658 = vmul.f32 %v5063, %v5255
      %v5659 = vmul.f32 %v5068, %v5255
      %v5660 = vmul.f32 %v5071, %v5255
      %v5661 = vmul.f32 %v5076, %v5255
      %v5662 = vmul.f32 %v5079, %v5255
      %v5663 = vmul.f32 %v5084, %v5255
      %v5664 = vmul.f32 %v5087, %v5255
      %v5665 = vmul.f32 %v5092, %v5255
      %v5666 = vmul.f32 %v5095, %v5255
      %v5667 = vmul.f32 %v5100, %v5255
      %v5668 = vmul.f32 %v5103, %v5255
      %v5669 = vmul.f32 %v5108, %v5255
      %v5670 = vmul.f32 %v5111, %v5255
      %v5671 = vmul.f32 %v5116, %v5255
      %v5672 = vmul.f32 %v5119, %v5255
      %v5673 = vmul.f32 %v5124, %v5255
      %v5674 = vmul.f32 %v5127, %v5255
      %v5675 = vmul.f32 %v5132, %v5255
      %v5676 = vmul.f32 %v5135, %v5255
      %v5677 = vmul.f32 %v5140, %v5255
      %v5678 = vmul.f32 %v5143, %v5255
      %v5679 = vmul.f32 %v5148, %v5255
      %v5680 = vmul.f32 %v5151, %v5255
      %v5681 = vmul.f32 %v5156, %v5255
      %v5682 = vmul.f32 %v5159, %v5255
      %v5683 = vmul.f32 %v5164, %v5255
      %v5684 = vmul.f32 %v5167, %v5255
      %v5685 = vmul.f32 %v5172, %v5255
      %v5686 = vmul.f32 %v5175, %v5255
      %v5687 = vmul.f32 %v5180, %v5255
      %v5688 = vmul.f32 %v5183, %v5255
      %v5689 = vmul.f32 %v5188, %v5255
      %v5690 = vmul.f32 %v5191, %v5255
      %v5691 = vmul.f32 %v5196, %v5255
      %v5692 = vmul.f32 %v5199, %v5255
      %v5693 = vmul.f32 %v5204, %v5255
      %v5694 = vmul.f32 %v5207, %v5255
      %v5695 = vmul.f32 %v5212, %v5255
      %v5696 = vmul.f32 %v5215, %v5255
      %v5697 = vmul.f32 %v5220, %v5255
      %v5698 = vmul.f32 %v5223, %v5255
      %v5699 = vmul.f32 %v5228, %v5255
      %v5700 = vmul.f32 %v5231, %v5255
      %v5701 = vmul.f32 %v5236, %v5255
      %v5702 = vmul.f32 %v5239, %v5255
      %v5703 = vmul.f32 %v5244, %v5255
      %v5704 = vmul.f32 %v5247, %v5255
      %v5705 = vld [vmem:[%s3] sm:$0x1]
      %v5707 = vlaneseq
      %v5708 = vshrl.u32 %v5707, 7
      %v5709 = vsub.s32 0, %v5708
      %v5710 = vrot.slane %v5705, %v5709
      %v5712 = vadd.f32 %v5257, %v5710
      %v5713 = vadd.f32 %v5258, %v5710
      %v5714 = vadd.f32 %v5259, %v5710
      %v5715 = vadd.f32 %v5260, %v5710
      %v5716 = vadd.f32 %v5261, %v5710
      %v5717 = vadd.f32 %v5262, %v5710
      %v5718 = vadd.f32 %v5263, %v5710
      %v5719 = vadd.f32 %v5264, %v5710
      %v5720 = vadd.f32 %v5265, %v5710
      %v5721 = vadd.f32 %v5266, %v5710
      %v5722 = vadd.f32 %v5267, %v5710
      %v5723 = vadd.f32 %v5268, %v5710
      %v5724 = vadd.f32 %v5269, %v5710
      %v5725 = vadd.f32 %v5270, %v5710
      %v5726 = vadd.f32 %v5271, %v5710
      %v5727 = vadd.f32 %v5272, %v5710
      %v5728 = vadd.f32 %v5273, %v5710
      %v5729 = vadd.f32 %v5274, %v5710
      %v5730 = vadd.f32 %v5275, %v5710
      %v5731 = vadd.f32 %v5276, %v5710
      %v5732 = vadd.f32 %v5277, %v5710
      %v5733 = vadd.f32 %v5278, %v5710
      %v5734 = vadd.f32 %v5279, %v5710
      %v5735 = vadd.f32 %v5280, %v5710
      %v5736 = vadd.f32 %v5281, %v5710
      %v5737 = vadd.f32 %v5282, %v5710
      %v5738 = vadd.f32 %v5283, %v5710
      %v5739 = vadd.f32 %v5284, %v5710
      %v5740 = vadd.f32 %v5285, %v5710
      %v5741 = vadd.f32 %v5286, %v5710
      %v5742 = vadd.f32 %v5287, %v5710
      %v5743 = vadd.f32 %v5288, %v5710
      %v5744 = vadd.f32 %v5289, %v5710
      %v5745 = vadd.f32 %v5290, %v5710
      %v5746 = vadd.f32 %v5291, %v5710
      %v5747 = vadd.f32 %v5292, %v5710
      %v5748 = vadd.f32 %v5293, %v5710
      %v5749 = vadd.f32 %v5294, %v5710
      %v5750 = vadd.f32 %v5295, %v5710
      %v5751 = vadd.f32 %v5296, %v5710
      %v5752 = vadd.f32 %v5297, %v5710
      %v5753 = vadd.f32 %v5298, %v5710
      %v5754 = vadd.f32 %v5299, %v5710
      %v5755 = vadd.f32 %v5300, %v5710
      %v5756 = vadd.f32 %v5301, %v5710
      %v5757 = vadd.f32 %v5302, %v5710
      %v5758 = vadd.f32 %v5303, %v5710
      %v5759 = vadd.f32 %v5304, %v5710
      %v5760 = vadd.f32 %v5305, %v5710
      %v5761 = vadd.f32 %v5306, %v5710
      %v5762 = vadd.f32 %v5307, %v5710
      %v5763 = vadd.f32 %v5308, %v5710
      %v5764 = vadd.f32 %v5309, %v5710
      %v5765 = vadd.f32 %v5310, %v5710
      %v5766 = vadd.f32 %v5311, %v5710
      %v5767 = vadd.f32 %v5312, %v5710
      %v5768 = vadd.f32 %v5313, %v5710
      %v5769 = vadd.f32 %v5314, %v5710
      %v5770 = vadd.f32 %v5315, %v5710
      %v5771 = vadd.f32 %v5316, %v5710
      %v5772 = vadd.f32 %v5317, %v5710
      %v5773 = vadd.f32 %v5318, %v5710
      %v5774 = vadd.f32 %v5319, %v5710
      %v5775 = vadd.f32 %v5320, %v5710
      %v5776 = vadd.f32 %v5321, %v5710
      %v5777 = vadd.f32 %v5322, %v5710
      %v5778 = vadd.f32 %v5323, %v5710
      %v5779 = vadd.f32 %v5324, %v5710
      %v5780 = vadd.f32 %v5325, %v5710
      %v5781 = vadd.f32 %v5326, %v5710
      %v5782 = vadd.f32 %v5327, %v5710
      %v5783 = vadd.f32 %v5328, %v5710
      %v5784 = vadd.f32 %v5329, %v5710
      %v5785 = vadd.f32 %v5330, %v5710
      %v5786 = vadd.f32 %v5331, %v5710
      %v5787 = vadd.f32 %v5332, %v5710
      %v5788 = vadd.f32 %v5333, %v5710
      %v5789 = vadd.f32 %v5334, %v5710
      %v5790 = vadd.f32 %v5335, %v5710
      %v5791 = vadd.f32 %v5336, %v5710
      %v5792 = vadd.f32 %v5337, %v5710
      %v5793 = vadd.f32 %v5338, %v5710
      %v5794 = vadd.f32 %v5339, %v5710
      %v5795 = vadd.f32 %v5340, %v5710
      %v5796 = vadd.f32 %v5341, %v5710
      %v5797 = vadd.f32 %v5342, %v5710
      %v5798 = vadd.f32 %v5343, %v5710
      %v5799 = vadd.f32 %v5344, %v5710
      %v5800 = vadd.f32 %v5345, %v5710
      %v5801 = vadd.f32 %v5346, %v5710
      %v5802 = vadd.f32 %v5347, %v5710
      %v5803 = vadd.f32 %v5348, %v5710
      %v5804 = vadd.f32 %v5349, %v5710
      %v5805 = vadd.f32 %v5350, %v5710
      %v5806 = vadd.f32 %v5351, %v5710
      %v5807 = vadd.f32 %v5352, %v5710
      %v5808 = vadd.f32 %v5353, %v5710
      %v5809 = vadd.f32 %v5354, %v5710
      %v5810 = vadd.f32 %v5355, %v5710
      %v5811 = vadd.f32 %v5356, %v5710
      %v5812 = vadd.f32 %v5357, %v5710
      %v5813 = vadd.f32 %v5358, %v5710
      %v5814 = vadd.f32 %v5359, %v5710
      %v5815 = vadd.f32 %v5360, %v5710
      %v5816 = vadd.f32 %v5361, %v5710
      %v5817 = vadd.f32 %v5362, %v5710
      %v5818 = vadd.f32 %v5363, %v5710
      %v5819 = vadd.f32 %v5364, %v5710
      %v5820 = vadd.f32 %v5365, %v5710
      %v5821 = vadd.f32 %v5366, %v5710
      %v5822 = vadd.f32 %v5367, %v5710
      %v5823 = vadd.f32 %v5368, %v5710
      %v5824 = vadd.f32 %v5369, %v5710
      %v5825 = vadd.f32 %v5370, %v5710
      %v5826 = vadd.f32 %v5371, %v5710
      %v5827 = vadd.f32 %v5372, %v5710
      %v5828 = vadd.f32 %v5373, %v5710
      %v5829 = vadd.f32 %v5374, %v5710
      %v5830 = vadd.f32 %v5375, %v5710
      %v5831 = vadd.f32 %v5376, %v5710
      %v5832 = vadd.f32 %v5377, %v5710
      %v5833 = vadd.f32 %v5378, %v5710
      %v5834 = vadd.f32 %v5379, %v5710
      %v5835 = vadd.f32 %v5380, %v5710
      %v5836 = vadd.f32 %v5381, %v5710
      %v5837 = vadd.f32 %v5382, %v5710
      %v5838 = vadd.f32 %v5383, %v5710
      %v5839 = vadd.f32 %v5384, %v5710
      %v5840 = vadd.f32 %v5385, %v5710
      %v5841 = vadd.f32 %v5386, %v5710
      %v5842 = vadd.f32 %v5387, %v5710
      %v5843 = vadd.f32 %v5388, %v5710
      %v5844 = vadd.f32 %v5389, %v5710
      %v5845 = vadd.f32 %v5390, %v5710
      %v5846 = vadd.f32 %v5391, %v5710
      %v5847 = vadd.f32 %v5392, %v5710
      %v5848 = vadd.f32 %v5393, %v5710
      %v5849 = vadd.f32 %v5394, %v5710
      %v5850 = vadd.f32 %v5395, %v5710
      %v5851 = vadd.f32 %v5396, %v5710
      %v5852 = vadd.f32 %v5397, %v5710
      %v5853 = vadd.f32 %v5398, %v5710
      %v5854 = vadd.f32 %v5399, %v5710
      %v5855 = vadd.f32 %v5400, %v5710
      %v5856 = vadd.f32 %v5401, %v5710
      %v5857 = vadd.f32 %v5402, %v5710
      %v5858 = vadd.f32 %v5403, %v5710
      %v5859 = vadd.f32 %v5404, %v5710
      %v5860 = vadd.f32 %v5405, %v5710
      %v5861 = vadd.f32 %v5406, %v5710
      %v5862 = vadd.f32 %v5407, %v5710
      %v5863 = vadd.f32 %v5408, %v5710
      %v5864 = vadd.f32 %v5409, %v5710
      %v5865 = vadd.f32 %v5410, %v5710
      %v5866 = vadd.f32 %v5411, %v5710
      %v5867 = vadd.f32 %v5412, %v5710
      %v5868 = vadd.f32 %v5413, %v5710
      %v5869 = vadd.f32 %v5414, %v5710
      %v5870 = vadd.f32 %v5415, %v5710
      %v5871 = vadd.f32 %v5416, %v5710
      %v5872 = vadd.f32 %v5417, %v5710
      %v5873 = vadd.f32 %v5418, %v5710
      %v5874 = vadd.f32 %v5419, %v5710
      %v5875 = vadd.f32 %v5420, %v5710
      %v5876 = vadd.f32 %v5421, %v5710
      %v5877 = vadd.f32 %v5422, %v5710
      %v5878 = vadd.f32 %v5423, %v5710
      %v5879 = vadd.f32 %v5424, %v5710
      %v5880 = vadd.f32 %v5425, %v5710
      %v5881 = vadd.f32 %v5426, %v5710
      %v5882 = vadd.f32 %v5427, %v5710
      %v5883 = vadd.f32 %v5428, %v5710
      %v5884 = vadd.f32 %v5429, %v5710
      %v5885 = vadd.f32 %v5430, %v5710
      %v5886 = vadd.f32 %v5431, %v5710
      %v5887 = vadd.f32 %v5432, %v5710
      %v5888 = vadd.f32 %v5433, %v5710
      %v5889 = vadd.f32 %v5434, %v5710
      %v5890 = vadd.f32 %v5435, %v5710
      %v5891 = vadd.f32 %v5436, %v5710
      %v5892 = vadd.f32 %v5437, %v5710
      %v5893 = vadd.f32 %v5438, %v5710
      %v5894 = vadd.f32 %v5439, %v5710
      %v5895 = vadd.f32 %v5440, %v5710
      %v5896 = vadd.f32 %v5441, %v5710
      %v5897 = vadd.f32 %v5442, %v5710
      %v5898 = vadd.f32 %v5443, %v5710
      %v5899 = vadd.f32 %v5444, %v5710
      %v5900 = vadd.f32 %v5445, %v5710
      %v5901 = vadd.f32 %v5446, %v5710
      %v5902 = vadd.f32 %v5447, %v5710
      %v5903 = vadd.f32 %v5448, %v5710
      %v5904 = vadd.f32 %v5449, %v5710
      %v5905 = vadd.f32 %v5450, %v5710
      %v5906 = vadd.f32 %v5451, %v5710
      %v5907 = vadd.f32 %v5452, %v5710
      %v5908 = vadd.f32 %v5453, %v5710
      %v5909 = vadd.f32 %v5454, %v5710
      %v5910 = vadd.f32 %v5455, %v5710
      %v5911 = vadd.f32 %v5456, %v5710
      %v5912 = vadd.f32 %v5457, %v5710
      %v5913 = vadd.f32 %v5458, %v5710
      %v5914 = vadd.f32 %v5459, %v5710
      %v5915 = vadd.f32 %v5460, %v5710
      %v5916 = vadd.f32 %v5461, %v5710
      %v5917 = vadd.f32 %v5462, %v5710
      %v5918 = vadd.f32 %v5463, %v5710
      %v5919 = vadd.f32 %v5464, %v5710
      %v5920 = vadd.f32 %v5465, %v5710
      %v5921 = vadd.f32 %v5466, %v5710
      %v5922 = vadd.f32 %v5467, %v5710
      %v5923 = vadd.f32 %v5468, %v5710
      %v5924 = vadd.f32 %v5469, %v5710
      %v5925 = vadd.f32 %v5470, %v5710
      %v5926 = vadd.f32 %v5471, %v5710
      %v5927 = vadd.f32 %v5472, %v5710
      %v5928 = vadd.f32 %v5473, %v5710
      %v5929 = vadd.f32 %v5474, %v5710
      %v5930 = vadd.f32 %v5475, %v5710
      %v5931 = vadd.f32 %v5476, %v5710
      %v5932 = vadd.f32 %v5477, %v5710
      %v5933 = vadd.f32 %v5478, %v5710
      %v5934 = vadd.f32 %v5479, %v5710
      %v5935 = vadd.f32 %v5480, %v5710
      %v5936 = vadd.f32 %v5481, %v5710
      %v5937 = vadd.f32 %v5482, %v5710
      %v5938 = vadd.f32 %v5483, %v5710
      %v5939 = vadd.f32 %v5484, %v5710
      %v5940 = vadd.f32 %v5485, %v5710
      %v5941 = vadd.f32 %v5486, %v5710
      %v5942 = vadd.f32 %v5487, %v5710
      %v5943 = vadd.f32 %v5488, %v5710
      %v5944 = vadd.f32 %v5489, %v5710
      %v5945 = vadd.f32 %v5490, %v5710
      %v5946 = vadd.f32 %v5491, %v5710
      %v5947 = vadd.f32 %v5492, %v5710
      %v5948 = vadd.f32 %v5493, %v5710
      %v5949 = vadd.f32 %v5494, %v5710
      %v5950 = vadd.f32 %v5495, %v5710
      %v5951 = vadd.f32 %v5496, %v5710
      %v5952 = vadd.f32 %v5497, %v5710
      %v5953 = vadd.f32 %v5498, %v5710
      %v5954 = vadd.f32 %v5499, %v5710
      %v5955 = vadd.f32 %v5500, %v5710
      %v5956 = vadd.f32 %v5501, %v5710
      %v5957 = vadd.f32 %v5502, %v5710
      %v5958 = vadd.f32 %v5503, %v5710
      %v5959 = vadd.f32 %v5504, %v5710
      %v5960 = vadd.f32 %v5505, %v5710
      %v5961 = vadd.f32 %v5506, %v5710
      %v5962 = vadd.f32 %v5507, %v5710
      %v5963 = vadd.f32 %v5508, %v5710
      %v5964 = vadd.f32 %v5509, %v5710
      %v5965 = vadd.f32 %v5510, %v5710
      %v5966 = vadd.f32 %v5511, %v5710
      %v5967 = vadd.f32 %v5512, %v5710
      %v5968 = vadd.f32 %v5513, %v5710
      %v5969 = vadd.f32 %v5514, %v5710
      %v5970 = vadd.f32 %v5515, %v5710
      %v5971 = vadd.f32 %v5516, %v5710
      %v5972 = vadd.f32 %v5517, %v5710
      %v5973 = vadd.f32 %v5518, %v5710
      %v5974 = vadd.f32 %v5519, %v5710
      %v5975 = vadd.f32 %v5520, %v5710
      %v5976 = vadd.f32 %v5521, %v5710
      %v5977 = vadd.f32 %v5522, %v5710
      %v5978 = vadd.f32 %v5523, %v5710
      %v5979 = vadd.f32 %v5524, %v5710
      %v5980 = vadd.f32 %v5525, %v5710
      %v5981 = vadd.f32 %v5526, %v5710
      %v5982 = vadd.f32 %v5527, %v5710
      %v5983 = vadd.f32 %v5528, %v5710
      %v5984 = vadd.f32 %v5529, %v5710
      %v5985 = vadd.f32 %v5530, %v5710
      %v5986 = vadd.f32 %v5531, %v5710
      %v5987 = vadd.f32 %v5532, %v5710
      %v5988 = vadd.f32 %v5533, %v5710
      %v5989 = vadd.f32 %v5534, %v5710
      %v5990 = vadd.f32 %v5535, %v5710
      %v5991 = vadd.f32 %v5536, %v5710
      %v5992 = vadd.f32 %v5537, %v5710
      %v5993 = vadd.f32 %v5538, %v5710
      %v5994 = vadd.f32 %v5539, %v5710
      %v5995 = vadd.f32 %v5540, %v5710
      %v5996 = vadd.f32 %v5541, %v5710
      %v5997 = vadd.f32 %v5542, %v5710
      %v5998 = vadd.f32 %v5543, %v5710
      %v5999 = vadd.f32 %v5544, %v5710
      %v6000 = vadd.f32 %v5545, %v5710
      %v6001 = vadd.f32 %v5546, %v5710
      %v6002 = vadd.f32 %v5547, %v5710
      %v6003 = vadd.f32 %v5548, %v5710
      %v6004 = vadd.f32 %v5549, %v5710
      %v6005 = vadd.f32 %v5550, %v5710
      %v6006 = vadd.f32 %v5551, %v5710
      %v6007 = vadd.f32 %v5552, %v5710
      %v6008 = vadd.f32 %v5553, %v5710
      %v6009 = vadd.f32 %v5554, %v5710
      %v6010 = vadd.f32 %v5555, %v5710
      %v6011 = vadd.f32 %v5556, %v5710
      %v6012 = vadd.f32 %v5557, %v5710
      %v6013 = vadd.f32 %v5558, %v5710
      %v6014 = vadd.f32 %v5559, %v5710
      %v6015 = vadd.f32 %v5560, %v5710
      %v6016 = vadd.f32 %v5561, %v5710
      %v6017 = vadd.f32 %v5562, %v5710
      %v6018 = vadd.f32 %v5563, %v5710
      %v6019 = vadd.f32 %v5564, %v5710
      %v6020 = vadd.f32 %v5565, %v5710
      %v6021 = vadd.f32 %v5566, %v5710
      %v6022 = vadd.f32 %v5567, %v5710
      %v6023 = vadd.f32 %v5568, %v5710
      %v6024 = vadd.f32 %v5569, %v5710
      %v6025 = vadd.f32 %v5570, %v5710
      %v6026 = vadd.f32 %v5571, %v5710
      %v6027 = vadd.f32 %v5572, %v5710
      %v6028 = vadd.f32 %v5573, %v5710
      %v6029 = vadd.f32 %v5574, %v5710
      %v6030 = vadd.f32 %v5575, %v5710
      %v6031 = vadd.f32 %v5576, %v5710
      %v6032 = vadd.f32 %v5577, %v5710
      %v6033 = vadd.f32 %v5578, %v5710
      %v6034 = vadd.f32 %v5579, %v5710
      %v6035 = vadd.f32 %v5580, %v5710
      %v6036 = vadd.f32 %v5581, %v5710
      %v6037 = vadd.f32 %v5582, %v5710
      %v6038 = vadd.f32 %v5583, %v5710
      %v6039 = vadd.f32 %v5584, %v5710
      %v6040 = vadd.f32 %v5585, %v5710
      %v6041 = vadd.f32 %v5586, %v5710
      %v6042 = vadd.f32 %v5587, %v5710
      %v6043 = vadd.f32 %v5588, %v5710
      %v6044 = vadd.f32 %v5589, %v5710
      %v6045 = vadd.f32 %v5590, %v5710
      %v6046 = vadd.f32 %v5591, %v5710
      %v6047 = vadd.f32 %v5592, %v5710
      %v6048 = vadd.f32 %v5593, %v5710
      %v6049 = vadd.f32 %v5594, %v5710
      %v6050 = vadd.f32 %v5595, %v5710
      %v6051 = vadd.f32 %v5596, %v5710
      %v6052 = vadd.f32 %v5597, %v5710
      %v6053 = vadd.f32 %v5598, %v5710
      %v6054 = vadd.f32 %v5599, %v5710
      %v6055 = vadd.f32 %v5600, %v5710
      %v6056 = vadd.f32 %v5601, %v5710
      %v6057 = vadd.f32 %v5602, %v5710
      %v6058 = vadd.f32 %v5603, %v5710
      %v6059 = vadd.f32 %v5604, %v5710
      %v6060 = vadd.f32 %v5605, %v5710
      %v6061 = vadd.f32 %v5606, %v5710
      %v6062 = vadd.f32 %v5607, %v5710
      %v6063 = vadd.f32 %v5608, %v5710
      %v6064 = vadd.f32 %v5609, %v5710
      %v6065 = vadd.f32 %v5610, %v5710
      %v6066 = vadd.f32 %v5611, %v5710
      %v6067 = vadd.f32 %v5612, %v5710
      %v6068 = vadd.f32 %v5613, %v5710
      %v6069 = vadd.f32 %v5614, %v5710
      %v6070 = vadd.f32 %v5615, %v5710
      %v6071 = vadd.f32 %v5616, %v5710
      %v6072 = vadd.f32 %v5617, %v5710
      %v6073 = vadd.f32 %v5618, %v5710
      %v6074 = vadd.f32 %v5619, %v5710
      %v6075 = vadd.f32 %v5620, %v5710
      %v6076 = vadd.f32 %v5621, %v5710
      %v6077 = vadd.f32 %v5622, %v5710
      %v6078 = vadd.f32 %v5623, %v5710
      %v6079 = vadd.f32 %v5624, %v5710
      %v6080 = vadd.f32 %v5625, %v5710
      %v6081 = vadd.f32 %v5626, %v5710
      %v6082 = vadd.f32 %v5627, %v5710
      %v6083 = vadd.f32 %v5628, %v5710
      %v6084 = vadd.f32 %v5629, %v5710
      %v6085 = vadd.f32 %v5630, %v5710
      %v6086 = vadd.f32 %v5631, %v5710
      %v6087 = vadd.f32 %v5632, %v5710
      %v6088 = vadd.f32 %v5633, %v5710
      %v6089 = vadd.f32 %v5634, %v5710
      %v6090 = vadd.f32 %v5635, %v5710
      %v6091 = vadd.f32 %v5636, %v5710
      %v6092 = vadd.f32 %v5637, %v5710
      %v6093 = vadd.f32 %v5638, %v5710
      %v6094 = vadd.f32 %v5639, %v5710
      %v6095 = vadd.f32 %v5640, %v5710
      %v6096 = vadd.f32 %v5641, %v5710
      %v6097 = vadd.f32 %v5642, %v5710
      %v6098 = vadd.f32 %v5643, %v5710
      %v6099 = vadd.f32 %v5644, %v5710
      %v6100 = vadd.f32 %v5645, %v5710
      %v6101 = vadd.f32 %v5646, %v5710
      %v6102 = vadd.f32 %v5647, %v5710
      %v6103 = vadd.f32 %v5648, %v5710
      %v6104 = vadd.f32 %v5649, %v5710
      %v6105 = vadd.f32 %v5650, %v5710
      %v6106 = vadd.f32 %v5651, %v5710
      %v6107 = vadd.f32 %v5652, %v5710
      %v6108 = vadd.f32 %v5653, %v5710
      %v6109 = vadd.f32 %v5654, %v5710
      %v6110 = vadd.f32 %v5655, %v5710
      %v6111 = vadd.f32 %v5656, %v5710
      %v6112 = vadd.f32 %v5657, %v5710
      %v6113 = vadd.f32 %v5658, %v5710
      %v6114 = vadd.f32 %v5659, %v5710
      %v6115 = vadd.f32 %v5660, %v5710
      %v6116 = vadd.f32 %v5661, %v5710
      %v6117 = vadd.f32 %v5662, %v5710
      %v6118 = vadd.f32 %v5663, %v5710
      %v6119 = vadd.f32 %v5664, %v5710
      %v6120 = vadd.f32 %v5665, %v5710
      %v6121 = vadd.f32 %v5666, %v5710
      %v6122 = vadd.f32 %v5667, %v5710
      %v6123 = vadd.f32 %v5668, %v5710
      %v6124 = vadd.f32 %v5669, %v5710
      %v6125 = vadd.f32 %v5670, %v5710
      %v6126 = vadd.f32 %v5671, %v5710
      %v6127 = vadd.f32 %v5672, %v5710
      %v6128 = vadd.f32 %v5673, %v5710
      %v6129 = vadd.f32 %v5674, %v5710
      %v6130 = vadd.f32 %v5675, %v5710
      %v6131 = vadd.f32 %v5676, %v5710
      %v6132 = vadd.f32 %v5677, %v5710
      %v6133 = vadd.f32 %v5678, %v5710
      %v6134 = vadd.f32 %v5679, %v5710
      %v6135 = vadd.f32 %v5680, %v5710
      %v6136 = vadd.f32 %v5681, %v5710
      %v6137 = vadd.f32 %v5682, %v5710
      %v6138 = vadd.f32 %v5683, %v5710
      %v6139 = vadd.f32 %v5684, %v5710
      %v6140 = vadd.f32 %v5685, %v5710
      %v6141 = vadd.f32 %v5686, %v5710
      %v6142 = vadd.f32 %v5687, %v5710
      %v6143 = vadd.f32 %v5688, %v5710
      %v6144 = vadd.f32 %v5689, %v5710
      %v6145 = vadd.f32 %v5690, %v5710
      %v6146 = vadd.f32 %v5691, %v5710
      %v6147 = vadd.f32 %v5692, %v5710
      %v6148 = vadd.f32 %v5693, %v5710
      %v6149 = vadd.f32 %v5694, %v5710
      %v6150 = vadd.f32 %v5695, %v5710
      %v6151 = vadd.f32 %v5696, %v5710
      %v6152 = vadd.f32 %v5697, %v5710
      %v6153 = vadd.f32 %v5698, %v5710
      %v6154 = vadd.f32 %v5699, %v5710
      %v6155 = vadd.f32 %v5700, %v5710
      %v6156 = vadd.f32 %v5701, %v5710
      %v6157 = vadd.f32 %v5702, %v5710
      %v6158 = vadd.f32 %v5703, %v5710
      %v6159 = vadd.f32 %v5704, %v5710
      %v6160 = vmax.f32 %v5712, 0.0
      %v6161 = vmax.f32 %v5713, 0.0
      %v6162 = vmax.f32 %v5714, 0.0
      %v6163 = vmax.f32 %v5715, 0.0
      %v6164 = vmax.f32 %v5716, 0.0
      %v6165 = vmax.f32 %v5717, 0.0
      %v6166 = vmax.f32 %v5718, 0.0
      %v6167 = vmax.f32 %v5719, 0.0
      %v6168 = vmax.f32 %v5720, 0.0
      %v6169 = vmax.f32 %v5721, 0.0
      %v6170 = vmax.f32 %v5722, 0.0
      %v6171 = vmax.f32 %v5723, 0.0
      %v6172 = vmax.f32 %v5724, 0.0
      %v6173 = vmax.f32 %v5725, 0.0
      %v6174 = vmax.f32 %v5726, 0.0
      %v6175 = vmax.f32 %v5727, 0.0
      %v6176 = vmax.f32 %v5728, 0.0
      %v6177 = vmax.f32 %v5729, 0.0
      %v6178 = vmax.f32 %v5730, 0.0
      %v6179 = vmax.f32 %v5731, 0.0
      %v6180 = vmax.f32 %v5732, 0.0
      %v6181 = vmax.f32 %v5733, 0.0
      %v6182 = vmax.f32 %v5734, 0.0
      %v6183 = vmax.f32 %v5735, 0.0
      %v6184 = vmax.f32 %v5736, 0.0
      %v6185 = vmax.f32 %v5737, 0.0
      %v6186 = vmax.f32 %v5738, 0.0
      %v6187 = vmax.f32 %v5739, 0.0
      %v6188 = vmax.f32 %v5740, 0.0
      %v6189 = vmax.f32 %v5741, 0.0
      %v6190 = vmax.f32 %v5742, 0.0
      %v6191 = vmax.f32 %v5743, 0.0
      %v6192 = vmax.f32 %v5744, 0.0
      %v6193 = vmax.f32 %v5745, 0.0
      %v6194 = vmax.f32 %v5746, 0.0
      %v6195 = vmax.f32 %v5747, 0.0
      %v6196 = vmax.f32 %v5748, 0.0
      %v6197 = vmax.f32 %v5749, 0.0
      %v6198 = vmax.f32 %v5750, 0.0
      %v6199 = vmax.f32 %v5751, 0.0
      %v6200 = vmax.f32 %v5752, 0.0
      %v6201 = vmax.f32 %v5753, 0.0
      %v6202 = vmax.f32 %v5754, 0.0
      %v6203 = vmax.f32 %v5755, 0.0
      %v6204 = vmax.f32 %v5756, 0.0
      %v6205 = vmax.f32 %v5757, 0.0
      %v6206 = vmax.f32 %v5758, 0.0
      %v6207 = vmax.f32 %v5759, 0.0
      %v6208 = vmax.f32 %v5760, 0.0
      %v6209 = vmax.f32 %v5761, 0.0
      %v6210 = vmax.f32 %v5762, 0.0
      %v6211 = vmax.f32 %v5763, 0.0
      %v6212 = vmax.f32 %v5764, 0.0
      %v6213 = vmax.f32 %v5765, 0.0
      %v6214 = vmax.f32 %v5766, 0.0
      %v6215 = vmax.f32 %v5767, 0.0
      %v6216 = vmax.f32 %v5768, 0.0
      %v6217 = vmax.f32 %v5769, 0.0
      %v6218 = vmax.f32 %v5770, 0.0
      %v6219 = vmax.f32 %v5771, 0.0
      %v6220 = vmax.f32 %v5772, 0.0
      %v6221 = vmax.f32 %v5773, 0.0
      %v6222 = vmax.f32 %v5774, 0.0
      %v6223 = vmax.f32 %v5775, 0.0
      %v6224 = vmax.f32 %v5776, 0.0
      %v6225 = vmax.f32 %v5777, 0.0
      %v6226 = vmax.f32 %v5778, 0.0
      %v6227 = vmax.f32 %v5779, 0.0
      %v6228 = vmax.f32 %v5780, 0.0
      %v6229 = vmax.f32 %v5781, 0.0
      %v6230 = vmax.f32 %v5782, 0.0
      %v6231 = vmax.f32 %v5783, 0.0
      %v6232 = vmax.f32 %v5784, 0.0
      %v6233 = vmax.f32 %v5785, 0.0
      %v6234 = vmax.f32 %v5786, 0.0
      %v6235 = vmax.f32 %v5787, 0.0
      %v6236 = vmax.f32 %v5788, 0.0
      %v6237 = vmax.f32 %v5789, 0.0
      %v6238 = vmax.f32 %v5790, 0.0
      %v6239 = vmax.f32 %v5791, 0.0
      %v6240 = vmax.f32 %v5792, 0.0
      %v6241 = vmax.f32 %v5793, 0.0
      %v6242 = vmax.f32 %v5794, 0.0
      %v6243 = vmax.f32 %v5795, 0.0
      %v6244 = vmax.f32 %v5796, 0.0
      %v6245 = vmax.f32 %v5797, 0.0
      %v6246 = vmax.f32 %v5798, 0.0
      %v6247 = vmax.f32 %v5799, 0.0
      %v6248 = vmax.f32 %v5800, 0.0
      %v6249 = vmax.f32 %v5801, 0.0
      %v6250 = vmax.f32 %v5802, 0.0
      %v6251 = vmax.f32 %v5803, 0.0
      %v6252 = vmax.f32 %v5804, 0.0
      %v6253 = vmax.f32 %v5805, 0.0
      %v6254 = vmax.f32 %v5806, 0.0
      %v6255 = vmax.f32 %v5807, 0.0
      %v6256 = vmax.f32 %v5808, 0.0
      %v6257 = vmax.f32 %v5809, 0.0
      %v6258 = vmax.f32 %v5810, 0.0
      %v6259 = vmax.f32 %v5811, 0.0
      %v6260 = vmax.f32 %v5812, 0.0
      %v6261 = vmax.f32 %v5813, 0.0
      %v6262 = vmax.f32 %v5814, 0.0
      %v6263 = vmax.f32 %v5815, 0.0
      %v6264 = vmax.f32 %v5816, 0.0
      %v6265 = vmax.f32 %v5817, 0.0
      %v6266 = vmax.f32 %v5818, 0.0
      %v6267 = vmax.f32 %v5819, 0.0
      %v6268 = vmax.f32 %v5820, 0.0
      %v6269 = vmax.f32 %v5821, 0.0
      %v6270 = vmax.f32 %v5822, 0.0
      %v6271 = vmax.f32 %v5823, 0.0
      %v6272 = vmax.f32 %v5824, 0.0
      %v6273 = vmax.f32 %v5825, 0.0
      %v6274 = vmax.f32 %v5826, 0.0
      %v6275 = vmax.f32 %v5827, 0.0
      %v6276 = vmax.f32 %v5828, 0.0
      %v6277 = vmax.f32 %v5829, 0.0
      %v6278 = vmax.f32 %v5830, 0.0
      %v6279 = vmax.f32 %v5831, 0.0
      %v6280 = vmax.f32 %v5832, 0.0
      %v6281 = vmax.f32 %v5833, 0.0
      %v6282 = vmax.f32 %v5834, 0.0
      %v6283 = vmax.f32 %v5835, 0.0
      %v6284 = vmax.f32 %v5836, 0.0
      %v6285 = vmax.f32 %v5837, 0.0
      %v6286 = vmax.f32 %v5838, 0.0
      %v6287 = vmax.f32 %v5839, 0.0
      %v6288 = vmax.f32 %v5840, 0.0
      %v6289 = vmax.f32 %v5841, 0.0
      %v6290 = vmax.f32 %v5842, 0.0
      %v6291 = vmax.f32 %v5843, 0.0
      %v6292 = vmax.f32 %v5844, 0.0
      %v6293 = vmax.f32 %v5845, 0.0
      %v6294 = vmax.f32 %v5846, 0.0
      %v6295 = vmax.f32 %v5847, 0.0
      %v6296 = vmax.f32 %v5848, 0.0
      %v6297 = vmax.f32 %v5849, 0.0
      %v6298 = vmax.f32 %v5850, 0.0
      %v6299 = vmax.f32 %v5851, 0.0
      %v6300 = vmax.f32 %v5852, 0.0
      %v6301 = vmax.f32 %v5853, 0.0
      %v6302 = vmax.f32 %v5854, 0.0
      %v6303 = vmax.f32 %v5855, 0.0
      %v6304 = vmax.f32 %v5856, 0.0
      %v6305 = vmax.f32 %v5857, 0.0
      %v6306 = vmax.f32 %v5858, 0.0
      %v6307 = vmax.f32 %v5859, 0.0
      %v6308 = vmax.f32 %v5860, 0.0
      %v6309 = vmax.f32 %v5861, 0.0
      %v6310 = vmax.f32 %v5862, 0.0
      %v6311 = vmax.f32 %v5863, 0.0
      %v6312 = vmax.f32 %v5864, 0.0
      %v6313 = vmax.f32 %v5865, 0.0
      %v6314 = vmax.f32 %v5866, 0.0
      %v6315 = vmax.f32 %v5867, 0.0
      %v6316 = vmax.f32 %v5868, 0.0
      %v6317 = vmax.f32 %v5869, 0.0
      %v6318 = vmax.f32 %v5870, 0.0
      %v6319 = vmax.f32 %v5871, 0.0
      %v6320 = vmax.f32 %v5872, 0.0
      %v6321 = vmax.f32 %v5873, 0.0
      %v6322 = vmax.f32 %v5874, 0.0
      %v6323 = vmax.f32 %v5875, 0.0
      %v6324 = vmax.f32 %v5876, 0.0
      %v6325 = vmax.f32 %v5877, 0.0
      %v6326 = vmax.f32 %v5878, 0.0
      %v6327 = vmax.f32 %v5879, 0.0
      %v6328 = vmax.f32 %v5880, 0.0
      %v6329 = vmax.f32 %v5881, 0.0
      %v6330 = vmax.f32 %v5882, 0.0
      %v6331 = vmax.f32 %v5883, 0.0
      %v6332 = vmax.f32 %v5884, 0.0
      %v6333 = vmax.f32 %v5885, 0.0
      %v6334 = vmax.f32 %v5886, 0.0
      %v6335 = vmax.f32 %v5887, 0.0
      %v6336 = vmax.f32 %v5888, 0.0
      %v6337 = vmax.f32 %v5889, 0.0
      %v6338 = vmax.f32 %v5890, 0.0
      %v6339 = vmax.f32 %v5891, 0.0
      %v6340 = vmax.f32 %v5892, 0.0
      %v6341 = vmax.f32 %v5893, 0.0
      %v6342 = vmax.f32 %v5894, 0.0
      %v6343 = vmax.f32 %v5895, 0.0
      %v6344 = vmax.f32 %v5896, 0.0
      %v6345 = vmax.f32 %v5897, 0.0
      %v6346 = vmax.f32 %v5898, 0.0
      %v6347 = vmax.f32 %v5899, 0.0
      %v6348 = vmax.f32 %v5900, 0.0
      %v6349 = vmax.f32 %v5901, 0.0
      %v6350 = vmax.f32 %v5902, 0.0
      %v6351 = vmax.f32 %v5903, 0.0
      %v6352 = vmax.f32 %v5904, 0.0
      %v6353 = vmax.f32 %v5905, 0.0
      %v6354 = vmax.f32 %v5906, 0.0
      %v6355 = vmax.f32 %v5907, 0.0
      %v6356 = vmax.f32 %v5908, 0.0
      %v6357 = vmax.f32 %v5909, 0.0
      %v6358 = vmax.f32 %v5910, 0.0
      %v6359 = vmax.f32 %v5911, 0.0
      %v6360 = vmax.f32 %v5912, 0.0
      %v6361 = vmax.f32 %v5913, 0.0
      %v6362 = vmax.f32 %v5914, 0.0
      %v6363 = vmax.f32 %v5915, 0.0
      %v6364 = vmax.f32 %v5916, 0.0
      %v6365 = vmax.f32 %v5917, 0.0
      %v6366 = vmax.f32 %v5918, 0.0
      %v6367 = vmax.f32 %v5919, 0.0
      %v6368 = vmax.f32 %v5920, 0.0
      %v6369 = vmax.f32 %v5921, 0.0
      %v6370 = vmax.f32 %v5922, 0.0
      %v6371 = vmax.f32 %v5923, 0.0
      %v6372 = vmax.f32 %v5924, 0.0
      %v6373 = vmax.f32 %v5925, 0.0
      %v6374 = vmax.f32 %v5926, 0.0
      %v6375 = vmax.f32 %v5927, 0.0
      %v6376 = vmax.f32 %v5928, 0.0
      %v6377 = vmax.f32 %v5929, 0.0
      %v6378 = vmax.f32 %v5930, 0.0
      %v6379 = vmax.f32 %v5931, 0.0
      %v6380 = vmax.f32 %v5932, 0.0
      %v6381 = vmax.f32 %v5933, 0.0
      %v6382 = vmax.f32 %v5934, 0.0
      %v6383 = vmax.f32 %v5935, 0.0
      %v6384 = vmax.f32 %v5936, 0.0
      %v6385 = vmax.f32 %v5937, 0.0
      %v6386 = vmax.f32 %v5938, 0.0
      %v6387 = vmax.f32 %v5939, 0.0
      %v6388 = vmax.f32 %v5940, 0.0
      %v6389 = vmax.f32 %v5941, 0.0
      %v6390 = vmax.f32 %v5942, 0.0
      %v6391 = vmax.f32 %v5943, 0.0
      %v6392 = vmax.f32 %v5944, 0.0
      %v6393 = vmax.f32 %v5945, 0.0
      %v6394 = vmax.f32 %v5946, 0.0
      %v6395 = vmax.f32 %v5947, 0.0
      %v6396 = vmax.f32 %v5948, 0.0
      %v6397 = vmax.f32 %v5949, 0.0
      %v6398 = vmax.f32 %v5950, 0.0
      %v6399 = vmax.f32 %v5951, 0.0
      %v6400 = vmax.f32 %v5952, 0.0
      %v6401 = vmax.f32 %v5953, 0.0
      %v6402 = vmax.f32 %v5954, 0.0
      %v6403 = vmax.f32 %v5955, 0.0
      %v6404 = vmax.f32 %v5956, 0.0
      %v6405 = vmax.f32 %v5957, 0.0
      %v6406 = vmax.f32 %v5958, 0.0
      %v6407 = vmax.f32 %v5959, 0.0
      %v6408 = vmax.f32 %v5960, 0.0
      %v6409 = vmax.f32 %v5961, 0.0
      %v6410 = vmax.f32 %v5962, 0.0
      %v6411 = vmax.f32 %v5963, 0.0
      %v6412 = vmax.f32 %v5964, 0.0
      %v6413 = vmax.f32 %v5965, 0.0
      %v6414 = vmax.f32 %v5966, 0.0
      %v6415 = vmax.f32 %v5967, 0.0
      %v6416 = vmax.f32 %v5968, 0.0
      %v6417 = vmax.f32 %v5969, 0.0
      %v6418 = vmax.f32 %v5970, 0.0
      %v6419 = vmax.f32 %v5971, 0.0
      %v6420 = vmax.f32 %v5972, 0.0
      %v6421 = vmax.f32 %v5973, 0.0
      %v6422 = vmax.f32 %v5974, 0.0
      %v6423 = vmax.f32 %v5975, 0.0
      %v6424 = vmax.f32 %v5976, 0.0
      %v6425 = vmax.f32 %v5977, 0.0
      %v6426 = vmax.f32 %v5978, 0.0
      %v6427 = vmax.f32 %v5979, 0.0
      %v6428 = vmax.f32 %v5980, 0.0
      %v6429 = vmax.f32 %v5981, 0.0
      %v6430 = vmax.f32 %v5982, 0.0
      %v6431 = vmax.f32 %v5983, 0.0
      %v6432 = vmax.f32 %v5984, 0.0
      %v6433 = vmax.f32 %v5985, 0.0
      %v6434 = vmax.f32 %v5986, 0.0
      %v6435 = vmax.f32 %v5987, 0.0
      %v6436 = vmax.f32 %v5988, 0.0
      %v6437 = vmax.f32 %v5989, 0.0
      %v6438 = vmax.f32 %v5990, 0.0
      %v6439 = vmax.f32 %v5991, 0.0
      %v6440 = vmax.f32 %v5992, 0.0
      %v6441 = vmax.f32 %v5993, 0.0
      %v6442 = vmax.f32 %v5994, 0.0
      %v6443 = vmax.f32 %v5995, 0.0
      %v6444 = vmax.f32 %v5996, 0.0
      %v6445 = vmax.f32 %v5997, 0.0
      %v6446 = vmax.f32 %v5998, 0.0
      %v6447 = vmax.f32 %v5999, 0.0
      %v6448 = vmax.f32 %v6000, 0.0
      %v6449 = vmax.f32 %v6001, 0.0
      %v6450 = vmax.f32 %v6002, 0.0
      %v6451 = vmax.f32 %v6003, 0.0
      %v6452 = vmax.f32 %v6004, 0.0
      %v6453 = vmax.f32 %v6005, 0.0
      %v6454 = vmax.f32 %v6006, 0.0
      %v6455 = vmax.f32 %v6007, 0.0
      %v6456 = vmax.f32 %v6008, 0.0
      %v6457 = vmax.f32 %v6009, 0.0
      %v6458 = vmax.f32 %v6010, 0.0
      %v6459 = vmax.f32 %v6011, 0.0
      %v6460 = vmax.f32 %v6012, 0.0
      %v6461 = vmax.f32 %v6013, 0.0
      %v6462 = vmax.f32 %v6014, 0.0
      %v6463 = vmax.f32 %v6015, 0.0
      %v6464 = vmax.f32 %v6016, 0.0
      %v6465 = vmax.f32 %v6017, 0.0
      %v6466 = vmax.f32 %v6018, 0.0
      %v6467 = vmax.f32 %v6019, 0.0
      %v6468 = vmax.f32 %v6020, 0.0
      %v6469 = vmax.f32 %v6021, 0.0
      %v6470 = vmax.f32 %v6022, 0.0
      %v6471 = vmax.f32 %v6023, 0.0
      %v6472 = vmax.f32 %v6024, 0.0
      %v6473 = vmax.f32 %v6025, 0.0
      %v6474 = vmax.f32 %v6026, 0.0
      %v6475 = vmax.f32 %v6027, 0.0
      %v6476 = vmax.f32 %v6028, 0.0
      %v6477 = vmax.f32 %v6029, 0.0
      %v6478 = vmax.f32 %v6030, 0.0
      %v6479 = vmax.f32 %v6031, 0.0
      %v6480 = vmax.f32 %v6032, 0.0
      %v6481 = vmax.f32 %v6033, 0.0
      %v6482 = vmax.f32 %v6034, 0.0
      %v6483 = vmax.f32 %v6035, 0.0
      %v6484 = vmax.f32 %v6036, 0.0
      %v6485 = vmax.f32 %v6037, 0.0
      %v6486 = vmax.f32 %v6038, 0.0
      %v6487 = vmax.f32 %v6039, 0.0
      %v6488 = vmax.f32 %v6040, 0.0
      %v6489 = vmax.f32 %v6041, 0.0
      %v6490 = vmax.f32 %v6042, 0.0
      %v6491 = vmax.f32 %v6043, 0.0
      %v6492 = vmax.f32 %v6044, 0.0
      %v6493 = vmax.f32 %v6045, 0.0
      %v6494 = vmax.f32 %v6046, 0.0
      %v6495 = vmax.f32 %v6047, 0.0
      %v6496 = vmax.f32 %v6048, 0.0
      %v6497 = vmax.f32 %v6049, 0.0
      %v6498 = vmax.f32 %v6050, 0.0
      %v6499 = vmax.f32 %v6051, 0.0
      %v6500 = vmax.f32 %v6052, 0.0
      %v6501 = vmax.f32 %v6053, 0.0
      %v6502 = vmax.f32 %v6054, 0.0
      %v6503 = vmax.f32 %v6055, 0.0
      %v6504 = vmax.f32 %v6056, 0.0
      %v6505 = vmax.f32 %v6057, 0.0
      %v6506 = vmax.f32 %v6058, 0.0
      %v6507 = vmax.f32 %v6059, 0.0
      %v6508 = vmax.f32 %v6060, 0.0
      %v6509 = vmax.f32 %v6061, 0.0
      %v6510 = vmax.f32 %v6062, 0.0
      %v6511 = vmax.f32 %v6063, 0.0
      %v6512 = vmax.f32 %v6064, 0.0
      %v6513 = vmax.f32 %v6065, 0.0
      %v6514 = vmax.f32 %v6066, 0.0
      %v6515 = vmax.f32 %v6067, 0.0
      %v6516 = vmax.f32 %v6068, 0.0
      %v6517 = vmax.f32 %v6069, 0.0
      %v6518 = vmax.f32 %v6070, 0.0
      %v6519 = vmax.f32 %v6071, 0.0
      %v6520 = vmax.f32 %v6072, 0.0
      %v6521 = vmax.f32 %v6073, 0.0
      %v6522 = vmax.f32 %v6074, 0.0
      %v6523 = vmax.f32 %v6075, 0.0
      %v6524 = vmax.f32 %v6076, 0.0
      %v6525 = vmax.f32 %v6077, 0.0
      %v6526 = vmax.f32 %v6078, 0.0
      %v6527 = vmax.f32 %v6079, 0.0
      %v6528 = vmax.f32 %v6080, 0.0
      %v6529 = vmax.f32 %v6081, 0.0
      %v6530 = vmax.f32 %v6082, 0.0
      %v6531 = vmax.f32 %v6083, 0.0
      %v6532 = vmax.f32 %v6084, 0.0
      %v6533 = vmax.f32 %v6085, 0.0
      %v6534 = vmax.f32 %v6086, 0.0
      %v6535 = vmax.f32 %v6087, 0.0
      %v6536 = vmax.f32 %v6088, 0.0
      %v6537 = vmax.f32 %v6089, 0.0
      %v6538 = vmax.f32 %v6090, 0.0
      %v6539 = vmax.f32 %v6091, 0.0
      %v6540 = vmax.f32 %v6092, 0.0
      %v6541 = vmax.f32 %v6093, 0.0
      %v6542 = vmax.f32 %v6094, 0.0
      %v6543 = vmax.f32 %v6095, 0.0
      %v6544 = vmax.f32 %v6096, 0.0
      %v6545 = vmax.f32 %v6097, 0.0
      %v6546 = vmax.f32 %v6098, 0.0
      %v6547 = vmax.f32 %v6099, 0.0
      %v6548 = vmax.f32 %v6100, 0.0
      %v6549 = vmax.f32 %v6101, 0.0
      %v6550 = vmax.f32 %v6102, 0.0
      %v6551 = vmax.f32 %v6103, 0.0
      %v6552 = vmax.f32 %v6104, 0.0
      %v6553 = vmax.f32 %v6105, 0.0
      %v6554 = vmax.f32 %v6106, 0.0
      %v6555 = vmax.f32 %v6107, 0.0
      %v6556 = vmax.f32 %v6108, 0.0
      %v6557 = vmax.f32 %v6109, 0.0
      %v6558 = vmax.f32 %v6110, 0.0
      %v6559 = vmax.f32 %v6111, 0.0
      %v6560 = vmax.f32 %v6112, 0.0
      %v6561 = vmax.f32 %v6113, 0.0
      %v6562 = vmax.f32 %v6114, 0.0
      %v6563 = vmax.f32 %v6115, 0.0
      %v6564 = vmax.f32 %v6116, 0.0
      %v6565 = vmax.f32 %v6117, 0.0
      %v6566 = vmax.f32 %v6118, 0.0
      %v6567 = vmax.f32 %v6119, 0.0
      %v6568 = vmax.f32 %v6120, 0.0
      %v6569 = vmax.f32 %v6121, 0.0
      %v6570 = vmax.f32 %v6122, 0.0
      %v6571 = vmax.f32 %v6123, 0.0
      %v6572 = vmax.f32 %v6124, 0.0
      %v6573 = vmax.f32 %v6125, 0.0
      %v6574 = vmax.f32 %v6126, 0.0
      %v6575 = vmax.f32 %v6127, 0.0
      %v6576 = vmax.f32 %v6128, 0.0
      %v6577 = vmax.f32 %v6129, 0.0
      %v6578 = vmax.f32 %v6130, 0.0
      %v6579 = vmax.f32 %v6131, 0.0
      %v6580 = vmax.f32 %v6132, 0.0
      %v6581 = vmax.f32 %v6133, 0.0
      %v6582 = vmax.f32 %v6134, 0.0
      %v6583 = vmax.f32 %v6135, 0.0
      %v6584 = vmax.f32 %v6136, 0.0
      %v6585 = vmax.f32 %v6137, 0.0
      %v6586 = vmax.f32 %v6138, 0.0
      %v6587 = vmax.f32 %v6139, 0.0
      %v6588 = vmax.f32 %v6140, 0.0
      %v6589 = vmax.f32 %v6141, 0.0
      %v6590 = vmax.f32 %v6142, 0.0
      %v6591 = vmax.f32 %v6143, 0.0
      %v6592 = vmax.f32 %v6144, 0.0
      %v6593 = vmax.f32 %v6145, 0.0
      %v6594 = vmax.f32 %v6146, 0.0
      %v6595 = vmax.f32 %v6147, 0.0
      %v6596 = vmax.f32 %v6148, 0.0
      %v6597 = vmax.f32 %v6149, 0.0
      %v6598 = vmax.f32 %v6150, 0.0
      %v6599 = vmax.f32 %v6151, 0.0
      %v6600 = vmax.f32 %v6152, 0.0
      %v6601 = vmax.f32 %v6153, 0.0
      %v6602 = vmax.f32 %v6154, 0.0
      %v6603 = vmax.f32 %v6155, 0.0
      %v6604 = vmax.f32 %v6156, 0.0
      %v6605 = vmax.f32 %v6157, 0.0
      %v6606 = vmax.f32 %v6158, 0.0
      %v6607 = vmax.f32 %v6159, 0.0
      %v6608 = vpack.c.bf16 %v6161, %v6160
      %v6609 = vpack.c.bf16 %v6163, %v6162
      %v6610 = vpack.c.bf16 %v6165, %v6164
      %v6611 = vpack.c.bf16 %v6167, %v6166
      %v6612 = vpack.c.bf16 %v6169, %v6168
      %v6613 = vpack.c.bf16 %v6171, %v6170
      %v6614 = vpack.c.bf16 %v6173, %v6172
      %v6615 = vpack.c.bf16 %v6175, %v6174
      %v6616 = vpack.c.bf16 %v6177, %v6176
      %v6617 = vpack.c.bf16 %v6179, %v6178
      %v6618 = vpack.c.bf16 %v6181, %v6180
      %v6619 = vpack.c.bf16 %v6183, %v6182
      %v6620 = vpack.c.bf16 %v6185, %v6184
      %v6621 = vpack.c.bf16 %v6187, %v6186
      %v6622 = vpack.c.bf16 %v6189, %v6188
      %v6623 = vpack.c.bf16 %v6191, %v6190
      %v6624 = vpack.c.bf16 %v6193, %v6192
      %v6625 = vpack.c.bf16 %v6195, %v6194
      %v6626 = vpack.c.bf16 %v6197, %v6196
      %v6627 = vpack.c.bf16 %v6199, %v6198
      %v6628 = vpack.c.bf16 %v6201, %v6200
      %v6629 = vpack.c.bf16 %v6203, %v6202
      %v6630 = vpack.c.bf16 %v6205, %v6204
      %v6631 = vpack.c.bf16 %v6207, %v6206
      %v6632 = vpack.c.bf16 %v6209, %v6208
      %v6633 = vpack.c.bf16 %v6211, %v6210
      %v6634 = vpack.c.bf16 %v6213, %v6212
      %v6635 = vpack.c.bf16 %v6215, %v6214
      %v6636 = vpack.c.bf16 %v6217, %v6216
      %v6637 = vpack.c.bf16 %v6219, %v6218
      %v6638 = vpack.c.bf16 %v6221, %v6220
      %v6639 = vpack.c.bf16 %v6223, %v6222
      %v6640 = vpack.c.bf16 %v6225, %v6224
      %v6641 = vpack.c.bf16 %v6227, %v6226
      %v6642 = vpack.c.bf16 %v6229, %v6228
      %v6643 = vpack.c.bf16 %v6231, %v6230
      %v6644 = vpack.c.bf16 %v6233, %v6232
      %v6645 = vpack.c.bf16 %v6235, %v6234
      %v6646 = vpack.c.bf16 %v6237, %v6236
      %v6647 = vpack.c.bf16 %v6239, %v6238
      %v6648 = vpack.c.bf16 %v6241, %v6240
      %v6649 = vpack.c.bf16 %v6243, %v6242
      %v6650 = vpack.c.bf16 %v6245, %v6244
      %v6651 = vpack.c.bf16 %v6247, %v6246
      %v6652 = vpack.c.bf16 %v6249, %v6248
      %v6653 = vpack.c.bf16 %v6251, %v6250
      %v6654 = vpack.c.bf16 %v6253, %v6252
      %v6655 = vpack.c.bf16 %v6255, %v6254
      %v6656 = vpack.c.bf16 %v6257, %v6256
      %v6657 = vpack.c.bf16 %v6259, %v6258
      %v6658 = vpack.c.bf16 %v6261, %v6260
      %v6659 = vpack.c.bf16 %v6263, %v6262
      %v6660 = vpack.c.bf16 %v6265, %v6264
      %v6661 = vpack.c.bf16 %v6267, %v6266
      %v6662 = vpack.c.bf16 %v6269, %v6268
      %v6663 = vpack.c.bf16 %v6271, %v6270
      %v6664 = vpack.c.bf16 %v6273, %v6272
      %v6665 = vpack.c.bf16 %v6275, %v6274
      %v6666 = vpack.c.bf16 %v6277, %v6276
      %v6667 = vpack.c.bf16 %v6279, %v6278
      %v6668 = vpack.c.bf16 %v6281, %v6280
      %v6669 = vpack.c.bf16 %v6283, %v6282
      %v6670 = vpack.c.bf16 %v6285, %v6284
      %v6671 = vpack.c.bf16 %v6287, %v6286
      %v6672 = vpack.c.bf16 %v6289, %v6288
      %v6673 = vpack.c.bf16 %v6291, %v6290
      %v6674 = vpack.c.bf16 %v6293, %v6292
      %v6675 = vpack.c.bf16 %v6295, %v6294
      %v6676 = vpack.c.bf16 %v6297, %v6296
      %v6677 = vpack.c.bf16 %v6299, %v6298
      %v6678 = vpack.c.bf16 %v6301, %v6300
      %v6679 = vpack.c.bf16 %v6303, %v6302
      %v6680 = vpack.c.bf16 %v6305, %v6304
      %v6681 = vpack.c.bf16 %v6307, %v6306
      %v6682 = vpack.c.bf16 %v6309, %v6308
      %v6683 = vpack.c.bf16 %v6311, %v6310
      %v6684 = vpack.c.bf16 %v6313, %v6312
      %v6685 = vpack.c.bf16 %v6315, %v6314
      %v6686 = vpack.c.bf16 %v6317, %v6316
      %v6687 = vpack.c.bf16 %v6319, %v6318
      %v6688 = vpack.c.bf16 %v6321, %v6320
      %v6689 = vpack.c.bf16 %v6323, %v6322
      %v6690 = vpack.c.bf16 %v6325, %v6324
      %v6691 = vpack.c.bf16 %v6327, %v6326
      %v6692 = vpack.c.bf16 %v6329, %v6328
      %v6693 = vpack.c.bf16 %v6331, %v6330
      %v6694 = vpack.c.bf16 %v6333, %v6332
      %v6695 = vpack.c.bf16 %v6335, %v6334
      %v6696 = vpack.c.bf16 %v6337, %v6336
      %v6697 = vpack.c.bf16 %v6339, %v6338
      %v6698 = vpack.c.bf16 %v6341, %v6340
      %v6699 = vpack.c.bf16 %v6343, %v6342
      %v6700 = vpack.c.bf16 %v6345, %v6344
      %v6701 = vpack.c.bf16 %v6347, %v6346
      %v6702 = vpack.c.bf16 %v6349, %v6348
      %v6703 = vpack.c.bf16 %v6351, %v6350
      %v6704 = vpack.c.bf16 %v6353, %v6352
      %v6705 = vpack.c.bf16 %v6355, %v6354
      %v6706 = vpack.c.bf16 %v6357, %v6356
      %v6707 = vpack.c.bf16 %v6359, %v6358
      %v6708 = vpack.c.bf16 %v6361, %v6360
      %v6709 = vpack.c.bf16 %v6363, %v6362
      %v6710 = vpack.c.bf16 %v6365, %v6364
      %v6711 = vpack.c.bf16 %v6367, %v6366
      %v6712 = vpack.c.bf16 %v6369, %v6368
      %v6713 = vpack.c.bf16 %v6371, %v6370
      %v6714 = vpack.c.bf16 %v6373, %v6372
      %v6715 = vpack.c.bf16 %v6375, %v6374
      %v6716 = vpack.c.bf16 %v6377, %v6376
      %v6717 = vpack.c.bf16 %v6379, %v6378
      %v6718 = vpack.c.bf16 %v6381, %v6380
      %v6719 = vpack.c.bf16 %v6383, %v6382
      %v6720 = vpack.c.bf16 %v6385, %v6384
      %v6721 = vpack.c.bf16 %v6387, %v6386
      %v6722 = vpack.c.bf16 %v6389, %v6388
      %v6723 = vpack.c.bf16 %v6391, %v6390
      %v6724 = vpack.c.bf16 %v6393, %v6392
      %v6725 = vpack.c.bf16 %v6395, %v6394
      %v6726 = vpack.c.bf16 %v6397, %v6396
      %v6727 = vpack.c.bf16 %v6399, %v6398
      %v6728 = vpack.c.bf16 %v6401, %v6400
      %v6729 = vpack.c.bf16 %v6403, %v6402
      %v6730 = vpack.c.bf16 %v6405, %v6404
      %v6731 = vpack.c.bf16 %v6407, %v6406
      %v6732 = vpack.c.bf16 %v6409, %v6408
      %v6733 = vpack.c.bf16 %v6411, %v6410
      %v6734 = vpack.c.bf16 %v6413, %v6412
      %v6735 = vpack.c.bf16 %v6415, %v6414
      %v6736 = vpack.c.bf16 %v6417, %v6416
      %v6737 = vpack.c.bf16 %v6419, %v6418
      %v6738 = vpack.c.bf16 %v6421, %v6420
      %v6739 = vpack.c.bf16 %v6423, %v6422
      %v6740 = vpack.c.bf16 %v6425, %v6424
      %v6741 = vpack.c.bf16 %v6427, %v6426
      %v6742 = vpack.c.bf16 %v6429, %v6428
      %v6743 = vpack.c.bf16 %v6431, %v6430
      %v6744 = vpack.c.bf16 %v6433, %v6432
      %v6745 = vpack.c.bf16 %v6435, %v6434
      %v6746 = vpack.c.bf16 %v6437, %v6436
      %v6747 = vpack.c.bf16 %v6439, %v6438
      %v6748 = vpack.c.bf16 %v6441, %v6440
      %v6749 = vpack.c.bf16 %v6443, %v6442
      %v6750 = vpack.c.bf16 %v6445, %v6444
      %v6751 = vpack.c.bf16 %v6447, %v6446
      %v6752 = vpack.c.bf16 %v6449, %v6448
      %v6753 = vpack.c.bf16 %v6451, %v6450
      %v6754 = vpack.c.bf16 %v6453, %v6452
      %v6755 = vpack.c.bf16 %v6455, %v6454
      %v6756 = vpack.c.bf16 %v6457, %v6456
      %v6757 = vpack.c.bf16 %v6459, %v6458
      %v6758 = vpack.c.bf16 %v6461, %v6460
      %v6759 = vpack.c.bf16 %v6463, %v6462
      %v6760 = vpack.c.bf16 %v6465, %v6464
      %v6761 = vpack.c.bf16 %v6467, %v6466
      %v6762 = vpack.c.bf16 %v6469, %v6468
      %v6763 = vpack.c.bf16 %v6471, %v6470
      %v6764 = vpack.c.bf16 %v6473, %v6472
      %v6765 = vpack.c.bf16 %v6475, %v6474
      %v6766 = vpack.c.bf16 %v6477, %v6476
      %v6767 = vpack.c.bf16 %v6479, %v6478
      %v6768 = vpack.c.bf16 %v6481, %v6480
      %v6769 = vpack.c.bf16 %v6483, %v6482
      %v6770 = vpack.c.bf16 %v6485, %v6484
      %v6771 = vpack.c.bf16 %v6487, %v6486
      %v6772 = vpack.c.bf16 %v6489, %v6488
      %v6773 = vpack.c.bf16 %v6491, %v6490
      %v6774 = vpack.c.bf16 %v6493, %v6492
      %v6775 = vpack.c.bf16 %v6495, %v6494
      %v6776 = vpack.c.bf16 %v6497, %v6496
      %v6777 = vpack.c.bf16 %v6499, %v6498
      %v6778 = vpack.c.bf16 %v6501, %v6500
      %v6779 = vpack.c.bf16 %v6503, %v6502
      %v6780 = vpack.c.bf16 %v6505, %v6504
      %v6781 = vpack.c.bf16 %v6507, %v6506
      %v6782 = vpack.c.bf16 %v6509, %v6508
      %v6783 = vpack.c.bf16 %v6511, %v6510
      %v6784 = vpack.c.bf16 %v6513, %v6512
      %v6785 = vpack.c.bf16 %v6515, %v6514
      %v6786 = vpack.c.bf16 %v6517, %v6516
      %v6787 = vpack.c.bf16 %v6519, %v6518
      %v6788 = vpack.c.bf16 %v6521, %v6520
      %v6789 = vpack.c.bf16 %v6523, %v6522
      %v6790 = vpack.c.bf16 %v6525, %v6524
      %v6791 = vpack.c.bf16 %v6527, %v6526
      %v6792 = vpack.c.bf16 %v6529, %v6528
      %v6793 = vpack.c.bf16 %v6531, %v6530
      %v6794 = vpack.c.bf16 %v6533, %v6532
      %v6795 = vpack.c.bf16 %v6535, %v6534
      %v6796 = vpack.c.bf16 %v6537, %v6536
      %v6797 = vpack.c.bf16 %v6539, %v6538
      %v6798 = vpack.c.bf16 %v6541, %v6540
      %v6799 = vpack.c.bf16 %v6543, %v6542
      %v6800 = vpack.c.bf16 %v6545, %v6544
      %v6801 = vpack.c.bf16 %v6547, %v6546
      %v6802 = vpack.c.bf16 %v6549, %v6548
      %v6803 = vpack.c.bf16 %v6551, %v6550
      %v6804 = vpack.c.bf16 %v6553, %v6552
      %v6805 = vpack.c.bf16 %v6555, %v6554
      %v6806 = vpack.c.bf16 %v6557, %v6556
      %v6807 = vpack.c.bf16 %v6559, %v6558
      %v6808 = vpack.c.bf16 %v6561, %v6560
      %v6809 = vpack.c.bf16 %v6563, %v6562
      %v6810 = vpack.c.bf16 %v6565, %v6564
      %v6811 = vpack.c.bf16 %v6567, %v6566
      %v6812 = vpack.c.bf16 %v6569, %v6568
      %v6813 = vpack.c.bf16 %v6571, %v6570
      %v6814 = vpack.c.bf16 %v6573, %v6572
      %v6815 = vpack.c.bf16 %v6575, %v6574
      %v6816 = vpack.c.bf16 %v6577, %v6576
      %v6817 = vpack.c.bf16 %v6579, %v6578
      %v6818 = vpack.c.bf16 %v6581, %v6580
      %v6819 = vpack.c.bf16 %v6583, %v6582
      %v6820 = vpack.c.bf16 %v6585, %v6584
      %v6821 = vpack.c.bf16 %v6587, %v6586
      %v6822 = vpack.c.bf16 %v6589, %v6588
      %v6823 = vpack.c.bf16 %v6591, %v6590
      %v6824 = vpack.c.bf16 %v6593, %v6592
      %v6825 = vpack.c.bf16 %v6595, %v6594
      %v6826 = vpack.c.bf16 %v6597, %v6596
      %v6827 = vpack.c.bf16 %v6599, %v6598
      %v6828 = vpack.c.bf16 %v6601, %v6600
      %v6829 = vpack.c.bf16 %v6603, %v6602
      %v6830 = vpack.c.bf16 %v6605, %v6604
      %v6831 = vpack.c.bf16 %v6607, %v6606
      %v7056 = vunpack.c.l.b16 %v6608
      %v7057 = vunpack.c.h.b16 %v6608
      %v7058 = vunpack.c.l.b16 %v6609
      %v7059 = vunpack.c.h.b16 %v6609
      %v7060 = vunpack.c.l.b16 %v6610
      %v7061 = vunpack.c.h.b16 %v6610
      %v7062 = vunpack.c.l.b16 %v6611
      %v7063 = vunpack.c.h.b16 %v6611
      %v7064 = vunpack.c.l.b16 %v6612
      %v7065 = vunpack.c.h.b16 %v6612
      %v7066 = vunpack.c.l.b16 %v6613
      %v7067 = vunpack.c.h.b16 %v6613
      %v7068 = vunpack.c.l.b16 %v6614
      %v7069 = vunpack.c.h.b16 %v6614
      %v7070 = vunpack.c.l.b16 %v6615
      %v7071 = vunpack.c.h.b16 %v6615
      %v7072 = vunpack.c.l.b16 %v6616
      %v7073 = vunpack.c.h.b16 %v6616
      %v7074 = vunpack.c.l.b16 %v6617
      %v7075 = vunpack.c.h.b16 %v6617
      %v7076 = vunpack.c.l.b16 %v6618
      %v7077 = vunpack.c.h.b16 %v6618
      %v7078 = vunpack.c.l.b16 %v6619
      %v7079 = vunpack.c.h.b16 %v6619
      %v7080 = vunpack.c.l.b16 %v6620
      %v7081 = vunpack.c.h.b16 %v6620
      %v7082 = vunpack.c.l.b16 %v6621
      %v7083 = vunpack.c.h.b16 %v6621
      %v7084 = vunpack.c.l.b16 %v6622
      %v7085 = vunpack.c.h.b16 %v6622
      %v7086 = vunpack.c.l.b16 %v6623
      %v7087 = vunpack.c.h.b16 %v6623
      %v7088 = vunpack.c.l.b16 %v6624
      %v7089 = vunpack.c.h.b16 %v6624
      %v7090 = vunpack.c.l.b16 %v6625
      %v7091 = vunpack.c.h.b16 %v6625
      %v7092 = vunpack.c.l.b16 %v6626
      %v7093 = vunpack.c.h.b16 %v6626
      %v7094 = vunpack.c.l.b16 %v6627
      %v7095 = vunpack.c.h.b16 %v6627
      %v7096 = vunpack.c.l.b16 %v6628
      %v7097 = vunpack.c.h.b16 %v6628
      %v7098 = vunpack.c.l.b16 %v6629
      %v7099 = vunpack.c.h.b16 %v6629
      %v7100 = vunpack.c.l.b16 %v6630
      %v7101 = vunpack.c.h.b16 %v6630
      %v7102 = vunpack.c.l.b16 %v6631
      %v7103 = vunpack.c.h.b16 %v6631
      %v7104 = vunpack.c.l.b16 %v6632
      %v7105 = vunpack.c.h.b16 %v6632
      %v7106 = vunpack.c.l.b16 %v6633
      %v7107 = vunpack.c.h.b16 %v6633
      %v7108 = vunpack.c.l.b16 %v6634
      %v7109 = vunpack.c.h.b16 %v6634
      %v7110 = vunpack.c.l.b16 %v6635
      %v7111 = vunpack.c.h.b16 %v6635
      %v7112 = vunpack.c.l.b16 %v6636
      %v7113 = vunpack.c.h.b16 %v6636
      %v7114 = vunpack.c.l.b16 %v6637
      %v7115 = vunpack.c.h.b16 %v6637
      %v7116 = vunpack.c.l.b16 %v6638
      %v7117 = vunpack.c.h.b16 %v6638
      %v7118 = vunpack.c.l.b16 %v6639
      %v7119 = vunpack.c.h.b16 %v6639
      %v7120 = vunpack.c.l.b16 %v6640
      %v7121 = vunpack.c.h.b16 %v6640
      %v7122 = vunpack.c.l.b16 %v6641
      %v7123 = vunpack.c.h.b16 %v6641
      %v7124 = vunpack.c.l.b16 %v6642
      %v7125 = vunpack.c.h.b16 %v6642
      %v7126 = vunpack.c.l.b16 %v6643
      %v7127 = vunpack.c.h.b16 %v6643
      %v7128 = vunpack.c.l.b16 %v6644
      %v7129 = vunpack.c.h.b16 %v6644
      %v7130 = vunpack.c.l.b16 %v6645
      %v7131 = vunpack.c.h.b16 %v6645
      %v7132 = vunpack.c.l.b16 %v6646
      %v7133 = vunpack.c.h.b16 %v6646
      %v7134 = vunpack.c.l.b16 %v6647
      %v7135 = vunpack.c.h.b16 %v6647
      %v7136 = vunpack.c.l.b16 %v6648
      %v7137 = vunpack.c.h.b16 %v6648
      %v7138 = vunpack.c.l.b16 %v6649
      %v7139 = vunpack.c.h.b16 %v6649
      %v7140 = vunpack.c.l.b16 %v6650
      %v7141 = vunpack.c.h.b16 %v6650
      %v7142 = vunpack.c.l.b16 %v6651
      %v7143 = vunpack.c.h.b16 %v6651
      %v7144 = vunpack.c.l.b16 %v6652
      %v7145 = vunpack.c.h.b16 %v6652
      %v7146 = vunpack.c.l.b16 %v6653
      %v7147 = vunpack.c.h.b16 %v6653
      %v7148 = vunpack.c.l.b16 %v6654
      %v7149 = vunpack.c.h.b16 %v6654
      %v7150 = vunpack.c.l.b16 %v6655
      %v7151 = vunpack.c.h.b16 %v6655
      %v7152 = vunpack.c.l.b16 %v6656
      %v7153 = vunpack.c.h.b16 %v6656
      %v7154 = vunpack.c.l.b16 %v6657
      %v7155 = vunpack.c.h.b16 %v6657
      %v7156 = vunpack.c.l.b16 %v6658
      %v7157 = vunpack.c.h.b16 %v6658
      %v7158 = vunpack.c.l.b16 %v6659
      %v7159 = vunpack.c.h.b16 %v6659
      %v7160 = vunpack.c.l.b16 %v6660
      %v7161 = vunpack.c.h.b16 %v6660
      %v7162 = vunpack.c.l.b16 %v6661
      %v7163 = vunpack.c.h.b16 %v6661
      %v7164 = vunpack.c.l.b16 %v6662
      %v7165 = vunpack.c.h.b16 %v6662
      %v7166 = vunpack.c.l.b16 %v6663
      %v7167 = vunpack.c.h.b16 %v6663
      %v7168 = vunpack.c.l.b16 %v6664
      %v7169 = vunpack.c.h.b16 %v6664
      %v7170 = vunpack.c.l.b16 %v6665
      %v7171 = vunpack.c.h.b16 %v6665
      %v7172 = vunpack.c.l.b16 %v6666
      %v7173 = vunpack.c.h.b16 %v6666
      %v7174 = vunpack.c.l.b16 %v6667
      %v7175 = vunpack.c.h.b16 %v6667
      %v7176 = vunpack.c.l.b16 %v6668
      %v7177 = vunpack.c.h.b16 %v6668
      %v7178 = vunpack.c.l.b16 %v6669
      %v7179 = vunpack.c.h.b16 %v6669
      %v7180 = vunpack.c.l.b16 %v6670
      %v7181 = vunpack.c.h.b16 %v6670
      %v7182 = vunpack.c.l.b16 %v6671
      %v7183 = vunpack.c.h.b16 %v6671
      %v7184 = vunpack.c.l.b16 %v6672
      %v7185 = vunpack.c.h.b16 %v6672
      %v7186 = vunpack.c.l.b16 %v6673
      %v7187 = vunpack.c.h.b16 %v6673
      %v7188 = vunpack.c.l.b16 %v6674
      %v7189 = vunpack.c.h.b16 %v6674
      %v7190 = vunpack.c.l.b16 %v6675
      %v7191 = vunpack.c.h.b16 %v6675
      %v7192 = vunpack.c.l.b16 %v6676
      %v7193 = vunpack.c.h.b16 %v6676
      %v7194 = vunpack.c.l.b16 %v6677
      %v7195 = vunpack.c.h.b16 %v6677
      %v7196 = vunpack.c.l.b16 %v6678
      %v7197 = vunpack.c.h.b16 %v6678
      %v7198 = vunpack.c.l.b16 %v6679
      %v7199 = vunpack.c.h.b16 %v6679
      %v7200 = vunpack.c.l.b16 %v6680
      %v7201 = vunpack.c.h.b16 %v6680
      %v7202 = vunpack.c.l.b16 %v6681
      %v7203 = vunpack.c.h.b16 %v6681
      %v7204 = vunpack.c.l.b16 %v6682
      %v7205 = vunpack.c.h.b16 %v6682
      %v7206 = vunpack.c.l.b16 %v6683
      %v7207 = vunpack.c.h.b16 %v6683
      %v7208 = vunpack.c.l.b16 %v6684
      %v7209 = vunpack.c.h.b16 %v6684
      %v7210 = vunpack.c.l.b16 %v6685
      %v7211 = vunpack.c.h.b16 %v6685
      %v7212 = vunpack.c.l.b16 %v6686
      %v7213 = vunpack.c.h.b16 %v6686
      %v7214 = vunpack.c.l.b16 %v6687
      %v7215 = vunpack.c.h.b16 %v6687
      %v7216 = vunpack.c.l.b16 %v6688
      %v7217 = vunpack.c.h.b16 %v6688
      %v7218 = vunpack.c.l.b16 %v6689
      %v7219 = vunpack.c.h.b16 %v6689
      %v7220 = vunpack.c.l.b16 %v6690
      %v7221 = vunpack.c.h.b16 %v6690
      %v7222 = vunpack.c.l.b16 %v6691
      %v7223 = vunpack.c.h.b16 %v6691
      %v7224 = vunpack.c.l.b16 %v6692
      %v7225 = vunpack.c.h.b16 %v6692
      %v7226 = vunpack.c.l.b16 %v6693
      %v7227 = vunpack.c.h.b16 %v6693
      %v7228 = vunpack.c.l.b16 %v6694
      %v7229 = vunpack.c.h.b16 %v6694
      %v7230 = vunpack.c.l.b16 %v6695
      %v7231 = vunpack.c.h.b16 %v6695
      %v7232 = vunpack.c.l.b16 %v6696
      %v7233 = vunpack.c.h.b16 %v6696
      %v7234 = vunpack.c.l.b16 %v6697
      %v7235 = vunpack.c.h.b16 %v6697
      %v7236 = vunpack.c.l.b16 %v6698
      %v7237 = vunpack.c.h.b16 %v6698
      %v7238 = vunpack.c.l.b16 %v6699
      %v7239 = vunpack.c.h.b16 %v6699
      %v7240 = vunpack.c.l.b16 %v6700
      %v7241 = vunpack.c.h.b16 %v6700
      %v7242 = vunpack.c.l.b16 %v6701
      %v7243 = vunpack.c.h.b16 %v6701
      %v7244 = vunpack.c.l.b16 %v6702
      %v7245 = vunpack.c.h.b16 %v6702
      %v7246 = vunpack.c.l.b16 %v6703
      %v7247 = vunpack.c.h.b16 %v6703
      %v7248 = vunpack.c.l.b16 %v6704
      %v7249 = vunpack.c.h.b16 %v6704
      %v7250 = vunpack.c.l.b16 %v6705
      %v7251 = vunpack.c.h.b16 %v6705
      %v7252 = vunpack.c.l.b16 %v6706
      %v7253 = vunpack.c.h.b16 %v6706
      %v7254 = vunpack.c.l.b16 %v6707
      %v7255 = vunpack.c.h.b16 %v6707
      %v7256 = vunpack.c.l.b16 %v6708
      %v7257 = vunpack.c.h.b16 %v6708
      %v7258 = vunpack.c.l.b16 %v6709
      %v7259 = vunpack.c.h.b16 %v6709
      %v7260 = vunpack.c.l.b16 %v6710
      %v7261 = vunpack.c.h.b16 %v6710
      %v7262 = vunpack.c.l.b16 %v6711
      %v7263 = vunpack.c.h.b16 %v6711
      %v7264 = vunpack.c.l.b16 %v6712
      %v7265 = vunpack.c.h.b16 %v6712
      %v7266 = vunpack.c.l.b16 %v6713
      %v7267 = vunpack.c.h.b16 %v6713
      %v7268 = vunpack.c.l.b16 %v6714
      %v7269 = vunpack.c.h.b16 %v6714
      %v7270 = vunpack.c.l.b16 %v6715
      %v7271 = vunpack.c.h.b16 %v6715
      %v7272 = vunpack.c.l.b16 %v6716
      %v7273 = vunpack.c.h.b16 %v6716
      %v7274 = vunpack.c.l.b16 %v6717
      %v7275 = vunpack.c.h.b16 %v6717
      %v7276 = vunpack.c.l.b16 %v6718
      %v7277 = vunpack.c.h.b16 %v6718
      %v7278 = vunpack.c.l.b16 %v6719
      %v7279 = vunpack.c.h.b16 %v6719
      %v7280 = vunpack.c.l.b16 %v6720
      %v7281 = vunpack.c.h.b16 %v6720
      %v7282 = vunpack.c.l.b16 %v6721
      %v7283 = vunpack.c.h.b16 %v6721
      %v7284 = vunpack.c.l.b16 %v6722
      %v7285 = vunpack.c.h.b16 %v6722
      %v7286 = vunpack.c.l.b16 %v6723
      %v7287 = vunpack.c.h.b16 %v6723
      %v7288 = vunpack.c.l.b16 %v6724
      %v7289 = vunpack.c.h.b16 %v6724
      %v7290 = vunpack.c.l.b16 %v6725
      %v7291 = vunpack.c.h.b16 %v6725
      %v7292 = vunpack.c.l.b16 %v6726
      %v7293 = vunpack.c.h.b16 %v6726
      %v7294 = vunpack.c.l.b16 %v6727
      %v7295 = vunpack.c.h.b16 %v6727
      %v7296 = vunpack.c.l.b16 %v6728
      %v7297 = vunpack.c.h.b16 %v6728
      %v7298 = vunpack.c.l.b16 %v6729
      %v7299 = vunpack.c.h.b16 %v6729
      %v7300 = vunpack.c.l.b16 %v6730
      %v7301 = vunpack.c.h.b16 %v6730
      %v7302 = vunpack.c.l.b16 %v6731
      %v7303 = vunpack.c.h.b16 %v6731
      %v7304 = vunpack.c.l.b16 %v6732
      %v7305 = vunpack.c.h.b16 %v6732
      %v7306 = vunpack.c.l.b16 %v6733
      %v7307 = vunpack.c.h.b16 %v6733
      %v7308 = vunpack.c.l.b16 %v6734
      %v7309 = vunpack.c.h.b16 %v6734
      %v7310 = vunpack.c.l.b16 %v6735
      %v7311 = vunpack.c.h.b16 %v6735
      %v7312 = vunpack.c.l.b16 %v6736
      %v7313 = vunpack.c.h.b16 %v6736
      %v7314 = vunpack.c.l.b16 %v6737
      %v7315 = vunpack.c.h.b16 %v6737
      %v7316 = vunpack.c.l.b16 %v6738
      %v7317 = vunpack.c.h.b16 %v6738
      %v7318 = vunpack.c.l.b16 %v6739
      %v7319 = vunpack.c.h.b16 %v6739
      %v7320 = vunpack.c.l.b16 %v6740
      %v7321 = vunpack.c.h.b16 %v6740
      %v7322 = vunpack.c.l.b16 %v6741
      %v7323 = vunpack.c.h.b16 %v6741
      %v7324 = vunpack.c.l.b16 %v6742
      %v7325 = vunpack.c.h.b16 %v6742
      %v7326 = vunpack.c.l.b16 %v6743
      %v7327 = vunpack.c.h.b16 %v6743
      %v7328 = vunpack.c.l.b16 %v6744
      %v7329 = vunpack.c.h.b16 %v6744
      %v7330 = vunpack.c.l.b16 %v6745
      %v7331 = vunpack.c.h.b16 %v6745
      %v7332 = vunpack.c.l.b16 %v6746
      %v7333 = vunpack.c.h.b16 %v6746
      %v7334 = vunpack.c.l.b16 %v6747
      %v7335 = vunpack.c.h.b16 %v6747
      %v7336 = vunpack.c.l.b16 %v6748
      %v7337 = vunpack.c.h.b16 %v6748
      %v7338 = vunpack.c.l.b16 %v6749
      %v7339 = vunpack.c.h.b16 %v6749
      %v7340 = vunpack.c.l.b16 %v6750
      %v7341 = vunpack.c.h.b16 %v6750
      %v7342 = vunpack.c.l.b16 %v6751
      %v7343 = vunpack.c.h.b16 %v6751
      %v7344 = vunpack.c.l.b16 %v6752
      %v7345 = vunpack.c.h.b16 %v6752
      %v7346 = vunpack.c.l.b16 %v6753
      %v7347 = vunpack.c.h.b16 %v6753
      %v7348 = vunpack.c.l.b16 %v6754
      %v7349 = vunpack.c.h.b16 %v6754
      %v7350 = vunpack.c.l.b16 %v6755
      %v7351 = vunpack.c.h.b16 %v6755
      %v7352 = vunpack.c.l.b16 %v6756
      %v7353 = vunpack.c.h.b16 %v6756
      %v7354 = vunpack.c.l.b16 %v6757
      %v7355 = vunpack.c.h.b16 %v6757
      %v7356 = vunpack.c.l.b16 %v6758
      %v7357 = vunpack.c.h.b16 %v6758
      %v7358 = vunpack.c.l.b16 %v6759
      %v7359 = vunpack.c.h.b16 %v6759
      %v7360 = vunpack.c.l.b16 %v6760
      %v7361 = vunpack.c.h.b16 %v6760
      %v7362 = vunpack.c.l.b16 %v6761
      %v7363 = vunpack.c.h.b16 %v6761
      %v7364 = vunpack.c.l.b16 %v6762
      %v7365 = vunpack.c.h.b16 %v6762
      %v7366 = vunpack.c.l.b16 %v6763
      %v7367 = vunpack.c.h.b16 %v6763
      %v7368 = vunpack.c.l.b16 %v6764
      %v7369 = vunpack.c.h.b16 %v6764
      %v7370 = vunpack.c.l.b16 %v6765
      %v7371 = vunpack.c.h.b16 %v6765
      %v7372 = vunpack.c.l.b16 %v6766
      %v7373 = vunpack.c.h.b16 %v6766
      %v7374 = vunpack.c.l.b16 %v6767
      %v7375 = vunpack.c.h.b16 %v6767
      %v7376 = vunpack.c.l.b16 %v6768
      %v7377 = vunpack.c.h.b16 %v6768
      %v7378 = vunpack.c.l.b16 %v6769
      %v7379 = vunpack.c.h.b16 %v6769
      %v7380 = vunpack.c.l.b16 %v6770
      %v7381 = vunpack.c.h.b16 %v6770
      %v7382 = vunpack.c.l.b16 %v6771
      %v7383 = vunpack.c.h.b16 %v6771
      %v7384 = vunpack.c.l.b16 %v6772
      %v7385 = vunpack.c.h.b16 %v6772
      %v7386 = vunpack.c.l.b16 %v6773
      %v7387 = vunpack.c.h.b16 %v6773
      %v7388 = vunpack.c.l.b16 %v6774
      %v7389 = vunpack.c.h.b16 %v6774
      %v7390 = vunpack.c.l.b16 %v6775
      %v7391 = vunpack.c.h.b16 %v6775
      %v7392 = vunpack.c.l.b16 %v6776
      %v7393 = vunpack.c.h.b16 %v6776
      %v7394 = vunpack.c.l.b16 %v6777
      %v7395 = vunpack.c.h.b16 %v6777
      %v7396 = vunpack.c.l.b16 %v6778
      %v7397 = vunpack.c.h.b16 %v6778
      %v7398 = vunpack.c.l.b16 %v6779
      %v7399 = vunpack.c.h.b16 %v6779
      %v7400 = vunpack.c.l.b16 %v6780
      %v7401 = vunpack.c.h.b16 %v6780
      %v7402 = vunpack.c.l.b16 %v6781
      %v7403 = vunpack.c.h.b16 %v6781
      %v7404 = vunpack.c.l.b16 %v6782
      %v7405 = vunpack.c.h.b16 %v6782
      %v7406 = vunpack.c.l.b16 %v6783
      %v7407 = vunpack.c.h.b16 %v6783
      %v7408 = vunpack.c.l.b16 %v6784
      %v7409 = vunpack.c.h.b16 %v6784
      %v7410 = vunpack.c.l.b16 %v6785
      %v7411 = vunpack.c.h.b16 %v6785
      %v7412 = vunpack.c.l.b16 %v6786
      %v7413 = vunpack.c.h.b16 %v6786
      %v7414 = vunpack.c.l.b16 %v6787
      %v7415 = vunpack.c.h.b16 %v6787
      %v7416 = vunpack.c.l.b16 %v6788
      %v7417 = vunpack.c.h.b16 %v6788
      %v7418 = vunpack.c.l.b16 %v6789
      %v7419 = vunpack.c.h.b16 %v6789
      %v7420 = vunpack.c.l.b16 %v6790
      %v7421 = vunpack.c.h.b16 %v6790
      %v7422 = vunpack.c.l.b16 %v6791
      %v7423 = vunpack.c.h.b16 %v6791
      %v7424 = vunpack.c.l.b16 %v6792
      %v7425 = vunpack.c.h.b16 %v6792
      %v7426 = vunpack.c.l.b16 %v6793
      %v7427 = vunpack.c.h.b16 %v6793
      %v7428 = vunpack.c.l.b16 %v6794
      %v7429 = vunpack.c.h.b16 %v6794
      %v7430 = vunpack.c.l.b16 %v6795
      %v7431 = vunpack.c.h.b16 %v6795
      %v7432 = vunpack.c.l.b16 %v6796
      %v7433 = vunpack.c.h.b16 %v6796
      %v7434 = vunpack.c.l.b16 %v6797
      %v7435 = vunpack.c.h.b16 %v6797
      %v7436 = vunpack.c.l.b16 %v6798
      %v7437 = vunpack.c.h.b16 %v6798
      %v7438 = vunpack.c.l.b16 %v6799
      %v7439 = vunpack.c.h.b16 %v6799
      %v7440 = vunpack.c.l.b16 %v6800
      %v7441 = vunpack.c.h.b16 %v6800
      %v7442 = vunpack.c.l.b16 %v6801
      %v7443 = vunpack.c.h.b16 %v6801
      %v7444 = vunpack.c.l.b16 %v6802
      %v7445 = vunpack.c.h.b16 %v6802
      %v7446 = vunpack.c.l.b16 %v6803
      %v7447 = vunpack.c.h.b16 %v6803
      %v7448 = vunpack.c.l.b16 %v6804
      %v7449 = vunpack.c.h.b16 %v6804
      %v7450 = vunpack.c.l.b16 %v6805
      %v7451 = vunpack.c.h.b16 %v6805
      %v7452 = vunpack.c.l.b16 %v6806
      %v7453 = vunpack.c.h.b16 %v6806
      %v7454 = vunpack.c.l.b16 %v6807
      %v7455 = vunpack.c.h.b16 %v6807
      %v7456 = vunpack.c.l.b16 %v6808
      %v7457 = vunpack.c.h.b16 %v6808
      %v7458 = vunpack.c.l.b16 %v6809
      %v7459 = vunpack.c.h.b16 %v6809
      %v7460 = vunpack.c.l.b16 %v6810
      %v7461 = vunpack.c.h.b16 %v6810
      %v7462 = vunpack.c.l.b16 %v6811
      %v7463 = vunpack.c.h.b16 %v6811
      %v7464 = vunpack.c.l.b16 %v6812
      %v7465 = vunpack.c.h.b16 %v6812
      %v7466 = vunpack.c.l.b16 %v6813
      %v7467 = vunpack.c.h.b16 %v6813
      %v7468 = vunpack.c.l.b16 %v6814
      %v7469 = vunpack.c.h.b16 %v6814
      %v7470 = vunpack.c.l.b16 %v6815
      %v7471 = vunpack.c.h.b16 %v6815
      %v7472 = vunpack.c.l.b16 %v6816
      %v7473 = vunpack.c.h.b16 %v6816
      %v7474 = vunpack.c.l.b16 %v6817
      %v7475 = vunpack.c.h.b16 %v6817
      %v7476 = vunpack.c.l.b16 %v6818
      %v7477 = vunpack.c.h.b16 %v6818
      %v7478 = vunpack.c.l.b16 %v6819
      %v7479 = vunpack.c.h.b16 %v6819
      %v7480 = vunpack.c.l.b16 %v6820
      %v7481 = vunpack.c.h.b16 %v6820
      %v7482 = vunpack.c.l.b16 %v6821
      %v7483 = vunpack.c.h.b16 %v6821
      %v7484 = vunpack.c.l.b16 %v6822
      %v7485 = vunpack.c.h.b16 %v6822
      %v7486 = vunpack.c.l.b16 %v6823
      %v7487 = vunpack.c.h.b16 %v6823
      %v7488 = vunpack.c.l.b16 %v6824
      %v7489 = vunpack.c.h.b16 %v6824
      %v7490 = vunpack.c.l.b16 %v6825
      %v7491 = vunpack.c.h.b16 %v6825
      %v7492 = vunpack.c.l.b16 %v6826
      %v7493 = vunpack.c.h.b16 %v6826
      %v7494 = vunpack.c.l.b16 %v6827
      %v7495 = vunpack.c.h.b16 %v6827
      %v7496 = vunpack.c.l.b16 %v6828
      %v7497 = vunpack.c.h.b16 %v6828
      %v7498 = vunpack.c.l.b16 %v6829
      %v7499 = vunpack.c.h.b16 %v6829
      %v7500 = vunpack.c.l.b16 %v6830
      %v7501 = vunpack.c.h.b16 %v6830
      %v7502 = vunpack.c.l.b16 %v6831
      %v7503 = vunpack.c.h.b16 %v6831
      %v7504 = vpack.c.b16 %v7056, %v7056
      %v7505 = vpack.c.b16 %v7057, %v7057
      %v7506 = vpack.c.b16 %v7058, %v7058
      %v7507 = vpack.c.b16 %v7059, %v7059
      %v7508 = vpack.c.b16 %v7060, %v7060
      %v7509 = vpack.c.b16 %v7061, %v7061
      %v7510 = vpack.c.b16 %v7062, %v7062
      %v7511 = vpack.c.b16 %v7063, %v7063
      %v7512 = vpack.c.b16 %v7064, %v7064
      %v7513 = vpack.c.b16 %v7065, %v7065
      %v7514 = vpack.c.b16 %v7066, %v7066
      %v7515 = vpack.c.b16 %v7067, %v7067
      %v7516 = vpack.c.b16 %v7068, %v7068
      %v7517 = vpack.c.b16 %v7069, %v7069
      %v7518 = vpack.c.b16 %v7070, %v7070
      %v7519 = vpack.c.b16 %v7071, %v7071
      %v7520 = vpack.c.b16 %v7072, %v7072
      %v7521 = vpack.c.b16 %v7073, %v7073
      %v7522 = vpack.c.b16 %v7074, %v7074
      %v7523 = vpack.c.b16 %v7075, %v7075
      %v7524 = vpack.c.b16 %v7076, %v7076
      %v7525 = vpack.c.b16 %v7077, %v7077
      %v7526 = vpack.c.b16 %v7078, %v7078
      %v7527 = vpack.c.b16 %v7079, %v7079
      %v7528 = vpack.c.b16 %v7080, %v7080
      %v7529 = vpack.c.b16 %v7081, %v7081
      %v7530 = vpack.c.b16 %v7082, %v7082
      %v7531 = vpack.c.b16 %v7083, %v7083
      %v7532 = vpack.c.b16 %v7084, %v7084
      %v7533 = vpack.c.b16 %v7085, %v7085
      %v7534 = vpack.c.b16 %v7086, %v7086
      %v7535 = vpack.c.b16 %v7087, %v7087
      %v7536 = vpack.c.b16 %v7088, %v7088
      %v7537 = vpack.c.b16 %v7089, %v7089
      %v7538 = vpack.c.b16 %v7090, %v7090
      %v7539 = vpack.c.b16 %v7091, %v7091
      %v7540 = vpack.c.b16 %v7092, %v7092
      %v7541 = vpack.c.b16 %v7093, %v7093
      %v7542 = vpack.c.b16 %v7094, %v7094
      %v7543 = vpack.c.b16 %v7095, %v7095
      %v7544 = vpack.c.b16 %v7096, %v7096
      %v7545 = vpack.c.b16 %v7097, %v7097
      %v7546 = vpack.c.b16 %v7098, %v7098
      %v7547 = vpack.c.b16 %v7099, %v7099
      %v7548 = vpack.c.b16 %v7100, %v7100
      %v7549 = vpack.c.b16 %v7101, %v7101
      %v7550 = vpack.c.b16 %v7102, %v7102
      %v7551 = vpack.c.b16 %v7103, %v7103
      %v7552 = vpack.c.b16 %v7104, %v7104
      %v7553 = vpack.c.b16 %v7105, %v7105
      %v7554 = vpack.c.b16 %v7106, %v7106
      %v7555 = vpack.c.b16 %v7107, %v7107
      %v7556 = vpack.c.b16 %v7108, %v7108
      %v7557 = vpack.c.b16 %v7109, %v7109
      %v7558 = vpack.c.b16 %v7110, %v7110
      %v7559 = vpack.c.b16 %v7111, %v7111
      %v7560 = vpack.c.b16 %v7112, %v7112
      %v7561 = vpack.c.b16 %v7113, %v7113
      %v7562 = vpack.c.b16 %v7114, %v7114
      %v7563 = vpack.c.b16 %v7115, %v7115
      %v7564 = vpack.c.b16 %v7116, %v7116
      %v7565 = vpack.c.b16 %v7117, %v7117
      %v7566 = vpack.c.b16 %v7118, %v7118
      %v7567 = vpack.c.b16 %v7119, %v7119
      %v7568 = vpack.c.b16 %v7120, %v7120
      %v7569 = vpack.c.b16 %v7121, %v7121
      %v7570 = vpack.c.b16 %v7122, %v7122
      %v7571 = vpack.c.b16 %v7123, %v7123
      %v7572 = vpack.c.b16 %v7124, %v7124
      %v7573 = vpack.c.b16 %v7125, %v7125
      %v7574 = vpack.c.b16 %v7126, %v7126
      %v7575 = vpack.c.b16 %v7127, %v7127
      %v7576 = vpack.c.b16 %v7128, %v7128
      %v7577 = vpack.c.b16 %v7129, %v7129
      %v7578 = vpack.c.b16 %v7130, %v7130
      %v7579 = vpack.c.b16 %v7131, %v7131
      %v7580 = vpack.c.b16 %v7132, %v7132
      %v7581 = vpack.c.b16 %v7133, %v7133
      %v7582 = vpack.c.b16 %v7134, %v7134
      %v7583 = vpack.c.b16 %v7135, %v7135
      %v7584 = vpack.c.b16 %v7136, %v7136
      %v7585 = vpack.c.b16 %v7137, %v7137
      %v7586 = vpack.c.b16 %v7138, %v7138
      %v7587 = vpack.c.b16 %v7139, %v7139
      %v7588 = vpack.c.b16 %v7140, %v7140
      %v7589 = vpack.c.b16 %v7141, %v7141
      %v7590 = vpack.c.b16 %v7142, %v7142
      %v7591 = vpack.c.b16 %v7143, %v7143
      %v7592 = vpack.c.b16 %v7144, %v7144
      %v7593 = vpack.c.b16 %v7145, %v7145
      %v7594 = vpack.c.b16 %v7146, %v7146
      %v7595 = vpack.c.b16 %v7147, %v7147
      %v7596 = vpack.c.b16 %v7148, %v7148
      %v7597 = vpack.c.b16 %v7149, %v7149
      %v7598 = vpack.c.b16 %v7150, %v7150
      %v7599 = vpack.c.b16 %v7151, %v7151
      %v7600 = vpack.c.b16 %v7152, %v7152
      %v7601 = vpack.c.b16 %v7153, %v7153
      %v7602 = vpack.c.b16 %v7154, %v7154
      %v7603 = vpack.c.b16 %v7155, %v7155
      %v7604 = vpack.c.b16 %v7156, %v7156
      %v7605 = vpack.c.b16 %v7157, %v7157
      %v7606 = vpack.c.b16 %v7158, %v7158
      %v7607 = vpack.c.b16 %v7159, %v7159
      %v7608 = vpack.c.b16 %v7160, %v7160
      %v7609 = vpack.c.b16 %v7161, %v7161
      %v7610 = vpack.c.b16 %v7162, %v7162
      %v7611 = vpack.c.b16 %v7163, %v7163
      %v7612 = vpack.c.b16 %v7164, %v7164
      %v7613 = vpack.c.b16 %v7165, %v7165
      %v7614 = vpack.c.b16 %v7166, %v7166
      %v7615 = vpack.c.b16 %v7167, %v7167
      %v7616 = vpack.c.b16 %v7168, %v7168
      %v7617 = vpack.c.b16 %v7169, %v7169
      %v7618 = vpack.c.b16 %v7170, %v7170
      %v7619 = vpack.c.b16 %v7171, %v7171
      %v7620 = vpack.c.b16 %v7172, %v7172
      %v7621 = vpack.c.b16 %v7173, %v7173
      %v7622 = vpack.c.b16 %v7174, %v7174
      %v7623 = vpack.c.b16 %v7175, %v7175
      %v7624 = vpack.c.b16 %v7176, %v7176
      %v7625 = vpack.c.b16 %v7177, %v7177
      %v7626 = vpack.c.b16 %v7178, %v7178
      %v7627 = vpack.c.b16 %v7179, %v7179
      %v7628 = vpack.c.b16 %v7180, %v7180
      %v7629 = vpack.c.b16 %v7181, %v7181
      %v7630 = vpack.c.b16 %v7182, %v7182
      %v7631 = vpack.c.b16 %v7183, %v7183
      %v7632 = vpack.c.b16 %v7184, %v7184
      %v7633 = vpack.c.b16 %v7185, %v7185
      %v7634 = vpack.c.b16 %v7186, %v7186
      %v7635 = vpack.c.b16 %v7187, %v7187
      %v7636 = vpack.c.b16 %v7188, %v7188
      %v7637 = vpack.c.b16 %v7189, %v7189
      %v7638 = vpack.c.b16 %v7190, %v7190
      %v7639 = vpack.c.b16 %v7191, %v7191
      %v7640 = vpack.c.b16 %v7192, %v7192
      %v7641 = vpack.c.b16 %v7193, %v7193
      %v7642 = vpack.c.b16 %v7194, %v7194
      %v7643 = vpack.c.b16 %v7195, %v7195
      %v7644 = vpack.c.b16 %v7196, %v7196
      %v7645 = vpack.c.b16 %v7197, %v7197
      %v7646 = vpack.c.b16 %v7198, %v7198
      %v7647 = vpack.c.b16 %v7199, %v7199
      %v7648 = vpack.c.b16 %v7200, %v7200
      %v7649 = vpack.c.b16 %v7201, %v7201
      %v7650 = vpack.c.b16 %v7202, %v7202
      %v7651 = vpack.c.b16 %v7203, %v7203
      %v7652 = vpack.c.b16 %v7204, %v7204
      %v7653 = vpack.c.b16 %v7205, %v7205
      %v7654 = vpack.c.b16 %v7206, %v7206
      %v7655 = vpack.c.b16 %v7207, %v7207
      %v7656 = vpack.c.b16 %v7208, %v7208
      %v7657 = vpack.c.b16 %v7209, %v7209
      %v7658 = vpack.c.b16 %v7210, %v7210
      %v7659 = vpack.c.b16 %v7211, %v7211
      %v7660 = vpack.c.b16 %v7212, %v7212
      %v7661 = vpack.c.b16 %v7213, %v7213
      %v7662 = vpack.c.b16 %v7214, %v7214
      %v7663 = vpack.c.b16 %v7215, %v7215
      %v7664 = vpack.c.b16 %v7216, %v7216
      %v7665 = vpack.c.b16 %v7217, %v7217
      %v7666 = vpack.c.b16 %v7218, %v7218
      %v7667 = vpack.c.b16 %v7219, %v7219
      %v7668 = vpack.c.b16 %v7220, %v7220
      %v7669 = vpack.c.b16 %v7221, %v7221
      %v7670 = vpack.c.b16 %v7222, %v7222
      %v7671 = vpack.c.b16 %v7223, %v7223
      %v7672 = vpack.c.b16 %v7224, %v7224
      %v7673 = vpack.c.b16 %v7225, %v7225
      %v7674 = vpack.c.b16 %v7226, %v7226
      %v7675 = vpack.c.b16 %v7227, %v7227
      %v7676 = vpack.c.b16 %v7228, %v7228
      %v7677 = vpack.c.b16 %v7229, %v7229
      %v7678 = vpack.c.b16 %v7230, %v7230
      %v7679 = vpack.c.b16 %v7231, %v7231
      %v7680 = vpack.c.b16 %v7232, %v7232
      %v7681 = vpack.c.b16 %v7233, %v7233
      %v7682 = vpack.c.b16 %v7234, %v7234
      %v7683 = vpack.c.b16 %v7235, %v7235
      %v7684 = vpack.c.b16 %v7236, %v7236
      %v7685 = vpack.c.b16 %v7237, %v7237
      %v7686 = vpack.c.b16 %v7238, %v7238
      %v7687 = vpack.c.b16 %v7239, %v7239
      %v7688 = vpack.c.b16 %v7240, %v7240
      %v7689 = vpack.c.b16 %v7241, %v7241
      %v7690 = vpack.c.b16 %v7242, %v7242
      %v7691 = vpack.c.b16 %v7243, %v7243
      %v7692 = vpack.c.b16 %v7244, %v7244
      %v7693 = vpack.c.b16 %v7245, %v7245
      %v7694 = vpack.c.b16 %v7246, %v7246
      %v7695 = vpack.c.b16 %v7247, %v7247
      %v7696 = vpack.c.b16 %v7248, %v7248
      %v7697 = vpack.c.b16 %v7249, %v7249
      %v7698 = vpack.c.b16 %v7250, %v7250
      %v7699 = vpack.c.b16 %v7251, %v7251
      %v7700 = vpack.c.b16 %v7252, %v7252
      %v7701 = vpack.c.b16 %v7253, %v7253
      %v7702 = vpack.c.b16 %v7254, %v7254
      %v7703 = vpack.c.b16 %v7255, %v7255
      %v7704 = vpack.c.b16 %v7256, %v7256
      %v7705 = vpack.c.b16 %v7257, %v7257
      %v7706 = vpack.c.b16 %v7258, %v7258
      %v7707 = vpack.c.b16 %v7259, %v7259
      %v7708 = vpack.c.b16 %v7260, %v7260
      %v7709 = vpack.c.b16 %v7261, %v7261
      %v7710 = vpack.c.b16 %v7262, %v7262
      %v7711 = vpack.c.b16 %v7263, %v7263
      %v7712 = vpack.c.b16 %v7264, %v7264
      %v7713 = vpack.c.b16 %v7265, %v7265
      %v7714 = vpack.c.b16 %v7266, %v7266
      %v7715 = vpack.c.b16 %v7267, %v7267
      %v7716 = vpack.c.b16 %v7268, %v7268
      %v7717 = vpack.c.b16 %v7269, %v7269
      %v7718 = vpack.c.b16 %v7270, %v7270
      %v7719 = vpack.c.b16 %v7271, %v7271
      %v7720 = vpack.c.b16 %v7272, %v7272
      %v7721 = vpack.c.b16 %v7273, %v7273
      %v7722 = vpack.c.b16 %v7274, %v7274
      %v7723 = vpack.c.b16 %v7275, %v7275
      %v7724 = vpack.c.b16 %v7276, %v7276
      %v7725 = vpack.c.b16 %v7277, %v7277
      %v7726 = vpack.c.b16 %v7278, %v7278
      %v7727 = vpack.c.b16 %v7279, %v7279
      %v7728 = vpack.c.b16 %v7280, %v7280
      %v7729 = vpack.c.b16 %v7281, %v7281
      %v7730 = vpack.c.b16 %v7282, %v7282
      %v7731 = vpack.c.b16 %v7283, %v7283
      %v7732 = vpack.c.b16 %v7284, %v7284
      %v7733 = vpack.c.b16 %v7285, %v7285
      %v7734 = vpack.c.b16 %v7286, %v7286
      %v7735 = vpack.c.b16 %v7287, %v7287
      %v7736 = vpack.c.b16 %v7288, %v7288
      %v7737 = vpack.c.b16 %v7289, %v7289
      %v7738 = vpack.c.b16 %v7290, %v7290
      %v7739 = vpack.c.b16 %v7291, %v7291
      %v7740 = vpack.c.b16 %v7292, %v7292
      %v7741 = vpack.c.b16 %v7293, %v7293
      %v7742 = vpack.c.b16 %v7294, %v7294
      %v7743 = vpack.c.b16 %v7295, %v7295
      %v7744 = vpack.c.b16 %v7296, %v7296
      %v7745 = vpack.c.b16 %v7297, %v7297
      %v7746 = vpack.c.b16 %v7298, %v7298
      %v7747 = vpack.c.b16 %v7299, %v7299
      %v7748 = vpack.c.b16 %v7300, %v7300
      %v7749 = vpack.c.b16 %v7301, %v7301
      %v7750 = vpack.c.b16 %v7302, %v7302
      %v7751 = vpack.c.b16 %v7303, %v7303
      %v7752 = vpack.c.b16 %v7304, %v7304
      %v7753 = vpack.c.b16 %v7305, %v7305
      %v7754 = vpack.c.b16 %v7306, %v7306
      %v7755 = vpack.c.b16 %v7307, %v7307
      %v7756 = vpack.c.b16 %v7308, %v7308
      %v7757 = vpack.c.b16 %v7309, %v7309
      %v7758 = vpack.c.b16 %v7310, %v7310
      %v7759 = vpack.c.b16 %v7311, %v7311
      %v7760 = vpack.c.b16 %v7312, %v7312
      %v7761 = vpack.c.b16 %v7313, %v7313
      %v7762 = vpack.c.b16 %v7314, %v7314
      %v7763 = vpack.c.b16 %v7315, %v7315
      %v7764 = vpack.c.b16 %v7316, %v7316
      %v7765 = vpack.c.b16 %v7317, %v7317
      %v7766 = vpack.c.b16 %v7318, %v7318
      %v7767 = vpack.c.b16 %v7319, %v7319
      %v7768 = vpack.c.b16 %v7320, %v7320
      %v7769 = vpack.c.b16 %v7321, %v7321
      %v7770 = vpack.c.b16 %v7322, %v7322
      %v7771 = vpack.c.b16 %v7323, %v7323
      %v7772 = vpack.c.b16 %v7324, %v7324
      %v7773 = vpack.c.b16 %v7325, %v7325
      %v7774 = vpack.c.b16 %v7326, %v7326
      %v7775 = vpack.c.b16 %v7327, %v7327
      %v7776 = vpack.c.b16 %v7328, %v7328
      %v7777 = vpack.c.b16 %v7329, %v7329
      %v7778 = vpack.c.b16 %v7330, %v7330
      %v7779 = vpack.c.b16 %v7331, %v7331
      %v7780 = vpack.c.b16 %v7332, %v7332
      %v7781 = vpack.c.b16 %v7333, %v7333
      %v7782 = vpack.c.b16 %v7334, %v7334
      %v7783 = vpack.c.b16 %v7335, %v7335
      %v7784 = vpack.c.b16 %v7336, %v7336
      %v7785 = vpack.c.b16 %v7337, %v7337
      %v7786 = vpack.c.b16 %v7338, %v7338
      %v7787 = vpack.c.b16 %v7339, %v7339
      %v7788 = vpack.c.b16 %v7340, %v7340
      %v7789 = vpack.c.b16 %v7341, %v7341
      %v7790 = vpack.c.b16 %v7342, %v7342
      %v7791 = vpack.c.b16 %v7343, %v7343
      %v7792 = vpack.c.b16 %v7344, %v7344
      %v7793 = vpack.c.b16 %v7345, %v7345
      %v7794 = vpack.c.b16 %v7346, %v7346
      %v7795 = vpack.c.b16 %v7347, %v7347
      %v7796 = vpack.c.b16 %v7348, %v7348
      %v7797 = vpack.c.b16 %v7349, %v7349
      %v7798 = vpack.c.b16 %v7350, %v7350
      %v7799 = vpack.c.b16 %v7351, %v7351
      %v7800 = vpack.c.b16 %v7352, %v7352
      %v7801 = vpack.c.b16 %v7353, %v7353
      %v7802 = vpack.c.b16 %v7354, %v7354
      %v7803 = vpack.c.b16 %v7355, %v7355
      %v7804 = vpack.c.b16 %v7356, %v7356
      %v7805 = vpack.c.b16 %v7357, %v7357
      %v7806 = vpack.c.b16 %v7358, %v7358
      %v7807 = vpack.c.b16 %v7359, %v7359
      %v7808 = vpack.c.b16 %v7360, %v7360
      %v7809 = vpack.c.b16 %v7361, %v7361
      %v7810 = vpack.c.b16 %v7362, %v7362
      %v7811 = vpack.c.b16 %v7363, %v7363
      %v7812 = vpack.c.b16 %v7364, %v7364
      %v7813 = vpack.c.b16 %v7365, %v7365
      %v7814 = vpack.c.b16 %v7366, %v7366
      %v7815 = vpack.c.b16 %v7367, %v7367
      %v7816 = vpack.c.b16 %v7368, %v7368
      %v7817 = vpack.c.b16 %v7369, %v7369
      %v7818 = vpack.c.b16 %v7370, %v7370
      %v7819 = vpack.c.b16 %v7371, %v7371
      %v7820 = vpack.c.b16 %v7372, %v7372
      %v7821 = vpack.c.b16 %v7373, %v7373
      %v7822 = vpack.c.b16 %v7374, %v7374
      %v7823 = vpack.c.b16 %v7375, %v7375
      %v7824 = vpack.c.b16 %v7376, %v7376
      %v7825 = vpack.c.b16 %v7377, %v7377
      %v7826 = vpack.c.b16 %v7378, %v7378
      %v7827 = vpack.c.b16 %v7379, %v7379
      %v7828 = vpack.c.b16 %v7380, %v7380
      %v7829 = vpack.c.b16 %v7381, %v7381
      %v7830 = vpack.c.b16 %v7382, %v7382
      %v7831 = vpack.c.b16 %v7383, %v7383
      %v7832 = vpack.c.b16 %v7384, %v7384
      %v7833 = vpack.c.b16 %v7385, %v7385
      %v7834 = vpack.c.b16 %v7386, %v7386
      %v7835 = vpack.c.b16 %v7387, %v7387
      %v7836 = vpack.c.b16 %v7388, %v7388
      %v7837 = vpack.c.b16 %v7389, %v7389
      %v7838 = vpack.c.b16 %v7390, %v7390
      %v7839 = vpack.c.b16 %v7391, %v7391
      %v7840 = vpack.c.b16 %v7392, %v7392
      %v7841 = vpack.c.b16 %v7393, %v7393
      %v7842 = vpack.c.b16 %v7394, %v7394
      %v7843 = vpack.c.b16 %v7395, %v7395
      %v7844 = vpack.c.b16 %v7396, %v7396
      %v7845 = vpack.c.b16 %v7397, %v7397
      %v7846 = vpack.c.b16 %v7398, %v7398
      %v7847 = vpack.c.b16 %v7399, %v7399
      %v7848 = vpack.c.b16 %v7400, %v7400
      %v7849 = vpack.c.b16 %v7401, %v7401
      %v7850 = vpack.c.b16 %v7402, %v7402
      %v7851 = vpack.c.b16 %v7403, %v7403
      %v7852 = vpack.c.b16 %v7404, %v7404
      %v7853 = vpack.c.b16 %v7405, %v7405
      %v7854 = vpack.c.b16 %v7406, %v7406
      %v7855 = vpack.c.b16 %v7407, %v7407
      %v7856 = vpack.c.b16 %v7408, %v7408
      %v7857 = vpack.c.b16 %v7409, %v7409
      %v7858 = vpack.c.b16 %v7410, %v7410
      %v7859 = vpack.c.b16 %v7411, %v7411
      %v7860 = vpack.c.b16 %v7412, %v7412
      %v7861 = vpack.c.b16 %v7413, %v7413
      %v7862 = vpack.c.b16 %v7414, %v7414
      %v7863 = vpack.c.b16 %v7415, %v7415
      %v7864 = vpack.c.b16 %v7416, %v7416
      %v7865 = vpack.c.b16 %v7417, %v7417
      %v7866 = vpack.c.b16 %v7418, %v7418
      %v7867 = vpack.c.b16 %v7419, %v7419
      %v7868 = vpack.c.b16 %v7420, %v7420
      %v7869 = vpack.c.b16 %v7421, %v7421
      %v7870 = vpack.c.b16 %v7422, %v7422
      %v7871 = vpack.c.b16 %v7423, %v7423
      %v7872 = vpack.c.b16 %v7424, %v7424
      %v7873 = vpack.c.b16 %v7425, %v7425
      %v7874 = vpack.c.b16 %v7426, %v7426
      %v7875 = vpack.c.b16 %v7427, %v7427
      %v7876 = vpack.c.b16 %v7428, %v7428
      %v7877 = vpack.c.b16 %v7429, %v7429
      %v7878 = vpack.c.b16 %v7430, %v7430
      %v7879 = vpack.c.b16 %v7431, %v7431
      %v7880 = vpack.c.b16 %v7432, %v7432
      %v7881 = vpack.c.b16 %v7433, %v7433
      %v7882 = vpack.c.b16 %v7434, %v7434
      %v7883 = vpack.c.b16 %v7435, %v7435
      %v7884 = vpack.c.b16 %v7436, %v7436
      %v7885 = vpack.c.b16 %v7437, %v7437
      %v7886 = vpack.c.b16 %v7438, %v7438
      %v7887 = vpack.c.b16 %v7439, %v7439
      %v7888 = vpack.c.b16 %v7440, %v7440
      %v7889 = vpack.c.b16 %v7441, %v7441
      %v7890 = vpack.c.b16 %v7442, %v7442
      %v7891 = vpack.c.b16 %v7443, %v7443
      %v7892 = vpack.c.b16 %v7444, %v7444
      %v7893 = vpack.c.b16 %v7445, %v7445
      %v7894 = vpack.c.b16 %v7446, %v7446
      %v7895 = vpack.c.b16 %v7447, %v7447
      %v7896 = vpack.c.b16 %v7448, %v7448
      %v7897 = vpack.c.b16 %v7449, %v7449
      %v7898 = vpack.c.b16 %v7450, %v7450
      %v7899 = vpack.c.b16 %v7451, %v7451
      %v7900 = vpack.c.b16 %v7452, %v7452
      %v7901 = vpack.c.b16 %v7453, %v7453
      %v7902 = vpack.c.b16 %v7454, %v7454
      %v7903 = vpack.c.b16 %v7455, %v7455
      %v7904 = vpack.c.b16 %v7456, %v7456
      %v7905 = vpack.c.b16 %v7457, %v7457
      %v7906 = vpack.c.b16 %v7458, %v7458
      %v7907 = vpack.c.b16 %v7459, %v7459
      %v7908 = vpack.c.b16 %v7460, %v7460
      %v7909 = vpack.c.b16 %v7461, %v7461
      %v7910 = vpack.c.b16 %v7462, %v7462
      %v7911 = vpack.c.b16 %v7463, %v7463
      %v7912 = vpack.c.b16 %v7464, %v7464
      %v7913 = vpack.c.b16 %v7465, %v7465
      %v7914 = vpack.c.b16 %v7466, %v7466
      %v7915 = vpack.c.b16 %v7467, %v7467
      %v7916 = vpack.c.b16 %v7468, %v7468
      %v7917 = vpack.c.b16 %v7469, %v7469
      %v7918 = vpack.c.b16 %v7470, %v7470
      %v7919 = vpack.c.b16 %v7471, %v7471
      %v7920 = vpack.c.b16 %v7472, %v7472
      %v7921 = vpack.c.b16 %v7473, %v7473
      %v7922 = vpack.c.b16 %v7474, %v7474
      %v7923 = vpack.c.b16 %v7475, %v7475
      %v7924 = vpack.c.b16 %v7476, %v7476
      %v7925 = vpack.c.b16 %v7477, %v7477
      %v7926 = vpack.c.b16 %v7478, %v7478
      %v7927 = vpack.c.b16 %v7479, %v7479
      %v7928 = vpack.c.b16 %v7480, %v7480
      %v7929 = vpack.c.b16 %v7481, %v7481
      %v7930 = vpack.c.b16 %v7482, %v7482
      %v7931 = vpack.c.b16 %v7483, %v7483
      %v7932 = vpack.c.b16 %v7484, %v7484
      %v7933 = vpack.c.b16 %v7485, %v7485
      %v7934 = vpack.c.b16 %v7486, %v7486
      %v7935 = vpack.c.b16 %v7487, %v7487
      %v7936 = vpack.c.b16 %v7488, %v7488
      %v7937 = vpack.c.b16 %v7489, %v7489
      %v7938 = vpack.c.b16 %v7490, %v7490
      %v7939 = vpack.c.b16 %v7491, %v7491
      %v7940 = vpack.c.b16 %v7492, %v7492
      %v7941 = vpack.c.b16 %v7493, %v7493
      %v7942 = vpack.c.b16 %v7494, %v7494
      %v7943 = vpack.c.b16 %v7495, %v7495
      %v7944 = vpack.c.b16 %v7496, %v7496
      %v7945 = vpack.c.b16 %v7497, %v7497
      %v7946 = vpack.c.b16 %v7498, %v7498
      %v7947 = vpack.c.b16 %v7499, %v7499
      %v7948 = vpack.c.b16 %v7500, %v7500
      %v7949 = vpack.c.b16 %v7501, %v7501
      %v7950 = vpack.c.b16 %v7502, %v7502
      %v7951 = vpack.c.b16 %v7503, %v7503
      %vm8400 = vcmask 519168
      %8401 = vst.msk [vmem:[%s202] sm:$0xf] %vm8400, %v7504
      %8402 = vst.msk [vmem:[%s202 + $0x4] sm:$0xf] %vm8400, %v7505
      %8403 = vst.msk [vmem:[%s202 + $0x8] sm:$0xf] %vm8400, %v7506
      %8404 = vst.msk [vmem:[%s202 + $0xc] sm:$0xf] %vm8400, %v7507
      %8405 = vst.msk [vmem:[%s202 + $0x10] sm:$0xf] %vm8400, %v7508
      %8406 = vst.msk [vmem:[%s202 + $0x14] sm:$0xf] %vm8400, %v7509
      %8407 = vst.msk [vmem:[%s202 + $0x18] sm:$0xf] %vm8400, %v7510
      %8408 = vst.msk [vmem:[%s202 + $0x1c] sm:$0xf] %vm8400, %v7511
      %8409 = vst.msk [vmem:[%s202 + $0x20] sm:$0xf] %vm8400, %v7512
      %8410 = vst.msk [vmem:[%s202 + $0x24] sm:$0xf] %vm8400, %v7513
      %8411 = vst.msk [vmem:[%s202 + $0x28] sm:$0xf] %vm8400, %v7514
      %8412 = vst.msk [vmem:[%s202 + $0x2c] sm:$0xf] %vm8400, %v7515
      %8413 = vst.msk [vmem:[%s202 + $0x30] sm:$0xf] %vm8400, %v7516
      %8414 = vst.msk [vmem:[%s202 + $0x34] sm:$0xf] %vm8400, %v7517
      %8415 = vst.msk [vmem:[%s202 + $0x38] sm:$0xf] %vm8400, %v7518
      %8416 = vst.msk [vmem:[%s202 + $0x3c] sm:$0xf] %vm8400, %v7519
      %8417 = vst.msk [vmem:[%s202 + $0x40] sm:$0xf] %vm8400, %v7520
      %8418 = vst.msk [vmem:[%s202 + $0x44] sm:$0xf] %vm8400, %v7521
      %8419 = vst.msk [vmem:[%s202 + $0x48] sm:$0xf] %vm8400, %v7522
      %8420 = vst.msk [vmem:[%s202 + $0x4c] sm:$0xf] %vm8400, %v7523
      %8421 = vst.msk [vmem:[%s202 + $0x50] sm:$0xf] %vm8400, %v7524
      %8422 = vst.msk [vmem:[%s202 + $0x54] sm:$0xf] %vm8400, %v7525
      %8423 = vst.msk [vmem:[%s202 + $0x58] sm:$0xf] %vm8400, %v7526
      %8424 = vst.msk [vmem:[%s202 + $0x5c] sm:$0xf] %vm8400, %v7527
      %8425 = vst.msk [vmem:[%s202 + $0x60] sm:$0xf] %vm8400, %v7528
      %8426 = vst.msk [vmem:[%s202 + $0x64] sm:$0xf] %vm8400, %v7529
      %8427 = vst.msk [vmem:[%s202 + $0x68] sm:$0xf] %vm8400, %v7530
      %8428 = vst.msk [vmem:[%s202 + $0x6c] sm:$0xf] %vm8400, %v7531
      %8429 = vst.msk [vmem:[%s202 + $0x70] sm:$0xf] %vm8400, %v7532
      %8430 = vst.msk [vmem:[%s202 + $0x74] sm:$0xf] %vm8400, %v7533
      %8431 = vst.msk [vmem:[%s202 + $0x78] sm:$0xf] %vm8400, %v7534
      %8432 = vst.msk [vmem:[%s202 + $0x7c] sm:$0xf] %vm8400, %v7535
      %8433 = vst.msk [vmem:[%s202 + $0x80] sm:$0xf] %vm8400, %v7536
      %8434 = vst.msk [vmem:[%s202 + $0x84] sm:$0xf] %vm8400, %v7537
      %8435 = vst.msk [vmem:[%s202 + $0x88] sm:$0xf] %vm8400, %v7538
      %8436 = vst.msk [vmem:[%s202 + $0x8c] sm:$0xf] %vm8400, %v7539
      %8437 = vst.msk [vmem:[%s202 + $0x90] sm:$0xf] %vm8400, %v7540
      %8438 = vst.msk [vmem:[%s202 + $0x94] sm:$0xf] %vm8400, %v7541
      %8439 = vst.msk [vmem:[%s202 + $0x98] sm:$0xf] %vm8400, %v7542
      %8440 = vst.msk [vmem:[%s202 + $0x9c] sm:$0xf] %vm8400, %v7543
      %8441 = vst.msk [vmem:[%s202 + $0xa0] sm:$0xf] %vm8400, %v7544
      %8442 = vst.msk [vmem:[%s202 + $0xa4] sm:$0xf] %vm8400, %v7545
      %8443 = vst.msk [vmem:[%s202 + $0xa8] sm:$0xf] %vm8400, %v7546
      %8444 = vst.msk [vmem:[%s202 + $0xac] sm:$0xf] %vm8400, %v7547
      %8445 = vst.msk [vmem:[%s202 + $0xb0] sm:$0xf] %vm8400, %v7548
      %8446 = vst.msk [vmem:[%s202 + $0xb4] sm:$0xf] %vm8400, %v7549
      %8447 = vst.msk [vmem:[%s202 + $0xb8] sm:$0xf] %vm8400, %v7550
      %8448 = vst.msk [vmem:[%s202 + $0xbc] sm:$0xf] %vm8400, %v7551
      %8449 = vst.msk [vmem:[%s202 + $0xc0] sm:$0xf] %vm8400, %v7552
      %8450 = vst.msk [vmem:[%s202 + $0xc4] sm:$0xf] %vm8400, %v7553
      %8451 = vst.msk [vmem:[%s202 + $0xc8] sm:$0xf] %vm8400, %v7554
      %8452 = vst.msk [vmem:[%s202 + $0xcc] sm:$0xf] %vm8400, %v7555
      %8453 = vst.msk [vmem:[%s202 + $0xd0] sm:$0xf] %vm8400, %v7556
      %8454 = vst.msk [vmem:[%s202 + $0xd4] sm:$0xf] %vm8400, %v7557
      %8455 = vst.msk [vmem:[%s202 + $0xd8] sm:$0xf] %vm8400, %v7558
      %8456 = vst.msk [vmem:[%s202 + $0xdc] sm:$0xf] %vm8400, %v7559
      %8457 = vst.msk [vmem:[%s202 + $0xe0] sm:$0xf] %vm8400, %v7560
      %8458 = vst.msk [vmem:[%s202 + $0xe4] sm:$0xf] %vm8400, %v7561
      %8459 = vst.msk [vmem:[%s202 + $0xe8] sm:$0xf] %vm8400, %v7562
      %8460 = vst.msk [vmem:[%s202 + $0xec] sm:$0xf] %vm8400, %v7563
      %8461 = vst.msk [vmem:[%s202 + $0xf0] sm:$0xf] %vm8400, %v7564
      %8462 = vst.msk [vmem:[%s202 + $0xf4] sm:$0xf] %vm8400, %v7565
      %8463 = vst.msk [vmem:[%s202 + $0xf8] sm:$0xf] %vm8400, %v7566
      %8464 = vst.msk [vmem:[%s202 + $0xfc] sm:$0xf] %vm8400, %v7567
      %8465 = vst.msk [vmem:[%s202 + $0x100] sm:$0xf] %vm8400, %v7568
      %8466 = vst.msk [vmem:[%s202 + $0x104] sm:$0xf] %vm8400, %v7569
      %8467 = vst.msk [vmem:[%s202 + $0x108] sm:$0xf] %vm8400, %v7570
      %8468 = vst.msk [vmem:[%s202 + $0x10c] sm:$0xf] %vm8400, %v7571
      %8469 = vst.msk [vmem:[%s202 + $0x110] sm:$0xf] %vm8400, %v7572
      %8470 = vst.msk [vmem:[%s202 + $0x114] sm:$0xf] %vm8400, %v7573
      %8471 = vst.msk [vmem:[%s202 + $0x118] sm:$0xf] %vm8400, %v7574
      %8472 = vst.msk [vmem:[%s202 + $0x11c] sm:$0xf] %vm8400, %v7575
      %8473 = vst.msk [vmem:[%s202 + $0x120] sm:$0xf] %vm8400, %v7576
      %8474 = vst.msk [vmem:[%s202 + $0x124] sm:$0xf] %vm8400, %v7577
      %8475 = vst.msk [vmem:[%s202 + $0x128] sm:$0xf] %vm8400, %v7578
      %8476 = vst.msk [vmem:[%s202 + $0x12c] sm:$0xf] %vm8400, %v7579
      %8477 = vst.msk [vmem:[%s202 + $0x130] sm:$0xf] %vm8400, %v7580
      %8478 = vst.msk [vmem:[%s202 + $0x134] sm:$0xf] %vm8400, %v7581
      %8479 = vst.msk [vmem:[%s202 + $0x138] sm:$0xf] %vm8400, %v7582
      %8480 = vst.msk [vmem:[%s202 + $0x13c] sm:$0xf] %vm8400, %v7583
      %8481 = vst.msk [vmem:[%s202 + $0x140] sm:$0xf] %vm8400, %v7584
      %8482 = vst.msk [vmem:[%s202 + $0x144] sm:$0xf] %vm8400, %v7585
      %8483 = vst.msk [vmem:[%s202 + $0x148] sm:$0xf] %vm8400, %v7586
      %8484 = vst.msk [vmem:[%s202 + $0x14c] sm:$0xf] %vm8400, %v7587
      %8485 = vst.msk [vmem:[%s202 + $0x150] sm:$0xf] %vm8400, %v7588
      %8486 = vst.msk [vmem:[%s202 + $0x154] sm:$0xf] %vm8400, %v7589
      %8487 = vst.msk [vmem:[%s202 + $0x158] sm:$0xf] %vm8400, %v7590
      %8488 = vst.msk [vmem:[%s202 + $0x15c] sm:$0xf] %vm8400, %v7591
      %8489 = vst.msk [vmem:[%s202 + $0x160] sm:$0xf] %vm8400, %v7592
      %8490 = vst.msk [vmem:[%s202 + $0x164] sm:$0xf] %vm8400, %v7593
      %8491 = vst.msk [vmem:[%s202 + $0x168] sm:$0xf] %vm8400, %v7594
      %8492 = vst.msk [vmem:[%s202 + $0x16c] sm:$0xf] %vm8400, %v7595
      %8493 = vst.msk [vmem:[%s202 + $0x170] sm:$0xf] %vm8400, %v7596
      %8494 = vst.msk [vmem:[%s202 + $0x174] sm:$0xf] %vm8400, %v7597
      %8495 = vst.msk [vmem:[%s202 + $0x178] sm:$0xf] %vm8400, %v7598
      %8496 = vst.msk [vmem:[%s202 + $0x17c] sm:$0xf] %vm8400, %v7599
      %8497 = vst.msk [vmem:[%s202 + $0x180] sm:$0xf] %vm8400, %v7600
      %8498 = vst.msk [vmem:[%s202 + $0x184] sm:$0xf] %vm8400, %v7601
      %8499 = vst.msk [vmem:[%s202 + $0x188] sm:$0xf] %vm8400, %v7602
      %8500 = vst.msk [vmem:[%s202 + $0x18c] sm:$0xf] %vm8400, %v7603
      %8501 = vst.msk [vmem:[%s202 + $0x190] sm:$0xf] %vm8400, %v7604
      %8502 = vst.msk [vmem:[%s202 + $0x194] sm:$0xf] %vm8400, %v7605
      %8503 = vst.msk [vmem:[%s202 + $0x198] sm:$0xf] %vm8400, %v7606
      %8504 = vst.msk [vmem:[%s202 + $0x19c] sm:$0xf] %vm8400, %v7607
      %8505 = vst.msk [vmem:[%s202 + $0x1a0] sm:$0xf] %vm8400, %v7608
      %8506 = vst.msk [vmem:[%s202 + $0x1a4] sm:$0xf] %vm8400, %v7609
      %8507 = vst.msk [vmem:[%s202 + $0x1a8] sm:$0xf] %vm8400, %v7610
      %8508 = vst.msk [vmem:[%s202 + $0x1ac] sm:$0xf] %vm8400, %v7611
      %8509 = vst.msk [vmem:[%s202 + $0x1b0] sm:$0xf] %vm8400, %v7612
      %8510 = vst.msk [vmem:[%s202 + $0x1b4] sm:$0xf] %vm8400, %v7613
      %8511 = vst.msk [vmem:[%s202 + $0x1b8] sm:$0xf] %vm8400, %v7614
      %8512 = vst.msk [vmem:[%s202 + $0x1bc] sm:$0xf] %vm8400, %v7615
      %8513 = vst.msk [vmem:[%s202 + $0x1c0] sm:$0xf] %vm8400, %v7616
      %8514 = vst.msk [vmem:[%s202 + $0x1c4] sm:$0xf] %vm8400, %v7617
      %8515 = vst.msk [vmem:[%s202 + $0x1c8] sm:$0xf] %vm8400, %v7618
      %8516 = vst.msk [vmem:[%s202 + $0x1cc] sm:$0xf] %vm8400, %v7619
      %8517 = vst.msk [vmem:[%s202 + $0x1d0] sm:$0xf] %vm8400, %v7620
      %8518 = vst.msk [vmem:[%s202 + $0x1d4] sm:$0xf] %vm8400, %v7621
      %8519 = vst.msk [vmem:[%s202 + $0x1d8] sm:$0xf] %vm8400, %v7622
      %8520 = vst.msk [vmem:[%s202 + $0x1dc] sm:$0xf] %vm8400, %v7623
      %8521 = vst.msk [vmem:[%s202 + $0x1e0] sm:$0xf] %vm8400, %v7624
      %8522 = vst.msk [vmem:[%s202 + $0x1e4] sm:$0xf] %vm8400, %v7625
      %8523 = vst.msk [vmem:[%s202 + $0x1e8] sm:$0xf] %vm8400, %v7626
      %8524 = vst.msk [vmem:[%s202 + $0x1ec] sm:$0xf] %vm8400, %v7627
      %8525 = vst.msk [vmem:[%s202 + $0x1f0] sm:$0xf] %vm8400, %v7628
      %8526 = vst.msk [vmem:[%s202 + $0x1f4] sm:$0xf] %vm8400, %v7629
      %8527 = vst.msk [vmem:[%s202 + $0x1f8] sm:$0xf] %vm8400, %v7630
      %8528 = vst.msk [vmem:[%s202 + $0x1fc] sm:$0xf] %vm8400, %v7631
      %8529 = vst.msk [vmem:[%s202 + $0x200] sm:$0xf] %vm8400, %v7632
      %8530 = vst.msk [vmem:[%s202 + $0x204] sm:$0xf] %vm8400, %v7633
      %8531 = vst.msk [vmem:[%s202 + $0x208] sm:$0xf] %vm8400, %v7634
      %8532 = vst.msk [vmem:[%s202 + $0x20c] sm:$0xf] %vm8400, %v7635
      %8533 = vst.msk [vmem:[%s202 + $0x210] sm:$0xf] %vm8400, %v7636
      %8534 = vst.msk [vmem:[%s202 + $0x214] sm:$0xf] %vm8400, %v7637
      %8535 = vst.msk [vmem:[%s202 + $0x218] sm:$0xf] %vm8400, %v7638
      %8536 = vst.msk [vmem:[%s202 + $0x21c] sm:$0xf] %vm8400, %v7639
      %8537 = vst.msk [vmem:[%s202 + $0x220] sm:$0xf] %vm8400, %v7640
      %8538 = vst.msk [vmem:[%s202 + $0x224] sm:$0xf] %vm8400, %v7641
      %8539 = vst.msk [vmem:[%s202 + $0x228] sm:$0xf] %vm8400, %v7642
      %8540 = vst.msk [vmem:[%s202 + $0x22c] sm:$0xf] %vm8400, %v7643
      %8541 = vst.msk [vmem:[%s202 + $0x230] sm:$0xf] %vm8400, %v7644
      %8542 = vst.msk [vmem:[%s202 + $0x234] sm:$0xf] %vm8400, %v7645
      %8543 = vst.msk [vmem:[%s202 + $0x238] sm:$0xf] %vm8400, %v7646
      %8544 = vst.msk [vmem:[%s202 + $0x23c] sm:$0xf] %vm8400, %v7647
      %8545 = vst.msk [vmem:[%s202 + $0x240] sm:$0xf] %vm8400, %v7648
      %8546 = vst.msk [vmem:[%s202 + $0x244] sm:$0xf] %vm8400, %v7649
      %8547 = vst.msk [vmem:[%s202 + $0x248] sm:$0xf] %vm8400, %v7650
      %8548 = vst.msk [vmem:[%s202 + $0x24c] sm:$0xf] %vm8400, %v7651
      %8549 = vst.msk [vmem:[%s202 + $0x250] sm:$0xf] %vm8400, %v7652
      %8550 = vst.msk [vmem:[%s202 + $0x254] sm:$0xf] %vm8400, %v7653
      %8551 = vst.msk [vmem:[%s202 + $0x258] sm:$0xf] %vm8400, %v7654
      %8552 = vst.msk [vmem:[%s202 + $0x25c] sm:$0xf] %vm8400, %v7655
      %8553 = vst.msk [vmem:[%s202 + $0x260] sm:$0xf] %vm8400, %v7656
      %8554 = vst.msk [vmem:[%s202 + $0x264] sm:$0xf] %vm8400, %v7657
      %8555 = vst.msk [vmem:[%s202 + $0x268] sm:$0xf] %vm8400, %v7658
      %8556 = vst.msk [vmem:[%s202 + $0x26c] sm:$0xf] %vm8400, %v7659
      %8557 = vst.msk [vmem:[%s202 + $0x270] sm:$0xf] %vm8400, %v7660
      %8558 = vst.msk [vmem:[%s202 + $0x274] sm:$0xf] %vm8400, %v7661
      %8559 = vst.msk [vmem:[%s202 + $0x278] sm:$0xf] %vm8400, %v7662
      %8560 = vst.msk [vmem:[%s202 + $0x27c] sm:$0xf] %vm8400, %v7663
      %8561 = vst.msk [vmem:[%s202 + $0x280] sm:$0xf] %vm8400, %v7664
      %8562 = vst.msk [vmem:[%s202 + $0x284] sm:$0xf] %vm8400, %v7665
      %8563 = vst.msk [vmem:[%s202 + $0x288] sm:$0xf] %vm8400, %v7666
      %8564 = vst.msk [vmem:[%s202 + $0x28c] sm:$0xf] %vm8400, %v7667
      %8565 = vst.msk [vmem:[%s202 + $0x290] sm:$0xf] %vm8400, %v7668
      %8566 = vst.msk [vmem:[%s202 + $0x294] sm:$0xf] %vm8400, %v7669
      %8567 = vst.msk [vmem:[%s202 + $0x298] sm:$0xf] %vm8400, %v7670
      %8568 = vst.msk [vmem:[%s202 + $0x29c] sm:$0xf] %vm8400, %v7671
      %8569 = vst.msk [vmem:[%s202 + $0x2a0] sm:$0xf] %vm8400, %v7672
      %8570 = vst.msk [vmem:[%s202 + $0x2a4] sm:$0xf] %vm8400, %v7673
      %8571 = vst.msk [vmem:[%s202 + $0x2a8] sm:$0xf] %vm8400, %v7674
      %8572 = vst.msk [vmem:[%s202 + $0x2ac] sm:$0xf] %vm8400, %v7675
      %8573 = vst.msk [vmem:[%s202 + $0x2b0] sm:$0xf] %vm8400, %v7676
      %8574 = vst.msk [vmem:[%s202 + $0x2b4] sm:$0xf] %vm8400, %v7677
      %8575 = vst.msk [vmem:[%s202 + $0x2b8] sm:$0xf] %vm8400, %v7678
      %8576 = vst.msk [vmem:[%s202 + $0x2bc] sm:$0xf] %vm8400, %v7679
      %8577 = vst.msk [vmem:[%s202 + $0x2c0] sm:$0xf] %vm8400, %v7680
      %8578 = vst.msk [vmem:[%s202 + $0x2c4] sm:$0xf] %vm8400, %v7681
      %8579 = vst.msk [vmem:[%s202 + $0x2c8] sm:$0xf] %vm8400, %v7682
      %8580 = vst.msk [vmem:[%s202 + $0x2cc] sm:$0xf] %vm8400, %v7683
      %8581 = vst.msk [vmem:[%s202 + $0x2d0] sm:$0xf] %vm8400, %v7684
      %8582 = vst.msk [vmem:[%s202 + $0x2d4] sm:$0xf] %vm8400, %v7685
      %8583 = vst.msk [vmem:[%s202 + $0x2d8] sm:$0xf] %vm8400, %v7686
      %8584 = vst.msk [vmem:[%s202 + $0x2dc] sm:$0xf] %vm8400, %v7687
      %8585 = vst.msk [vmem:[%s202 + $0x2e0] sm:$0xf] %vm8400, %v7688
      %8586 = vst.msk [vmem:[%s202 + $0x2e4] sm:$0xf] %vm8400, %v7689
      %8587 = vst.msk [vmem:[%s202 + $0x2e8] sm:$0xf] %vm8400, %v7690
      %8588 = vst.msk [vmem:[%s202 + $0x2ec] sm:$0xf] %vm8400, %v7691
      %8589 = vst.msk [vmem:[%s202 + $0x2f0] sm:$0xf] %vm8400, %v7692
      %8590 = vst.msk [vmem:[%s202 + $0x2f4] sm:$0xf] %vm8400, %v7693
      %8591 = vst.msk [vmem:[%s202 + $0x2f8] sm:$0xf] %vm8400, %v7694
      %8592 = vst.msk [vmem:[%s202 + $0x2fc] sm:$0xf] %vm8400, %v7695
      %8593 = vst.msk [vmem:[%s202 + $0x300] sm:$0xf] %vm8400, %v7696
      %8594 = vst.msk [vmem:[%s202 + $0x304] sm:$0xf] %vm8400, %v7697
      %8595 = vst.msk [vmem:[%s202 + $0x308] sm:$0xf] %vm8400, %v7698
      %8596 = vst.msk [vmem:[%s202 + $0x30c] sm:$0xf] %vm8400, %v7699
      %8597 = vst.msk [vmem:[%s202 + $0x310] sm:$0xf] %vm8400, %v7700
      %8598 = vst.msk [vmem:[%s202 + $0x314] sm:$0xf] %vm8400, %v7701
      %8599 = vst.msk [vmem:[%s202 + $0x318] sm:$0xf] %vm8400, %v7702
      %8600 = vst.msk [vmem:[%s202 + $0x31c] sm:$0xf] %vm8400, %v7703
      %8601 = vst.msk [vmem:[%s202 + $0x320] sm:$0xf] %vm8400, %v7704
      %8602 = vst.msk [vmem:[%s202 + $0x324] sm:$0xf] %vm8400, %v7705
      %8603 = vst.msk [vmem:[%s202 + $0x328] sm:$0xf] %vm8400, %v7706
      %8604 = vst.msk [vmem:[%s202 + $0x32c] sm:$0xf] %vm8400, %v7707
      %8605 = vst.msk [vmem:[%s202 + $0x330] sm:$0xf] %vm8400, %v7708
      %8606 = vst.msk [vmem:[%s202 + $0x334] sm:$0xf] %vm8400, %v7709
      %8607 = vst.msk [vmem:[%s202 + $0x338] sm:$0xf] %vm8400, %v7710
      %8608 = vst.msk [vmem:[%s202 + $0x33c] sm:$0xf] %vm8400, %v7711
      %8609 = vst.msk [vmem:[%s202 + $0x340] sm:$0xf] %vm8400, %v7712
      %8610 = vst.msk [vmem:[%s202 + $0x344] sm:$0xf] %vm8400, %v7713
      %8611 = vst.msk [vmem:[%s202 + $0x348] sm:$0xf] %vm8400, %v7714
      %8612 = vst.msk [vmem:[%s202 + $0x34c] sm:$0xf] %vm8400, %v7715
      %8613 = vst.msk [vmem:[%s202 + $0x350] sm:$0xf] %vm8400, %v7716
      %8614 = vst.msk [vmem:[%s202 + $0x354] sm:$0xf] %vm8400, %v7717
      %8615 = vst.msk [vmem:[%s202 + $0x358] sm:$0xf] %vm8400, %v7718
      %8616 = vst.msk [vmem:[%s202 + $0x35c] sm:$0xf] %vm8400, %v7719
      %8617 = vst.msk [vmem:[%s202 + $0x360] sm:$0xf] %vm8400, %v7720
      %8618 = vst.msk [vmem:[%s202 + $0x364] sm:$0xf] %vm8400, %v7721
      %8619 = vst.msk [vmem:[%s202 + $0x368] sm:$0xf] %vm8400, %v7722
      %8620 = vst.msk [vmem:[%s202 + $0x36c] sm:$0xf] %vm8400, %v7723
      %8621 = vst.msk [vmem:[%s202 + $0x370] sm:$0xf] %vm8400, %v7724
      %8622 = vst.msk [vmem:[%s202 + $0x374] sm:$0xf] %vm8400, %v7725
      %8623 = vst.msk [vmem:[%s202 + $0x378] sm:$0xf] %vm8400, %v7726
      %8624 = vst.msk [vmem:[%s202 + $0x37c] sm:$0xf] %vm8400, %v7727
      %8625 = vst.msk [vmem:[%s202 + $0x380] sm:$0xf] %vm8400, %v7728
      %8626 = vst.msk [vmem:[%s202 + $0x384] sm:$0xf] %vm8400, %v7729
      %8627 = vst.msk [vmem:[%s202 + $0x388] sm:$0xf] %vm8400, %v7730
      %8628 = vst.msk [vmem:[%s202 + $0x38c] sm:$0xf] %vm8400, %v7731
      %8629 = vst.msk [vmem:[%s202 + $0x390] sm:$0xf] %vm8400, %v7732
      %8630 = vst.msk [vmem:[%s202 + $0x394] sm:$0xf] %vm8400, %v7733
      %8631 = vst.msk [vmem:[%s202 + $0x398] sm:$0xf] %vm8400, %v7734
      %8632 = vst.msk [vmem:[%s202 + $0x39c] sm:$0xf] %vm8400, %v7735
      %8633 = vst.msk [vmem:[%s202 + $0x3a0] sm:$0xf] %vm8400, %v7736
      %8634 = vst.msk [vmem:[%s202 + $0x3a4] sm:$0xf] %vm8400, %v7737
      %8635 = vst.msk [vmem:[%s202 + $0x3a8] sm:$0xf] %vm8400, %v7738
      %8636 = vst.msk [vmem:[%s202 + $0x3ac] sm:$0xf] %vm8400, %v7739
      %8637 = vst.msk [vmem:[%s202 + $0x3b0] sm:$0xf] %vm8400, %v7740
      %8638 = vst.msk [vmem:[%s202 + $0x3b4] sm:$0xf] %vm8400, %v7741
      %8639 = vst.msk [vmem:[%s202 + $0x3b8] sm:$0xf] %vm8400, %v7742
      %8640 = vst.msk [vmem:[%s202 + $0x3bc] sm:$0xf] %vm8400, %v7743
      %8641 = vst.msk [vmem:[%s202 + $0x3c0] sm:$0xf] %vm8400, %v7744
      %8642 = vst.msk [vmem:[%s202 + $0x3c4] sm:$0xf] %vm8400, %v7745
      %8643 = vst.msk [vmem:[%s202 + $0x3c8] sm:$0xf] %vm8400, %v7746
      %8644 = vst.msk [vmem:[%s202 + $0x3cc] sm:$0xf] %vm8400, %v7747
      %8645 = vst.msk [vmem:[%s202 + $0x3d0] sm:$0xf] %vm8400, %v7748
      %8646 = vst.msk [vmem:[%s202 + $0x3d4] sm:$0xf] %vm8400, %v7749
      %8647 = vst.msk [vmem:[%s202 + $0x3d8] sm:$0xf] %vm8400, %v7750
      %8648 = vst.msk [vmem:[%s202 + $0x3dc] sm:$0xf] %vm8400, %v7751
      %8649 = vst.msk [vmem:[%s202 + $0x3e0] sm:$0xf] %vm8400, %v7752
      %8650 = vst.msk [vmem:[%s202 + $0x3e4] sm:$0xf] %vm8400, %v7753
      %8651 = vst.msk [vmem:[%s202 + $0x3e8] sm:$0xf] %vm8400, %v7754
      %8652 = vst.msk [vmem:[%s202 + $0x3ec] sm:$0xf] %vm8400, %v7755
      %8653 = vst.msk [vmem:[%s202 + $0x3f0] sm:$0xf] %vm8400, %v7756
      %8654 = vst.msk [vmem:[%s202 + $0x3f4] sm:$0xf] %vm8400, %v7757
      %8655 = vst.msk [vmem:[%s202 + $0x3f8] sm:$0xf] %vm8400, %v7758
      %8656 = vst.msk [vmem:[%s202 + $0x3fc] sm:$0xf] %vm8400, %v7759
      %8657 = vst.msk [vmem:[%s202 + $0x400] sm:$0xf] %vm8400, %v7760
      %8658 = vst.msk [vmem:[%s202 + $0x404] sm:$0xf] %vm8400, %v7761
      %8659 = vst.msk [vmem:[%s202 + $0x408] sm:$0xf] %vm8400, %v7762
      %8660 = vst.msk [vmem:[%s202 + $0x40c] sm:$0xf] %vm8400, %v7763
      %8661 = vst.msk [vmem:[%s202 + $0x410] sm:$0xf] %vm8400, %v7764
      %8662 = vst.msk [vmem:[%s202 + $0x414] sm:$0xf] %vm8400, %v7765
      %8663 = vst.msk [vmem:[%s202 + $0x418] sm:$0xf] %vm8400, %v7766
      %8664 = vst.msk [vmem:[%s202 + $0x41c] sm:$0xf] %vm8400, %v7767
      %8665 = vst.msk [vmem:[%s202 + $0x420] sm:$0xf] %vm8400, %v7768
      %8666 = vst.msk [vmem:[%s202 + $0x424] sm:$0xf] %vm8400, %v7769
      %8667 = vst.msk [vmem:[%s202 + $0x428] sm:$0xf] %vm8400, %v7770
      %8668 = vst.msk [vmem:[%s202 + $0x42c] sm:$0xf] %vm8400, %v7771
      %8669 = vst.msk [vmem:[%s202 + $0x430] sm:$0xf] %vm8400, %v7772
      %8670 = vst.msk [vmem:[%s202 + $0x434] sm:$0xf] %vm8400, %v7773
      %8671 = vst.msk [vmem:[%s202 + $0x438] sm:$0xf] %vm8400, %v7774
      %8672 = vst.msk [vmem:[%s202 + $0x43c] sm:$0xf] %vm8400, %v7775
      %8673 = vst.msk [vmem:[%s202 + $0x440] sm:$0xf] %vm8400, %v7776
      %8674 = vst.msk [vmem:[%s202 + $0x444] sm:$0xf] %vm8400, %v7777
      %8675 = vst.msk [vmem:[%s202 + $0x448] sm:$0xf] %vm8400, %v7778
      %8676 = vst.msk [vmem:[%s202 + $0x44c] sm:$0xf] %vm8400, %v7779
      %8677 = vst.msk [vmem:[%s202 + $0x450] sm:$0xf] %vm8400, %v7780
      %8678 = vst.msk [vmem:[%s202 + $0x454] sm:$0xf] %vm8400, %v7781
      %8679 = vst.msk [vmem:[%s202 + $0x458] sm:$0xf] %vm8400, %v7782
      %8680 = vst.msk [vmem:[%s202 + $0x45c] sm:$0xf] %vm8400, %v7783
      %8681 = vst.msk [vmem:[%s202 + $0x460] sm:$0xf] %vm8400, %v7784
      %8682 = vst.msk [vmem:[%s202 + $0x464] sm:$0xf] %vm8400, %v7785
      %8683 = vst.msk [vmem:[%s202 + $0x468] sm:$0xf] %vm8400, %v7786
      %8684 = vst.msk [vmem:[%s202 + $0x46c] sm:$0xf] %vm8400, %v7787
      %8685 = vst.msk [vmem:[%s202 + $0x470] sm:$0xf] %vm8400, %v7788
      %8686 = vst.msk [vmem:[%s202 + $0x474] sm:$0xf] %vm8400, %v7789
      %8687 = vst.msk [vmem:[%s202 + $0x478] sm:$0xf] %vm8400, %v7790
      %8688 = vst.msk [vmem:[%s202 + $0x47c] sm:$0xf] %vm8400, %v7791
      %8689 = vst.msk [vmem:[%s202 + $0x480] sm:$0xf] %vm8400, %v7792
      %8690 = vst.msk [vmem:[%s202 + $0x484] sm:$0xf] %vm8400, %v7793
      %8691 = vst.msk [vmem:[%s202 + $0x488] sm:$0xf] %vm8400, %v7794
      %8692 = vst.msk [vmem:[%s202 + $0x48c] sm:$0xf] %vm8400, %v7795
      %8693 = vst.msk [vmem:[%s202 + $0x490] sm:$0xf] %vm8400, %v7796
      %8694 = vst.msk [vmem:[%s202 + $0x494] sm:$0xf] %vm8400, %v7797
      %8695 = vst.msk [vmem:[%s202 + $0x498] sm:$0xf] %vm8400, %v7798
      %8696 = vst.msk [vmem:[%s202 + $0x49c] sm:$0xf] %vm8400, %v7799
      %8697 = vst.msk [vmem:[%s202 + $0x4a0] sm:$0xf] %vm8400, %v7800
      %8698 = vst.msk [vmem:[%s202 + $0x4a4] sm:$0xf] %vm8400, %v7801
      %8699 = vst.msk [vmem:[%s202 + $0x4a8] sm:$0xf] %vm8400, %v7802
      %8700 = vst.msk [vmem:[%s202 + $0x4ac] sm:$0xf] %vm8400, %v7803
      %8701 = vst.msk [vmem:[%s202 + $0x4b0] sm:$0xf] %vm8400, %v7804
      %8702 = vst.msk [vmem:[%s202 + $0x4b4] sm:$0xf] %vm8400, %v7805
      %8703 = vst.msk [vmem:[%s202 + $0x4b8] sm:$0xf] %vm8400, %v7806
      %8704 = vst.msk [vmem:[%s202 + $0x4bc] sm:$0xf] %vm8400, %v7807
      %8705 = vst.msk [vmem:[%s202 + $0x4c0] sm:$0xf] %vm8400, %v7808
      %8706 = vst.msk [vmem:[%s202 + $0x4c4] sm:$0xf] %vm8400, %v7809
      %8707 = vst.msk [vmem:[%s202 + $0x4c8] sm:$0xf] %vm8400, %v7810
      %8708 = vst.msk [vmem:[%s202 + $0x4cc] sm:$0xf] %vm8400, %v7811
      %8709 = vst.msk [vmem:[%s202 + $0x4d0] sm:$0xf] %vm8400, %v7812
      %8710 = vst.msk [vmem:[%s202 + $0x4d4] sm:$0xf] %vm8400, %v7813
      %8711 = vst.msk [vmem:[%s202 + $0x4d8] sm:$0xf] %vm8400, %v7814
      %8712 = vst.msk [vmem:[%s202 + $0x4dc] sm:$0xf] %vm8400, %v7815
      %8713 = vst.msk [vmem:[%s202 + $0x4e0] sm:$0xf] %vm8400, %v7816
      %8714 = vst.msk [vmem:[%s202 + $0x4e4] sm:$0xf] %vm8400, %v7817
      %8715 = vst.msk [vmem:[%s202 + $0x4e8] sm:$0xf] %vm8400, %v7818
      %8716 = vst.msk [vmem:[%s202 + $0x4ec] sm:$0xf] %vm8400, %v7819
      %8717 = vst.msk [vmem:[%s202 + $0x4f0] sm:$0xf] %vm8400, %v7820
      %8718 = vst.msk [vmem:[%s202 + $0x4f4] sm:$0xf] %vm8400, %v7821
      %8719 = vst.msk [vmem:[%s202 + $0x4f8] sm:$0xf] %vm8400, %v7822
      %8720 = vst.msk [vmem:[%s202 + $0x4fc] sm:$0xf] %vm8400, %v7823
      %8721 = vst.msk [vmem:[%s202 + $0x500] sm:$0xf] %vm8400, %v7824
      %8722 = vst.msk [vmem:[%s202 + $0x504] sm:$0xf] %vm8400, %v7825
      %8723 = vst.msk [vmem:[%s202 + $0x508] sm:$0xf] %vm8400, %v7826
      %8724 = vst.msk [vmem:[%s202 + $0x50c] sm:$0xf] %vm8400, %v7827
      %8725 = vst.msk [vmem:[%s202 + $0x510] sm:$0xf] %vm8400, %v7828
      %8726 = vst.msk [vmem:[%s202 + $0x514] sm:$0xf] %vm8400, %v7829
      %8727 = vst.msk [vmem:[%s202 + $0x518] sm:$0xf] %vm8400, %v7830
      %8728 = vst.msk [vmem:[%s202 + $0x51c] sm:$0xf] %vm8400, %v7831
      %8729 = vst.msk [vmem:[%s202 + $0x520] sm:$0xf] %vm8400, %v7832
      %8730 = vst.msk [vmem:[%s202 + $0x524] sm:$0xf] %vm8400, %v7833
      %8731 = vst.msk [vmem:[%s202 + $0x528] sm:$0xf] %vm8400, %v7834
      %8732 = vst.msk [vmem:[%s202 + $0x52c] sm:$0xf] %vm8400, %v7835
      %8733 = vst.msk [vmem:[%s202 + $0x530] sm:$0xf] %vm8400, %v7836
      %8734 = vst.msk [vmem:[%s202 + $0x534] sm:$0xf] %vm8400, %v7837
      %8735 = vst.msk [vmem:[%s202 + $0x538] sm:$0xf] %vm8400, %v7838
      %8736 = vst.msk [vmem:[%s202 + $0x53c] sm:$0xf] %vm8400, %v7839
      %8737 = vst.msk [vmem:[%s202 + $0x540] sm:$0xf] %vm8400, %v7840
      %8738 = vst.msk [vmem:[%s202 + $0x544] sm:$0xf] %vm8400, %v7841
      %8739 = vst.msk [vmem:[%s202 + $0x548] sm:$0xf] %vm8400, %v7842
      %8740 = vst.msk [vmem:[%s202 + $0x54c] sm:$0xf] %vm8400, %v7843
      %8741 = vst.msk [vmem:[%s202 + $0x550] sm:$0xf] %vm8400, %v7844
      %8742 = vst.msk [vmem:[%s202 + $0x554] sm:$0xf] %vm8400, %v7845
      %8743 = vst.msk [vmem:[%s202 + $0x558] sm:$0xf] %vm8400, %v7846
      %8744 = vst.msk [vmem:[%s202 + $0x55c] sm:$0xf] %vm8400, %v7847
      %8745 = vst.msk [vmem:[%s202 + $0x560] sm:$0xf] %vm8400, %v7848
      %8746 = vst.msk [vmem:[%s202 + $0x564] sm:$0xf] %vm8400, %v7849
      %8747 = vst.msk [vmem:[%s202 + $0x568] sm:$0xf] %vm8400, %v7850
      %8748 = vst.msk [vmem:[%s202 + $0x56c] sm:$0xf] %vm8400, %v7851
      %8749 = vst.msk [vmem:[%s202 + $0x570] sm:$0xf] %vm8400, %v7852
      %8750 = vst.msk [vmem:[%s202 + $0x574] sm:$0xf] %vm8400, %v7853
      %8751 = vst.msk [vmem:[%s202 + $0x578] sm:$0xf] %vm8400, %v7854
      %8752 = vst.msk [vmem:[%s202 + $0x57c] sm:$0xf] %vm8400, %v7855
      %8753 = vst.msk [vmem:[%s202 + $0x580] sm:$0xf] %vm8400, %v7856
      %8754 = vst.msk [vmem:[%s202 + $0x584] sm:$0xf] %vm8400, %v7857
      %8755 = vst.msk [vmem:[%s202 + $0x588] sm:$0xf] %vm8400, %v7858
      %8756 = vst.msk [vmem:[%s202 + $0x58c] sm:$0xf] %vm8400, %v7859
      %8757 = vst.msk [vmem:[%s202 + $0x590] sm:$0xf] %vm8400, %v7860
      %8758 = vst.msk [vmem:[%s202 + $0x594] sm:$0xf] %vm8400, %v7861
      %8759 = vst.msk [vmem:[%s202 + $0x598] sm:$0xf] %vm8400, %v7862
      %8760 = vst.msk [vmem:[%s202 + $0x59c] sm:$0xf] %vm8400, %v7863
      %8761 = vst.msk [vmem:[%s202 + $0x5a0] sm:$0xf] %vm8400, %v7864
      %8762 = vst.msk [vmem:[%s202 + $0x5a4] sm:$0xf] %vm8400, %v7865
      %8763 = vst.msk [vmem:[%s202 + $0x5a8] sm:$0xf] %vm8400, %v7866
      %8764 = vst.msk [vmem:[%s202 + $0x5ac] sm:$0xf] %vm8400, %v7867
      %8765 = vst.msk [vmem:[%s202 + $0x5b0] sm:$0xf] %vm8400, %v7868
      %8766 = vst.msk [vmem:[%s202 + $0x5b4] sm:$0xf] %vm8400, %v7869
      %8767 = vst.msk [vmem:[%s202 + $0x5b8] sm:$0xf] %vm8400, %v7870
      %8768 = vst.msk [vmem:[%s202 + $0x5bc] sm:$0xf] %vm8400, %v7871
      %8769 = vst.msk [vmem:[%s202 + $0x5c0] sm:$0xf] %vm8400, %v7872
      %8770 = vst.msk [vmem:[%s202 + $0x5c4] sm:$0xf] %vm8400, %v7873
      %8771 = vst.msk [vmem:[%s202 + $0x5c8] sm:$0xf] %vm8400, %v7874
      %8772 = vst.msk [vmem:[%s202 + $0x5cc] sm:$0xf] %vm8400, %v7875
      %8773 = vst.msk [vmem:[%s202 + $0x5d0] sm:$0xf] %vm8400, %v7876
      %8774 = vst.msk [vmem:[%s202 + $0x5d4] sm:$0xf] %vm8400, %v7877
      %8775 = vst.msk [vmem:[%s202 + $0x5d8] sm:$0xf] %vm8400, %v7878
      %8776 = vst.msk [vmem:[%s202 + $0x5dc] sm:$0xf] %vm8400, %v7879
      %8777 = vst.msk [vmem:[%s202 + $0x5e0] sm:$0xf] %vm8400, %v7880
      %8778 = vst.msk [vmem:[%s202 + $0x5e4] sm:$0xf] %vm8400, %v7881
      %8779 = vst.msk [vmem:[%s202 + $0x5e8] sm:$0xf] %vm8400, %v7882
      %8780 = vst.msk [vmem:[%s202 + $0x5ec] sm:$0xf] %vm8400, %v7883
      %8781 = vst.msk [vmem:[%s202 + $0x5f0] sm:$0xf] %vm8400, %v7884
      %8782 = vst.msk [vmem:[%s202 + $0x5f4] sm:$0xf] %vm8400, %v7885
      %8783 = vst.msk [vmem:[%s202 + $0x5f8] sm:$0xf] %vm8400, %v7886
      %8784 = vst.msk [vmem:[%s202 + $0x5fc] sm:$0xf] %vm8400, %v7887
      %8785 = vst.msk [vmem:[%s202 + $0x600] sm:$0xf] %vm8400, %v7888
      %8786 = vst.msk [vmem:[%s202 + $0x604] sm:$0xf] %vm8400, %v7889
      %8787 = vst.msk [vmem:[%s202 + $0x608] sm:$0xf] %vm8400, %v7890
      %8788 = vst.msk [vmem:[%s202 + $0x60c] sm:$0xf] %vm8400, %v7891
      %8789 = vst.msk [vmem:[%s202 + $0x610] sm:$0xf] %vm8400, %v7892
      %8790 = vst.msk [vmem:[%s202 + $0x614] sm:$0xf] %vm8400, %v7893
      %8791 = vst.msk [vmem:[%s202 + $0x618] sm:$0xf] %vm8400, %v7894
      %8792 = vst.msk [vmem:[%s202 + $0x61c] sm:$0xf] %vm8400, %v7895
      %8793 = vst.msk [vmem:[%s202 + $0x620] sm:$0xf] %vm8400, %v7896
      %8794 = vst.msk [vmem:[%s202 + $0x624] sm:$0xf] %vm8400, %v7897
      %8795 = vst.msk [vmem:[%s202 + $0x628] sm:$0xf] %vm8400, %v7898
      %8796 = vst.msk [vmem:[%s202 + $0x62c] sm:$0xf] %vm8400, %v7899
      %8797 = vst.msk [vmem:[%s202 + $0x630] sm:$0xf] %vm8400, %v7900
      %8798 = vst.msk [vmem:[%s202 + $0x634] sm:$0xf] %vm8400, %v7901
      %8799 = vst.msk [vmem:[%s202 + $0x638] sm:$0xf] %vm8400, %v7902
      %8800 = vst.msk [vmem:[%s202 + $0x63c] sm:$0xf] %vm8400, %v7903
      %8801 = vst.msk [vmem:[%s202 + $0x640] sm:$0xf] %vm8400, %v7904
      %8802 = vst.msk [vmem:[%s202 + $0x644] sm:$0xf] %vm8400, %v7905
      %8803 = vst.msk [vmem:[%s202 + $0x648] sm:$0xf] %vm8400, %v7906
      %8804 = vst.msk [vmem:[%s202 + $0x64c] sm:$0xf] %vm8400, %v7907
      %8805 = vst.msk [vmem:[%s202 + $0x650] sm:$0xf] %vm8400, %v7908
      %8806 = vst.msk [vmem:[%s202 + $0x654] sm:$0xf] %vm8400, %v7909
      %8807 = vst.msk [vmem:[%s202 + $0x658] sm:$0xf] %vm8400, %v7910
      %8808 = vst.msk [vmem:[%s202 + $0x65c] sm:$0xf] %vm8400, %v7911
      %8809 = vst.msk [vmem:[%s202 + $0x660] sm:$0xf] %vm8400, %v7912
      %8810 = vst.msk [vmem:[%s202 + $0x664] sm:$0xf] %vm8400, %v7913
      %8811 = vst.msk [vmem:[%s202 + $0x668] sm:$0xf] %vm8400, %v7914
      %8812 = vst.msk [vmem:[%s202 + $0x66c] sm:$0xf] %vm8400, %v7915
      %8813 = vst.msk [vmem:[%s202 + $0x670] sm:$0xf] %vm8400, %v7916
      %8814 = vst.msk [vmem:[%s202 + $0x674] sm:$0xf] %vm8400, %v7917
      %8815 = vst.msk [vmem:[%s202 + $0x678] sm:$0xf] %vm8400, %v7918
      %8816 = vst.msk [vmem:[%s202 + $0x67c] sm:$0xf] %vm8400, %v7919
      %8817 = vst.msk [vmem:[%s202 + $0x680] sm:$0xf] %vm8400, %v7920
      %8818 = vst.msk [vmem:[%s202 + $0x684] sm:$0xf] %vm8400, %v7921
      %8819 = vst.msk [vmem:[%s202 + $0x688] sm:$0xf] %vm8400, %v7922
      %8820 = vst.msk [vmem:[%s202 + $0x68c] sm:$0xf] %vm8400, %v7923
      %8821 = vst.msk [vmem:[%s202 + $0x690] sm:$0xf] %vm8400, %v7924
      %8822 = vst.msk [vmem:[%s202 + $0x694] sm:$0xf] %vm8400, %v7925
      %8823 = vst.msk [vmem:[%s202 + $0x698] sm:$0xf] %vm8400, %v7926
      %8824 = vst.msk [vmem:[%s202 + $0x69c] sm:$0xf] %vm8400, %v7927
      %8825 = vst.msk [vmem:[%s202 + $0x6a0] sm:$0xf] %vm8400, %v7928
      %8826 = vst.msk [vmem:[%s202 + $0x6a4] sm:$0xf] %vm8400, %v7929
      %8827 = vst.msk [vmem:[%s202 + $0x6a8] sm:$0xf] %vm8400, %v7930
      %8828 = vst.msk [vmem:[%s202 + $0x6ac] sm:$0xf] %vm8400, %v7931
      %8829 = vst.msk [vmem:[%s202 + $0x6b0] sm:$0xf] %vm8400, %v7932
      %8830 = vst.msk [vmem:[%s202 + $0x6b4] sm:$0xf] %vm8400, %v7933
      %8831 = vst.msk [vmem:[%s202 + $0x6b8] sm:$0xf] %vm8400, %v7934
      %8832 = vst.msk [vmem:[%s202 + $0x6bc] sm:$0xf] %vm8400, %v7935
      %8833 = vst.msk [vmem:[%s202 + $0x6c0] sm:$0xf] %vm8400, %v7936
      %8834 = vst.msk [vmem:[%s202 + $0x6c4] sm:$0xf] %vm8400, %v7937
      %8835 = vst.msk [vmem:[%s202 + $0x6c8] sm:$0xf] %vm8400, %v7938
      %8836 = vst.msk [vmem:[%s202 + $0x6cc] sm:$0xf] %vm8400, %v7939
      %8837 = vst.msk [vmem:[%s202 + $0x6d0] sm:$0xf] %vm8400, %v7940
      %8838 = vst.msk [vmem:[%s202 + $0x6d4] sm:$0xf] %vm8400, %v7941
      %8839 = vst.msk [vmem:[%s202 + $0x6d8] sm:$0xf] %vm8400, %v7942
      %8840 = vst.msk [vmem:[%s202 + $0x6dc] sm:$0xf] %vm8400, %v7943
      %8841 = vst.msk [vmem:[%s202 + $0x6e0] sm:$0xf] %vm8400, %v7944
      %8842 = vst.msk [vmem:[%s202 + $0x6e4] sm:$0xf] %vm8400, %v7945
      %8843 = vst.msk [vmem:[%s202 + $0x6e8] sm:$0xf] %vm8400, %v7946
      %8844 = vst.msk [vmem:[%s202 + $0x6ec] sm:$0xf] %vm8400, %v7947
      %8845 = vst.msk [vmem:[%s202 + $0x6f0] sm:$0xf] %vm8400, %v7948
      %8846 = vst.msk [vmem:[%s202 + $0x6f4] sm:$0xf] %vm8400, %v7949
      %8847 = vst.msk [vmem:[%s202 + $0x6f8] sm:$0xf] %vm8400, %v7950
      %8848 = vst.msk [vmem:[%s202 + $0x6fc] sm:$0xf] %vm8400, %v7951
      %s8849 = smul.u32 448, %s15
      %p8850 = scmp.lt.s32.totalorder %s8849, 3135
      %s8851 = scalar_select %p8850, %s8849, 3135
      %s8852 = smul.addr %s8851, 4
      %s8853 = scalar_lea.vmem %s4, %s8852
      // Predicated region
      $region37: #{stem_forward.1} parent=35 // pred_check
        %p8854 = pneg %p122
      $region38: #{stem_forward.1} parent=35 // pred_check_branch
        %8856 = sbr.rel (%p8854) target = $region40
      $region39: #{stem_forward.1} parent=35 // pred_region
        %s8857 = smul.u32 448, %s15
      $region40: #{stem_forward.1} parent=35 // pred_fallthru
        _
    $region36: #{stem_forward.1} parent=5 // pred_fallthru
      _
    %p8858 = scmp.le.s32.totalorder 2, %s10
    // Predicated region
    $region41: #{stem_forward.1} parent=5 // pred_check
      %p8859 = pneg %p8858
    $region42: #{stem_forward.1} parent=5 // pred_check_branch
      %8861 = sbr.rel (%p8859) target = $region44
    $region43: #{stem_forward.1} parent=5 // pred_region
      %s8862 = ssub.s32 %s10, 2
      // Predicated region
      $region45: #{stem_forward.1} parent=43 // pred_check
        %p8863 = pneg %p128
      $region46: #{stem_forward.1} parent=43 // pred_check_branch
        %8865 = sbr.rel (%p8863) target = $region48
      $region47: #{stem_forward.1} parent=43 // pred_region
        %s8866 = smul.u32 448, %s16
        %p8867 = scmp.lt.s32.totalorder %s8866, 3135
        %s8868 = scalar_select %p8867, %s8866, 3135
        %s8869 = smul.addr %s8868, 4
        %s8870 = scalar_lea.vmem %s4, %s8869
      $region48: #{stem_forward.1} parent=43 // pred_fallthru
        _
    $region44: #{stem_forward.1} parent=5 // pred_fallthru
      _
  $region6: #{stem_forward.1} parent=0 // loop_footer
    %s14 = sadd.s32 1, %s10
  $region7: #{stem_forward.1} parent=0 // loop_footer_branch
    %9 = sbr.rel target = $region3
  $region8: #{stem_forward.1} parent=0 // loop_exit
    _

</llo_original>
